<compile_context>
chip_gen: v7x
topology: tpu7x:2x2x1
jax: 0.10.0
libtpu: 0.0.40
codegen_flags: <defaults>
</compile_context>

<pallas_src>
import functools

import jax
import jax.numpy as jnp
from jax.experimental import pallas as pl
from jax.experimental.pallas import tpu as pltpu

# ----------------------- model hyper-parameters (small) -----------------------
DIM = 32          # stands in for in_planes = 2048
HEADS = 4         # stands in for heads = 8
DEPTH = 2         # stands in for depth = 6
MLP_DIM = 32      # stands in for mlp_dim = 2048
NUM_CLASSES = 8   # classifier head (unused in eval forward)
STEM_CH = 16
N_PAD = 128       # token count padded to a lane multiple (real tokens = 65)
TM = 128          # row tile for the token-path kernels
LN_EPS = 1e-6     # TODO(synk): ViT convention; PyTorch nn.LayerNorm default is 1e-5
BN_EPS = 1e-5


def _fold_bn(bn, c):
    scale = bn["gamma"] / jnp.sqrt(bn["var"] + BN_EPS)
    shift = bn["beta"] - bn["mean"] * scale
    return scale.reshape(1, c).astype(jnp.float32), shift.reshape(1, c).astype(jnp.float32)


# -------------------- fused conv3x3/s2 + BN + ReLU kernel ----------------------

def _conv3x3s2_bn_relu_kernel(x_ref, w_ref, s_ref, t_ref, o_ref, *, ho, wo, cin):
    # x_ref: (4, Hh, Wh, Cin) parity-split (space-to-depth) padded input, one batch elem
    # w_ref: (9, Cin, O) bf16 tap weights; s_ref/t_ref: (1, O) folded BN scale/shift
    out_ch = w_ref.shape[-1]
    planes = [x_ref[p] for p in range(4)]               # each (Hh, Wh, Cin) f32
    acc = jnp.zeros((ho * wo, out_ch), jnp.float32)
    for ki in range(3):
        for kj in range(3):
            pidx = (ki % 2) * 2 + (kj % 2)
            oi, oj = ki // 2, kj // 2
            win = planes[pidx][oi:oi + ho, oj:oj + wo, :]        # (ho, wo, cin)
            win = win.reshape(ho * wo, cin).astype(jnp.bfloat16)
            acc = acc + jnp.dot(win, w_ref[ki * 3 + kj],
                                preferred_element_type=jnp.float32)
    y = acc * s_ref[...] + t_ref[...]                   # folded BN (eval) epilogue
    o_ref[...] = jnp.maximum(y, 0.0)                    # ReLU


def conv3x3_s2_bn_relu(x_nhwc, w_oihw, bn):
    """3x3 stride-2 pad-1 conv + folded BatchNorm(eval) + ReLU, fully fused."""
    B, H, W, C = x_nhwc.shape
    O = w_oihw.shape[0]
    pad = 1
    xp = jnp.pad(x_nhwc, ((0, 0), (pad, pad), (pad, pad), (0, 0)))
    Hp, Wp = H + 2 * pad, W + 2 * pad
    assert Hp % 2 == 0 and Wp % 2 == 0, "stem stand-in assumes even padded dims"
    Hh, Wh = Hp // 2, Wp // 2
    Ho, Wo = (Hp - 3) // 2 + 1, (Wp - 3) // 2 + 1
    # space-to-depth by output-stride parity: same byte count as the input,
    # no 9x im2col expansion in HBM; tap windows become contiguous slices.
    xs = xp.reshape(B, Hh, 2, Wh, 2, C).transpose(0, 2, 4, 1, 3, 5)
    xs = xs.reshape(B, 4, Hh, Wh, C)
    # per-tap weights (9, C, O), bf16 for the MXU
    wt = jnp.transpose(w_oihw, (2, 3, 1, 0)).reshape(9, C, O).astype(jnp.bfloat16)
    scale, shift = _fold_bn(bn, O)

    y = pl.pallas_call(
        functools.partial(_conv3x3s2_bn_relu_kernel, ho=Ho, wo=Wo, cin=C),
        out_shape=jax.ShapeDtypeStruct((B * Ho * Wo, O), jnp.float32),
        grid=(B,),
        in_specs=[
            pl.BlockSpec((None, 4, Hh, Wh, C), lambda b: (b, 0, 0, 0, 0)),
            pl.BlockSpec((9, C, O), lambda b: (0, 0, 0)),
            pl.BlockSpec((1, O), lambda b: (0, 0)),
            pl.BlockSpec((1, O), lambda b: (0, 0)),
        ],
        out_specs=pl.BlockSpec((Ho * Wo, O), lambda b: (b, 0)),
        compiler_params=pltpu.CompilerParams(dimension_semantics=("parallel",)),
    )(xs, wt, scale, shift)
    return y.reshape(B, Ho, Wo, O)


# ------------------- fused LN + linear (QKV projection) kernel -----------------

def _ln_linear_kernel(x_ref, g_ref, b_ref, w_ref, wb_ref, o_ref, *, eps):
    x = x_ref[...]                                       # (tm, D) f32
    mu = jnp.mean(x, axis=-1, keepdims=True)
    var = jnp.mean(jnp.square(x - mu), axis=-1, keepdims=True)
    h = (x - mu) * jax.lax.rsqrt(var + eps) * g_ref[...] + b_ref[...]
    y = jnp.dot(h.astype(jnp.bfloat16), w_ref[...],
                preferred_element_type=jnp.float32) + wb_ref[...]
    o_ref[...] = y.astype(o_ref.dtype)


def ln_linear(x, g, b, w_bf16, wb, out_dtype=jnp.float32):
    M, D = x.shape
    N = w_bf16.shape[1]
    tm = min(TM, M)
    assert M % tm == 0
    return pl.pallas_call(
        functools.partial(_ln_linear_kernel, eps=LN_EPS),
        out_shape=jax.ShapeDtypeStruct((M, N), out_dtype),
        grid=(M // tm,),
        in_specs=[
            pl.BlockSpec((tm, D), lambda i: (i, 0)),
            pl.BlockSpec((1, D), lambda i: (0, 0)),
            pl.BlockSpec((1, D), lambda i: (0, 0)),
            pl.BlockSpec((D, N), lambda i: (0, 0)),
            pl.BlockSpec((1, N), lambda i: (0, 0)),
        ],
        out_specs=pl.BlockSpec((tm, N), lambda i: (i, 0)),
        compiler_params=pltpu.CompilerParams(dimension_semantics=("parallel",)),
    )(x, g.reshape(1, D), b.reshape(1, D), w_bf16, wb.reshape(1, N))


# -------------- fused multi-head attention + out-proj + residual ---------------

def _attn_proj_res_kernel(qkv_ref, x_ref, wp_ref, bp_ref, o_ref,
                          *, heads, dh, n_real, scale):
    d = heads * dh
    x = x_ref[...]                                       # (Npad, D) f32 residual
    npad = x.shape[0]
    col = jax.lax.broadcasted_iota(jnp.int32, (npad, npad), 1)
    key_mask = col < n_real                              # mask out padded key tokens
    acc = x + bp_ref[...]                                # residual + proj bias (once)
    for h in range(heads):
        q = qkv_ref[:, h * dh:(h + 1) * dh]              # (Npad, dh) bf16
        k = qkv_ref[:, d + h * dh:d + (h + 1) * dh]
        v = qkv_ref[:, 2 * d + h * dh:2 * d + (h + 1) * dh]
        # q k^T without materializing a transpose (contraction on last axes)
        s = jax.lax.dot_general(q, k, (((1,), (1,)), ((), ())),
                                preferred_element_type=jnp.float32) * scale
        s = jnp.where(key_mask, s, jnp.float32(-1e30))
        s = s - jnp.max(s, axis=-1, keepdims=True)
        p = jnp.exp(s)
        p = p * pl.reciprocal(jnp.sum(p, axis=-1, keepdims=True), approx=True)
        oh = jnp.dot(p.astype(jnp.bfloat16), v, preferred_element_type=jnp.float32)
        # apply the matching slice of the output projection and accumulate:
        # proj(concat_h oh) == sum_h oh @ Wp[h*dh:(h+1)*dh, :]
        acc = acc + jnp.dot(oh.astype(jnp.bfloat16), wp_ref[h * dh:(h + 1) * dh, :],
                            preferred_element_type=jnp.float32)
    o_ref[...] = acc


def attention_proj_residual(qkv_bf16, x, wp_bf16, bp, batch, n_real):
    rows, d = x.shape
    assert rows % batch == 0
    npad = rows // batch
    dh = d // HEADS
    return pl.pallas_call(
        functools.partial(_attn_proj_res_kernel, heads=HEADS, dh=dh,
                          n_real=n_real, scale=1.0 / (dh ** 0.5)),
        out_shape=jax.ShapeDtypeStruct((rows, d), jnp.float32),
        grid=(batch,),
        in_specs=[
            pl.BlockSpec((npad, 3 * d), lambda b: (b, 0)),
            pl.BlockSpec((npad, d), lambda b: (b, 0)),
            pl.BlockSpec((d, d), lambda b: (0, 0)),
            pl.BlockSpec((1, d), lambda b: (0, 0)),
        ],
        out_specs=pl.BlockSpec((npad, d), lambda b: (b, 0)),
        compiler_params=pltpu.CompilerParams(dimension_semantics=("parallel",)),
    )(qkv_bf16, x, wp_bf16, bp.reshape(1, d))


# -------------------- fused LN + MLP (fc1+GELU+fc2) + residual ------------------

def _ln_mlp_res_kernel(x_ref, g_ref, b_ref, w1_ref, b1_ref, w2_ref, b2_ref, o_ref, *, eps):
    x = x_ref[...]                                       # (tm, D) f32
    mu = jnp.mean(x, axis=-1, keepdims=True)
    var = jnp.mean(jnp.square(x - mu), axis=-1, keepdims=True)
    h = (x - mu) * jax.lax.rsqrt(var + eps) * g_ref[...] + b_ref[...]
    h1 = jnp.dot(h.astype(jnp.bfloat16), w1_ref[...],
                 preferred_element_type=jnp.float32) + b1_ref[...]
    # TODO(synk): PyTorch nn.GELU defaults to exact erf; tanh approximation kept here.
    h1 = jax.nn.gelu(h1, approximate=True)
    h2 = jnp.dot(h1.astype(jnp.bfloat16), w2_ref[...],
                 preferred_element_type=jnp.float32) + b2_ref[...]
    o_ref[...] = x + h2


def ln_mlp_residual(x, p):
    M, D = x.shape
    Hm = p["fc1_w"].shape[1]
    tm = min(TM, M)
    assert M % tm == 0
    return pl.pallas_call(
        functools.partial(_ln_mlp_res_kernel, eps=LN_EPS),
        out_shape=jax.ShapeDtypeStruct((M, D), jnp.float32),
        grid=(M // tm,),
        in_specs=[
            pl.BlockSpec((tm, D), lambda i: (i, 0)),
            pl.BlockSpec((1, D), lambda i: (0, 0)),
            pl.BlockSpec((1, D), lambda i: (0, 0)),
            pl.BlockSpec((D, Hm), lambda i: (0, 0)),
            pl.BlockSpec((1, Hm), lambda i: (0, 0)),
            pl.BlockSpec((Hm, D), lambda i: (0, 0)),
            pl.BlockSpec((1, D), lambda i: (0, 0)),
        ],
        out_specs=pl.BlockSpec((tm, D), lambda i: (i, 0)),
        compiler_params=pltpu.CompilerParams(dimension_semantics=("parallel",)),
    )(x, p["ln2_g"].reshape(1, D), p["ln2_b"].reshape(1, D),
      p["fc1_w"].astype(jnp.bfloat16), p["fc1_b"].reshape(1, Hm),
      p["fc2_w"].astype(jnp.bfloat16), p["fc2_b"].reshape(1, D))


# ------------------- fused final LayerNorm + BN-neck (cls rows) -----------------

def _ln_bn_kernel(x_ref, g_ref, b_ref, s_ref, t_ref, o_ref, *, eps):
    x = x_ref[...]
    mu = jnp.mean(x, axis=-1, keepdims=True)
    var = jnp.mean(jnp.square(x - mu), axis=-1, keepdims=True)
    h = (x - mu) * jax.lax.rsqrt(var + eps) * g_ref[...] + b_ref[...]
    o_ref[...] = h * s_ref[...] + t_ref[...]


def ln_bn_neck(cls_rows, g, b, bn):
    B, D = cls_rows.shape
    scale, shift = _fold_bn(bn, D)
    vec = pl.BlockSpec((1, D), lambda i: (0, 0))
    return pl.pallas_call(
        functools.partial(_ln_bn_kernel, eps=LN_EPS),
        out_shape=jax.ShapeDtypeStruct((B, D), jnp.float32),
        grid=(1,),
        in_specs=[pl.BlockSpec((B, D), lambda i: (0, 0)), vec, vec, vec, vec],
        out_specs=pl.BlockSpec((B, D), lambda i: (0, 0)),
    )(cls_rows, g.reshape(1, D), b.reshape(1, D), scale, shift)


# ------------------------------- transformer -----------------------------------

def transformer_block(xslab, p, batch, n_real):
    qkv = ln_linear(xslab, p["ln1_g"], p["ln1_b"],
                    p["qkv_w"].astype(jnp.bfloat16), p["qkv_b"],
                    out_dtype=jnp.bfloat16)                       # (rows, 3D) bf16
    xslab = attention_proj_residual(qkv, xslab,
                                    p["proj_w"].astype(jnp.bfloat16),
                                    p["proj_b"], batch, n_real)   # (rows, D) f32
    xslab = ln_mlp_residual(xslab, p)                             # (rows, D) f32
    return xslab


# -------------------------------- full forward ---------------------------------

def forward(params, x_nchw, cam_label=None, view_label=None):
    """Eval-mode forward (cfg.TEST.NECK_FEAT == 'after' -> return BN-neck feat)."""
    # NCHW (PyTorch) -> NHWC internal layout (channels on the lane axis)
    x = jnp.transpose(x_nchw, (0, 2, 3, 1)).astype(jnp.float32)

    # --- self.base (CNN backbone) ---
    # TODO(synk): full resnet50_ibn_a not reproduced (module source not provided);
    # a 2-layer fused conv/BN/ReLU stem producing a [B, h, w, DIM] map stands in.
    f = conv3x3_s2_bn_relu(x, params["conv1_w"], params["bn1"])
    f = conv3x3_s2_bn_relu(f, params["conv2_w"], params["bn2"])

    # --- self.transformer (ResNetTransformer: cls token + pos embed + blocks) ---
    B, Hf, Wf, D = f.shape
    tokens = f.reshape(B, Hf * Wf, D)
    cls = jnp.broadcast_to(params["cls_token"], (B, 1, D))
    tok = jnp.concatenate([cls, tokens], axis=1) + params["pos_embed"]
    n_real = tok.shape[1]
    # pad token axis to a lane multiple; pad keys are masked inside attention
    tok = jnp.pad(tok, ((0, 0), (0, N_PAD - n_real), (0, 0)))
    xslab = tok.reshape(B * N_PAD, D)
    # TODO(synk): SIE camera/view embeddings omitted (SIE_CAMERA/SIE_VIEW off -> zero term)
    for blk in params["blocks"]:
        xslab = transformer_block(xslab, blk, B, n_real)

    # --- final LayerNorm (cls token only) + BN-neck (eval running stats) ---
    cls_rows = xslab.reshape(B, N_PAD, D)[:, 0, :]                # (B, D)
    feat = ln_bn_neck(cls_rows, params["norm_g"], params["norm_b"],
                      params["bottleneck"])
    # eval mode, neck_feat == 'after' -> return feat (classifier unused in eval)
    return feat


# ------------------------------ parameter init ----------------------------------

def init_params(key, num_tokens):
    keys = iter(jax.random.split(key, 64))
    nk = lambda: next(keys)
    p = {}
    # conv stem (kaiming fan_in, bias-free, BN weight=1 bias=0, running stats 0/1)
    p["conv1_w"] = jax.random.normal(nk(), (STEM_CH, 3, 3, 3), jnp.float32) * jnp.sqrt(2.0 / (3 * 3 * 3))
    p["bn1"] = dict(gamma=jnp.ones(STEM_CH), beta=jnp.zeros(STEM_CH),
                    mean=jnp.zeros(STEM_CH), var=jnp.ones(STEM_CH))
    p["conv2_w"] = jax.random.normal(nk(), (DIM, STEM_CH, 3, 3), jnp.float32) * jnp.sqrt(2.0 / (STEM_CH * 3 * 3))
    p["bn2"] = dict(gamma=jnp.ones(DIM), beta=jnp.zeros(DIM),
                    mean=jnp.zeros(DIM), var=jnp.ones(DIM))
    # transformer
    p["cls_token"] = jax.random.normal(nk(), (1, 1, DIM), jnp.float32) * 0.02
    p["pos_embed"] = jax.random.normal(nk(), (1, num_tokens, DIM), jnp.float32) * 0.02
    blocks = []
    for _ in range(DEPTH):
        blocks.append(dict(
            ln1_g=jnp.ones(DIM), ln1_b=jnp.zeros(DIM),
            qkv_w=jax.random.normal(nk(), (DIM, 3 * DIM), jnp.float32) * 0.02,
            qkv_b=jnp.zeros(3 * DIM),
            proj_w=jax.random.normal(nk(), (DIM, DIM), jnp.float32) * 0.02,
            proj_b=jnp.zeros(DIM),
            ln2_g=jnp.ones(DIM), ln2_b=jnp.zeros(DIM),
            fc1_w=jax.random.normal(nk(), (DIM, MLP_DIM), jnp.float32) * 0.02,
            fc1_b=jnp.zeros(MLP_DIM),
            fc2_w=jax.random.normal(nk(), (MLP_DIM, DIM), jnp.float32) * 0.02,
            fc2_b=jnp.zeros(DIM),
        ))
    p["blocks"] = blocks
    p["norm_g"] = jnp.ones(DIM)
    p["norm_b"] = jnp.zeros(DIM)
    # BN-neck (weights_init_kaiming: weight=1, bias=0; bias grad frozen)
    p["bottleneck"] = dict(gamma=jnp.ones(DIM), beta=jnp.zeros(DIM),
                           mean=jnp.zeros(DIM), var=jnp.ones(DIM))
    # classifier (weights_init_classifier: normal std=0.001, no bias) - unused in eval
    p["classifier_w"] = jax.random.normal(nk(), (DIM, NUM_CLASSES), jnp.float32) * 0.001
    return p


# ----------------------------------- main ---------------------------------------

if __name__ == "__main__":
    key = jax.random.PRNGKey(0)
    pkey, xkey = jax.random.split(key)

    # PyTorch-style NCHW input
    B, C, H, W = 2, 3, 32, 32
    x = jax.random.normal(xkey, (B, C, H, W), jnp.float32)

    # stem downsamples 32 -> 16 -> 8 ; real tokens = 8*8 + 1 cls = 65 (padded to 128)
    num_tokens = (H // 4) * (W // 4) + 1
    params = init_params(pkey, num_tokens)

    fwd = jax.jit(forward)
    out = fwd(params, x)
    out = jax.block_until_ready(out)
    assert out.shape == (B, DIM) and out.dtype == jnp.float32
    assert bool(jnp.all(jnp.isfinite(out)))
    print("KERNEL_OK")
</pallas_src>

<mosaic_0001>
module attributes {stable_mosaic.version = 11 : i64} {
  func.func @_conv3x3s2_bn_relu_kernel(%arg0: i32, %arg1: memref<1x4x17x17x3xf32, #tpu.memory_space<vmem>>, %arg2: memref<9x3x16xbf16, #tpu.memory_space<vmem>>, %arg3: memref<1x16xf32, #tpu.memory_space<vmem>>, %arg4: memref<1x16xf32, #tpu.memory_space<vmem>>, %arg5: memref<256x16xf32, #tpu.memory_space<vmem>>) attributes {dimension_semantics = [#tpu.dimension_semantics<parallel>], iteration_bounds = array<i64: 2>, scalar_prefetch = 0 : i64, scratch_operands = 0 : i64, tpu.core_type = #tpu.core_type<tc>, window_params = [{transform_indices = @transform_0, window_bounds = array<i64: 1, 4, 17, 17, 3>}, {pipeline_mode = #tpu.pipeline_mode<synchronous>, transform_indices = @transform_1, window_bounds = array<i64: 9, 3, 16>}, {pipeline_mode = #tpu.pipeline_mode<synchronous>, transform_indices = @transform_2, window_bounds = array<i64: 1, 16>}, {pipeline_mode = #tpu.pipeline_mode<synchronous>, transform_indices = @transform_3, window_bounds = array<i64: 1, 16>}, {transform_indices = @transform_4, window_bounds = array<i64: 256, 16>}]} {
    %c0 = arith.constant 0 : index
    %c0_0 = arith.constant 0 : index
    %c0_1 = arith.constant 0 : index
    %c0_2 = arith.constant 0 : index
    %c0_3 = arith.constant 0 : index
    %0 = vector.load %arg1[%c0, %c0_0, %c0_1, %c0_2, %c0_3] : memref<1x4x17x17x3xf32, #tpu.memory_space<vmem>>, vector<1x1x17x17x3xf32>
    %1 = vector.shape_cast %0 : vector<1x1x17x17x3xf32> to vector<17x17x3xf32>
    %c0_4 = arith.constant 0 : index
    %c1 = arith.constant 1 : index
    %c0_5 = arith.constant 0 : index
    %c0_6 = arith.constant 0 : index
    %c0_7 = arith.constant 0 : index
    %2 = vector.load %arg1[%c0_4, %c1, %c0_5, %c0_6, %c0_7] : memref<1x4x17x17x3xf32, #tpu.memory_space<vmem>>, vector<1x1x17x17x3xf32>
    %3 = vector.shape_cast %2 : vector<1x1x17x17x3xf32> to vector<17x17x3xf32>
    %c0_8 = arith.constant 0 : index
    %c2 = arith.constant 2 : index
    %c0_9 = arith.constant 0 : index
    %c0_10 = arith.constant 0 : index
    %c0_11 = arith.constant 0 : index
    %4 = vector.load %arg1[%c0_8, %c2, %c0_9, %c0_10, %c0_11] : memref<1x4x17x17x3xf32, #tpu.memory_space<vmem>>, vector<1x1x17x17x3xf32>
    %5 = vector.shape_cast %4 : vector<1x1x17x17x3xf32> to vector<17x17x3xf32>
    %c0_12 = arith.constant 0 : index
    %c3 = arith.constant 3 : index
    %c0_13 = arith.constant 0 : index
    %c0_14 = arith.constant 0 : index
    %c0_15 = arith.constant 0 : index
    %6 = vector.load %arg1[%c0_12, %c3, %c0_13, %c0_14, %c0_15] : memref<1x4x17x17x3xf32, #tpu.memory_space<vmem>>, vector<1x1x17x17x3xf32>
    %7 = vector.shape_cast %6 : vector<1x1x17x17x3xf32> to vector<17x17x3xf32>
    %cst = arith.constant 0.000000e+00 : f32
    %8 = vector.broadcast %cst : f32 to vector<256x16xf32>
    %9 = vector.extract_strided_slice %1 {offsets = [0, 0, 0], sizes = [16, 16, 3], strides = [1, 1, 1]} : vector<17x17x3xf32> to vector<16x16x3xf32>
    %10 = vector.shape_cast %9 : vector<16x16x3xf32> to vector<256x3xf32>
    %11 = arith.truncf %10 : vector<256x3xf32> to vector<256x3xbf16>
    %c0_16 = arith.constant 0 : index
    %c0_17 = arith.constant 0 : index
    %c0_18 = arith.constant 0 : index
    %12 = vector.load %arg2[%c0_16, %c0_17, %c0_18] : memref<9x3x16xbf16, #tpu.memory_space<vmem>>, vector<1x3x16xbf16>
    %13 = vector.shape_cast %12 : vector<1x3x16xbf16> to vector<3x16xbf16>
    %cst_19 = arith.constant dense<0.000000e+00> : vector<256x16xf32>
    %14 = tpu.matmul %11, %13, %cst_19 {dimension_numbers = #tpu.dot_dimension_numbers<[1], [0], [0], [1], [0, 0, 1, 1], [], []>} : vector<256x3xbf16>, vector<3x16xbf16>, vector<256x16xf32> -> vector<256x16xf32>
    %15 = arith.addf %8, %14 : vector<256x16xf32>
    %16 = vector.extract_strided_slice %3 {offsets = [0, 0, 0], sizes = [16, 16, 3], strides = [1, 1, 1]} : vector<17x17x3xf32> to vector<16x16x3xf32>
    %17 = vector.shape_cast %16 : vector<16x16x3xf32> to vector<256x3xf32>
    %18 = arith.truncf %17 : vector<256x3xf32> to vector<256x3xbf16>
    %c1_20 = arith.constant 1 : index
    %c0_21 = arith.constant 0 : index
    %c0_22 = arith.constant 0 : index
    %19 = vector.load %arg2[%c1_20, %c0_21, %c0_22] : memref<9x3x16xbf16, #tpu.memory_space<vmem>>, vector<1x3x16xbf16>
    %20 = vector.shape_cast %19 : vector<1x3x16xbf16> to vector<3x16xbf16>
    %cst_23 = arith.constant dense<0.000000e+00> : vector<256x16xf32>
    %21 = tpu.matmul %18, %20, %cst_23 {dimension_numbers = #tpu.dot_dimension_numbers<[1], [0], [0], [1], [0, 0, 1, 1], [], []>} : vector<256x3xbf16>, vector<3x16xbf16>, vector<256x16xf32> -> vector<256x16xf32>
    %22 = arith.addf %15, %21 : vector<256x16xf32>
    %23 = vector.extract_strided_slice %1 {offsets = [0, 1, 0], sizes = [16, 16, 3], strides = [1, 1, 1]} : vector<17x17x3xf32> to vector<16x16x3xf32>
    %24 = vector.shape_cast %23 : vector<16x16x3xf32> to vector<256x3xf32>
    %25 = arith.truncf %24 : vector<256x3xf32> to vector<256x3xbf16>
    %c2_24 = arith.constant 2 : index
    %c0_25 = arith.constant 0 : index
    %c0_26 = arith.constant 0 : index
    %26 = vector.load %arg2[%c2_24, %c0_25, %c0_26] : memref<9x3x16xbf16, #tpu.memory_space<vmem>>, vector<1x3x16xbf16>
    %27 = vector.shape_cast %26 : vector<1x3x16xbf16> to vector<3x16xbf16>
    %cst_27 = arith.constant dense<0.000000e+00> : vector<256x16xf32>
    %28 = tpu.matmul %25, %27, %cst_27 {dimension_numbers = #tpu.dot_dimension_numbers<[1], [0], [0], [1], [0, 0, 1, 1], [], []>} : vector<256x3xbf16>, vector<3x16xbf16>, vector<256x16xf32> -> vector<256x16xf32>
    %29 = arith.addf %22, %28 : vector<256x16xf32>
    %30 = vector.extract_strided_slice %5 {offsets = [0, 0, 0], sizes = [16, 16, 3], strides = [1, 1, 1]} : vector<17x17x3xf32> to vector<16x16x3xf32>
    %31 = vector.shape_cast %30 : vector<16x16x3xf32> to vector<256x3xf32>
    %32 = arith.truncf %31 : vector<256x3xf32> to vector<256x3xbf16>
    %c3_28 = arith.constant 3 : index
    %c0_29 = arith.constant 0 : index
    %c0_30 = arith.constant 0 : index
    %33 = vector.load %arg2[%c3_28, %c0_29, %c0_30] : memref<9x3x16xbf16, #tpu.memory_space<vmem>>, vector<1x3x16xbf16>
    %34 = vector.shape_cast %33 : vector<1x3x16xbf16> to vector<3x16xbf16>
    %cst_31 = arith.constant dense<0.000000e+00> : vector<256x16xf32>
    %35 = tpu.matmul %32, %34, %cst_31 {dimension_numbers = #tpu.dot_dimension_numbers<[1], [0], [0], [1], [0, 0, 1, 1], [], []>} : vector<256x3xbf16>, vector<3x16xbf16>, vector<256x16xf32> -> vector<256x16xf32>
    %36 = arith.addf %29, %35 : vector<256x16xf32>
    %37 = vector.extract_strided_slice %7 {offsets = [0, 0, 0], sizes = [16, 16, 3], strides = [1, 1, 1]} : vector<17x17x3xf32> to vector<16x16x3xf32>
    %38 = vector.shape_cast %37 : vector<16x16x3xf32> to vector<256x3xf32>
    %39 = arith.truncf %38 : vector<256x3xf32> to vector<256x3xbf16>
    %c4 = arith.constant 4 : index
    %c0_32 = arith.constant 0 : index
    %c0_33 = arith.constant 0 : index
    %40 = vector.load %arg2[%c4, %c0_32, %c0_33] : memref<9x3x16xbf16, #tpu.memory_space<vmem>>, vector<1x3x16xbf16>
    %41 = vector.shape_cast %40 : vector<1x3x16xbf16> to vector<3x16xbf16>
    %cst_34 = arith.constant dense<0.000000e+00> : vector<256x16xf32>
    %42 = tpu.matmul %39, %41, %cst_34 {dimension_numbers = #tpu.dot_dimension_numbers<[1], [0], [0], [1], [0, 0, 1, 1], [], []>} : vector<256x3xbf16>, vector<3x16xbf16>, vector<256x16xf32> -> vector<256x16xf32>
    %43 = arith.addf %36, %42 : vector<256x16xf32>
    %44 = vector.extract_strided_slice %5 {offsets = [0, 1, 0], sizes = [16, 16, 3], strides = [1, 1, 1]} : vector<17x17x3xf32> to vector<16x16x3xf32>
    %45 = vector.shape_cast %44 : vector<16x16x3xf32> to vector<256x3xf32>
    %46 = arith.truncf %45 : vector<256x3xf32> to vector<256x3xbf16>
    %c5 = arith.constant 5 : index
    %c0_35 = arith.constant 0 : index
    %c0_36 = arith.constant 0 : index
    %47 = vector.load %arg2[%c5, %c0_35, %c0_36] : memref<9x3x16xbf16, #tpu.memory_space<vmem>>, vector<1x3x16xbf16>
    %48 = vector.shape_cast %47 : vector<1x3x16xbf16> to vector<3x16xbf16>
    %cst_37 = arith.constant dense<0.000000e+00> : vector<256x16xf32>
    %49 = tpu.matmul %46, %48, %cst_37 {dimension_numbers = #tpu.dot_dimension_numbers<[1], [0], [0], [1], [0, 0, 1, 1], [], []>} : vector<256x3xbf16>, vector<3x16xbf16>, vector<256x16xf32> -> vector<256x16xf32>
    %50 = arith.addf %43, %49 : vector<256x16xf32>
    %51 = vector.extract_strided_slice %1 {offsets = [1, 0, 0], sizes = [16, 16, 3], strides = [1, 1, 1]} : vector<17x17x3xf32> to vector<16x16x3xf32>
    %52 = vector.shape_cast %51 : vector<16x16x3xf32> to vector<256x3xf32>
    %53 = arith.truncf %52 : vector<256x3xf32> to vector<256x3xbf16>
    %c6 = arith.constant 6 : index
    %c0_38 = arith.constant 0 : index
    %c0_39 = arith.constant 0 : index
    %54 = vector.load %arg2[%c6, %c0_38, %c0_39] : memref<9x3x16xbf16, #tpu.memory_space<vmem>>, vector<1x3x16xbf16>
    %55 = vector.shape_cast %54 : vector<1x3x16xbf16> to vector<3x16xbf16>
    %cst_40 = arith.constant dense<0.000000e+00> : vector<256x16xf32>
    %56 = tpu.matmul %53, %55, %cst_40 {dimension_numbers = #tpu.dot_dimension_numbers<[1], [0], [0], [1], [0, 0, 1, 1], [], []>} : vector<256x3xbf16>, vector<3x16xbf16>, vector<256x16xf32> -> vector<256x16xf32>
    %57 = arith.addf %50, %56 : vector<256x16xf32>
    %58 = vector.extract_strided_slice %3 {offsets = [1, 0, 0], sizes = [16, 16, 3], strides = [1, 1, 1]} : vector<17x17x3xf32> to vector<16x16x3xf32>
    %59 = vector.shape_cast %58 : vector<16x16x3xf32> to vector<256x3xf32>
    %60 = arith.truncf %59 : vector<256x3xf32> to vector<256x3xbf16>
    %c7 = arith.constant 7 : index
    %c0_41 = arith.constant 0 : index
    %c0_42 = arith.constant 0 : index
    %61 = vector.load %arg2[%c7, %c0_41, %c0_42] : memref<9x3x16xbf16, #tpu.memory_space<vmem>>, vector<1x3x16xbf16>
    %62 = vector.shape_cast %61 : vector<1x3x16xbf16> to vector<3x16xbf16>
    %cst_43 = arith.constant dense<0.000000e+00> : vector<256x16xf32>
    %63 = tpu.matmul %60, %62, %cst_43 {dimension_numbers = #tpu.dot_dimension_numbers<[1], [0], [0], [1], [0, 0, 1, 1], [], []>} : vector<256x3xbf16>, vector<3x16xbf16>, vector<256x16xf32> -> vector<256x16xf32>
    %64 = arith.addf %57, %63 : vector<256x16xf32>
    %65 = vector.extract_strided_slice %1 {offsets = [1, 1, 0], sizes = [16, 16, 3], strides = [1, 1, 1]} : vector<17x17x3xf32> to vector<16x16x3xf32>
    %66 = vector.shape_cast %65 : vector<16x16x3xf32> to vector<256x3xf32>
    %67 = arith.truncf %66 : vector<256x3xf32> to vector<256x3xbf16>
    %c8 = arith.constant 8 : index
    %c0_44 = arith.constant 0 : index
    %c0_45 = arith.constant 0 : index
    %68 = vector.load %arg2[%c8, %c0_44, %c0_45] : memref<9x3x16xbf16, #tpu.memory_space<vmem>>, vector<1x3x16xbf16>
    %69 = vector.shape_cast %68 : vector<1x3x16xbf16> to vector<3x16xbf16>
    %cst_46 = arith.constant dense<0.000000e+00> : vector<256x16xf32>
    %70 = tpu.matmul %67, %69, %cst_46 {dimension_numbers = #tpu.dot_dimension_numbers<[1], [0], [0], [1], [0, 0, 1, 1], [], []>} : vector<256x3xbf16>, vector<3x16xbf16>, vector<256x16xf32> -> vector<256x16xf32>
    %71 = arith.addf %64, %70 : vector<256x16xf32>
    %c0_47 = arith.constant 0 : index
    %c0_48 = arith.constant 0 : index
    %72 = vector.load %arg3[%c0_47, %c0_48] : memref<1x16xf32, #tpu.memory_space<vmem>>, vector<1x16xf32>
    %73 = vector.broadcast %72 : vector<1x16xf32> to vector<256x16xf32>
    %74 = arith.mulf %71, %73 : vector<256x16xf32>
    %c0_49 = arith.constant 0 : index
    %c0_50 = arith.constant 0 : index
    %75 = vector.load %arg4[%c0_49, %c0_50] : memref<1x16xf32, #tpu.memory_space<vmem>>, vector<1x16xf32>
    %76 = vector.broadcast %75 : vector<1x16xf32> to vector<256x16xf32>
    %77 = arith.addf %74, %76 : vector<256x16xf32>
    %cst_51 = arith.constant 0.000000e+00 : f32
    %78 = vector.broadcast %cst_51 : f32 to vector<256x16xf32>
    %79 = arith.maximumf %77, %78 : vector<256x16xf32>
    %c0_52 = arith.constant 0 : index
    %c0_53 = arith.constant 0 : index
    %80 = vector.load %arg5[%c0_52, %c0_53] : memref<256x16xf32, #tpu.memory_space<vmem>>, vector<256x16xf32>
    tpu.vector_store %arg5[%c0_52, %c0_53], %79 {strides = array<i32>} : memref<256x16xf32, #tpu.memory_space<vmem>>, vector<256x16xf32>,
    return
  }
  func.func @transform_0(%arg0: i32) -> (i32, i32, i32, i32, i32) {
    %c0_i32 = arith.constant 0 : i32
    %c0_i32_0 = arith.constant 0 : i32
    %c0_i32_1 = arith.constant 0 : i32
    %c0_i32_2 = arith.constant 0 : i32
    %c0_i32_3 = arith.constant 0 : i32
    return %arg0, %c0_i32, %c0_i32_0, %c0_i32_1, %c0_i32_2 : i32, i32, i32, i32, i32
  }
  func.func @transform_1(%arg0: i32) -> (i32, i32, i32) {
    %c0_i32 = arith.constant 0 : i32
    %c0_i32_0 = arith.constant 0 : i32
    %c0_i32_1 = arith.constant 0 : i32
    %c0_i32_2 = arith.constant 0 : i32
    return %c0_i32, %c0_i32_0, %c0_i32_1 : i32, i32, i32
  }
  func.func @transform_2(%arg0: i32) -> (i32, i32) {
    %c0_i32 = arith.constant 0 : i32
    %c0_i32_0 = arith.constant 0 : i32
    %c0_i32_1 = arith.constant 0 : i32
    return %c0_i32, %c0_i32_0 : i32, i32
  }
  func.func @transform_3(%arg0: i32) -> (i32, i32) {
    %c0_i32 = arith.constant 0 : i32
    %c0_i32_0 = arith.constant 0 : i32
    %c0_i32_1 = arith.constant 0 : i32
    return %c0_i32, %c0_i32_0 : i32, i32
  }
  func.func @transform_4(%arg0: i32) -> (i32, i32) {
    %c0_i32 = arith.constant 0 : i32
    %c0_i32_0 = arith.constant 0 : i32
    return %arg0, %c0_i32 : i32, i32
  }
}

module attributes {stable_mosaic.version = 11 : i64} {
  func.func @_conv3x3s2_bn_relu_kernel(%arg0: i32, %arg1: memref<1x4x9x9x16xf32, #tpu.memory_space<vmem>>, %arg2: memref<9x16x32xbf16, #tpu.memory_space<vmem>>, %arg3: memref<1x32xf32, #tpu.memory_space<vmem>>, %arg4: memref<1x32xf32, #tpu.memory_space<vmem>>, %arg5: memref<64x32xf32, #tpu.memory_space<vmem>>) attributes {dimension_semantics = [#tpu.dimension_semantics<parallel>], iteration_bounds = array<i64: 2>, scalar_prefetch = 0 : i64, scratch_operands = 0 : i64, tpu.core_type = #tpu.core_type<tc>, window_params = [{transform_indices = @transform_0, window_bounds = array<i64: 1, 4, 9, 9, 16>}, {pipeline_mode = #tpu.pipeline_mode<synchronous>, transform_indices = @transform_1, window_bounds = array<i64: 9, 16, 32>}, {pipeline_mode = #tpu.pipeline_mode<synchronous>, transform_indices = @transform_2, window_bounds = array<i64: 1, 32>}, {pipeline_mode = #tpu.pipeline_mode<synchronous>, transform_indices = @transform_3, window_bounds = array<i64: 1, 32>}, {transform_indices = @transform_4, window_bounds = array<i64: 64, 32>}]} {
    %c0 = arith.constant 0 : index
    %c0_0 = arith.constant 0 : index
    %c0_1 = arith.constant 0 : index
    %c0_2 = arith.constant 0 : index
    %c0_3 = arith.constant 0 : index
    %0 = vector.load %arg1[%c0, %c0_0, %c0_1, %c0_2, %c0_3] : memref<1x4x9x9x16xf32, #tpu.memory_space<vmem>>, vector<1x1x9x9x16xf32>
    %1 = vector.shape_cast %0 : vector<1x1x9x9x16xf32> to vector<9x9x16xf32>
    %c0_4 = arith.constant 0 : index
    %c1 = arith.constant 1 : index
    %c0_5 = arith.constant 0 : index
    %c0_6 = arith.constant 0 : index
    %c0_7 = arith.constant 0 : index
    %2 = vector.load %arg1[%c0_4, %c1, %c0_5, %c0_6, %c0_7] : memref<1x4x9x9x16xf32, #tpu.memory_space<vmem>>, vector<1x1x9x9x16xf32>
    %3 = vector.shape_cast %2 : vector<1x1x9x9x16xf32> to vector<9x9x16xf32>
    %c0_8 = arith.constant 0 : index
    %c2 = arith.constant 2 : index
    %c0_9 = arith.constant 0 : index
    %c0_10 = arith.constant 0 : index
    %c0_11 = arith.constant 0 : index
    %4 = vector.load %arg1[%c0_8, %c2, %c0_9, %c0_10, %c0_11] : memref<1x4x9x9x16xf32, #tpu.memory_space<vmem>>, vector<1x1x9x9x16xf32>
    %5 = vector.shape_cast %4 : vector<1x1x9x9x16xf32> to vector<9x9x16xf32>
    %c0_12 = arith.constant 0 : index
    %c3 = arith.constant 3 : index
    %c0_13 = arith.constant 0 : index
    %c0_14 = arith.constant 0 : index
    %c0_15 = arith.constant 0 : index
    %6 = vector.load %arg1[%c0_12, %c3, %c0_13, %c0_14, %c0_15] : memref<1x4x9x9x16xf32, #tpu.memory_space<vmem>>, vector<1x1x9x9x16xf32>
    %7 = vector.shape_cast %6 : vector<1x1x9x9x16xf32> to vector<9x9x16xf32>
    %cst = arith.constant 0.000000e+00 : f32
    %8 = vector.broadcast %cst : f32 to vector<64x32xf32>
    %9 = vector.extract_strided_slice %1 {offsets = [0, 0, 0], sizes = [8, 8, 16], strides = [1, 1, 1]} : vector<9x9x16xf32> to vector<8x8x16xf32>
    %10 = vector.shape_cast %9 : vector<8x8x16xf32> to vector<64x16xf32>
    %11 = arith.truncf %10 : vector<64x16xf32> to vector<64x16xbf16>
    %c0_16 = arith.constant 0 : index
    %c0_17 = arith.constant 0 : index
    %c0_18 = arith.constant 0 : index
    %12 = vector.load %arg2[%c0_16, %c0_17, %c0_18] : memref<9x16x32xbf16, #tpu.memory_space<vmem>>, vector<1x16x32xbf16>
    %13 = vector.shape_cast %12 : vector<1x16x32xbf16> to vector<16x32xbf16>
    %cst_19 = arith.constant dense<0.000000e+00> : vector<64x32xf32>
    %14 = tpu.matmul %11, %13, %cst_19 {dimension_numbers = #tpu.dot_dimension_numbers<[1], [0], [0], [1], [0, 0, 1, 1], [], []>} : vector<64x16xbf16>, vector<16x32xbf16>, vector<64x32xf32> -> vector<64x32xf32>
    %15 = arith.addf %8, %14 : vector<64x32xf32>
    %16 = vector.extract_strided_slice %3 {offsets = [0, 0, 0], sizes = [8, 8, 16], strides = [1, 1, 1]} : vector<9x9x16xf32> to vector<8x8x16xf32>
    %17 = vector.shape_cast %16 : vector<8x8x16xf32> to vector<64x16xf32>
    %18 = arith.truncf %17 : vector<64x16xf32> to vector<64x16xbf16>
    %c1_20 = arith.constant 1 : index
    %c0_21 = arith.constant 0 : index
    %c0_22 = arith.constant 0 : index
    %19 = vector.load %arg2[%c1_20, %c0_21, %c0_22] : memref<9x16x32xbf16, #tpu.memory_space<vmem>>, vector<1x16x32xbf16>
    %20 = vector.shape_cast %19 : vector<1x16x32xbf16> to vector<16x32xbf16>
    %cst_23 = arith.constant dense<0.000000e+00> : vector<64x32xf32>
    %21 = tpu.matmul %18, %20, %cst_23 {dimension_numbers = #tpu.dot_dimension_numbers<[1], [0], [0], [1], [0, 0, 1, 1], [], []>} : vector<64x16xbf16>, vector<16x32xbf16>, vector<64x32xf32> -> vector<64x32xf32>
    %22 = arith.addf %15, %21 : vector<64x32xf32>
    %23 = vector.extract_strided_slice %1 {offsets = [0, 1, 0], sizes = [8, 8, 16], strides = [1, 1, 1]} : vector<9x9x16xf32> to vector<8x8x16xf32>
    %24 = vector.shape_cast %23 : vector<8x8x16xf32> to vector<64x16xf32>
    %25 = arith.truncf %24 : vector<64x16xf32> to vector<64x16xbf16>
    %c2_24 = arith.constant 2 : index
    %c0_25 = arith.constant 0 : index
    %c0_26 = arith.constant 0 : index
    %26 = vector.load %arg2[%c2_24, %c0_25, %c0_26] : memref<9x16x32xbf16, #tpu.memory_space<vmem>>, vector<1x16x32xbf16>
    %27 = vector.shape_cast %26 : vector<1x16x32xbf16> to vector<16x32xbf16>
    %cst_27 = arith.constant dense<0.000000e+00> : vector<64x32xf32>
    %28 = tpu.matmul %25, %27, %cst_27 {dimension_numbers = #tpu.dot_dimension_numbers<[1], [0], [0], [1], [0, 0, 1, 1], [], []>} : vector<64x16xbf16>, vector<16x32xbf16>, vector<64x32xf32> -> vector<64x32xf32>
    %29 = arith.addf %22, %28 : vector<64x32xf32>
    %30 = vector.extract_strided_slice %5 {offsets = [0, 0, 0], sizes = [8, 8, 16], strides = [1, 1, 1]} : vector<9x9x16xf32> to vector<8x8x16xf32>
    %31 = vector.shape_cast %30 : vector<8x8x16xf32> to vector<64x16xf32>
    %32 = arith.truncf %31 : vector<64x16xf32> to vector<64x16xbf16>
    %c3_28 = arith.constant 3 : index
    %c0_29 = arith.constant 0 : index
    %c0_30 = arith.constant 0 : index
    %33 = vector.load %arg2[%c3_28, %c0_29, %c0_30] : memref<9x16x32xbf16, #tpu.memory_space<vmem>>, vector<1x16x32xbf16>
    %34 = vector.shape_cast %33 : vector<1x16x32xbf16> to vector<16x32xbf16>
    %cst_31 = arith.constant dense<0.000000e+00> : vector<64x32xf32>
    %35 = tpu.matmul %32, %34, %cst_31 {dimension_numbers = #tpu.dot_dimension_numbers<[1], [0], [0], [1], [0, 0, 1, 1], [], []>} : vector<64x16xbf16>, vector<16x32xbf16>, vector<64x32xf32> -> vector<64x32xf32>
    %36 = arith.addf %29, %35 : vector<64x32xf32>
    %37 = vector.extract_strided_slice %7 {offsets = [0, 0, 0], sizes = [8, 8, 16], strides = [1, 1, 1]} : vector<9x9x16xf32> to vector<8x8x16xf32>
    %38 = vector.shape_cast %37 : vector<8x8x16xf32> to vector<64x16xf32>
    %39 = arith.truncf %38 : vector<64x16xf32> to vector<64x16xbf16>
    %c4 = arith.constant 4 : index
    %c0_32 = arith.constant 0 : index
    %c0_33 = arith.constant 0 : index
    %40 = vector.load %arg2[%c4, %c0_32, %c0_33] : memref<9x16x32xbf16, #tpu.memory_space<vmem>>, vector<1x16x32xbf16>
    %41 = vector.shape_cast %40 : vector<1x16x32xbf16> to vector<16x32xbf16>
    %cst_34 = arith.constant dense<0.000000e+00> : vector<64x32xf32>
    %42 = tpu.matmul %39, %41, %cst_34 {dimension_numbers = #tpu.dot_dimension_numbers<[1], [0], [0], [1], [0, 0, 1, 1], [], []>} : vector<64x16xbf16>, vector<16x32xbf16>, vector<64x32xf32> -> vector<64x32xf32>
    %43 = arith.addf %36, %42 : vector<64x32xf32>
    %44 = vector.extract_strided_slice %5 {offsets = [0, 1, 0], sizes = [8, 8, 16], strides = [1, 1, 1]} : vector<9x9x16xf32> to vector<8x8x16xf32>
    %45 = vector.shape_cast %44 : vector<8x8x16xf32> to vector<64x16xf32>
    %46 = arith.truncf %45 : vector<64x16xf32> to vector<64x16xbf16>
    %c5 = arith.constant 5 : index
    %c0_35 = arith.constant 0 : index
    %c0_36 = arith.constant 0 : index
    %47 = vector.load %arg2[%c5, %c0_35, %c0_36] : memref<9x16x32xbf16, #tpu.memory_space<vmem>>, vector<1x16x32xbf16>
    %48 = vector.shape_cast %47 : vector<1x16x32xbf16> to vector<16x32xbf16>
    %cst_37 = arith.constant dense<0.000000e+00> : vector<64x32xf32>
    %49 = tpu.matmul %46, %48, %cst_37 {dimension_numbers = #tpu.dot_dimension_numbers<[1], [0], [0], [1], [0, 0, 1, 1], [], []>} : vector<64x16xbf16>, vector<16x32xbf16>, vector<64x32xf32> -> vector<64x32xf32>
    %50 = arith.addf %43, %49 : vector<64x32xf32>
    %51 = vector.extract_strided_slice %1 {offsets = [1, 0, 0], sizes = [8, 8, 16], strides = [1, 1, 1]} : vector<9x9x16xf32> to vector<8x8x16xf32>
    %52 = vector.shape_cast %51 : vector<8x8x16xf32> to vector<64x16xf32>
    %53 = arith.truncf %52 : vector<64x16xf32> to vector<64x16xbf16>
    %c6 = arith.constant 6 : index
    %c0_38 = arith.constant 0 : index
    %c0_39 = arith.constant 0 : index
    %54 = vector.load %arg2[%c6, %c0_38, %c0_39] : memref<9x16x32xbf16, #tpu.memory_space<vmem>>, vector<1x16x32xbf16>
    %55 = vector.shape_cast %54 : vector<1x16x32xbf16> to vector<16x32xbf16>
    %cst_40 = arith.constant dense<0.000000e+00> : vector<64x32xf32>
    %56 = tpu.matmul %53, %55, %cst_40 {dimension_numbers = #tpu.dot_dimension_numbers<[1], [0], [0], [1], [0, 0, 1, 1], [], []>} : vector<64x16xbf16>, vector<16x32xbf16>, vector<64x32xf32> -> vector<64x32xf32>
    %57 = arith.addf %50, %56 : vector<64x32xf32>
    %58 = vector.extract_strided_slice %3 {offsets = [1, 0, 0], sizes = [8, 8, 16], strides = [1, 1, 1]} : vector<9x9x16xf32> to vector<8x8x16xf32>
    %59 = vector.shape_cast %58 : vector<8x8x16xf32> to vector<64x16xf32>
    %60 = arith.truncf %59 : vector<64x16xf32> to vector<64x16xbf16>
    %c7 = arith.constant 7 : index
    %c0_41 = arith.constant 0 : index
    %c0_42 = arith.constant 0 : index
    %61 = vector.load %arg2[%c7, %c0_41, %c0_42] : memref<9x16x32xbf16, #tpu.memory_space<vmem>>, vector<1x16x32xbf16>
    %62 = vector.shape_cast %61 : vector<1x16x32xbf16> to vector<16x32xbf16>
    %cst_43 = arith.constant dense<0.000000e+00> : vector<64x32xf32>
    %63 = tpu.matmul %60, %62, %cst_43 {dimension_numbers = #tpu.dot_dimension_numbers<[1], [0], [0], [1], [0, 0, 1, 1], [], []>} : vector<64x16xbf16>, vector<16x32xbf16>, vector<64x32xf32> -> vector<64x32xf32>
    %64 = arith.addf %57, %63 : vector<64x32xf32>
    %65 = vector.extract_strided_slice %1 {offsets = [1, 1, 0], sizes = [8, 8, 16], strides = [1, 1, 1]} : vector<9x9x16xf32> to vector<8x8x16xf32>
    %66 = vector.shape_cast %65 : vector<8x8x16xf32> to vector<64x16xf32>
    %67 = arith.truncf %66 : vector<64x16xf32> to vector<64x16xbf16>
    %c8 = arith.constant 8 : index
    %c0_44 = arith.constant 0 : index
    %c0_45 = arith.constant 0 : index
    %68 = vector.load %arg2[%c8, %c0_44, %c0_45] : memref<9x16x32xbf16, #tpu.memory_space<vmem>>, vector<1x16x32xbf16>
    %69 = vector.shape_cast %68 : vector<1x16x32xbf16> to vector<16x32xbf16>
    %cst_46 = arith.constant dense<0.000000e+00> : vector<64x32xf32>
    %70 = tpu.matmul %67, %69, %cst_46 {dimension_numbers = #tpu.dot_dimension_numbers<[1], [0], [0], [1], [0, 0, 1, 1], [], []>} : vector<64x16xbf16>, vector<16x32xbf16>, vector<64x32xf32> -> vector<64x32xf32>
    %71 = arith.addf %64, %70 : vector<64x32xf32>
    %c0_47 = arith.constant 0 : index
    %c0_48 = arith.constant 0 : index
    %72 = vector.load %arg3[%c0_47, %c0_48] : memref<1x32xf32, #tpu.memory_space<vmem>>, vector<1x32xf32>
    %73 = vector.broadcast %72 : vector<1x32xf32> to vector<64x32xf32>
    %74 = arith.mulf %71, %73 : vector<64x32xf32>
    %c0_49 = arith.constant 0 : index
    %c0_50 = arith.constant 0 : index
    %75 = vector.load %arg4[%c0_49, %c0_50] : memref<1x32xf32, #tpu.memory_space<vmem>>, vector<1x32xf32>
    %76 = vector.broadcast %75 : vector<1x32xf32> to vector<64x32xf32>
    %77 = arith.addf %74, %76 : vector<64x32xf32>
    %cst_51 = arith.constant 0.000000e+00 : f32
    %78 = vector.broadcast %cst_51 : f32 to vector<64x32xf32>
    %79 = arith.maximumf %77, %78 : vector<64x32xf32>
    %c0_52 = arith.constant 0 : index
    %c0_53 = arith.constant 0 : index
    %80 = vector.load %arg5[%c0_52, %c0_53] : memref<64x32xf32, #tpu.memory_space<vmem>>, vector<64x32xf32>
    tpu.vector_store %arg5[%c0_52, %c0_53], %79 {strides = array<i32>} : memref<64x32xf32, #tpu.memory_space<vmem>>, vector<64x32xf32>,
    return
  }
  func.func @transform_0(%arg0: i32) -> (i32, i32, i32, i32, i32) {
    %c0_i32 = arith.constant 0 : i32
    %c0_i32_0 = arith.constant 0 : i32
    %c0_i32_1 = arith.constant 0 : i32
    %c0_i32_2 = arith.constant 0 : i32
    %c0_i32_3 = arith.constant 0 : i32
    return %arg0, %c0_i32, %c0_i32_0, %c0_i32_1, %c0_i32_2 : i32, i32, i32, i32, i32
  }
  func.func @transform_1(%arg0: i32) -> (i32, i32, i32) {
    %c0_i32 = arith.constant 0 : i32
    %c0_i32_0 = arith.constant 0 : i32
    %c0_i32_1 = arith.constant 0 : i32
    %c0_i32_2 = arith.constant 0 : i32
    return %c0_i32, %c0_i32_0, %c0_i32_1 : i32, i32, i32
  }
  func.func @transform_2(%arg0: i32) -> (i32, i32) {
    %c0_i32 = arith.constant 0 : i32
    %c0_i32_0 = arith.constant 0 : i32
    %c0_i32_1 = arith.constant 0 : i32
    return %c0_i32, %c0_i32_0 : i32, i32
  }
  func.func @transform_3(%arg0: i32) -> (i32, i32) {
    %c0_i32 = arith.constant 0 : i32
    %c0_i32_0 = arith.constant 0 : i32
    %c0_i32_1 = arith.constant 0 : i32
    return %c0_i32, %c0_i32_0 : i32, i32
  }
  func.func @transform_4(%arg0: i32) -> (i32, i32) {
    %c0_i32 = arith.constant 0 : i32
    %c0_i32_0 = arith.constant 0 : i32
    return %arg0, %c0_i32 : i32, i32
  }
}

module attributes {stable_mosaic.version = 11 : i64} {
  func.func @_ln_linear_kernel(%arg0: i32, %arg1: memref<128x32xf32, #tpu.memory_space<vmem>>, %arg2: memref<1x32xf32, #tpu.memory_space<vmem>>, %arg3: memref<1x32xf32, #tpu.memory_space<vmem>>, %arg4: memref<32x96xbf16, #tpu.memory_space<vmem>>, %arg5: memref<1x96xf32, #tpu.memory_space<vmem>>, %arg6: memref<128x96xbf16, #tpu.memory_space<vmem>>) attributes {dimension_semantics = [#tpu.dimension_semantics<parallel>], iteration_bounds = array<i64: 2>, scalar_prefetch = 0 : i64, scratch_operands = 0 : i64, tpu.core_type = #tpu.core_type<tc>, window_params = [{transform_indices = @transform_0, window_bounds = array<i64: 128, 32>}, {pipeline_mode = #tpu.pipeline_mode<synchronous>, transform_indices = @transform_1, window_bounds = array<i64: 1, 32>}, {pipeline_mode = #tpu.pipeline_mode<synchronous>, transform_indices = @transform_2, window_bounds = array<i64: 1, 32>}, {pipeline_mode = #tpu.pipeline_mode<synchronous>, transform_indices = @transform_3, window_bounds = array<i64: 32, 96>}, {pipeline_mode = #tpu.pipeline_mode<synchronous>, transform_indices = @transform_4, window_bounds = array<i64: 1, 96>}, {transform_indices = @transform_5, window_bounds = array<i64: 128, 96>}]} {
    %c0 = arith.constant 0 : index
    %c0_0 = arith.constant 0 : index
    %0 = vector.load %arg1[%c0, %c0_0] : memref<128x32xf32, #tpu.memory_space<vmem>>, vector<128x32xf32>
    %cst = arith.constant dense<0.000000e+00> : vector<128xf32>
    %1 = vector.multi_reduction <add>, %0, %cst [1] : vector<128x32xf32> to vector<128xf32>
    %2 = vector.shape_cast %1 : vector<128xf32> to vector<128x1xf32>
    %cst_1 = arith.constant 3.200000e+01 : f32
    %3 = vector.broadcast %cst_1 : f32 to vector<128x1xf32>
    %4 = arith.divf %2, %3 : vector<128x1xf32>
    %5 = vector.broadcast %4 : vector<128x1xf32> to vector<128x32xf32>
    %6 = arith.subf %0, %5 : vector<128x32xf32>
    %7 = arith.mulf %6, %6 : vector<128x32xf32>
    %cst_2 = arith.constant dense<0.000000e+00> : vector<128xf32>
    %8 = vector.multi_reduction <add>, %7, %cst_2 [1] : vector<128x32xf32> to vector<128xf32>
    %9 = vector.shape_cast %8 : vector<128xf32> to vector<128x1xf32>
    %cst_3 = arith.constant 3.200000e+01 : f32
    %10 = vector.broadcast %cst_3 : f32 to vector<128x1xf32>
    %11 = arith.divf %9, %10 : vector<128x1xf32>
    %12 = vector.broadcast %4 : vector<128x1xf32> to vector<128x32xf32>
    %13 = arith.subf %0, %12 : vector<128x32xf32>
    %cst_4 = arith.constant 9.99999997E-7 : f32
    %14 = vector.broadcast %cst_4 : f32 to vector<128x1xf32>
    %15 = arith.addf %11, %14 : vector<128x1xf32>
    %16 = math.rsqrt %15 : vector<128x1xf32>
    %17 = vector.broadcast %16 : vector<128x1xf32> to vector<128x32xf32>
    %18 = arith.mulf %13, %17 : vector<128x32xf32>
    %c0_5 = arith.constant 0 : index
    %c0_6 = arith.constant 0 : index
    %19 = vector.load %arg2[%c0_5, %c0_6] : memref<1x32xf32, #tpu.memory_space<vmem>>, vector<1x32xf32>
    %20 = vector.broadcast %19 : vector<1x32xf32> to vector<128x32xf32>
    %21 = arith.mulf %18, %20 : vector<128x32xf32>
    %c0_7 = arith.constant 0 : index
    %c0_8 = arith.constant 0 : index
    %22 = vector.load %arg3[%c0_7, %c0_8] : memref<1x32xf32, #tpu.memory_space<vmem>>, vector<1x32xf32>
    %23 = vector.broadcast %22 : vector<1x32xf32> to vector<128x32xf32>
    %24 = arith.addf %21, %23 : vector<128x32xf32>
    %25 = arith.truncf %24 : vector<128x32xf32> to vector<128x32xbf16>
    %c0_9 = arith.constant 0 : index
    %c0_10 = arith.constant 0 : index
    %26 = vector.load %arg4[%c0_9, %c0_10] : memref<32x96xbf16, #tpu.memory_space<vmem>>, vector<32x96xbf16>
    %cst_11 = arith.constant dense<0.000000e+00> : vector<128x96xf32>
    %27 = tpu.matmul %25, %26, %cst_11 {dimension_numbers = #tpu.dot_dimension_numbers<[1], [0], [0], [1], [0, 0, 1, 1], [], []>} : vector<128x32xbf16>, vector<32x96xbf16>, vector<128x96xf32> -> vector<128x96xf32>
    %c0_12 = arith.constant 0 : index
    %c0_13 = arith.constant 0 : index
    %28 = vector.load %arg5[%c0_12, %c0_13] : memref<1x96xf32, #tpu.memory_space<vmem>>, vector<1x96xf32>
    %29 = vector.broadcast %28 : vector<1x96xf32> to vector<128x96xf32>
    %30 = arith.addf %27, %29 : vector<128x96xf32>
    %31 = arith.truncf %30 : vector<128x96xf32> to vector<128x96xbf16>
    %c0_14 = arith.constant 0 : index
    %c0_15 = arith.constant 0 : index
    %32 = vector.load %arg6[%c0_14, %c0_15] : memref<128x96xbf16, #tpu.memory_space<vmem>>, vector<128x96xbf16>
    tpu.vector_store %arg6[%c0_14, %c0_15], %31 {strides = array<i32>} : memref<128x96xbf16, #tpu.memory_space<vmem>>, vector<128x96xbf16>,
    return
  }
  func.func @transform_0(%arg0: i32) -> (i32, i32) {
    %c0_i32 = arith.constant 0 : i32
    %c0_i32_0 = arith.constant 0 : i32
    return %arg0, %c0_i32 : i32, i32
  }
  func.func @transform_1(%arg0: i32) -> (i32, i32) {
    %c0_i32 = arith.constant 0 : i32
    %c0_i32_0 = arith.constant 0 : i32
    %c0_i32_1 = arith.constant 0 : i32
    return %c0_i32, %c0_i32_0 : i32, i32
  }
  func.func @transform_2(%arg0: i32) -> (i32, i32) {
    %c0_i32 = arith.constant 0 : i32
    %c0_i32_0 = arith.constant 0 : i32
    %c0_i32_1 = arith.constant 0 : i32
    return %c0_i32, %c0_i32_0 : i32, i32
  }
  func.func @transform_3(%arg0: i32) -> (i32, i32) {
    %c0_i32 = arith.constant 0 : i32
    %c0_i32_0 = arith.constant 0 : i32
    %c0_i32_1 = arith.constant 0 : i32
    return %c0_i32, %c0_i32_0 : i32, i32
  }
  func.func @transform_4(%arg0: i32) -> (i32, i32) {
    %c0_i32 = arith.constant 0 : i32
    %c0_i32_0 = arith.constant 0 : i32
    %c0_i32_1 = arith.constant 0 : i32
    return %c0_i32, %c0_i32_0 : i32, i32
  }
  func.func @transform_5(%arg0: i32) -> (i32, i32) {
    %c0_i32 = arith.constant 0 : i32
    %c0_i32_0 = arith.constant 0 : i32
    return %arg0, %c0_i32 : i32, i32
  }
}

module attributes {stable_mosaic.version = 11 : i64} {
  func.func @_attn_proj_res_kernel(%arg0: i32, %arg1: memref<128x96xbf16, #tpu.memory_space<vmem>>, %arg2: memref<128x32xf32, #tpu.memory_space<vmem>>, %arg3: memref<32x32xbf16, #tpu.memory_space<vmem>>, %arg4: memref<1x32xf32, #tpu.memory_space<vmem>>, %arg5: memref<128x32xf32, #tpu.memory_space<vmem>>) attributes {dimension_semantics = [#tpu.dimension_semantics<parallel>], iteration_bounds = array<i64: 2>, scalar_prefetch = 0 : i64, scratch_operands = 0 : i64, tpu.core_type = #tpu.core_type<tc>, window_params = [{transform_indices = @transform_0, window_bounds = array<i64: 128, 96>}, {transform_indices = @transform_1, window_bounds = array<i64: 128, 32>}, {pipeline_mode = #tpu.pipeline_mode<synchronous>, transform_indices = @transform_2, window_bounds = array<i64: 32, 32>}, {pipeline_mode = #tpu.pipeline_mode<synchronous>, transform_indices = @transform_3, window_bounds = array<i64: 1, 32>}, {transform_indices = @transform_4, window_bounds = array<i64: 128, 32>}]} {
    %c0 = arith.constant 0 : index
    %c0_0 = arith.constant 0 : index
    %0 = vector.load %arg2[%c0, %c0_0] : memref<128x32xf32, #tpu.memory_space<vmem>>, vector<128x32xf32>
    %1 = tpu.iota {dimensions = array<i32: 1>} : vector<128x128xi32>
    %c65_i32 = arith.constant 65 : i32
    %2 = vector.broadcast %c65_i32 : i32 to vector<128x128xi32>
    %3 = arith.cmpi slt, %1, %2 : vector<128x128xi32>
    %c0_1 = arith.constant 0 : index
    %c0_2 = arith.constant 0 : index
    %4 = vector.load %arg4[%c0_1, %c0_2] : memref<1x32xf32, #tpu.memory_space<vmem>>, vector<1x32xf32>
    %5 = vector.broadcast %4 : vector<1x32xf32> to vector<128x32xf32>
    %6 = arith.addf %0, %5 : vector<128x32xf32>
    %c0_3 = arith.constant 0 : index
    %c0_4 = arith.constant 0 : index
    %7 = vector.load %arg1[%c0_3, %c0_4] : memref<128x96xbf16, #tpu.memory_space<vmem>>, vector<128x8xbf16>
    %c0_5 = arith.constant 0 : index
    %c32 = arith.constant 32 : index
    %8 = vector.load %arg1[%c0_5, %c32] : memref<128x96xbf16, #tpu.memory_space<vmem>>, vector<128x8xbf16>
    %c0_6 = arith.constant 0 : index
    %c64 = arith.constant 64 : index
    %9 = vector.load %arg1[%c0_6, %c64] : memref<128x96xbf16, #tpu.memory_space<vmem>>, vector<128x8xbf16>
    %cst = arith.constant dense<0.000000e+00> : vector<128x128xf32>
    %10 = tpu.matmul %7, %8, %cst {dimension_numbers = #tpu.dot_dimension_numbers<[1], [1], [0], [0], [0, 0, 1, 0], [], []>} : vector<128x8xbf16>, vector<128x8xbf16>, vector<128x128xf32> -> vector<128x128xf32>
    %cst_7 = arith.constant 0.353553385 : f32
    %11 = vector.broadcast %cst_7 : f32 to vector<128x128xf32>
    %12 = arith.mulf %10, %11 : vector<128x128xf32>
    %cst_8 = arith.constant -1.000000e+30 : f32
    %13 = vector.broadcast %cst_8 : f32 to vector<128x128xf32>
    %14 = arith.select %3, %12, %13 : vector<128x128xi1>, vector<128x128xf32>
    %cst_9 = arith.constant dense<0xFF800000> : vector<128xf32>
    %15 = vector.multi_reduction <maximumf>, %14, %cst_9 [1] : vector<128x128xf32> to vector<128xf32>
    %16 = vector.shape_cast %15 : vector<128xf32> to vector<128x1xf32>
    %17 = vector.broadcast %16 : vector<128x1xf32> to vector<128x128xf32>
    %18 = arith.subf %14, %17 : vector<128x128xf32>
    %19 = math.exp %18 : vector<128x128xf32>
    %cst_10 = arith.constant dense<0.000000e+00> : vector<128xf32>
    %20 = vector.multi_reduction <add>, %19, %cst_10 [1] : vector<128x128xf32> to vector<128xf32>
    %21 = vector.shape_cast %20 : vector<128xf32> to vector<128x1xf32>
    %22 = tpu.reciprocal %21 {approx = true} : vector<128x1xf32> -> vector<128x1xf32>
    %23 = vector.broadcast %22 : vector<128x1xf32> to vector<128x128xf32>
    %24 = arith.mulf %19, %23 : vector<128x128xf32>
    %25 = arith.truncf %24 : vector<128x128xf32> to vector<128x128xbf16>
    %cst_11 = arith.constant dense<0.000000e+00> : vector<128x8xf32>
    %26 = tpu.matmul %25, %9, %cst_11 {dimension_numbers = #tpu.dot_dimension_numbers<[1], [0], [0], [1], [0, 0, 1, 1], [], []>} : vector<128x128xbf16>, vector<128x8xbf16>, vector<128x8xf32> -> vector<128x8xf32>
    %27 = arith.truncf %26 : vector<128x8xf32> to vector<128x8xbf16>
    %c0_12 = arith.constant 0 : index
    %c0_13 = arith.constant 0 : index
    %28 = vector.load %arg3[%c0_12, %c0_13] : memref<32x32xbf16, #tpu.memory_space<vmem>>, vector<8x32xbf16>
    %cst_14 = arith.constant dense<0.000000e+00> : vector<128x32xf32>
    %29 = tpu.matmul %27, %28, %cst_14 {dimension_numbers = #tpu.dot_dimension_numbers<[1], [0], [0], [1], [0, 0, 1, 1], [], []>} : vector<128x8xbf16>, vector<8x32xbf16>, vector<128x32xf32> -> vector<128x32xf32>
    %30 = arith.addf %6, %29 : vector<128x32xf32>
    %c0_15 = arith.constant 0 : index
    %c8 = arith.constant 8 : index
    %31 = vector.load %arg1[%c0_15, %c8] : memref<128x96xbf16, #tpu.memory_space<vmem>>, vector<128x8xbf16>
    %c0_16 = arith.constant 0 : index
    %c40 = arith.constant 40 : index
    %32 = vector.load %arg1[%c0_16, %c40] : memref<128x96xbf16, #tpu.memory_space<vmem>>, vector<128x8xbf16>
    %c0_17 = arith.constant 0 : index
    %c72 = arith.constant 72 : index
    %33 = vector.load %arg1[%c0_17, %c72] : memref<128x96xbf16, #tpu.memory_space<vmem>>, vector<128x8xbf16>
    %cst_18 = arith.constant dense<0.000000e+00> : vector<128x128xf32>
    %34 = tpu.matmul %31, %32, %cst_18 {dimension_numbers = #tpu.dot_dimension_numbers<[1], [1], [0], [0], [0, 0, 1, 0], [], []>} : vector<128x8xbf16>, vector<128x8xbf16>, vector<128x128xf32> -> vector<128x128xf32>
    %cst_19 = arith.constant 0.353553385 : f32
    %35 = vector.broadcast %cst_19 : f32 to vector<128x128xf32>
    %36 = arith.mulf %34, %35 : vector<128x128xf32>
    %cst_20 = arith.constant -1.000000e+30 : f32
    %37 = vector.broadcast %cst_20 : f32 to vector<128x128xf32>
    %38 = arith.select %3, %36, %37 : vector<128x128xi1>, vector<128x128xf32>
    %cst_21 = arith.constant dense<0xFF800000> : vector<128xf32>
    %39 = vector.multi_reduction <maximumf>, %38, %cst_21 [1] : vector<128x128xf32> to vector<128xf32>
    %40 = vector.shape_cast %39 : vector<128xf32> to vector<128x1xf32>
    %41 = vector.broadcast %40 : vector<128x1xf32> to vector<128x128xf32>
    %42 = arith.subf %38, %41 : vector<128x128xf32>
    %43 = math.exp %42 : vector<128x128xf32>
    %cst_22 = arith.constant dense<0.000000e+00> : vector<128xf32>
    %44 = vector.multi_reduction <add>, %43, %cst_22 [1] : vector<128x128xf32> to vector<128xf32>
    %45 = vector.shape_cast %44 : vector<128xf32> to vector<128x1xf32>
    %46 = tpu.reciprocal %45 {approx = true} : vector<128x1xf32> -> vector<128x1xf32>
    %47 = vector.broadcast %46 : vector<128x1xf32> to vector<128x128xf32>
    %48 = arith.mulf %43, %47 : vector<128x128xf32>
    %49 = arith.truncf %48 : vector<128x128xf32> to vector<128x128xbf16>
    %cst_23 = arith.constant dense<0.000000e+00> : vector<128x8xf32>
    %50 = tpu.matmul %49, %33, %cst_23 {dimension_numbers = #tpu.dot_dimension_numbers<[1], [0], [0], [1], [0, 0, 1, 1], [], []>} : vector<128x128xbf16>, vector<128x8xbf16>, vector<128x8xf32> -> vector<128x8xf32>
    %51 = arith.truncf %50 : vector<128x8xf32> to vector<128x8xbf16>
    %c8_24 = arith.constant 8 : index
    %c0_25 = arith.constant 0 : index
    %52 = vector.load %arg3[%c8_24, %c0_25] : memref<32x32xbf16, #tpu.memory_space<vmem>>, vector<8x32xbf16>
    %cst_26 = arith.constant dense<0.000000e+00> : vector<128x32xf32>
    %53 = tpu.matmul %51, %52, %cst_26 {dimension_numbers = #tpu.dot_dimension_numbers<[1], [0], [0], [1], [0, 0, 1, 1], [], []>} : vector<128x8xbf16>, vector<8x32xbf16>, vector<128x32xf32> -> vector<128x32xf32>
    %54 = arith.addf %30, %53 : vector<128x32xf32>
    %c0_27 = arith.constant 0 : index
    %c16 = arith.constant 16 : index
    %55 = vector.load %arg1[%c0_27, %c16] : memref<128x96xbf16, #tpu.memory_space<vmem>>, vector<128x8xbf16>
    %c0_28 = arith.constant 0 : index
    %c48 = arith.constant 48 : index
    %56 = vector.load %arg1[%c0_28, %c48] : memref<128x96xbf16, #tpu.memory_space<vmem>>, vector<128x8xbf16>
    %c0_29 = arith.constant 0 : index
    %c80 = arith.constant 80 : index
    %57 = vector.load %arg1[%c0_29, %c80] : memref<128x96xbf16, #tpu.memory_space<vmem>>, vector<128x8xbf16>
    %cst_30 = arith.constant dense<0.000000e+00> : vector<128x128xf32>
    %58 = tpu.matmul %55, %56, %cst_30 {dimension_numbers = #tpu.dot_dimension_numbers<[1], [1], [0], [0], [0, 0, 1, 0], [], []>} : vector<128x8xbf16>, vector<128x8xbf16>, vector<128x128xf32> -> vector<128x128xf32>
    %cst_31 = arith.constant 0.353553385 : f32
    %59 = vector.broadcast %cst_31 : f32 to vector<128x128xf32>
    %60 = arith.mulf %58, %59 : vector<128x128xf32>
    %cst_32 = arith.constant -1.000000e+30 : f32
    %61 = vector.broadcast %cst_32 : f32 to vector<128x128xf32>
    %62 = arith.select %3, %60, %61 : vector<128x128xi1>, vector<128x128xf32>
    %cst_33 = arith.constant dense<0xFF800000> : vector<128xf32>
    %63 = vector.multi_reduction <maximumf>, %62, %cst_33 [1] : vector<128x128xf32> to vector<128xf32>
    %64 = vector.shape_cast %63 : vector<128xf32> to vector<128x1xf32>
    %65 = vector.broadcast %64 : vector<128x1xf32> to vector<128x128xf32>
    %66 = arith.subf %62, %65 : vector<128x128xf32>
    %67 = math.exp %66 : vector<128x128xf32>
    %cst_34 = arith.constant dense<0.000000e+00> : vector<128xf32>
    %68 = vector.multi_reduction <add>, %67, %cst_34 [1] : vector<128x128xf32> to vector<128xf32>
    %69 = vector.shape_cast %68 : vector<128xf32> to vector<128x1xf32>
    %70 = tpu.reciprocal %69 {approx = true} : vector<128x1xf32> -> vector<128x1xf32>
    %71 = vector.broadcast %70 : vector<128x1xf32> to vector<128x128xf32>
    %72 = arith.mulf %67, %71 : vector<128x128xf32>
    %73 = arith.truncf %72 : vector<128x128xf32> to vector<128x128xbf16>
    %cst_35 = arith.constant dense<0.000000e+00> : vector<128x8xf32>
    %74 = tpu.matmul %73, %57, %cst_35 {dimension_numbers = #tpu.dot_dimension_numbers<[1], [0], [0], [1], [0, 0, 1, 1], [], []>} : vector<128x128xbf16>, vector<128x8xbf16>, vector<128x8xf32> -> vector<128x8xf32>
    %75 = arith.truncf %74 : vector<128x8xf32> to vector<128x8xbf16>
    %c16_36 = arith.constant 16 : index
    %c0_37 = arith.constant 0 : index
    %76 = vector.load %arg3[%c16_36, %c0_37] : memref<32x32xbf16, #tpu.memory_space<vmem>>, vector<8x32xbf16>
    %cst_38 = arith.constant dense<0.000000e+00> : vector<128x32xf32>
    %77 = tpu.matmul %75, %76, %cst_38 {dimension_numbers = #tpu.dot_dimension_numbers<[1], [0], [0], [1], [0, 0, 1, 1], [], []>} : vector<128x8xbf16>, vector<8x32xbf16>, vector<128x32xf32> -> vector<128x32xf32>
    %78 = arith.addf %54, %77 : vector<128x32xf32>
    %c0_39 = arith.constant 0 : index
    %c24 = arith.constant 24 : index
    %79 = vector.load %arg1[%c0_39, %c24] : memref<128x96xbf16, #tpu.memory_space<vmem>>, vector<128x8xbf16>
    %c0_40 = arith.constant 0 : index
    %c56 = arith.constant 56 : index
    %80 = vector.load %arg1[%c0_40, %c56] : memref<128x96xbf16, #tpu.memory_space<vmem>>, vector<128x8xbf16>
    %c0_41 = arith.constant 0 : index
    %c88 = arith.constant 88 : index
    %81 = vector.load %arg1[%c0_41, %c88] : memref<128x96xbf16, #tpu.memory_space<vmem>>, vector<128x8xbf16>
    %cst_42 = arith.constant dense<0.000000e+00> : vector<128x128xf32>
    %82 = tpu.matmul %79, %80, %cst_42 {dimension_numbers = #tpu.dot_dimension_numbers<[1], [1], [0], [0], [0, 0, 1, 0], [], []>} : vector<128x8xbf16>, vector<128x8xbf16>, vector<128x128xf32> -> vector<128x128xf32>
    %cst_43 = arith.constant 0.353553385 : f32
    %83 = vector.broadcast %cst_43 : f32 to vector<128x128xf32>
    %84 = arith.mulf %82, %83 : vector<128x128xf32>
    %cst_44 = arith.constant -1.000000e+30 : f32
    %85 = vector.broadcast %cst_44 : f32 to vector<128x128xf32>
    %86 = arith.select %3, %84, %85 : vector<128x128xi1>, vector<128x128xf32>
    %cst_45 = arith.constant dense<0xFF800000> : vector<128xf32>
    %87 = vector.multi_reduction <maximumf>, %86, %cst_45 [1] : vector<128x128xf32> to vector<128xf32>
    %88 = vector.shape_cast %87 : vector<128xf32> to vector<128x1xf32>
    %89 = vector.broadcast %88 : vector<128x1xf32> to vector<128x128xf32>
    %90 = arith.subf %86, %89 : vector<128x128xf32>
    %91 = math.exp %90 : vector<128x128xf32>
    %cst_46 = arith.constant dense<0.000000e+00> : vector<128xf32>
    %92 = vector.multi_reduction <add>, %91, %cst_46 [1] : vector<128x128xf32> to vector<128xf32>
    %93 = vector.shape_cast %92 : vector<128xf32> to vector<128x1xf32>
    %94 = tpu.reciprocal %93 {approx = true} : vector<128x1xf32> -> vector<128x1xf32>
    %95 = vector.broadcast %94 : vector<128x1xf32> to vector<128x128xf32>
    %96 = arith.mulf %91, %95 : vector<128x128xf32>
    %97 = arith.truncf %96 : vector<128x128xf32> to vector<128x128xbf16>
    %cst_47 = arith.constant dense<0.000000e+00> : vector<128x8xf32>
    %98 = tpu.matmul %97, %81, %cst_47 {dimension_numbers = #tpu.dot_dimension_numbers<[1], [0], [0], [1], [0, 0, 1, 1], [], []>} : vector<128x128xbf16>, vector<128x8xbf16>, vector<128x8xf32> -> vector<128x8xf32>
    %99 = arith.truncf %98 : vector<128x8xf32> to vector<128x8xbf16>
    %c24_48 = arith.constant 24 : index
    %c0_49 = arith.constant 0 : index
    %100 = vector.load %arg3[%c24_48, %c0_49] : memref<32x32xbf16, #tpu.memory_space<vmem>>, vector<8x32xbf16>
    %cst_50 = arith.constant dense<0.000000e+00> : vector<128x32xf32>
    %101 = tpu.matmul %99, %100, %cst_50 {dimension_numbers = #tpu.dot_dimension_numbers<[1], [0], [0], [1], [0, 0, 1, 1], [], []>} : vector<128x8xbf16>, vector<8x32xbf16>, vector<128x32xf32> -> vector<128x32xf32>
    %102 = arith.addf %78, %101 : vector<128x32xf32>
    %c0_51 = arith.constant 0 : index
    %c0_52 = arith.constant 0 : index
    %103 = vector.load %arg5[%c0_51, %c0_52] : memref<128x32xf32, #tpu.memory_space<vmem>>, vector<128x32xf32>
    tpu.vector_store %arg5[%c0_51, %c0_52], %102 {strides = array<i32>} : memref<128x32xf32, #tpu.memory_space<vmem>>, vector<128x32xf32>,
    return
  }
  func.func @transform_0(%arg0: i32) -> (i32, i32) {
    %c0_i32 = arith.constant 0 : i32
    %c0_i32_0 = arith.constant 0 : i32
    return %arg0, %c0_i32 : i32, i32
  }
  func.func @transform_1(%arg0: i32) -> (i32, i32) {
    %c0_i32 = arith.constant 0 : i32
    %c0_i32_0 = arith.constant 0 : i32
    return %arg0, %c0_i32 : i32, i32
  }
  func.func @transform_2(%arg0: i32) -> (i32, i32) {
    %c0_i32 = arith.constant 0 : i32
    %c0_i32_0 = arith.constant 0 : i32
    %c0_i32_1 = arith.constant 0 : i32
    return %c0_i32, %c0_i32_0 : i32, i32
  }
  func.func @transform_3(%arg0: i32) -> (i32, i32) {
    %c0_i32 = arith.constant 0 : i32
    %c0_i32_0 = arith.constant 0 : i32
    %c0_i32_1 = arith.constant 0 : i32
    return %c0_i32, %c0_i32_0 : i32, i32
  }
  func.func @transform_4(%arg0: i32) -> (i32, i32) {
    %c0_i32 = arith.constant 0 : i32
    %c0_i32_0 = arith.constant 0 : i32
    return %arg0, %c0_i32 : i32, i32
  }
}

module attributes {stable_mosaic.version = 11 : i64} {
  func.func @_ln_mlp_res_kernel(%arg0: i32, %arg1: memref<128x32xf32, #tpu.memory_space<vmem>>, %arg2: memref<1x32xf32, #tpu.memory_space<vmem>>, %arg3: memref<1x32xf32, #tpu.memory_space<vmem>>, %arg4: memref<32x32xbf16, #tpu.memory_space<vmem>>, %arg5: memref<1x32xf32, #tpu.memory_space<vmem>>, %arg6: memref<32x32xbf16, #tpu.memory_space<vmem>>, %arg7: memref<1x32xf32, #tpu.memory_space<vmem>>, %arg8: memref<128x32xf32, #tpu.memory_space<vmem>>) attributes {dimension_semantics = [#tpu.dimension_semantics<parallel>], iteration_bounds = array<i64: 2>, scalar_prefetch = 0 : i64, scratch_operands = 0 : i64, tpu.core_type = #tpu.core_type<tc>, window_params = [{transform_indices = @transform_0, window_bounds = array<i64: 128, 32>}, {pipeline_mode = #tpu.pipeline_mode<synchronous>, transform_indices = @transform_1, window_bounds = array<i64: 1, 32>}, {pipeline_mode = #tpu.pipeline_mode<synchronous>, transform_indices = @transform_2, window_bounds = array<i64: 1, 32>}, {pipeline_mode = #tpu.pipeline_mode<synchronous>, transform_indices = @transform_3, window_bounds = array<i64: 32, 32>}, {pipeline_mode = #tpu.pipeline_mode<synchronous>, transform_indices = @transform_4, window_bounds = array<i64: 1, 32>}, {pipeline_mode = #tpu.pipeline_mode<synchronous>, transform_indices = @transform_5, window_bounds = array<i64: 32, 32>}, {pipeline_mode = #tpu.pipeline_mode<synchronous>, transform_indices = @transform_6, window_bounds = array<i64: 1, 32>}, {transform_indices = @transform_7, window_bounds = array<i64: 128, 32>}]} {
    %c0 = arith.constant 0 : index
    %c0_0 = arith.constant 0 : index
    %0 = vector.load %arg1[%c0, %c0_0] : memref<128x32xf32, #tpu.memory_space<vmem>>, vector<128x32xf32>
    %cst = arith.constant dense<0.000000e+00> : vector<128xf32>
    %1 = vector.multi_reduction <add>, %0, %cst [1] : vector<128x32xf32> to vector<128xf32>
    %2 = vector.shape_cast %1 : vector<128xf32> to vector<128x1xf32>
    %cst_1 = arith.constant 3.200000e+01 : f32
    %3 = vector.broadcast %cst_1 : f32 to vector<128x1xf32>
    %4 = arith.divf %2, %3 : vector<128x1xf32>
    %5 = vector.broadcast %4 : vector<128x1xf32> to vector<128x32xf32>
    %6 = arith.subf %0, %5 : vector<128x32xf32>
    %7 = arith.mulf %6, %6 : vector<128x32xf32>
    %cst_2 = arith.constant dense<0.000000e+00> : vector<128xf32>
    %8 = vector.multi_reduction <add>, %7, %cst_2 [1] : vector<128x32xf32> to vector<128xf32>
    %9 = vector.shape_cast %8 : vector<128xf32> to vector<128x1xf32>
    %cst_3 = arith.constant 3.200000e+01 : f32
    %10 = vector.broadcast %cst_3 : f32 to vector<128x1xf32>
    %11 = arith.divf %9, %10 : vector<128x1xf32>
    %12 = vector.broadcast %4 : vector<128x1xf32> to vector<128x32xf32>
    %13 = arith.subf %0, %12 : vector<128x32xf32>
    %cst_4 = arith.constant 9.99999997E-7 : f32
    %14 = vector.broadcast %cst_4 : f32 to vector<128x1xf32>
    %15 = arith.addf %11, %14 : vector<128x1xf32>
    %16 = math.rsqrt %15 : vector<128x1xf32>
    %17 = vector.broadcast %16 : vector<128x1xf32> to vector<128x32xf32>
    %18 = arith.mulf %13, %17 : vector<128x32xf32>
    %c0_5 = arith.constant 0 : index
    %c0_6 = arith.constant 0 : index
    %19 = vector.load %arg2[%c0_5, %c0_6] : memref<1x32xf32, #tpu.memory_space<vmem>>, vector<1x32xf32>
    %20 = vector.broadcast %19 : vector<1x32xf32> to vector<128x32xf32>
    %21 = arith.mulf %18, %20 : vector<128x32xf32>
    %c0_7 = arith.constant 0 : index
    %c0_8 = arith.constant 0 : index
    %22 = vector.load %arg3[%c0_7, %c0_8] : memref<1x32xf32, #tpu.memory_space<vmem>>, vector<1x32xf32>
    %23 = vector.broadcast %22 : vector<1x32xf32> to vector<128x32xf32>
    %24 = arith.addf %21, %23 : vector<128x32xf32>
    %25 = arith.truncf %24 : vector<128x32xf32> to vector<128x32xbf16>
    %c0_9 = arith.constant 0 : index
    %c0_10 = arith.constant 0 : index
    %26 = vector.load %arg4[%c0_9, %c0_10] : memref<32x32xbf16, #tpu.memory_space<vmem>>, vector<32x32xbf16>
    %cst_11 = arith.constant dense<0.000000e+00> : vector<128x32xf32>
    %27 = tpu.matmul %25, %26, %cst_11 {dimension_numbers = #tpu.dot_dimension_numbers<[1], [0], [0], [1], [0, 0, 1, 1], [], []>} : vector<128x32xbf16>, vector<32x32xbf16>, vector<128x32xf32> -> vector<128x32xf32>
    %c0_12 = arith.constant 0 : index
    %c0_13 = arith.constant 0 : index
    %28 = vector.load %arg5[%c0_12, %c0_13] : memref<1x32xf32, #tpu.memory_space<vmem>>, vector<1x32xf32>
    %29 = vector.broadcast %28 : vector<1x32xf32> to vector<128x32xf32>
    %30 = arith.addf %27, %29 : vector<128x32xf32>
    %31 = arith.mulf %30, %30 : vector<128x32xf32>
    %32 = arith.mulf %30, %31 : vector<128x32xf32>
    %cst_14 = arith.constant 4.471500e-02 : f32
    %33 = vector.broadcast %cst_14 : f32 to vector<128x32xf32>
    %34 = arith.mulf %33, %32 : vector<128x32xf32>
    %35 = arith.addf %30, %34 : vector<128x32xf32>
    %cst_15 = arith.constant 0.797884583 : f32
    %36 = vector.broadcast %cst_15 : f32 to vector<128x32xf32>
    %37 = arith.mulf %36, %35 : vector<128x32xf32>
    %38 = math.tanh %37 : vector<128x32xf32>
    %cst_16 = arith.constant 1.000000e+00 : f32
    %39 = vector.broadcast %cst_16 : f32 to vector<128x32xf32>
    %40 = arith.addf %39, %38 : vector<128x32xf32>
    %cst_17 = arith.constant 5.000000e-01 : f32
    %41 = vector.broadcast %cst_17 : f32 to vector<128x32xf32>
    %42 = arith.mulf %41, %40 : vector<128x32xf32>
    %43 = arith.mulf %30, %42 : vector<128x32xf32>
    %44 = arith.truncf %43 : vector<128x32xf32> to vector<128x32xbf16>
    %c0_18 = arith.constant 0 : index
    %c0_19 = arith.constant 0 : index
    %45 = vector.load %arg6[%c0_18, %c0_19] : memref<32x32xbf16, #tpu.memory_space<vmem>>, vector<32x32xbf16>
    %cst_20 = arith.constant dense<0.000000e+00> : vector<128x32xf32>
    %46 = tpu.matmul %44, %45, %cst_20 {dimension_numbers = #tpu.dot_dimension_numbers<[1], [0], [0], [1], [0, 0, 1, 1], [], []>} : vector<128x32xbf16>, vector<32x32xbf16>, vector<128x32xf32> -> vector<128x32xf32>
    %c0_21 = arith.constant 0 : index
    %c0_22 = arith.constant 0 : index
    %47 = vector.load %arg7[%c0_21, %c0_22] : memref<1x32xf32, #tpu.memory_space<vmem>>, vector<1x32xf32>
    %48 = vector.broadcast %47 : vector<1x32xf32> to vector<128x32xf32>
    %49 = arith.addf %46, %48 : vector<128x32xf32>
    %50 = arith.addf %0, %49 : vector<128x32xf32>
    %c0_23 = arith.constant 0 : index
    %c0_24 = arith.constant 0 : index
    %51 = vector.load %arg8[%c0_23, %c0_24] : memref<128x32xf32, #tpu.memory_space<vmem>>, vector<128x32xf32>
    tpu.vector_store %arg8[%c0_23, %c0_24], %50 {strides = array<i32>} : memref<128x32xf32, #tpu.memory_space<vmem>>, vector<128x32xf32>,
    return
  }
  func.func @transform_0(%arg0: i32) -> (i32, i32) {
    %c0_i32 = arith.constant 0 : i32
    %c0_i32_0 = arith.constant 0 : i32
    return %arg0, %c0_i32 : i32, i32
  }
  func.func @transform_1(%arg0: i32) -> (i32, i32) {
    %c0_i32 = arith.constant 0 : i32
    %c0_i32_0 = arith.constant 0 : i32
    %c0_i32_1 = arith.constant 0 : i32
    return %c0_i32, %c0_i32_0 : i32, i32
  }
  func.func @transform_2(%arg0: i32) -> (i32, i32) {
    %c0_i32 = arith.constant 0 : i32
    %c0_i32_0 = arith.constant 0 : i32
    %c0_i32_1 = arith.constant 0 : i32
    return %c0_i32, %c0_i32_0 : i32, i32
  }
  func.func @transform_3(%arg0: i32) -> (i32, i32) {
    %c0_i32 = arith.constant 0 : i32
    %c0_i32_0 = arith.constant 0 : i32
    %c0_i32_1 = arith.constant 0 : i32
    return %c0_i32, %c0_i32_0 : i32, i32
  }
  func.func @transform_4(%arg0: i32) -> (i32, i32) {
    %c0_i32 = arith.constant 0 : i32
    %c0_i32_0 = arith.constant 0 : i32
    %c0_i32_1 = arith.constant 0 : i32
    return %c0_i32, %c0_i32_0 : i32, i32
  }
  func.func @transform_5(%arg0: i32) -> (i32, i32) {
    %c0_i32 = arith.constant 0 : i32
    %c0_i32_0 = arith.constant 0 : i32
    %c0_i32_1 = arith.constant 0 : i32
    return %c0_i32, %c0_i32_0 : i32, i32
  }
  func.func @transform_6(%arg0: i32) -> (i32, i32) {
    %c0_i32 = arith.constant 0 : i32
    %c0_i32_0 = arith.constant 0 : i32
    %c0_i32_1 = arith.constant 0 : i32
    return %c0_i32, %c0_i32_0 : i32, i32
  }
  func.func @transform_7(%arg0: i32) -> (i32, i32) {
    %c0_i32 = arith.constant 0 : i32
    %c0_i32_0 = arith.constant 0 : i32
    return %arg0, %c0_i32 : i32, i32
  }
}

module attributes {stable_mosaic.version = 11 : i64} {
  func.func @_ln_bn_kernel(%arg0: i32, %arg1: memref<2x32xf32, #tpu.memory_space<vmem>>, %arg2: memref<1x32xf32, #tpu.memory_space<vmem>>, %arg3: memref<1x32xf32, #tpu.memory_space<vmem>>, %arg4: memref<1x32xf32, #tpu.memory_space<vmem>>, %arg5: memref<1x32xf32, #tpu.memory_space<vmem>>, %arg6: memref<2x32xf32, #tpu.memory_space<vmem>>) attributes {dimension_semantics = [#tpu.dimension_semantics<arbitrary>], iteration_bounds = array<i64: 1>, scalar_prefetch = 0 : i64, scratch_operands = 0 : i64, tpu.core_type = #tpu.core_type<tc>, window_params = [{pipeline_mode = #tpu.pipeline_mode<synchronous>, transform_indices = @transform_0, window_bounds = array<i64: 2, 32>}, {pipeline_mode = #tpu.pipeline_mode<synchronous>, transform_indices = @transform_1, window_bounds = array<i64: 1, 32>}, {pipeline_mode = #tpu.pipeline_mode<synchronous>, transform_indices = @transform_2, window_bounds = array<i64: 1, 32>}, {pipeline_mode = #tpu.pipeline_mode<synchronous>, transform_indices = @transform_3, window_bounds = array<i64: 1, 32>}, {pipeline_mode = #tpu.pipeline_mode<synchronous>, transform_indices = @transform_4, window_bounds = array<i64: 1, 32>}, {pipeline_mode = #tpu.pipeline_mode<synchronous>, transform_indices = @transform_5, window_bounds = array<i64: 2, 32>}]} {
    %c0 = arith.constant 0 : index
    %c0_0 = arith.constant 0 : index
    %0 = vector.load %arg1[%c0, %c0_0] : memref<2x32xf32, #tpu.memory_space<vmem>>, vector<2x32xf32>
    %cst = arith.constant dense<0.000000e+00> : vector<2xf32>
    %1 = vector.multi_reduction <add>, %0, %cst [1] : vector<2x32xf32> to vector<2xf32>
    %2 = vector.shape_cast %1 : vector<2xf32> to vector<2x1xf32>
    %cst_1 = arith.constant 3.200000e+01 : f32
    %3 = vector.broadcast %cst_1 : f32 to vector<2x1xf32>
    %4 = arith.divf %2, %3 : vector<2x1xf32>
    %5 = vector.broadcast %4 : vector<2x1xf32> to vector<2x32xf32>
    %6 = arith.subf %0, %5 : vector<2x32xf32>
    %7 = arith.mulf %6, %6 : vector<2x32xf32>
    %cst_2 = arith.constant dense<0.000000e+00> : vector<2xf32>
    %8 = vector.multi_reduction <add>, %7, %cst_2 [1] : vector<2x32xf32> to vector<2xf32>
    %9 = vector.shape_cast %8 : vector<2xf32> to vector<2x1xf32>
    %cst_3 = arith.constant 3.200000e+01 : f32
    %10 = vector.broadcast %cst_3 : f32 to vector<2x1xf32>
    %11 = arith.divf %9, %10 : vector<2x1xf32>
    %12 = vector.broadcast %4 : vector<2x1xf32> to vector<2x32xf32>
    %13 = arith.subf %0, %12 : vector<2x32xf32>
    %cst_4 = arith.constant 9.99999997E-7 : f32
    %14 = vector.broadcast %cst_4 : f32 to vector<2x1xf32>
    %15 = arith.addf %11, %14 : vector<2x1xf32>
    %16 = math.rsqrt %15 : vector<2x1xf32>
    %17 = vector.broadcast %16 : vector<2x1xf32> to vector<2x32xf32>
    %18 = arith.mulf %13, %17 : vector<2x32xf32>
    %c0_5 = arith.constant 0 : index
    %c0_6 = arith.constant 0 : index
    %19 = vector.load %arg2[%c0_5, %c0_6] : memref<1x32xf32, #tpu.memory_space<vmem>>, vector<1x32xf32>
    %20 = vector.broadcast %19 : vector<1x32xf32> to vector<2x32xf32>
    %21 = arith.mulf %18, %20 : vector<2x32xf32>
    %c0_7 = arith.constant 0 : index
    %c0_8 = arith.constant 0 : index
    %22 = vector.load %arg3[%c0_7, %c0_8] : memref<1x32xf32, #tpu.memory_space<vmem>>, vector<1x32xf32>
    %23 = vector.broadcast %22 : vector<1x32xf32> to vector<2x32xf32>
    %24 = arith.addf %21, %23 : vector<2x32xf32>
    %c0_9 = arith.constant 0 : index
    %c0_10 = arith.constant 0 : index
    %25 = vector.load %arg4[%c0_9, %c0_10] : memref<1x32xf32, #tpu.memory_space<vmem>>, vector<1x32xf32>
    %26 = vector.broadcast %25 : vector<1x32xf32> to vector<2x32xf32>
    %27 = arith.mulf %24, %26 : vector<2x32xf32>
    %c0_11 = arith.constant 0 : index
    %c0_12 = arith.constant 0 : index
    %28 = vector.load %arg5[%c0_11, %c0_12] : memref<1x32xf32, #tpu.memory_space<vmem>>, vector<1x32xf32>
    %29 = vector.broadcast %28 : vector<1x32xf32> to vector<2x32xf32>
    %30 = arith.addf %27, %29 : vector<2x32xf32>
    %c0_13 = arith.constant 0 : index
    %c0_14 = arith.constant 0 : index
    %31 = vector.load %arg6[%c0_13, %c0_14] : memref<2x32xf32, #tpu.memory_space<vmem>>, vector<2x32xf32>
    tpu.vector_store %arg6[%c0_13, %c0_14], %30 {strides = array<i32>} : memref<2x32xf32, #tpu.memory_space<vmem>>, vector<2x32xf32>,
    return
  }
  func.func @transform_0(%arg0: i32) -> (i32, i32) {
    %c0_i32 = arith.constant 0 : i32
    %c0_i32_0 = arith.constant 0 : i32
    %c0_i32_1 = arith.constant 0 : i32
    return %c0_i32, %c0_i32_0 : i32, i32
  }
  func.func @transform_1(%arg0: i32) -> (i32, i32) {
    %c0_i32 = arith.constant 0 : i32
    %c0_i32_0 = arith.constant 0 : i32
    %c0_i32_1 = arith.constant 0 : i32
    return %c0_i32, %c0_i32_0 : i32, i32
  }
  func.func @transform_2(%arg0: i32) -> (i32, i32) {
    %c0_i32 = arith.constant 0 : i32
    %c0_i32_0 = arith.constant 0 : i32
    %c0_i32_1 = arith.constant 0 : i32
    return %c0_i32, %c0_i32_0 : i32, i32
  }
  func.func @transform_3(%arg0: i32) -> (i32, i32) {
    %c0_i32 = arith.constant 0 : i32
    %c0_i32_0 = arith.constant 0 : i32
    %c0_i32_1 = arith.constant 0 : i32
    return %c0_i32, %c0_i32_0 : i32, i32
  }
  func.func @transform_4(%arg0: i32) -> (i32, i32) {
    %c0_i32 = arith.constant 0 : i32
    %c0_i32_0 = arith.constant 0 : i32
    %c0_i32_1 = arith.constant 0 : i32
    return %c0_i32, %c0_i32_0 : i32, i32
  }
  func.func @transform_5(%arg0: i32) -> (i32, i32) {
    %c0_i32 = arith.constant 0 : i32
    %c0_i32_0 = arith.constant 0 : i32
    %c0_i32_1 = arith.constant 0 : i32
    return %c0_i32, %c0_i32_0 : i32, i32
  }
}

</mosaic_0001>

<llo_original>
// kernel: forward.9
$region0: #{forward.9}
  #allocation0 [shape = 'u32[]', space=smem, size = 0x4, offset = 0x4, fixed_abs, tag = 'smem constant byte address 0x4 - core index']
  #allocation1 [shape = 'u32[144,128]{1,0:T(1,128)}', space=vmem, size = 0x12000, scoped, tag = 'internal scratch']
  %s0 = inlined_call_operand.vmem [shape: f32[2,4,17,17,3], index: 0, kind: input, shape index: {}]
  %s1 = inlined_call_operand.vmem [shape: bf16[9,3,16], index: 1, kind: input, shape index: {}]
  %s2 = inlined_call_operand.vmem [shape: f32[1,16], index: 2, kind: input, shape index: {}]
  %s3 = inlined_call_operand.vmem [shape: f32[1,16], index: 3, kind: input, shape index: {}]
  %s4 = inlined_call_operand.vmem [shape: f32[512,16], index: 4, kind: output, shape index: {}]
  %s5 = sld [smem:[#allocation0]]
  $region49: #{forward.9} parent=0
    _
  %s7 = ssub.s32 1, %s5
  %s8 = scalar_select 0, %s7, %s5
  loop: start=0, step=1, limit=4
  $region2: #{forward.9} parent=0 // loop_pre_header
    _
  $region3: #{forward.9} parent=0 // loop_header
    %s10 = sphi 0, %s14
    %p11 = scmp.ge.s32.totalorder %s10, 4
    %s20 = sphi 0, %s22
    %s23 = sphi 0, %s20
    %s24 = sphi 0, %s23
    %s40 = sphi 0, %s24
    %s44 = sphi 0, %s44
    %s46 = sphi 0, %s44
    %s47 = sphi 0, %s46
    %s61 = sphi 0, %s47
    %s65 = sphi 0, %s65
    %s67 = sphi 0, %s65
    %s68 = sphi 0, %s67
    %s82 = sphi 0, %s68
    %s86 = sphi 0, %s86
    %s88 = sphi 0, %s86
    %s89 = sphi 0, %s88
    %s103 = sphi 0, %s89
    %s109 = sphi 0, %s111
    %s112 = sphi 0, %s109
    %s113 = sphi 0, %s112
    %s129 = sphi 0, %s113
  $region4: #{forward.9} parent=0 // loop_header_branch
    %13 = sbr.rel (%p11) target = $region8
  $region5: #{forward.9} parent=0 // loop_body
    %s15 = ssub.s32 %s10, 1
    %s16 = ssub.s32 %s10, 2
    %s17 = sadd.s32 %s10, 1
    %s18 = ssub.s32 %s10, %s17
    %p19 = scmp.eq.s32.totalorder %s18, 0
    %s21 = sadd.s32 %s20, 1
    %s22 = scalar_select %p19, %s20, %s21
    %p25 = pneg %p19
    %p26 = scmp.eq.s32.totalorder %s10, 1
    %p27 = por %p25, %p26
    %p28 = scmp.ne.s32.totalorder %s20, %s23
    %p29 = scmp.eq.s32.totalorder %s10, 0
    %p30 = por %p28, %p29
    %p31 = scmp.ne.s32.totalorder %s20, %s23
    %p32 = scmp.eq.s32.totalorder %s15, 1
    %p33 = por %p31, %p32
    %p34 = scmp.ne.s32.totalorder %s23, %s24
    %p35 = scmp.eq.s32.totalorder %s15, 0
    %p36 = por %p34, %p35
    %p37 = scmp.ne.s32.totalorder %s23, %s24
    %p38 = scmp.eq.s32.totalorder %s16, 1
    %p39 = por %p37, %p38
    %p41 = scmp.ne.s32.totalorder %s24, %s40
    %p42 = scmp.eq.s32.totalorder %s16, 0
    %p43 = por %p41, %p42
    %s45 = sadd.s32 %s44, 1
    %p48 = scmp.eq.s32.totalorder %s10, 1
    %p49 = scmp.ne.s32.totalorder %s44, %s46
    %p50 = scmp.eq.s32.totalorder %s10, 0
    %p51 = por %p49, %p50
    %p52 = scmp.ne.s32.totalorder %s44, %s46
    %p53 = scmp.eq.s32.totalorder %s15, 1
    %p54 = por %p52, %p53
    %p55 = scmp.ne.s32.totalorder %s46, %s47
    %p56 = scmp.eq.s32.totalorder %s15, 0
    %p57 = por %p55, %p56
    %p58 = scmp.ne.s32.totalorder %s46, %s47
    %p59 = scmp.eq.s32.totalorder %s16, 1
    %p60 = por %p58, %p59
    %p62 = scmp.ne.s32.totalorder %s47, %s61
    %p63 = scmp.eq.s32.totalorder %s16, 0
    %p64 = por %p62, %p63
    %s66 = sadd.s32 %s65, 1
    %p69 = scmp.eq.s32.totalorder %s10, 1
    %p70 = scmp.ne.s32.totalorder %s65, %s67
    %p71 = scmp.eq.s32.totalorder %s10, 0
    %p72 = por %p70, %p71
    %p73 = scmp.ne.s32.totalorder %s65, %s67
    %p74 = scmp.eq.s32.totalorder %s15, 1
    %p75 = por %p73, %p74
    %p76 = scmp.ne.s32.totalorder %s67, %s68
    %p77 = scmp.eq.s32.totalorder %s15, 0
    %p78 = por %p76, %p77
    %p79 = scmp.ne.s32.totalorder %s67, %s68
    %p80 = scmp.eq.s32.totalorder %s16, 1
    %p81 = por %p79, %p80
    %p83 = scmp.ne.s32.totalorder %s68, %s82
    %p84 = scmp.eq.s32.totalorder %s16, 0
    %p85 = por %p83, %p84
    %s87 = sadd.s32 %s86, 1
    %p90 = scmp.eq.s32.totalorder %s10, 1
    %p91 = scmp.ne.s32.totalorder %s86, %s88
    %p92 = scmp.eq.s32.totalorder %s10, 0
    %p93 = por %p91, %p92
    %p94 = scmp.ne.s32.totalorder %s86, %s88
    %p95 = scmp.eq.s32.totalorder %s15, 1
    %p96 = por %p94, %p95
    %p97 = scmp.ne.s32.totalorder %s88, %s89
    %p98 = scmp.eq.s32.totalorder %s15, 0
    %p99 = por %p97, %p98
    %p100 = scmp.ne.s32.totalorder %s88, %s89
    %p101 = scmp.eq.s32.totalorder %s16, 1
    %p102 = por %p100, %p101
    %p104 = scmp.ne.s32.totalorder %s89, %s103
    %p105 = scmp.eq.s32.totalorder %s16, 0
    %p106 = por %p104, %p105
    %s107 = ssub.s32 %s10, %s17
    %p108 = scmp.eq.s32.totalorder %s107, 0
    %s110 = sadd.s32 %s109, 1
    %s111 = scalar_select %p108, %s109, %s110
    %p114 = pneg %p108
    %p115 = scmp.eq.s32.totalorder %s10, 1
    %p116 = por %p114, %p115
    %p117 = scmp.ne.s32.totalorder %s109, %s112
    %p118 = scmp.eq.s32.totalorder %s10, 0
    %p119 = por %p117, %p118
    %p120 = scmp.ne.s32.totalorder %s109, %s112
    %p121 = scmp.eq.s32.totalorder %s15, 1
    %p122 = por %p120, %p121
    %p123 = scmp.ne.s32.totalorder %s112, %s113
    %p124 = scmp.eq.s32.totalorder %s15, 0
    %p125 = por %p123, %p124
    %p126 = scmp.ne.s32.totalorder %s112, %s113
    %p127 = scmp.eq.s32.totalorder %s16, 1
    %p128 = por %p126, %p127
    %p130 = scmp.ne.s32.totalorder %s113, %s129
    %p131 = scmp.eq.s32.totalorder %s16, 0
    %p132 = por %p130, %p131
    %p133 = scmp.le.s32.totalorder 1, %s10
    %p134 = scmp.lt.s32.totalorder %s10, 3
    %p135 = pnand %p133, %p134
    %p136 = pneg %p135
    // Predicated region
    $region9: #{forward.9} parent=5 // pred_check
      _
    $region10: #{forward.9} parent=5 // pred_check_branch
      %138 = sbr.rel (%p135) target = $region12
    $region11: #{forward.9} parent=5 // pred_region
      %s139 = ssub.s32 %s10, 1
      // Predicated region
      $region13: #{forward.9} parent=11 // pred_check
        %p140 = pneg %p57
      $region14: #{forward.9} parent=11 // pred_check_branch
        %142 = sbr.rel (%p140) target = $region16
      $region15: #{forward.9} parent=11 // pred_region
        _
      $region16: #{forward.9} parent=11 // pred_fallthru
        _
      // Predicated region
      $region17: #{forward.9} parent=11 // pred_check
        %p143 = pneg %p78
      $region18: #{forward.9} parent=11 // pred_check_branch
        %145 = sbr.rel (%p143) target = $region20
      $region19: #{forward.9} parent=11 // pred_region
        _
      $region20: #{forward.9} parent=11 // pred_fallthru
        _
      // Predicated region
      $region21: #{forward.9} parent=11 // pred_check
        %p146 = pneg %p99
      $region22: #{forward.9} parent=11 // pred_check_branch
        %148 = sbr.rel (%p146) target = $region24
      $region23: #{forward.9} parent=11 // pred_region
        _
      $region24: #{forward.9} parent=11 // pred_fallthru
        _
    $region12: #{forward.9} parent=5 // pred_fallthru
      _
    %p149 = scmp.lt.s32.totalorder %s10, 2
    // Predicated region
    $region25: #{forward.9} parent=5 // pred_check
      %p150 = pneg %p149
    $region26: #{forward.9} parent=5 // pred_check_branch
      %152 = sbr.rel (%p150) target = $region28
    $region27: #{forward.9} parent=5 // pred_region
      // Predicated region
      $region29: #{forward.9} parent=27 // pred_check
        %p153 = pneg %p30
      $region30: #{forward.9} parent=27 // pred_check_branch
        %155 = sbr.rel (%p153) target = $region32
      $region31: #{forward.9} parent=27 // pred_region
        %p156 = scmp.lt.s32.totalorder %s10, 1
        %s157 = scalar_select %p156, %s10, 1
        %s158 = smul.addr %s157, 204
        %s159 = smul.addr %s158, 8
        %s160 = scalar_lea.vmem %s0, %s159
      $region32: #{forward.9} parent=27 // pred_fallthru
        _
    $region28: #{forward.9} parent=5 // pred_fallthru
      _
    %p161 = scmp.le.s32.totalorder 1, %s10
    %p162 = scmp.lt.s32.totalorder %s10, 3
    %p163 = pnand %p161, %p162
    %p164 = pneg %p163
    // Predicated region
    $region33: #{forward.9} parent=5 // pred_check
      _
    $region34: #{forward.9} parent=5 // pred_check_branch
      %166 = sbr.rel (%p163) target = $region36
    $region35: #{forward.9} parent=5 // pred_region
      %s167 = ssub.s32 %s10, 1
      %p168 = scmp.lt.s32.totalorder %s15, 1
      %s169 = scalar_select %p168, %s15, 1
      %s170 = smul.addr %s169, 204
      %s171 = smul.addr %s170, 8
      %s172 = scalar_lea.vmem %s0, %s171
      %p173 = pneg %p36
      %p174 = pneg %p33
      %p175 = pneg %p57
      %p176 = pneg %p54
      %p177 = pneg %p78
      %p178 = pneg %p75
      %p179 = pneg %p99
      %p180 = pneg %p96
      %p181 = pneg %p125
      %p182 = pneg %p122
      %s183 = smul.u32 32, %s15
      %p184 = scmp.lt.s32.totalorder %s183, 63
      %s185 = scalar_select %p184, %s183, 63
      %s186 = smul.addr %s185, 8
      %s187 = scalar_lea.vmem %s4, %s186
      %p188 = scmp.lt.s32.totalorder %s15, 1
      %s189 = scalar_select %p188, %s15, 1
      %s190 = smul.addr %s189, 204
      %s191 = smul.addr %s190, 8
      %s192 = scalar_lea.vmem %s0, %s191
      %s193 = smul.u32 32, %s15
      %p194 = scmp.lt.s32.totalorder %s193, 63
      %s195 = scalar_select %p194, %s193, 63
      %s196 = smul.addr %s195, 8
      %s197 = scalar_lea.vmem %s4, %s196
      %s198 = smul.u32 32, %s15
      %v200 = vld [vmem:[%s192] sm:$0xff]
      %v201 = vld [vmem:[%s192 + $0x8] sm:$0xff]
      %v202 = vld [vmem:[%s192 + $0x10] sm:$0x1]
      %v203 = vld [vmem:[%s192 + $0x18] sm:$0xff]
      %v204 = vld [vmem:[%s192 + $0x20] sm:$0xff]
      %v205 = vld [vmem:[%s192 + $0x28] sm:$0x1]
      %v206 = vld [vmem:[%s192 + $0x30] sm:$0xff]
      %v207 = vld [vmem:[%s192 + $0x38] sm:$0xff]
      %v208 = vld [vmem:[%s192 + $0x40] sm:$0x1]
      %v209 = vld [vmem:[%s192 + $0x48] sm:$0xff]
      %v210 = vld [vmem:[%s192 + $0x50] sm:$0xff]
      %v211 = vld [vmem:[%s192 + $0x58] sm:$0x1]
      %v212 = vld [vmem:[%s192 + $0x60] sm:$0xff]
      %v213 = vld [vmem:[%s192 + $0x68] sm:$0xff]
      %v214 = vld [vmem:[%s192 + $0x70] sm:$0x1]
      %v215 = vld [vmem:[%s192 + $0x78] sm:$0xff]
      %v216 = vld [vmem:[%s192 + $0x80] sm:$0xff]
      %v217 = vld [vmem:[%s192 + $0x88] sm:$0x1]
      %v218 = vld [vmem:[%s192 + $0x90] sm:$0xff]
      %v219 = vld [vmem:[%s192 + $0x98] sm:$0xff]
      %v220 = vld [vmem:[%s192 + $0xa0] sm:$0x1]
      %v221 = vld [vmem:[%s192 + $0xa8] sm:$0xff]
      %v222 = vld [vmem:[%s192 + $0xb0] sm:$0xff]
      %v223 = vld [vmem:[%s192 + $0xb8] sm:$0x1]
      %v224 = vld [vmem:[%s192 + $0xc0] sm:$0xff]
      %v225 = vld [vmem:[%s192 + $0xc8] sm:$0xff]
      %v226 = vld [vmem:[%s192 + $0xd0] sm:$0x1]
      %v227 = vld [vmem:[%s192 + $0xd8] sm:$0xff]
      %v228 = vld [vmem:[%s192 + $0xe0] sm:$0xff]
      %v229 = vld [vmem:[%s192 + $0xe8] sm:$0x1]
      %v230 = vld [vmem:[%s192 + $0xf0] sm:$0xff]
      %v231 = vld [vmem:[%s192 + $0xf8] sm:$0xff]
      %v232 = vld [vmem:[%s192 + $0x100] sm:$0x1]
      %v233 = vld [vmem:[%s192 + $0x108] sm:$0xff]
      %v234 = vld [vmem:[%s192 + $0x110] sm:$0xff]
      %v235 = vld [vmem:[%s192 + $0x118] sm:$0x1]
      %v236 = vld [vmem:[%s192 + $0x120] sm:$0xff]
      %v237 = vld [vmem:[%s192 + $0x128] sm:$0xff]
      %v238 = vld [vmem:[%s192 + $0x130] sm:$0x1]
      %v239 = vld [vmem:[%s192 + $0x138] sm:$0xff]
      %v240 = vld [vmem:[%s192 + $0x140] sm:$0xff]
      %v241 = vld [vmem:[%s192 + $0x148] sm:$0x1]
      %v242 = vld [vmem:[%s192 + $0x150] sm:$0xff]
      %v243 = vld [vmem:[%s192 + $0x158] sm:$0xff]
      %v244 = vld [vmem:[%s192 + $0x160] sm:$0x1]
      %v245 = vld [vmem:[%s192 + $0x168] sm:$0xff]
      %v246 = vld [vmem:[%s192 + $0x170] sm:$0xff]
      %v247 = vld [vmem:[%s192 + $0x178] sm:$0x1]
      %v248 = vld [vmem:[%s192 + $0x180] sm:$0xff]
      %v249 = vld [vmem:[%s192 + $0x188] sm:$0xff]
      %v250 = vld [vmem:[%s192 + $0x190] sm:$0x1]
      %s251 = scalar_lea.vmem %s192, 408
      %v252 = vld [vmem:[%s251] sm:$0xff]
      %v253 = vld [vmem:[%s251 + $0x8] sm:$0xff]
      %v254 = vld [vmem:[%s251 + $0x18] sm:$0xff]
      %v255 = vld [vmem:[%s251 + $0x20] sm:$0xff]
      %v256 = vld [vmem:[%s251 + $0x30] sm:$0xff]
      %v257 = vld [vmem:[%s251 + $0x38] sm:$0xff]
      %v258 = vld [vmem:[%s251 + $0x48] sm:$0xff]
      %v259 = vld [vmem:[%s251 + $0x50] sm:$0xff]
      %v260 = vld [vmem:[%s251 + $0x60] sm:$0xff]
      %v261 = vld [vmem:[%s251 + $0x68] sm:$0xff]
      %v262 = vld [vmem:[%s251 + $0x78] sm:$0xff]
      %v263 = vld [vmem:[%s251 + $0x80] sm:$0xff]
      %v264 = vld [vmem:[%s251 + $0x90] sm:$0xff]
      %v265 = vld [vmem:[%s251 + $0x98] sm:$0xff]
      %v266 = vld [vmem:[%s251 + $0xa8] sm:$0xff]
      %v267 = vld [vmem:[%s251 + $0xb0] sm:$0xff]
      %v268 = vld [vmem:[%s251 + $0xc0] sm:$0xff]
      %v269 = vld [vmem:[%s251 + $0xc8] sm:$0xff]
      %v270 = vld [vmem:[%s251 + $0xd8] sm:$0xff]
      %v271 = vld [vmem:[%s251 + $0xe0] sm:$0xff]
      %v272 = vld [vmem:[%s251 + $0xf0] sm:$0xff]
      %v273 = vld [vmem:[%s251 + $0xf8] sm:$0xff]
      %v274 = vld [vmem:[%s251 + $0x108] sm:$0xff]
      %v275 = vld [vmem:[%s251 + $0x110] sm:$0xff]
      %v276 = vld [vmem:[%s251 + $0x120] sm:$0xff]
      %v277 = vld [vmem:[%s251 + $0x128] sm:$0xff]
      %v278 = vld [vmem:[%s251 + $0x138] sm:$0xff]
      %v279 = vld [vmem:[%s251 + $0x140] sm:$0xff]
      %v280 = vld [vmem:[%s251 + $0x150] sm:$0xff]
      %v281 = vld [vmem:[%s251 + $0x158] sm:$0xff]
      %v282 = vld [vmem:[%s251 + $0x168] sm:$0xff]
      %v283 = vld [vmem:[%s251 + $0x170] sm:$0xff]
      %v284 = vld [vmem:[%s251 + $0x180] sm:$0xff]
      %v285 = vld [vmem:[%s251 + $0x188] sm:$0xff]
      %s286 = scalar_lea.vmem %s192, 816
      %v287 = vld [vmem:[%s286] sm:$0xff]
      %v288 = vld [vmem:[%s286 + $0x8] sm:$0xff]
      %v289 = vld [vmem:[%s286 + $0x10] sm:$0x1]
      %v290 = vld [vmem:[%s286 + $0x18] sm:$0xff]
      %v291 = vld [vmem:[%s286 + $0x20] sm:$0xff]
      %v292 = vld [vmem:[%s286 + $0x28] sm:$0x1]
      %v293 = vld [vmem:[%s286 + $0x30] sm:$0xff]
      %v294 = vld [vmem:[%s286 + $0x38] sm:$0xff]
      %v295 = vld [vmem:[%s286 + $0x40] sm:$0x1]
      %v296 = vld [vmem:[%s286 + $0x48] sm:$0xff]
      %v297 = vld [vmem:[%s286 + $0x50] sm:$0xff]
      %v298 = vld [vmem:[%s286 + $0x58] sm:$0x1]
      %v299 = vld [vmem:[%s286 + $0x60] sm:$0xff]
      %v300 = vld [vmem:[%s286 + $0x68] sm:$0xff]
      %v301 = vld [vmem:[%s286 + $0x70] sm:$0x1]
      %v302 = vld [vmem:[%s286 + $0x78] sm:$0xff]
      %v303 = vld [vmem:[%s286 + $0x80] sm:$0xff]
      %v304 = vld [vmem:[%s286 + $0x88] sm:$0x1]
      %v305 = vld [vmem:[%s286 + $0x90] sm:$0xff]
      %v306 = vld [vmem:[%s286 + $0x98] sm:$0xff]
      %v307 = vld [vmem:[%s286 + $0xa0] sm:$0x1]
      %v308 = vld [vmem:[%s286 + $0xa8] sm:$0xff]
      %v309 = vld [vmem:[%s286 + $0xb0] sm:$0xff]
      %v310 = vld [vmem:[%s286 + $0xb8] sm:$0x1]
      %v311 = vld [vmem:[%s286 + $0xc0] sm:$0xff]
      %v312 = vld [vmem:[%s286 + $0xc8] sm:$0xff]
      %v313 = vld [vmem:[%s286 + $0xd0] sm:$0x1]
      %v314 = vld [vmem:[%s286 + $0xd8] sm:$0xff]
      %v315 = vld [vmem:[%s286 + $0xe0] sm:$0xff]
      %v316 = vld [vmem:[%s286 + $0xe8] sm:$0x1]
      %v317 = vld [vmem:[%s286 + $0xf0] sm:$0xff]
      %v318 = vld [vmem:[%s286 + $0xf8] sm:$0xff]
      %v319 = vld [vmem:[%s286 + $0x100] sm:$0x1]
      %v320 = vld [vmem:[%s286 + $0x108] sm:$0xff]
      %v321 = vld [vmem:[%s286 + $0x110] sm:$0xff]
      %v322 = vld [vmem:[%s286 + $0x118] sm:$0x1]
      %v323 = vld [vmem:[%s286 + $0x120] sm:$0xff]
      %v324 = vld [vmem:[%s286 + $0x128] sm:$0xff]
      %v325 = vld [vmem:[%s286 + $0x130] sm:$0x1]
      %v326 = vld [vmem:[%s286 + $0x138] sm:$0xff]
      %v327 = vld [vmem:[%s286 + $0x140] sm:$0xff]
      %v328 = vld [vmem:[%s286 + $0x148] sm:$0x1]
      %v329 = vld [vmem:[%s286 + $0x150] sm:$0xff]
      %v330 = vld [vmem:[%s286 + $0x158] sm:$0xff]
      %v331 = vld [vmem:[%s286 + $0x160] sm:$0x1]
      %v332 = vld [vmem:[%s286 + $0x168] sm:$0xff]
      %v333 = vld [vmem:[%s286 + $0x170] sm:$0xff]
      %v334 = vld [vmem:[%s286 + $0x178] sm:$0x1]
      %s335 = scalar_lea.vmem %s192, 1224
      %v336 = vld [vmem:[%s335] sm:$0xff]
      %v337 = vld [vmem:[%s335 + $0x8] sm:$0xff]
      %v338 = vld [vmem:[%s335 + $0x18] sm:$0xff]
      %v339 = vld [vmem:[%s335 + $0x20] sm:$0xff]
      %v340 = vld [vmem:[%s335 + $0x30] sm:$0xff]
      %v341 = vld [vmem:[%s335 + $0x38] sm:$0xff]
      %v342 = vld [vmem:[%s335 + $0x48] sm:$0xff]
      %v343 = vld [vmem:[%s335 + $0x50] sm:$0xff]
      %v344 = vld [vmem:[%s335 + $0x60] sm:$0xff]
      %v345 = vld [vmem:[%s335 + $0x68] sm:$0xff]
      %v346 = vld [vmem:[%s335 + $0x78] sm:$0xff]
      %v347 = vld [vmem:[%s335 + $0x80] sm:$0xff]
      %v348 = vld [vmem:[%s335 + $0x90] sm:$0xff]
      %v349 = vld [vmem:[%s335 + $0x98] sm:$0xff]
      %v350 = vld [vmem:[%s335 + $0xa8] sm:$0xff]
      %v351 = vld [vmem:[%s335 + $0xb0] sm:$0xff]
      %v352 = vld [vmem:[%s335 + $0xc0] sm:$0xff]
      %v353 = vld [vmem:[%s335 + $0xc8] sm:$0xff]
      %v354 = vld [vmem:[%s335 + $0xd8] sm:$0xff]
      %v355 = vld [vmem:[%s335 + $0xe0] sm:$0xff]
      %v356 = vld [vmem:[%s335 + $0xf0] sm:$0xff]
      %v357 = vld [vmem:[%s335 + $0xf8] sm:$0xff]
      %v358 = vld [vmem:[%s335 + $0x108] sm:$0xff]
      %v359 = vld [vmem:[%s335 + $0x110] sm:$0xff]
      %v360 = vld [vmem:[%s335 + $0x120] sm:$0xff]
      %v361 = vld [vmem:[%s335 + $0x128] sm:$0xff]
      %v362 = vld [vmem:[%s335 + $0x138] sm:$0xff]
      %v363 = vld [vmem:[%s335 + $0x140] sm:$0xff]
      %v364 = vld [vmem:[%s335 + $0x150] sm:$0xff]
      %v365 = vld [vmem:[%s335 + $0x158] sm:$0xff]
      %v366 = vld [vmem:[%s335 + $0x168] sm:$0xff]
      %v367 = vld [vmem:[%s335 + $0x170] sm:$0xff]
      %v368 = vpack.c.bf16 %v201, %v200
      %v369 = vpack.c.bf16 %v204, %v203
      %v370 = vpack.c.bf16 %v207, %v206
      %v371 = vpack.c.bf16 %v210, %v209
      %v372 = vpack.c.bf16 %v213, %v212
      %v373 = vpack.c.bf16 %v216, %v215
      %v374 = vpack.c.bf16 %v219, %v218
      %v375 = vpack.c.bf16 %v222, %v221
      %v376 = vpack.c.bf16 %v225, %v224
      %v377 = vpack.c.bf16 %v228, %v227
      %v378 = vpack.c.bf16 %v231, %v230
      %v379 = vpack.c.bf16 %v234, %v233
      %v380 = vpack.c.bf16 %v237, %v236
      %v381 = vpack.c.bf16 %v240, %v239
      %v382 = vpack.c.bf16 %v243, %v242
      %v383 = vpack.c.bf16 %v246, %v245
      %v384 = vld [vmem:[%s1] sm:$0x3]
      %v385 = vpack.c.bf16 %v253, %v252
      %v386 = vpack.c.bf16 %v255, %v254
      %v387 = vpack.c.bf16 %v257, %v256
      %v388 = vpack.c.bf16 %v259, %v258
      %v389 = vpack.c.bf16 %v261, %v260
      %v390 = vpack.c.bf16 %v263, %v262
      %v391 = vpack.c.bf16 %v265, %v264
      %v392 = vpack.c.bf16 %v267, %v266
      %v393 = vpack.c.bf16 %v269, %v268
      %v394 = vpack.c.bf16 %v271, %v270
      %v395 = vpack.c.bf16 %v273, %v272
      %v396 = vpack.c.bf16 %v275, %v274
      %v397 = vpack.c.bf16 %v277, %v276
      %v398 = vpack.c.bf16 %v279, %v278
      %v399 = vpack.c.bf16 %v281, %v280
      %v400 = vpack.c.bf16 %v283, %v282
      %s401 = scalar_lea.vmem %s1, 2
      %v402 = vld [vmem:[%s401] sm:$0x3]
      %vm403 = vcmask 23552
      %v405 = vsel %vm403, %v385, 0
      %v408 = vsel %vm403, %v386, 0
      %v411 = vsel %vm403, %v387, 0
      %v414 = vsel %vm403, %v388, 0
      %v417 = vsel %vm403, %v389, 0
      %v420 = vsel %vm403, %v390, 0
      %v423 = vsel %vm403, %v391, 0
      %v426 = vsel %vm403, %v392, 0
      %v429 = vsel %vm403, %v393, 0
      %v432 = vsel %vm403, %v394, 0
      %v435 = vsel %vm403, %v395, 0
      %v438 = vsel %vm403, %v396, 0
      %v441 = vsel %vm403, %v397, 0
      %v444 = vsel %vm403, %v398, 0
      %v447 = vsel %vm403, %v399, 0
      %v450 = vsel %vm403, %v400, 0
      %vm452 = vcmask 1040384
      %vm453 = vcmask 1041408
      %v454 = vsel %vm452, 4294967295, 65535
      %v455 = vsel %vm453, %v454, 0
      %v457 = vand.u32 %v402, %v455
      %459 = vmatprep.subr.bf16.mxu0 0
      %460 = vmatpush1.bf16.msra.mxu0 %v457
      %461 = vmatprep.subr.bf16.mxu0 0
      %462 = vmatpush1.bf16.msra.mxu0 0
      %463 = vmatprep.subr.bf16.mxu0 0
      %464 = vmatpush1.bf16.msra.mxu0 0
      %465 = vmatprep.subr.bf16.mxu0 0
      %466 = vmatpush1.bf16.msra.mxu0 0
      %467 = vmatprep.subr.bf16.mxu0 0
      %468 = vmatpush1.bf16.msra.mxu0 0
      %469 = vmatprep.subr.bf16.mxu0 0
      %470 = vmatpush1.bf16.msra.mxu0 0
      %471 = vmatprep.subr.bf16.mxu0 0
      %472 = vmatpush1.bf16.msra.mxu0 0
      %473 = vmatprep.subr.bf16.mxu0 0
      %474 = vmatpush1.bf16.msra.mxu0 0
      %475 = vmatprep.subr.bf16.mxu0 0
      %476 = vmatpush1.bf16.msra.mxu0 0
      %477 = vmatprep.subr.bf16.mxu0 0
      %478 = vmatpush1.bf16.msra.mxu0 0
      %479 = vmatprep.subr.bf16.mxu0 0
      %480 = vmatpush1.bf16.msra.mxu0 0
      %481 = vmatprep.subr.bf16.mxu0 0
      %482 = vmatpush1.bf16.msra.mxu0 0
      %483 = vmatprep.subr.bf16.mxu0 0
      %484 = vmatpush1.bf16.msra.mxu0 0
      %485 = vmatprep.subr.bf16.mxu0 0
      %486 = vmatpush1.bf16.msra.mxu0 0
      %487 = vmatprep.subr.bf16.mxu0 0
      %488 = vmatpush1.bf16.msra.mxu0 0
      %489 = vmatprep.subr.bf16.mxu0 0
      %490 = vmatpush1.bf16.msra.mxu0 0
      %491 = vmatprep.mubr.bf16.mxu0 0
      %492 = vmatmul.mubr.bf16.gmra.mrb[0].mxu0 %v405
      %v493 = vpop.f32.mrb[0].mxu0
      %v494 = vadd.f32 0.0, %v493
      %v495 = vpop.f32.mrb[0].mxu0
      %v496 = vpop.f32.mrb[0].mxu0
      %v497 = vadd.f32 0.0, %v496
      %v498 = vpop.f32.mrb[0].mxu0
      %499 = vmatprep.mubr.bf16.mxu0 0
      %500 = vmatmul.mubr.bf16.gmra.mrb[0].mxu0 %v408
      %v501 = vpop.f32.mrb[0].mxu0
      %v502 = vadd.f32 0.0, %v501
      %v503 = vpop.f32.mrb[0].mxu0
      %v504 = vpop.f32.mrb[0].mxu0
      %v505 = vadd.f32 0.0, %v504
      %v506 = vpop.f32.mrb[0].mxu0
      %507 = vmatprep.mubr.bf16.mxu0 0
      %508 = vmatmul.mubr.bf16.gmra.mrb[0].mxu0 %v411
      %v509 = vpop.f32.mrb[0].mxu0
      %v510 = vadd.f32 0.0, %v509
      %v511 = vpop.f32.mrb[0].mxu0
      %v512 = vpop.f32.mrb[0].mxu0
      %v513 = vadd.f32 0.0, %v512
      %v514 = vpop.f32.mrb[0].mxu0
      %515 = vmatprep.mubr.bf16.mxu0 0
      %516 = vmatmul.mubr.bf16.gmra.mrb[0].mxu0 %v414
      %v517 = vpop.f32.mrb[0].mxu0
      %v518 = vadd.f32 0.0, %v517
      %v519 = vpop.f32.mrb[0].mxu0
      %v520 = vpop.f32.mrb[0].mxu0
      %v521 = vadd.f32 0.0, %v520
      %v522 = vpop.f32.mrb[0].mxu0
      %523 = vmatprep.mubr.bf16.mxu0 0
      %524 = vmatmul.mubr.bf16.gmra.mrb[0].mxu0 %v417
      %v525 = vpop.f32.mrb[0].mxu0
      %v526 = vadd.f32 0.0, %v525
      %v527 = vpop.f32.mrb[0].mxu0
      %v528 = vpop.f32.mrb[0].mxu0
      %v529 = vadd.f32 0.0, %v528
      %v530 = vpop.f32.mrb[0].mxu0
      %531 = vmatprep.mubr.bf16.mxu0 0
      %532 = vmatmul.mubr.bf16.gmra.mrb[0].mxu0 %v420
      %v533 = vpop.f32.mrb[0].mxu0
      %v534 = vadd.f32 0.0, %v533
      %v535 = vpop.f32.mrb[0].mxu0
      %v536 = vpop.f32.mrb[0].mxu0
      %v537 = vadd.f32 0.0, %v536
      %v538 = vpop.f32.mrb[0].mxu0
      %539 = vmatprep.mubr.bf16.mxu0 0
      %540 = vmatmul.mubr.bf16.gmra.mrb[0].mxu0 %v423
      %v541 = vpop.f32.mrb[0].mxu0
      %v542 = vadd.f32 0.0, %v541
      %v543 = vpop.f32.mrb[0].mxu0
      %v544 = vpop.f32.mrb[0].mxu0
      %v545 = vadd.f32 0.0, %v544
      %v546 = vpop.f32.mrb[0].mxu0
      %547 = vmatprep.mubr.bf16.mxu0 0
      %548 = vmatmul.mubr.bf16.gmra.mrb[0].mxu0 %v426
      %v549 = vpop.f32.mrb[0].mxu0
      %v550 = vadd.f32 0.0, %v549
      %v551 = vpop.f32.mrb[0].mxu0
      %v552 = vpop.f32.mrb[0].mxu0
      %v553 = vadd.f32 0.0, %v552
      %v554 = vpop.f32.mrb[0].mxu0
      %555 = vmatprep.mubr.bf16.mxu0 0
      %556 = vmatmul.mubr.bf16.gmra.mrb[0].mxu0 %v429
      %v557 = vpop.f32.mrb[0].mxu0
      %v558 = vadd.f32 0.0, %v557
      %v559 = vpop.f32.mrb[0].mxu0
      %v560 = vpop.f32.mrb[0].mxu0
      %v561 = vadd.f32 0.0, %v560
      %v562 = vpop.f32.mrb[0].mxu0
      %563 = vmatprep.mubr.bf16.mxu0 0
      %564 = vmatmul.mubr.bf16.gmra.mrb[0].mxu0 %v432
      %v565 = vpop.f32.mrb[0].mxu0
      %v566 = vadd.f32 0.0, %v565
      %v567 = vpop.f32.mrb[0].mxu0
      %v568 = vpop.f32.mrb[0].mxu0
      %v569 = vadd.f32 0.0, %v568
      %v570 = vpop.f32.mrb[0].mxu0
      %571 = vmatprep.mubr.bf16.mxu0 0
      %572 = vmatmul.mubr.bf16.gmra.mrb[0].mxu0 %v435
      %v573 = vpop.f32.mrb[0].mxu0
      %v574 = vadd.f32 0.0, %v573
      %v575 = vpop.f32.mrb[0].mxu0
      %v576 = vpop.f32.mrb[0].mxu0
      %v577 = vadd.f32 0.0, %v576
      %v578 = vpop.f32.mrb[0].mxu0
      %579 = vmatprep.mubr.bf16.mxu0 0
      %580 = vmatmul.mubr.bf16.gmra.mrb[0].mxu0 %v438
      %v581 = vpop.f32.mrb[0].mxu0
      %v582 = vadd.f32 0.0, %v581
      %v583 = vpop.f32.mrb[0].mxu0
      %v584 = vpop.f32.mrb[0].mxu0
      %v585 = vadd.f32 0.0, %v584
      %v586 = vpop.f32.mrb[0].mxu0
      %587 = vmatprep.mubr.bf16.mxu0 0
      %588 = vmatmul.mubr.bf16.gmra.mrb[0].mxu0 %v441
      %v589 = vpop.f32.mrb[0].mxu0
      %v590 = vadd.f32 0.0, %v589
      %v591 = vpop.f32.mrb[0].mxu0
      %v592 = vpop.f32.mrb[0].mxu0
      %v593 = vadd.f32 0.0, %v592
      %v594 = vpop.f32.mrb[0].mxu0
      %595 = vmatprep.mubr.bf16.mxu0 0
      %596 = vmatmul.mubr.bf16.gmra.mrb[0].mxu0 %v444
      %v597 = vpop.f32.mrb[0].mxu0
      %v598 = vadd.f32 0.0, %v597
      %v599 = vpop.f32.mrb[0].mxu0
      %v600 = vpop.f32.mrb[0].mxu0
      %v601 = vadd.f32 0.0, %v600
      %v602 = vpop.f32.mrb[0].mxu0
      %603 = vmatprep.mubr.bf16.mxu0 0
      %604 = vmatmul.mubr.bf16.gmra.mrb[0].mxu0 %v447
      %v605 = vpop.f32.mrb[0].mxu0
      %v606 = vadd.f32 0.0, %v605
      %v607 = vpop.f32.mrb[0].mxu0
      %v608 = vpop.f32.mrb[0].mxu0
      %v609 = vadd.f32 0.0, %v608
      %v610 = vpop.f32.mrb[0].mxu0
      %611 = vmatprep.mubr.bf16.mxu0 0
      %612 = vmatmul.mubr.bf16.gmra.mrb[0].mxu0 %v450
      %v613 = vpop.f32.mrb[0].mxu0
      %v614 = vadd.f32 0.0, %v613
      %v615 = vpop.f32.mrb[0].mxu0
      %v616 = vpop.f32.mrb[0].mxu0
      %v617 = vadd.f32 0.0, %v616
      %v618 = vpop.f32.mrb[0].mxu0
      %619 = vdwg.mxu0
      %v621 = vsel %vm403, %v368, 0
      %v624 = vsel %vm403, %v369, 0
      %v627 = vsel %vm403, %v370, 0
      %v630 = vsel %vm403, %v371, 0
      %v633 = vsel %vm403, %v372, 0
      %v636 = vsel %vm403, %v373, 0
      %v639 = vsel %vm403, %v374, 0
      %v642 = vsel %vm403, %v375, 0
      %v645 = vsel %vm403, %v376, 0
      %v648 = vsel %vm403, %v377, 0
      %v651 = vsel %vm403, %v378, 0
      %v654 = vsel %vm403, %v379, 0
      %v657 = vsel %vm403, %v380, 0
      %v660 = vsel %vm403, %v381, 0
      %v663 = vsel %vm403, %v382, 0
      %v666 = vsel %vm403, %v383, 0
      %v669 = vand.u32 %v384, %v455
      %671 = vmatprep.subr.bf16.mxu0 0
      %672 = vmatpush1.bf16.msra.mxu0 %v669
      %673 = vmatprep.subr.bf16.mxu0 0
      %674 = vmatpush1.bf16.msra.mxu0 0
      %675 = vmatprep.subr.bf16.mxu0 0
      %676 = vmatpush1.bf16.msra.mxu0 0
      %677 = vmatprep.subr.bf16.mxu0 0
      %678 = vmatpush1.bf16.msra.mxu0 0
      %679 = vmatprep.subr.bf16.mxu0 0
      %680 = vmatpush1.bf16.msra.mxu0 0
      %681 = vmatprep.subr.bf16.mxu0 0
      %682 = vmatpush1.bf16.msra.mxu0 0
      %683 = vmatprep.subr.bf16.mxu0 0
      %684 = vmatpush1.bf16.msra.mxu0 0
      %685 = vmatprep.subr.bf16.mxu0 0
      %686 = vmatpush1.bf16.msra.mxu0 0
      %687 = vmatprep.subr.bf16.mxu0 0
      %688 = vmatpush1.bf16.msra.mxu0 0
      %689 = vmatprep.subr.bf16.mxu0 0
      %690 = vmatpush1.bf16.msra.mxu0 0
      %691 = vmatprep.subr.bf16.mxu0 0
      %692 = vmatpush1.bf16.msra.mxu0 0
      %693 = vmatprep.subr.bf16.mxu0 0
      %694 = vmatpush1.bf16.msra.mxu0 0
      %695 = vmatprep.subr.bf16.mxu0 0
      %696 = vmatpush1.bf16.msra.mxu0 0
      %697 = vmatprep.subr.bf16.mxu0 0
      %698 = vmatpush1.bf16.msra.mxu0 0
      %699 = vmatprep.subr.bf16.mxu0 0
      %700 = vmatpush1.bf16.msra.mxu0 0
      %701 = vmatprep.subr.bf16.mxu0 0
      %702 = vmatpush1.bf16.msra.mxu0 0
      %703 = vmatprep.mubr.bf16.mxu0 0
      %704 = vmatmul.mubr.bf16.gmra.mrb[0].mxu0 %v621
      %v705 = vpop.f32.mrb[0].mxu0
      %v706 = vadd.f32 %v494, %v705
      %v707 = vpop.f32.mrb[0].mxu0
      %v708 = vpop.f32.mrb[0].mxu0
      %v709 = vadd.f32 %v497, %v708
      %v710 = vpop.f32.mrb[0].mxu0
      %711 = vmatprep.mubr.bf16.mxu0 0
      %712 = vmatmul.mubr.bf16.gmra.mrb[0].mxu0 %v624
      %v713 = vpop.f32.mrb[0].mxu0
      %v714 = vadd.f32 %v502, %v713
      %v715 = vpop.f32.mrb[0].mxu0
      %v716 = vpop.f32.mrb[0].mxu0
      %v717 = vadd.f32 %v505, %v716
      %v718 = vpop.f32.mrb[0].mxu0
      %719 = vmatprep.mubr.bf16.mxu0 0
      %720 = vmatmul.mubr.bf16.gmra.mrb[0].mxu0 %v627
      %v721 = vpop.f32.mrb[0].mxu0
      %v722 = vadd.f32 %v510, %v721
      %v723 = vpop.f32.mrb[0].mxu0
      %v724 = vpop.f32.mrb[0].mxu0
      %v725 = vadd.f32 %v513, %v724
      %v726 = vpop.f32.mrb[0].mxu0
      %727 = vmatprep.mubr.bf16.mxu0 0
      %728 = vmatmul.mubr.bf16.gmra.mrb[0].mxu0 %v630
      %v729 = vpop.f32.mrb[0].mxu0
      %v730 = vadd.f32 %v518, %v729
      %v731 = vpop.f32.mrb[0].mxu0
      %v732 = vpop.f32.mrb[0].mxu0
      %v733 = vadd.f32 %v521, %v732
      %v734 = vpop.f32.mrb[0].mxu0
      %735 = vmatprep.mubr.bf16.mxu0 0
      %736 = vmatmul.mubr.bf16.gmra.mrb[0].mxu0 %v633
      %v737 = vpop.f32.mrb[0].mxu0
      %v738 = vadd.f32 %v526, %v737
      %v739 = vpop.f32.mrb[0].mxu0
      %v740 = vpop.f32.mrb[0].mxu0
      %v741 = vadd.f32 %v529, %v740
      %v742 = vpop.f32.mrb[0].mxu0
      %743 = vmatprep.mubr.bf16.mxu0 0
      %744 = vmatmul.mubr.bf16.gmra.mrb[0].mxu0 %v636
      %v745 = vpop.f32.mrb[0].mxu0
      %v746 = vadd.f32 %v534, %v745
      %v747 = vpop.f32.mrb[0].mxu0
      %v748 = vpop.f32.mrb[0].mxu0
      %v749 = vadd.f32 %v537, %v748
      %v750 = vpop.f32.mrb[0].mxu0
      %751 = vmatprep.mubr.bf16.mxu0 0
      %752 = vmatmul.mubr.bf16.gmra.mrb[0].mxu0 %v639
      %v753 = vpop.f32.mrb[0].mxu0
      %v754 = vadd.f32 %v542, %v753
      %v755 = vpop.f32.mrb[0].mxu0
      %v756 = vpop.f32.mrb[0].mxu0
      %v757 = vadd.f32 %v545, %v756
      %v758 = vpop.f32.mrb[0].mxu0
      %759 = vmatprep.mubr.bf16.mxu0 0
      %760 = vmatmul.mubr.bf16.gmra.mrb[0].mxu0 %v642
      %v761 = vpop.f32.mrb[0].mxu0
      %v762 = vadd.f32 %v550, %v761
      %v763 = vpop.f32.mrb[0].mxu0
      %v764 = vpop.f32.mrb[0].mxu0
      %v765 = vadd.f32 %v553, %v764
      %v766 = vpop.f32.mrb[0].mxu0
      %767 = vmatprep.mubr.bf16.mxu0 0
      %768 = vmatmul.mubr.bf16.gmra.mrb[0].mxu0 %v645
      %v769 = vpop.f32.mrb[0].mxu0
      %v770 = vadd.f32 %v558, %v769
      %v771 = vpop.f32.mrb[0].mxu0
      %v772 = vpop.f32.mrb[0].mxu0
      %v773 = vadd.f32 %v561, %v772
      %v774 = vpop.f32.mrb[0].mxu0
      %775 = vmatprep.mubr.bf16.mxu0 0
      %776 = vmatmul.mubr.bf16.gmra.mrb[0].mxu0 %v648
      %v777 = vpop.f32.mrb[0].mxu0
      %v778 = vadd.f32 %v566, %v777
      %v779 = vpop.f32.mrb[0].mxu0
      %v780 = vpop.f32.mrb[0].mxu0
      %v781 = vadd.f32 %v569, %v780
      %v782 = vpop.f32.mrb[0].mxu0
      %783 = vmatprep.mubr.bf16.mxu0 0
      %784 = vmatmul.mubr.bf16.gmra.mrb[0].mxu0 %v651
      %v785 = vpop.f32.mrb[0].mxu0
      %v786 = vadd.f32 %v574, %v785
      %v787 = vpop.f32.mrb[0].mxu0
      %v788 = vpop.f32.mrb[0].mxu0
      %v789 = vadd.f32 %v577, %v788
      %v790 = vpop.f32.mrb[0].mxu0
      %791 = vmatprep.mubr.bf16.mxu0 0
      %792 = vmatmul.mubr.bf16.gmra.mrb[0].mxu0 %v654
      %v793 = vpop.f32.mrb[0].mxu0
      %v794 = vadd.f32 %v582, %v793
      %v795 = vpop.f32.mrb[0].mxu0
      %v796 = vpop.f32.mrb[0].mxu0
      %v797 = vadd.f32 %v585, %v796
      %v798 = vpop.f32.mrb[0].mxu0
      %799 = vmatprep.mubr.bf16.mxu0 0
      %800 = vmatmul.mubr.bf16.gmra.mrb[0].mxu0 %v657
      %v801 = vpop.f32.mrb[0].mxu0
      %v802 = vadd.f32 %v590, %v801
      %v803 = vpop.f32.mrb[0].mxu0
      %v804 = vpop.f32.mrb[0].mxu0
      %v805 = vadd.f32 %v593, %v804
      %v806 = vpop.f32.mrb[0].mxu0
      %807 = vmatprep.mubr.bf16.mxu0 0
      %808 = vmatmul.mubr.bf16.gmra.mrb[0].mxu0 %v660
      %v809 = vpop.f32.mrb[0].mxu0
      %v810 = vadd.f32 %v598, %v809
      %v811 = vpop.f32.mrb[0].mxu0
      %v812 = vpop.f32.mrb[0].mxu0
      %v813 = vadd.f32 %v601, %v812
      %v814 = vpop.f32.mrb[0].mxu0
      %815 = vmatprep.mubr.bf16.mxu0 0
      %816 = vmatmul.mubr.bf16.gmra.mrb[0].mxu0 %v663
      %v817 = vpop.f32.mrb[0].mxu0
      %v818 = vadd.f32 %v606, %v817
      %v819 = vpop.f32.mrb[0].mxu0
      %v820 = vpop.f32.mrb[0].mxu0
      %v821 = vadd.f32 %v609, %v820
      %v822 = vpop.f32.mrb[0].mxu0
      %823 = vmatprep.mubr.bf16.mxu0 0
      %824 = vmatmul.mubr.bf16.gmra.mrb[0].mxu0 %v666
      %v825 = vpop.f32.mrb[0].mxu0
      %v826 = vadd.f32 %v614, %v825
      %v827 = vpop.f32.mrb[0].mxu0
      %v828 = vpop.f32.mrb[0].mxu0
      %v829 = vadd.f32 %v617, %v828
      %v830 = vpop.f32.mrb[0].mxu0
      %831 = vdwg.mxu0
      %vm880 = vcmask 1046528
      %v881 = vrot.slane %v200, 1
      %v882 = vrot.slane %v201, 1
      %v883 = vsel %vm880, %v881, %v882
      %v884 = vrot.slane %v202, 1
      %v885 = vsel %vm880, %v882, %v884
      %v886 = vrot.slane %v203, 1
      %v887 = vrot.slane %v204, 1
      %v888 = vsel %vm880, %v886, %v887
      %v889 = vrot.slane %v205, 1
      %v890 = vsel %vm880, %v887, %v889
      %v891 = vrot.slane %v206, 1
      %v892 = vrot.slane %v207, 1
      %v893 = vsel %vm880, %v891, %v892
      %v894 = vrot.slane %v208, 1
      %v895 = vsel %vm880, %v892, %v894
      %v896 = vrot.slane %v209, 1
      %v897 = vrot.slane %v210, 1
      %v898 = vsel %vm880, %v896, %v897
      %v899 = vrot.slane %v211, 1
      %v900 = vsel %vm880, %v897, %v899
      %v901 = vrot.slane %v212, 1
      %v902 = vrot.slane %v213, 1
      %v903 = vsel %vm880, %v901, %v902
      %v904 = vrot.slane %v214, 1
      %v905 = vsel %vm880, %v902, %v904
      %v906 = vrot.slane %v215, 1
      %v907 = vrot.slane %v216, 1
      %v908 = vsel %vm880, %v906, %v907
      %v909 = vrot.slane %v217, 1
      %v910 = vsel %vm880, %v907, %v909
      %v911 = vrot.slane %v218, 1
      %v912 = vrot.slane %v219, 1
      %v913 = vsel %vm880, %v911, %v912
      %v914 = vrot.slane %v220, 1
      %v915 = vsel %vm880, %v912, %v914
      %v916 = vrot.slane %v221, 1
      %v917 = vrot.slane %v222, 1
      %v918 = vsel %vm880, %v916, %v917
      %v919 = vrot.slane %v223, 1
      %v920 = vsel %vm880, %v917, %v919
      %v921 = vrot.slane %v224, 1
      %v922 = vrot.slane %v225, 1
      %v923 = vsel %vm880, %v921, %v922
      %v924 = vrot.slane %v226, 1
      %v925 = vsel %vm880, %v922, %v924
      %v926 = vrot.slane %v227, 1
      %v927 = vrot.slane %v228, 1
      %v928 = vsel %vm880, %v926, %v927
      %v929 = vrot.slane %v229, 1
      %v930 = vsel %vm880, %v927, %v929
      %v931 = vrot.slane %v230, 1
      %v932 = vrot.slane %v231, 1
      %v933 = vsel %vm880, %v931, %v932
      %v934 = vrot.slane %v232, 1
      %v935 = vsel %vm880, %v932, %v934
      %v936 = vrot.slane %v233, 1
      %v937 = vrot.slane %v234, 1
      %v938 = vsel %vm880, %v936, %v937
      %v939 = vrot.slane %v235, 1
      %v940 = vsel %vm880, %v937, %v939
      %v941 = vrot.slane %v236, 1
      %v942 = vrot.slane %v237, 1
      %v943 = vsel %vm880, %v941, %v942
      %v944 = vrot.slane %v238, 1
      %v945 = vsel %vm880, %v942, %v944
      %v946 = vrot.slane %v239, 1
      %v947 = vrot.slane %v240, 1
      %v948 = vsel %vm880, %v946, %v947
      %v949 = vrot.slane %v241, 1
      %v950 = vsel %vm880, %v947, %v949
      %v951 = vrot.slane %v242, 1
      %v952 = vrot.slane %v243, 1
      %v953 = vsel %vm880, %v951, %v952
      %v954 = vrot.slane %v244, 1
      %v955 = vsel %vm880, %v952, %v954
      %v956 = vrot.slane %v245, 1
      %v957 = vrot.slane %v246, 1
      %v958 = vsel %vm880, %v956, %v957
      %v959 = vrot.slane %v247, 1
      %v960 = vsel %vm880, %v957, %v959
      %v993 = vpack.c.bf16 %v885, %v883
      %v994 = vpack.c.bf16 %v890, %v888
      %v995 = vpack.c.bf16 %v895, %v893
      %v996 = vpack.c.bf16 %v900, %v898
      %v997 = vpack.c.bf16 %v905, %v903
      %v998 = vpack.c.bf16 %v910, %v908
      %v999 = vpack.c.bf16 %v915, %v913
      %v1000 = vpack.c.bf16 %v920, %v918
      %v1001 = vpack.c.bf16 %v925, %v923
      %v1002 = vpack.c.bf16 %v930, %v928
      %v1003 = vpack.c.bf16 %v935, %v933
      %v1004 = vpack.c.bf16 %v940, %v938
      %v1005 = vpack.c.bf16 %v945, %v943
      %v1006 = vpack.c.bf16 %v950, %v948
      %v1007 = vpack.c.bf16 %v955, %v953
      %v1008 = vpack.c.bf16 %v960, %v958
      %s1009 = scalar_lea.vmem %s1, 4
      %v1010 = vld [vmem:[%s1009] sm:$0x3]
      %v1012 = vsel %vm403, %v993, 0
      %v1015 = vsel %vm403, %v994, 0
      %v1018 = vsel %vm403, %v995, 0
      %v1021 = vsel %vm403, %v996, 0
      %v1024 = vsel %vm403, %v997, 0
      %v1027 = vsel %vm403, %v998, 0
      %v1030 = vsel %vm403, %v999, 0
      %v1033 = vsel %vm403, %v1000, 0
      %v1036 = vsel %vm403, %v1001, 0
      %v1039 = vsel %vm403, %v1002, 0
      %v1042 = vsel %vm403, %v1003, 0
      %v1045 = vsel %vm403, %v1004, 0
      %v1048 = vsel %vm403, %v1005, 0
      %v1051 = vsel %vm403, %v1006, 0
      %v1054 = vsel %vm403, %v1007, 0
      %v1057 = vsel %vm403, %v1008, 0
      %v1060 = vand.u32 %v1010, %v455
      %1062 = vmatprep.subr.bf16.mxu0 0
      %1063 = vmatpush1.bf16.msra.mxu0 %v1060
      %1064 = vmatprep.subr.bf16.mxu0 0
      %1065 = vmatpush1.bf16.msra.mxu0 0
      %1066 = vmatprep.subr.bf16.mxu0 0
      %1067 = vmatpush1.bf16.msra.mxu0 0
      %1068 = vmatprep.subr.bf16.mxu0 0
      %1069 = vmatpush1.bf16.msra.mxu0 0
      %1070 = vmatprep.subr.bf16.mxu0 0
      %1071 = vmatpush1.bf16.msra.mxu0 0
      %1072 = vmatprep.subr.bf16.mxu0 0
      %1073 = vmatpush1.bf16.msra.mxu0 0
      %1074 = vmatprep.subr.bf16.mxu0 0
      %1075 = vmatpush1.bf16.msra.mxu0 0
      %1076 = vmatprep.subr.bf16.mxu0 0
      %1077 = vmatpush1.bf16.msra.mxu0 0
      %1078 = vmatprep.subr.bf16.mxu0 0
      %1079 = vmatpush1.bf16.msra.mxu0 0
      %1080 = vmatprep.subr.bf16.mxu0 0
      %1081 = vmatpush1.bf16.msra.mxu0 0
      %1082 = vmatprep.subr.bf16.mxu0 0
      %1083 = vmatpush1.bf16.msra.mxu0 0
      %1084 = vmatprep.subr.bf16.mxu0 0
      %1085 = vmatpush1.bf16.msra.mxu0 0
      %1086 = vmatprep.subr.bf16.mxu0 0
      %1087 = vmatpush1.bf16.msra.mxu0 0
      %1088 = vmatprep.subr.bf16.mxu0 0
      %1089 = vmatpush1.bf16.msra.mxu0 0
      %1090 = vmatprep.subr.bf16.mxu0 0
      %1091 = vmatpush1.bf16.msra.mxu0 0
      %1092 = vmatprep.subr.bf16.mxu0 0
      %1093 = vmatpush1.bf16.msra.mxu0 0
      %1094 = vmatprep.mubr.bf16.mxu0 0
      %1095 = vmatmul.mubr.bf16.gmra.mrb[0].mxu0 %v1012
      %v1096 = vpop.f32.mrb[0].mxu0
      %v1097 = vadd.f32 0.0, %v1096
      %v1098 = vpop.f32.mrb[0].mxu0
      %v1099 = vpop.f32.mrb[0].mxu0
      %v1100 = vadd.f32 0.0, %v1099
      %v1101 = vpop.f32.mrb[0].mxu0
      %1102 = vmatprep.mubr.bf16.mxu0 0
      %1103 = vmatmul.mubr.bf16.gmra.mrb[0].mxu0 %v1015
      %v1104 = vpop.f32.mrb[0].mxu0
      %v1105 = vadd.f32 0.0, %v1104
      %v1106 = vpop.f32.mrb[0].mxu0
      %v1107 = vpop.f32.mrb[0].mxu0
      %v1108 = vadd.f32 0.0, %v1107
      %v1109 = vpop.f32.mrb[0].mxu0
      %1110 = vmatprep.mubr.bf16.mxu0 0
      %1111 = vmatmul.mubr.bf16.gmra.mrb[0].mxu0 %v1018
      %v1112 = vpop.f32.mrb[0].mxu0
      %v1113 = vadd.f32 0.0, %v1112
      %v1114 = vpop.f32.mrb[0].mxu0
      %v1115 = vpop.f32.mrb[0].mxu0
      %v1116 = vadd.f32 0.0, %v1115
      %v1117 = vpop.f32.mrb[0].mxu0
      %1118 = vmatprep.mubr.bf16.mxu0 0
      %1119 = vmatmul.mubr.bf16.gmra.mrb[0].mxu0 %v1021
      %v1120 = vpop.f32.mrb[0].mxu0
      %v1121 = vadd.f32 0.0, %v1120
      %v1122 = vpop.f32.mrb[0].mxu0
      %v1123 = vpop.f32.mrb[0].mxu0
      %v1124 = vadd.f32 0.0, %v1123
      %v1125 = vpop.f32.mrb[0].mxu0
      %1126 = vmatprep.mubr.bf16.mxu0 0
      %1127 = vmatmul.mubr.bf16.gmra.mrb[0].mxu0 %v1024
      %v1128 = vpop.f32.mrb[0].mxu0
      %v1129 = vadd.f32 0.0, %v1128
      %v1130 = vpop.f32.mrb[0].mxu0
      %v1131 = vpop.f32.mrb[0].mxu0
      %v1132 = vadd.f32 0.0, %v1131
      %v1133 = vpop.f32.mrb[0].mxu0
      %1134 = vmatprep.mubr.bf16.mxu0 0
      %1135 = vmatmul.mubr.bf16.gmra.mrb[0].mxu0 %v1027
      %v1136 = vpop.f32.mrb[0].mxu0
      %v1137 = vadd.f32 0.0, %v1136
      %v1138 = vpop.f32.mrb[0].mxu0
      %v1139 = vpop.f32.mrb[0].mxu0
      %v1140 = vadd.f32 0.0, %v1139
      %v1141 = vpop.f32.mrb[0].mxu0
      %1142 = vmatprep.mubr.bf16.mxu0 0
      %1143 = vmatmul.mubr.bf16.gmra.mrb[0].mxu0 %v1030
      %v1144 = vpop.f32.mrb[0].mxu0
      %v1145 = vadd.f32 0.0, %v1144
      %v1146 = vpop.f32.mrb[0].mxu0
      %v1147 = vpop.f32.mrb[0].mxu0
      %v1148 = vadd.f32 0.0, %v1147
      %v1149 = vpop.f32.mrb[0].mxu0
      %1150 = vmatprep.mubr.bf16.mxu0 0
      %1151 = vmatmul.mubr.bf16.gmra.mrb[0].mxu0 %v1033
      %v1152 = vpop.f32.mrb[0].mxu0
      %v1153 = vadd.f32 0.0, %v1152
      %v1154 = vpop.f32.mrb[0].mxu0
      %v1155 = vpop.f32.mrb[0].mxu0
      %v1156 = vadd.f32 0.0, %v1155
      %v1157 = vpop.f32.mrb[0].mxu0
      %1158 = vmatprep.mubr.bf16.mxu0 0
      %1159 = vmatmul.mubr.bf16.gmra.mrb[0].mxu0 %v1036
      %v1160 = vpop.f32.mrb[0].mxu0
      %v1161 = vadd.f32 0.0, %v1160
      %v1162 = vpop.f32.mrb[0].mxu0
      %v1163 = vpop.f32.mrb[0].mxu0
      %v1164 = vadd.f32 0.0, %v1163
      %v1165 = vpop.f32.mrb[0].mxu0
      %1166 = vmatprep.mubr.bf16.mxu0 0
      %1167 = vmatmul.mubr.bf16.gmra.mrb[0].mxu0 %v1039
      %v1168 = vpop.f32.mrb[0].mxu0
      %v1169 = vadd.f32 0.0, %v1168
      %v1170 = vpop.f32.mrb[0].mxu0
      %v1171 = vpop.f32.mrb[0].mxu0
      %v1172 = vadd.f32 0.0, %v1171
      %v1173 = vpop.f32.mrb[0].mxu0
      %1174 = vmatprep.mubr.bf16.mxu0 0
      %1175 = vmatmul.mubr.bf16.gmra.mrb[0].mxu0 %v1042
      %v1176 = vpop.f32.mrb[0].mxu0
      %v1177 = vadd.f32 0.0, %v1176
      %v1178 = vpop.f32.mrb[0].mxu0
      %v1179 = vpop.f32.mrb[0].mxu0
      %v1180 = vadd.f32 0.0, %v1179
      %v1181 = vpop.f32.mrb[0].mxu0
      %1182 = vmatprep.mubr.bf16.mxu0 0
      %1183 = vmatmul.mubr.bf16.gmra.mrb[0].mxu0 %v1045
      %v1184 = vpop.f32.mrb[0].mxu0
      %v1185 = vadd.f32 0.0, %v1184
      %v1186 = vpop.f32.mrb[0].mxu0
      %v1187 = vpop.f32.mrb[0].mxu0
      %v1188 = vadd.f32 0.0, %v1187
      %v1189 = vpop.f32.mrb[0].mxu0
      %1190 = vmatprep.mubr.bf16.mxu0 0
      %1191 = vmatmul.mubr.bf16.gmra.mrb[0].mxu0 %v1048
      %v1192 = vpop.f32.mrb[0].mxu0
      %v1193 = vadd.f32 0.0, %v1192
      %v1194 = vpop.f32.mrb[0].mxu0
      %v1195 = vpop.f32.mrb[0].mxu0
      %v1196 = vadd.f32 0.0, %v1195
      %v1197 = vpop.f32.mrb[0].mxu0
      %1198 = vmatprep.mubr.bf16.mxu0 0
      %1199 = vmatmul.mubr.bf16.gmra.mrb[0].mxu0 %v1051
      %v1200 = vpop.f32.mrb[0].mxu0
      %v1201 = vadd.f32 0.0, %v1200
      %v1202 = vpop.f32.mrb[0].mxu0
      %v1203 = vpop.f32.mrb[0].mxu0
      %v1204 = vadd.f32 0.0, %v1203
      %v1205 = vpop.f32.mrb[0].mxu0
      %1206 = vmatprep.mubr.bf16.mxu0 0
      %1207 = vmatmul.mubr.bf16.gmra.mrb[0].mxu0 %v1054
      %v1208 = vpop.f32.mrb[0].mxu0
      %v1209 = vadd.f32 0.0, %v1208
      %v1210 = vpop.f32.mrb[0].mxu0
      %v1211 = vpop.f32.mrb[0].mxu0
      %v1212 = vadd.f32 0.0, %v1211
      %v1213 = vpop.f32.mrb[0].mxu0
      %1214 = vmatprep.mubr.bf16.mxu0 0
      %1215 = vmatmul.mubr.bf16.gmra.mrb[0].mxu0 %v1057
      %v1216 = vpop.f32.mrb[0].mxu0
      %v1217 = vadd.f32 0.0, %v1216
      %v1218 = vpop.f32.mrb[0].mxu0
      %v1219 = vpop.f32.mrb[0].mxu0
      %v1220 = vadd.f32 0.0, %v1219
      %v1221 = vpop.f32.mrb[0].mxu0
      %1222 = vdwg.mxu0
      %v1223 = vadd.f32 %v706, %v1097
      %v1224 = vadd.f32 %v709, %v1100
      %v1225 = vadd.f32 %v714, %v1105
      %v1226 = vadd.f32 %v717, %v1108
      %v1227 = vadd.f32 %v722, %v1113
      %v1228 = vadd.f32 %v725, %v1116
      %v1229 = vadd.f32 %v730, %v1121
      %v1230 = vadd.f32 %v733, %v1124
      %v1231 = vadd.f32 %v738, %v1129
      %v1232 = vadd.f32 %v741, %v1132
      %v1233 = vadd.f32 %v746, %v1137
      %v1234 = vadd.f32 %v749, %v1140
      %v1235 = vadd.f32 %v754, %v1145
      %v1236 = vadd.f32 %v757, %v1148
      %v1237 = vadd.f32 %v762, %v1153
      %v1238 = vadd.f32 %v765, %v1156
      %v1239 = vadd.f32 %v770, %v1161
      %v1240 = vadd.f32 %v773, %v1164
      %v1241 = vadd.f32 %v778, %v1169
      %v1242 = vadd.f32 %v781, %v1172
      %v1243 = vadd.f32 %v786, %v1177
      %v1244 = vadd.f32 %v789, %v1180
      %v1245 = vadd.f32 %v794, %v1185
      %v1246 = vadd.f32 %v797, %v1188
      %v1247 = vadd.f32 %v802, %v1193
      %v1248 = vadd.f32 %v805, %v1196
      %v1249 = vadd.f32 %v810, %v1201
      %v1250 = vadd.f32 %v813, %v1204
      %v1251 = vadd.f32 %v818, %v1209
      %v1252 = vadd.f32 %v821, %v1212
      %v1253 = vadd.f32 %v826, %v1217
      %v1254 = vadd.f32 %v829, %v1220
      %v1255 = vpack.c.bf16 %v288, %v287
      %v1256 = vpack.c.bf16 %v291, %v290
      %v1257 = vpack.c.bf16 %v294, %v293
      %v1258 = vpack.c.bf16 %v297, %v296
      %v1259 = vpack.c.bf16 %v300, %v299
      %v1260 = vpack.c.bf16 %v303, %v302
      %v1261 = vpack.c.bf16 %v306, %v305
      %v1262 = vpack.c.bf16 %v309, %v308
      %v1263 = vpack.c.bf16 %v312, %v311
      %v1264 = vpack.c.bf16 %v315, %v314
      %v1265 = vpack.c.bf16 %v318, %v317
      %v1266 = vpack.c.bf16 %v321, %v320
      %v1267 = vpack.c.bf16 %v324, %v323
      %v1268 = vpack.c.bf16 %v327, %v326
      %v1269 = vpack.c.bf16 %v330, %v329
      %v1270 = vpack.c.bf16 %v333, %v332
      %s1271 = scalar_lea.vmem %s1, 6
      %v1272 = vld [vmem:[%s1271] sm:$0x3]
      %v1274 = vsel %vm403, %v1255, 0
      %v1277 = vsel %vm403, %v1256, 0
      %v1280 = vsel %vm403, %v1257, 0
      %v1283 = vsel %vm403, %v1258, 0
      %v1286 = vsel %vm403, %v1259, 0
      %v1289 = vsel %vm403, %v1260, 0
      %v1292 = vsel %vm403, %v1261, 0
      %v1295 = vsel %vm403, %v1262, 0
      %v1298 = vsel %vm403, %v1263, 0
      %v1301 = vsel %vm403, %v1264, 0
      %v1304 = vsel %vm403, %v1265, 0
      %v1307 = vsel %vm403, %v1266, 0
      %v1310 = vsel %vm403, %v1267, 0
      %v1313 = vsel %vm403, %v1268, 0
      %v1316 = vsel %vm403, %v1269, 0
      %v1319 = vsel %vm403, %v1270, 0
      %v1322 = vand.u32 %v1272, %v455
      %1324 = vmatprep.subr.bf16.mxu0 0
      %1325 = vmatpush1.bf16.msra.mxu0 %v1322
      %1326 = vmatprep.subr.bf16.mxu0 0
      %1327 = vmatpush1.bf16.msra.mxu0 0
      %1328 = vmatprep.subr.bf16.mxu0 0
      %1329 = vmatpush1.bf16.msra.mxu0 0
      %1330 = vmatprep.subr.bf16.mxu0 0
      %1331 = vmatpush1.bf16.msra.mxu0 0
      %1332 = vmatprep.subr.bf16.mxu0 0
      %1333 = vmatpush1.bf16.msra.mxu0 0
      %1334 = vmatprep.subr.bf16.mxu0 0
      %1335 = vmatpush1.bf16.msra.mxu0 0
      %1336 = vmatprep.subr.bf16.mxu0 0
      %1337 = vmatpush1.bf16.msra.mxu0 0
      %1338 = vmatprep.subr.bf16.mxu0 0
      %1339 = vmatpush1.bf16.msra.mxu0 0
      %1340 = vmatprep.subr.bf16.mxu0 0
      %1341 = vmatpush1.bf16.msra.mxu0 0
      %1342 = vmatprep.subr.bf16.mxu0 0
      %1343 = vmatpush1.bf16.msra.mxu0 0
      %1344 = vmatprep.subr.bf16.mxu0 0
      %1345 = vmatpush1.bf16.msra.mxu0 0
      %1346 = vmatprep.subr.bf16.mxu0 0
      %1347 = vmatpush1.bf16.msra.mxu0 0
      %1348 = vmatprep.subr.bf16.mxu0 0
      %1349 = vmatpush1.bf16.msra.mxu0 0
      %1350 = vmatprep.subr.bf16.mxu0 0
      %1351 = vmatpush1.bf16.msra.mxu0 0
      %1352 = vmatprep.subr.bf16.mxu0 0
      %1353 = vmatpush1.bf16.msra.mxu0 0
      %1354 = vmatprep.subr.bf16.mxu0 0
      %1355 = vmatpush1.bf16.msra.mxu0 0
      %1356 = vmatprep.mubr.bf16.mxu0 0
      %1357 = vmatmul.mubr.bf16.gmra.mrb[0].mxu0 %v1274
      %v1358 = vpop.f32.mrb[0].mxu0
      %v1359 = vadd.f32 0.0, %v1358
      %v1360 = vpop.f32.mrb[0].mxu0
      %v1361 = vpop.f32.mrb[0].mxu0
      %v1362 = vadd.f32 0.0, %v1361
      %v1363 = vpop.f32.mrb[0].mxu0
      %1364 = vmatprep.mubr.bf16.mxu0 0
      %1365 = vmatmul.mubr.bf16.gmra.mrb[0].mxu0 %v1277
      %v1366 = vpop.f32.mrb[0].mxu0
      %v1367 = vadd.f32 0.0, %v1366
      %v1368 = vpop.f32.mrb[0].mxu0
      %v1369 = vpop.f32.mrb[0].mxu0
      %v1370 = vadd.f32 0.0, %v1369
      %v1371 = vpop.f32.mrb[0].mxu0
      %1372 = vmatprep.mubr.bf16.mxu0 0
      %1373 = vmatmul.mubr.bf16.gmra.mrb[0].mxu0 %v1280
      %v1374 = vpop.f32.mrb[0].mxu0
      %v1375 = vadd.f32 0.0, %v1374
      %v1376 = vpop.f32.mrb[0].mxu0
      %v1377 = vpop.f32.mrb[0].mxu0
      %v1378 = vadd.f32 0.0, %v1377
      %v1379 = vpop.f32.mrb[0].mxu0
      %1380 = vmatprep.mubr.bf16.mxu0 0
      %1381 = vmatmul.mubr.bf16.gmra.mrb[0].mxu0 %v1283
      %v1382 = vpop.f32.mrb[0].mxu0
      %v1383 = vadd.f32 0.0, %v1382
      %v1384 = vpop.f32.mrb[0].mxu0
      %v1385 = vpop.f32.mrb[0].mxu0
      %v1386 = vadd.f32 0.0, %v1385
      %v1387 = vpop.f32.mrb[0].mxu0
      %1388 = vmatprep.mubr.bf16.mxu0 0
      %1389 = vmatmul.mubr.bf16.gmra.mrb[0].mxu0 %v1286
      %v1390 = vpop.f32.mrb[0].mxu0
      %v1391 = vadd.f32 0.0, %v1390
      %v1392 = vpop.f32.mrb[0].mxu0
      %v1393 = vpop.f32.mrb[0].mxu0
      %v1394 = vadd.f32 0.0, %v1393
      %v1395 = vpop.f32.mrb[0].mxu0
      %1396 = vmatprep.mubr.bf16.mxu0 0
      %1397 = vmatmul.mubr.bf16.gmra.mrb[0].mxu0 %v1289
      %v1398 = vpop.f32.mrb[0].mxu0
      %v1399 = vadd.f32 0.0, %v1398
      %v1400 = vpop.f32.mrb[0].mxu0
      %v1401 = vpop.f32.mrb[0].mxu0
      %v1402 = vadd.f32 0.0, %v1401
      %v1403 = vpop.f32.mrb[0].mxu0
      %1404 = vmatprep.mubr.bf16.mxu0 0
      %1405 = vmatmul.mubr.bf16.gmra.mrb[0].mxu0 %v1292
      %v1406 = vpop.f32.mrb[0].mxu0
      %v1407 = vadd.f32 0.0, %v1406
      %v1408 = vpop.f32.mrb[0].mxu0
      %v1409 = vpop.f32.mrb[0].mxu0
      %v1410 = vadd.f32 0.0, %v1409
      %v1411 = vpop.f32.mrb[0].mxu0
      %1412 = vmatprep.mubr.bf16.mxu0 0
      %1413 = vmatmul.mubr.bf16.gmra.mrb[0].mxu0 %v1295
      %v1414 = vpop.f32.mrb[0].mxu0
      %v1415 = vadd.f32 0.0, %v1414
      %v1416 = vpop.f32.mrb[0].mxu0
      %v1417 = vpop.f32.mrb[0].mxu0
      %v1418 = vadd.f32 0.0, %v1417
      %v1419 = vpop.f32.mrb[0].mxu0
      %1420 = vmatprep.mubr.bf16.mxu0 0
      %1421 = vmatmul.mubr.bf16.gmra.mrb[0].mxu0 %v1298
      %v1422 = vpop.f32.mrb[0].mxu0
      %v1423 = vadd.f32 0.0, %v1422
      %v1424 = vpop.f32.mrb[0].mxu0
      %v1425 = vpop.f32.mrb[0].mxu0
      %v1426 = vadd.f32 0.0, %v1425
      %v1427 = vpop.f32.mrb[0].mxu0
      %1428 = vmatprep.mubr.bf16.mxu0 0
      %1429 = vmatmul.mubr.bf16.gmra.mrb[0].mxu0 %v1301
      %v1430 = vpop.f32.mrb[0].mxu0
      %v1431 = vadd.f32 0.0, %v1430
      %v1432 = vpop.f32.mrb[0].mxu0
      %v1433 = vpop.f32.mrb[0].mxu0
      %v1434 = vadd.f32 0.0, %v1433
      %v1435 = vpop.f32.mrb[0].mxu0
      %1436 = vmatprep.mubr.bf16.mxu0 0
      %1437 = vmatmul.mubr.bf16.gmra.mrb[0].mxu0 %v1304
      %v1438 = vpop.f32.mrb[0].mxu0
      %v1439 = vadd.f32 0.0, %v1438
      %v1440 = vpop.f32.mrb[0].mxu0
      %v1441 = vpop.f32.mrb[0].mxu0
      %v1442 = vadd.f32 0.0, %v1441
      %v1443 = vpop.f32.mrb[0].mxu0
      %1444 = vmatprep.mubr.bf16.mxu0 0
      %1445 = vmatmul.mubr.bf16.gmra.mrb[0].mxu0 %v1307
      %v1446 = vpop.f32.mrb[0].mxu0
      %v1447 = vadd.f32 0.0, %v1446
      %v1448 = vpop.f32.mrb[0].mxu0
      %v1449 = vpop.f32.mrb[0].mxu0
      %v1450 = vadd.f32 0.0, %v1449
      %v1451 = vpop.f32.mrb[0].mxu0
      %1452 = vmatprep.mubr.bf16.mxu0 0
      %1453 = vmatmul.mubr.bf16.gmra.mrb[0].mxu0 %v1310
      %v1454 = vpop.f32.mrb[0].mxu0
      %v1455 = vadd.f32 0.0, %v1454
      %v1456 = vpop.f32.mrb[0].mxu0
      %v1457 = vpop.f32.mrb[0].mxu0
      %v1458 = vadd.f32 0.0, %v1457
      %v1459 = vpop.f32.mrb[0].mxu0
      %1460 = vmatprep.mubr.bf16.mxu0 0
      %1461 = vmatmul.mubr.bf16.gmra.mrb[0].mxu0 %v1313
      %v1462 = vpop.f32.mrb[0].mxu0
      %v1463 = vadd.f32 0.0, %v1462
      %v1464 = vpop.f32.mrb[0].mxu0
      %v1465 = vpop.f32.mrb[0].mxu0
      %v1466 = vadd.f32 0.0, %v1465
      %v1467 = vpop.f32.mrb[0].mxu0
      %1468 = vmatprep.mubr.bf16.mxu0 0
      %1469 = vmatmul.mubr.bf16.gmra.mrb[0].mxu0 %v1316
      %v1470 = vpop.f32.mrb[0].mxu0
      %v1471 = vadd.f32 0.0, %v1470
      %v1472 = vpop.f32.mrb[0].mxu0
      %v1473 = vpop.f32.mrb[0].mxu0
      %v1474 = vadd.f32 0.0, %v1473
      %v1475 = vpop.f32.mrb[0].mxu0
      %1476 = vmatprep.mubr.bf16.mxu0 0
      %1477 = vmatmul.mubr.bf16.gmra.mrb[0].mxu0 %v1319
      %v1478 = vpop.f32.mrb[0].mxu0
      %v1479 = vadd.f32 0.0, %v1478
      %v1480 = vpop.f32.mrb[0].mxu0
      %v1481 = vpop.f32.mrb[0].mxu0
      %v1482 = vadd.f32 0.0, %v1481
      %v1483 = vpop.f32.mrb[0].mxu0
      %1484 = vdwg.mxu0
      %v1485 = vadd.f32 %v1223, %v1359
      %v1486 = vadd.f32 %v1224, %v1362
      %v1487 = vadd.f32 %v1225, %v1367
      %v1488 = vadd.f32 %v1226, %v1370
      %v1489 = vadd.f32 %v1227, %v1375
      %v1490 = vadd.f32 %v1228, %v1378
      %v1491 = vadd.f32 %v1229, %v1383
      %v1492 = vadd.f32 %v1230, %v1386
      %v1493 = vadd.f32 %v1231, %v1391
      %v1494 = vadd.f32 %v1232, %v1394
      %v1495 = vadd.f32 %v1233, %v1399
      %v1496 = vadd.f32 %v1234, %v1402
      %v1497 = vadd.f32 %v1235, %v1407
      %v1498 = vadd.f32 %v1236, %v1410
      %v1499 = vadd.f32 %v1237, %v1415
      %v1500 = vadd.f32 %v1238, %v1418
      %v1501 = vadd.f32 %v1239, %v1423
      %v1502 = vadd.f32 %v1240, %v1426
      %v1503 = vadd.f32 %v1241, %v1431
      %v1504 = vadd.f32 %v1242, %v1434
      %v1505 = vadd.f32 %v1243, %v1439
      %v1506 = vadd.f32 %v1244, %v1442
      %v1507 = vadd.f32 %v1245, %v1447
      %v1508 = vadd.f32 %v1246, %v1450
      %v1509 = vadd.f32 %v1247, %v1455
      %v1510 = vadd.f32 %v1248, %v1458
      %v1511 = vadd.f32 %v1249, %v1463
      %v1512 = vadd.f32 %v1250, %v1466
      %v1513 = vadd.f32 %v1251, %v1471
      %v1514 = vadd.f32 %v1252, %v1474
      %v1515 = vadd.f32 %v1253, %v1479
      %v1516 = vadd.f32 %v1254, %v1482
      %v1517 = vpack.c.bf16 %v337, %v336
      %v1518 = vpack.c.bf16 %v339, %v338
      %v1519 = vpack.c.bf16 %v341, %v340
      %v1520 = vpack.c.bf16 %v343, %v342
      %v1521 = vpack.c.bf16 %v345, %v344
      %v1522 = vpack.c.bf16 %v347, %v346
      %v1523 = vpack.c.bf16 %v349, %v348
      %v1524 = vpack.c.bf16 %v351, %v350
      %v1525 = vpack.c.bf16 %v353, %v352
      %v1526 = vpack.c.bf16 %v355, %v354
      %v1527 = vpack.c.bf16 %v357, %v356
      %v1528 = vpack.c.bf16 %v359, %v358
      %v1529 = vpack.c.bf16 %v361, %v360
      %v1530 = vpack.c.bf16 %v363, %v362
      %v1531 = vpack.c.bf16 %v365, %v364
      %v1532 = vpack.c.bf16 %v367, %v366
      %s1533 = scalar_lea.vmem %s1, 8
      %v1534 = vld [vmem:[%s1533] sm:$0x3]
      %v1536 = vsel %vm403, %v1517, 0
      %v1539 = vsel %vm403, %v1518, 0
      %v1542 = vsel %vm403, %v1519, 0
      %v1545 = vsel %vm403, %v1520, 0
      %v1548 = vsel %vm403, %v1521, 0
      %v1551 = vsel %vm403, %v1522, 0
      %v1554 = vsel %vm403, %v1523, 0
      %v1557 = vsel %vm403, %v1524, 0
      %v1560 = vsel %vm403, %v1525, 0
      %v1563 = vsel %vm403, %v1526, 0
      %v1566 = vsel %vm403, %v1527, 0
      %v1569 = vsel %vm403, %v1528, 0
      %v1572 = vsel %vm403, %v1529, 0
      %v1575 = vsel %vm403, %v1530, 0
      %v1578 = vsel %vm403, %v1531, 0
      %v1581 = vsel %vm403, %v1532, 0
      %v1584 = vand.u32 %v1534, %v455
      %1586 = vmatprep.subr.bf16.mxu0 0
      %1587 = vmatpush1.bf16.msra.mxu0 %v1584
      %1588 = vmatprep.subr.bf16.mxu0 0
      %1589 = vmatpush1.bf16.msra.mxu0 0
      %1590 = vmatprep.subr.bf16.mxu0 0
      %1591 = vmatpush1.bf16.msra.mxu0 0
      %1592 = vmatprep.subr.bf16.mxu0 0
      %1593 = vmatpush1.bf16.msra.mxu0 0
      %1594 = vmatprep.subr.bf16.mxu0 0
      %1595 = vmatpush1.bf16.msra.mxu0 0
      %1596 = vmatprep.subr.bf16.mxu0 0
      %1597 = vmatpush1.bf16.msra.mxu0 0
      %1598 = vmatprep.subr.bf16.mxu0 0
      %1599 = vmatpush1.bf16.msra.mxu0 0
      %1600 = vmatprep.subr.bf16.mxu0 0
      %1601 = vmatpush1.bf16.msra.mxu0 0
      %1602 = vmatprep.subr.bf16.mxu0 0
      %1603 = vmatpush1.bf16.msra.mxu0 0
      %1604 = vmatprep.subr.bf16.mxu0 0
      %1605 = vmatpush1.bf16.msra.mxu0 0
      %1606 = vmatprep.subr.bf16.mxu0 0
      %1607 = vmatpush1.bf16.msra.mxu0 0
      %1608 = vmatprep.subr.bf16.mxu0 0
      %1609 = vmatpush1.bf16.msra.mxu0 0
      %1610 = vmatprep.subr.bf16.mxu0 0
      %1611 = vmatpush1.bf16.msra.mxu0 0
      %1612 = vmatprep.subr.bf16.mxu0 0
      %1613 = vmatpush1.bf16.msra.mxu0 0
      %1614 = vmatprep.subr.bf16.mxu0 0
      %1615 = vmatpush1.bf16.msra.mxu0 0
      %1616 = vmatprep.subr.bf16.mxu0 0
      %1617 = vmatpush1.bf16.msra.mxu0 0
      %1618 = vmatprep.mubr.bf16.mxu0 0
      %1619 = vmatmul.mubr.bf16.gmra.mrb[0].mxu0 %v1536
      %v1620 = vpop.f32.mrb[0].mxu0
      %v1621 = vadd.f32 0.0, %v1620
      %v1622 = vpop.f32.mrb[0].mxu0
      %v1623 = vpop.f32.mrb[0].mxu0
      %v1624 = vadd.f32 0.0, %v1623
      %v1625 = vpop.f32.mrb[0].mxu0
      %1626 = vmatprep.mubr.bf16.mxu0 0
      %1627 = vmatmul.mubr.bf16.gmra.mrb[0].mxu0 %v1539
      %v1628 = vpop.f32.mrb[0].mxu0
      %v1629 = vadd.f32 0.0, %v1628
      %v1630 = vpop.f32.mrb[0].mxu0
      %v1631 = vpop.f32.mrb[0].mxu0
      %v1632 = vadd.f32 0.0, %v1631
      %v1633 = vpop.f32.mrb[0].mxu0
      %1634 = vmatprep.mubr.bf16.mxu0 0
      %1635 = vmatmul.mubr.bf16.gmra.mrb[0].mxu0 %v1542
      %v1636 = vpop.f32.mrb[0].mxu0
      %v1637 = vadd.f32 0.0, %v1636
      %v1638 = vpop.f32.mrb[0].mxu0
      %v1639 = vpop.f32.mrb[0].mxu0
      %v1640 = vadd.f32 0.0, %v1639
      %v1641 = vpop.f32.mrb[0].mxu0
      %1642 = vmatprep.mubr.bf16.mxu0 0
      %1643 = vmatmul.mubr.bf16.gmra.mrb[0].mxu0 %v1545
      %v1644 = vpop.f32.mrb[0].mxu0
      %v1645 = vadd.f32 0.0, %v1644
      %v1646 = vpop.f32.mrb[0].mxu0
      %v1647 = vpop.f32.mrb[0].mxu0
      %v1648 = vadd.f32 0.0, %v1647
      %v1649 = vpop.f32.mrb[0].mxu0
      %1650 = vmatprep.mubr.bf16.mxu0 0
      %1651 = vmatmul.mubr.bf16.gmra.mrb[0].mxu0 %v1548
      %v1652 = vpop.f32.mrb[0].mxu0
      %v1653 = vadd.f32 0.0, %v1652
      %v1654 = vpop.f32.mrb[0].mxu0
      %v1655 = vpop.f32.mrb[0].mxu0
      %v1656 = vadd.f32 0.0, %v1655
      %v1657 = vpop.f32.mrb[0].mxu0
      %1658 = vmatprep.mubr.bf16.mxu0 0
      %1659 = vmatmul.mubr.bf16.gmra.mrb[0].mxu0 %v1551
      %v1660 = vpop.f32.mrb[0].mxu0
      %v1661 = vadd.f32 0.0, %v1660
      %v1662 = vpop.f32.mrb[0].mxu0
      %v1663 = vpop.f32.mrb[0].mxu0
      %v1664 = vadd.f32 0.0, %v1663
      %v1665 = vpop.f32.mrb[0].mxu0
      %1666 = vmatprep.mubr.bf16.mxu0 0
      %1667 = vmatmul.mubr.bf16.gmra.mrb[0].mxu0 %v1554
      %v1668 = vpop.f32.mrb[0].mxu0
      %v1669 = vadd.f32 0.0, %v1668
      %v1670 = vpop.f32.mrb[0].mxu0
      %v1671 = vpop.f32.mrb[0].mxu0
      %v1672 = vadd.f32 0.0, %v1671
      %v1673 = vpop.f32.mrb[0].mxu0
      %1674 = vmatprep.mubr.bf16.mxu0 0
      %1675 = vmatmul.mubr.bf16.gmra.mrb[0].mxu0 %v1557
      %v1676 = vpop.f32.mrb[0].mxu0
      %v1677 = vadd.f32 0.0, %v1676
      %v1678 = vpop.f32.mrb[0].mxu0
      %v1679 = vpop.f32.mrb[0].mxu0
      %v1680 = vadd.f32 0.0, %v1679
      %v1681 = vpop.f32.mrb[0].mxu0
      %1682 = vmatprep.mubr.bf16.mxu0 0
      %1683 = vmatmul.mubr.bf16.gmra.mrb[0].mxu0 %v1560
      %v1684 = vpop.f32.mrb[0].mxu0
      %v1685 = vadd.f32 0.0, %v1684
      %v1686 = vpop.f32.mrb[0].mxu0
      %v1687 = vpop.f32.mrb[0].mxu0
      %v1688 = vadd.f32 0.0, %v1687
      %v1689 = vpop.f32.mrb[0].mxu0
      %1690 = vmatprep.mubr.bf16.mxu0 0
      %1691 = vmatmul.mubr.bf16.gmra.mrb[0].mxu0 %v1563
      %v1692 = vpop.f32.mrb[0].mxu0
      %v1693 = vadd.f32 0.0, %v1692
      %v1694 = vpop.f32.mrb[0].mxu0
      %v1695 = vpop.f32.mrb[0].mxu0
      %v1696 = vadd.f32 0.0, %v1695
      %v1697 = vpop.f32.mrb[0].mxu0
      %1698 = vmatprep.mubr.bf16.mxu0 0
      %1699 = vmatmul.mubr.bf16.gmra.mrb[0].mxu0 %v1566
      %v1700 = vpop.f32.mrb[0].mxu0
      %v1701 = vadd.f32 0.0, %v1700
      %v1702 = vpop.f32.mrb[0].mxu0
      %v1703 = vpop.f32.mrb[0].mxu0
      %v1704 = vadd.f32 0.0, %v1703
      %v1705 = vpop.f32.mrb[0].mxu0
      %1706 = vmatprep.mubr.bf16.mxu0 0
      %1707 = vmatmul.mubr.bf16.gmra.mrb[0].mxu0 %v1569
      %v1708 = vpop.f32.mrb[0].mxu0
      %v1709 = vadd.f32 0.0, %v1708
      %v1710 = vpop.f32.mrb[0].mxu0
      %v1711 = vpop.f32.mrb[0].mxu0
      %v1712 = vadd.f32 0.0, %v1711
      %v1713 = vpop.f32.mrb[0].mxu0
      %1714 = vmatprep.mubr.bf16.mxu0 0
      %1715 = vmatmul.mubr.bf16.gmra.mrb[0].mxu0 %v1572
      %v1716 = vpop.f32.mrb[0].mxu0
      %v1717 = vadd.f32 0.0, %v1716
      %v1718 = vpop.f32.mrb[0].mxu0
      %v1719 = vpop.f32.mrb[0].mxu0
      %v1720 = vadd.f32 0.0, %v1719
      %v1721 = vpop.f32.mrb[0].mxu0
      %1722 = vmatprep.mubr.bf16.mxu0 0
      %1723 = vmatmul.mubr.bf16.gmra.mrb[0].mxu0 %v1575
      %v1724 = vpop.f32.mrb[0].mxu0
      %v1725 = vadd.f32 0.0, %v1724
      %v1726 = vpop.f32.mrb[0].mxu0
      %v1727 = vpop.f32.mrb[0].mxu0
      %v1728 = vadd.f32 0.0, %v1727
      %v1729 = vpop.f32.mrb[0].mxu0
      %1730 = vmatprep.mubr.bf16.mxu0 0
      %1731 = vmatmul.mubr.bf16.gmra.mrb[0].mxu0 %v1578
      %v1732 = vpop.f32.mrb[0].mxu0
      %v1733 = vadd.f32 0.0, %v1732
      %v1734 = vpop.f32.mrb[0].mxu0
      %v1735 = vpop.f32.mrb[0].mxu0
      %v1736 = vadd.f32 0.0, %v1735
      %v1737 = vpop.f32.mrb[0].mxu0
      %1738 = vmatprep.mubr.bf16.mxu0 0
      %1739 = vmatmul.mubr.bf16.gmra.mrb[0].mxu0 %v1581
      %v1740 = vpop.f32.mrb[0].mxu0
      %v1741 = vadd.f32 0.0, %v1740
      %v1742 = vpop.f32.mrb[0].mxu0
      %v1743 = vpop.f32.mrb[0].mxu0
      %v1744 = vadd.f32 0.0, %v1743
      %v1745 = vpop.f32.mrb[0].mxu0
      %1746 = vdwg.mxu0
      %v1747 = vadd.f32 %v1485, %v1621
      %v1748 = vadd.f32 %v1486, %v1624
      %v1749 = vadd.f32 %v1487, %v1629
      %v1750 = vadd.f32 %v1488, %v1632
      %v1751 = vadd.f32 %v1489, %v1637
      %v1752 = vadd.f32 %v1490, %v1640
      %v1753 = vadd.f32 %v1491, %v1645
      %v1754 = vadd.f32 %v1492, %v1648
      %v1755 = vadd.f32 %v1493, %v1653
      %v1756 = vadd.f32 %v1494, %v1656
      %v1757 = vadd.f32 %v1495, %v1661
      %v1758 = vadd.f32 %v1496, %v1664
      %v1759 = vadd.f32 %v1497, %v1669
      %v1760 = vadd.f32 %v1498, %v1672
      %v1761 = vadd.f32 %v1499, %v1677
      %v1762 = vadd.f32 %v1500, %v1680
      %v1763 = vadd.f32 %v1501, %v1685
      %v1764 = vadd.f32 %v1502, %v1688
      %v1765 = vadd.f32 %v1503, %v1693
      %v1766 = vadd.f32 %v1504, %v1696
      %v1767 = vadd.f32 %v1505, %v1701
      %v1768 = vadd.f32 %v1506, %v1704
      %v1769 = vadd.f32 %v1507, %v1709
      %v1770 = vadd.f32 %v1508, %v1712
      %v1771 = vadd.f32 %v1509, %v1717
      %v1772 = vadd.f32 %v1510, %v1720
      %v1773 = vadd.f32 %v1511, %v1725
      %v1774 = vadd.f32 %v1512, %v1728
      %v1775 = vadd.f32 %v1513, %v1733
      %v1776 = vadd.f32 %v1514, %v1736
      %v1777 = vadd.f32 %v1515, %v1741
      %v1778 = vadd.f32 %v1516, %v1744
      %v1827 = vrot.slane %v287, 1
      %v1828 = vrot.slane %v288, 1
      %v1829 = vsel %vm880, %v1827, %v1828
      %v1830 = vrot.slane %v289, 1
      %v1831 = vsel %vm880, %v1828, %v1830
      %v1832 = vrot.slane %v290, 1
      %v1833 = vrot.slane %v291, 1
      %v1834 = vsel %vm880, %v1832, %v1833
      %v1835 = vrot.slane %v292, 1
      %v1836 = vsel %vm880, %v1833, %v1835
      %v1837 = vrot.slane %v293, 1
      %v1838 = vrot.slane %v294, 1
      %v1839 = vsel %vm880, %v1837, %v1838
      %v1840 = vrot.slane %v295, 1
      %v1841 = vsel %vm880, %v1838, %v1840
      %v1842 = vrot.slane %v296, 1
      %v1843 = vrot.slane %v297, 1
      %v1844 = vsel %vm880, %v1842, %v1843
      %v1845 = vrot.slane %v298, 1
      %v1846 = vsel %vm880, %v1843, %v1845
      %v1847 = vrot.slane %v299, 1
      %v1848 = vrot.slane %v300, 1
      %v1849 = vsel %vm880, %v1847, %v1848
      %v1850 = vrot.slane %v301, 1
      %v1851 = vsel %vm880, %v1848, %v1850
      %v1852 = vrot.slane %v302, 1
      %v1853 = vrot.slane %v303, 1
      %v1854 = vsel %vm880, %v1852, %v1853
      %v1855 = vrot.slane %v304, 1
      %v1856 = vsel %vm880, %v1853, %v1855
      %v1857 = vrot.slane %v305, 1
      %v1858 = vrot.slane %v306, 1
      %v1859 = vsel %vm880, %v1857, %v1858
      %v1860 = vrot.slane %v307, 1
      %v1861 = vsel %vm880, %v1858, %v1860
      %v1862 = vrot.slane %v308, 1
      %v1863 = vrot.slane %v309, 1
      %v1864 = vsel %vm880, %v1862, %v1863
      %v1865 = vrot.slane %v310, 1
      %v1866 = vsel %vm880, %v1863, %v1865
      %v1867 = vrot.slane %v311, 1
      %v1868 = vrot.slane %v312, 1
      %v1869 = vsel %vm880, %v1867, %v1868
      %v1870 = vrot.slane %v313, 1
      %v1871 = vsel %vm880, %v1868, %v1870
      %v1872 = vrot.slane %v314, 1
      %v1873 = vrot.slane %v315, 1
      %v1874 = vsel %vm880, %v1872, %v1873
      %v1875 = vrot.slane %v316, 1
      %v1876 = vsel %vm880, %v1873, %v1875
      %v1877 = vrot.slane %v317, 1
      %v1878 = vrot.slane %v318, 1
      %v1879 = vsel %vm880, %v1877, %v1878
      %v1880 = vrot.slane %v319, 1
      %v1881 = vsel %vm880, %v1878, %v1880
      %v1882 = vrot.slane %v320, 1
      %v1883 = vrot.slane %v321, 1
      %v1884 = vsel %vm880, %v1882, %v1883
      %v1885 = vrot.slane %v322, 1
      %v1886 = vsel %vm880, %v1883, %v1885
      %v1887 = vrot.slane %v323, 1
      %v1888 = vrot.slane %v324, 1
      %v1889 = vsel %vm880, %v1887, %v1888
      %v1890 = vrot.slane %v325, 1
      %v1891 = vsel %vm880, %v1888, %v1890
      %v1892 = vrot.slane %v326, 1
      %v1893 = vrot.slane %v327, 1
      %v1894 = vsel %vm880, %v1892, %v1893
      %v1895 = vrot.slane %v328, 1
      %v1896 = vsel %vm880, %v1893, %v1895
      %v1897 = vrot.slane %v329, 1
      %v1898 = vrot.slane %v330, 1
      %v1899 = vsel %vm880, %v1897, %v1898
      %v1900 = vrot.slane %v331, 1
      %v1901 = vsel %vm880, %v1898, %v1900
      %v1902 = vrot.slane %v332, 1
      %v1903 = vrot.slane %v333, 1
      %v1904 = vsel %vm880, %v1902, %v1903
      %v1905 = vrot.slane %v334, 1
      %v1906 = vsel %vm880, %v1903, %v1905
      %v1939 = vpack.c.bf16 %v1831, %v1829
      %v1940 = vpack.c.bf16 %v1836, %v1834
      %v1941 = vpack.c.bf16 %v1841, %v1839
      %v1942 = vpack.c.bf16 %v1846, %v1844
      %v1943 = vpack.c.bf16 %v1851, %v1849
      %v1944 = vpack.c.bf16 %v1856, %v1854
      %v1945 = vpack.c.bf16 %v1861, %v1859
      %v1946 = vpack.c.bf16 %v1866, %v1864
      %v1947 = vpack.c.bf16 %v1871, %v1869
      %v1948 = vpack.c.bf16 %v1876, %v1874
      %v1949 = vpack.c.bf16 %v1881, %v1879
      %v1950 = vpack.c.bf16 %v1886, %v1884
      %v1951 = vpack.c.bf16 %v1891, %v1889
      %v1952 = vpack.c.bf16 %v1896, %v1894
      %v1953 = vpack.c.bf16 %v1901, %v1899
      %v1954 = vpack.c.bf16 %v1906, %v1904
      %s1955 = scalar_lea.vmem %s1, 10
      %v1956 = vld [vmem:[%s1955] sm:$0x3]
      %v1958 = vsel %vm403, %v1939, 0
      %v1961 = vsel %vm403, %v1940, 0
      %v1964 = vsel %vm403, %v1941, 0
      %v1967 = vsel %vm403, %v1942, 0
      %v1970 = vsel %vm403, %v1943, 0
      %v1973 = vsel %vm403, %v1944, 0
      %v1976 = vsel %vm403, %v1945, 0
      %v1979 = vsel %vm403, %v1946, 0
      %v1982 = vsel %vm403, %v1947, 0
      %v1985 = vsel %vm403, %v1948, 0
      %v1988 = vsel %vm403, %v1949, 0
      %v1991 = vsel %vm403, %v1950, 0
      %v1994 = vsel %vm403, %v1951, 0
      %v1997 = vsel %vm403, %v1952, 0
      %v2000 = vsel %vm403, %v1953, 0
      %v2003 = vsel %vm403, %v1954, 0
      %v2006 = vand.u32 %v1956, %v455
      %2008 = vmatprep.subr.bf16.mxu0 0
      %2009 = vmatpush1.bf16.msra.mxu0 %v2006
      %2010 = vmatprep.subr.bf16.mxu0 0
      %2011 = vmatpush1.bf16.msra.mxu0 0
      %2012 = vmatprep.subr.bf16.mxu0 0
      %2013 = vmatpush1.bf16.msra.mxu0 0
      %2014 = vmatprep.subr.bf16.mxu0 0
      %2015 = vmatpush1.bf16.msra.mxu0 0
      %2016 = vmatprep.subr.bf16.mxu0 0
      %2017 = vmatpush1.bf16.msra.mxu0 0
      %2018 = vmatprep.subr.bf16.mxu0 0
      %2019 = vmatpush1.bf16.msra.mxu0 0
      %2020 = vmatprep.subr.bf16.mxu0 0
      %2021 = vmatpush1.bf16.msra.mxu0 0
      %2022 = vmatprep.subr.bf16.mxu0 0
      %2023 = vmatpush1.bf16.msra.mxu0 0
      %2024 = vmatprep.subr.bf16.mxu0 0
      %2025 = vmatpush1.bf16.msra.mxu0 0
      %2026 = vmatprep.subr.bf16.mxu0 0
      %2027 = vmatpush1.bf16.msra.mxu0 0
      %2028 = vmatprep.subr.bf16.mxu0 0
      %2029 = vmatpush1.bf16.msra.mxu0 0
      %2030 = vmatprep.subr.bf16.mxu0 0
      %2031 = vmatpush1.bf16.msra.mxu0 0
      %2032 = vmatprep.subr.bf16.mxu0 0
      %2033 = vmatpush1.bf16.msra.mxu0 0
      %2034 = vmatprep.subr.bf16.mxu0 0
      %2035 = vmatpush1.bf16.msra.mxu0 0
      %2036 = vmatprep.subr.bf16.mxu0 0
      %2037 = vmatpush1.bf16.msra.mxu0 0
      %2038 = vmatprep.subr.bf16.mxu0 0
      %2039 = vmatpush1.bf16.msra.mxu0 0
      %2040 = vmatprep.mubr.bf16.mxu0 0
      %2041 = vmatmul.mubr.bf16.gmra.mrb[0].mxu0 %v1958
      %v2042 = vpop.f32.mrb[0].mxu0
      %v2043 = vadd.f32 0.0, %v2042
      %v2044 = vpop.f32.mrb[0].mxu0
      %v2045 = vpop.f32.mrb[0].mxu0
      %v2046 = vadd.f32 0.0, %v2045
      %v2047 = vpop.f32.mrb[0].mxu0
      %2048 = vmatprep.mubr.bf16.mxu0 0
      %2049 = vmatmul.mubr.bf16.gmra.mrb[0].mxu0 %v1961
      %v2050 = vpop.f32.mrb[0].mxu0
      %v2051 = vadd.f32 0.0, %v2050
      %v2052 = vpop.f32.mrb[0].mxu0
      %v2053 = vpop.f32.mrb[0].mxu0
      %v2054 = vadd.f32 0.0, %v2053
      %v2055 = vpop.f32.mrb[0].mxu0
      %2056 = vmatprep.mubr.bf16.mxu0 0
      %2057 = vmatmul.mubr.bf16.gmra.mrb[0].mxu0 %v1964
      %v2058 = vpop.f32.mrb[0].mxu0
      %v2059 = vadd.f32 0.0, %v2058
      %v2060 = vpop.f32.mrb[0].mxu0
      %v2061 = vpop.f32.mrb[0].mxu0
      %v2062 = vadd.f32 0.0, %v2061
      %v2063 = vpop.f32.mrb[0].mxu0
      %2064 = vmatprep.mubr.bf16.mxu0 0
      %2065 = vmatmul.mubr.bf16.gmra.mrb[0].mxu0 %v1967
      %v2066 = vpop.f32.mrb[0].mxu0
      %v2067 = vadd.f32 0.0, %v2066
      %v2068 = vpop.f32.mrb[0].mxu0
      %v2069 = vpop.f32.mrb[0].mxu0
      %v2070 = vadd.f32 0.0, %v2069
      %v2071 = vpop.f32.mrb[0].mxu0
      %2072 = vmatprep.mubr.bf16.mxu0 0
      %2073 = vmatmul.mubr.bf16.gmra.mrb[0].mxu0 %v1970
      %v2074 = vpop.f32.mrb[0].mxu0
      %v2075 = vadd.f32 0.0, %v2074
      %v2076 = vpop.f32.mrb[0].mxu0
      %v2077 = vpop.f32.mrb[0].mxu0
      %v2078 = vadd.f32 0.0, %v2077
      %v2079 = vpop.f32.mrb[0].mxu0
      %2080 = vmatprep.mubr.bf16.mxu0 0
      %2081 = vmatmul.mubr.bf16.gmra.mrb[0].mxu0 %v1973
      %v2082 = vpop.f32.mrb[0].mxu0
      %v2083 = vadd.f32 0.0, %v2082
      %v2084 = vpop.f32.mrb[0].mxu0
      %v2085 = vpop.f32.mrb[0].mxu0
      %v2086 = vadd.f32 0.0, %v2085
      %v2087 = vpop.f32.mrb[0].mxu0
      %2088 = vmatprep.mubr.bf16.mxu0 0
      %2089 = vmatmul.mubr.bf16.gmra.mrb[0].mxu0 %v1976
      %v2090 = vpop.f32.mrb[0].mxu0
      %v2091 = vadd.f32 0.0, %v2090
      %v2092 = vpop.f32.mrb[0].mxu0
      %v2093 = vpop.f32.mrb[0].mxu0
      %v2094 = vadd.f32 0.0, %v2093
      %v2095 = vpop.f32.mrb[0].mxu0
      %2096 = vmatprep.mubr.bf16.mxu0 0
      %2097 = vmatmul.mubr.bf16.gmra.mrb[0].mxu0 %v1979
      %v2098 = vpop.f32.mrb[0].mxu0
      %v2099 = vadd.f32 0.0, %v2098
      %v2100 = vpop.f32.mrb[0].mxu0
      %v2101 = vpop.f32.mrb[0].mxu0
      %v2102 = vadd.f32 0.0, %v2101
      %v2103 = vpop.f32.mrb[0].mxu0
      %2104 = vmatprep.mubr.bf16.mxu0 0
      %2105 = vmatmul.mubr.bf16.gmra.mrb[0].mxu0 %v1982
      %v2106 = vpop.f32.mrb[0].mxu0
      %v2107 = vadd.f32 0.0, %v2106
      %v2108 = vpop.f32.mrb[0].mxu0
      %v2109 = vpop.f32.mrb[0].mxu0
      %v2110 = vadd.f32 0.0, %v2109
      %v2111 = vpop.f32.mrb[0].mxu0
      %2112 = vmatprep.mubr.bf16.mxu0 0
      %2113 = vmatmul.mubr.bf16.gmra.mrb[0].mxu0 %v1985
      %v2114 = vpop.f32.mrb[0].mxu0
      %v2115 = vadd.f32 0.0, %v2114
      %v2116 = vpop.f32.mrb[0].mxu0
      %v2117 = vpop.f32.mrb[0].mxu0
      %v2118 = vadd.f32 0.0, %v2117
      %v2119 = vpop.f32.mrb[0].mxu0
      %2120 = vmatprep.mubr.bf16.mxu0 0
      %2121 = vmatmul.mubr.bf16.gmra.mrb[0].mxu0 %v1988
      %v2122 = vpop.f32.mrb[0].mxu0
      %v2123 = vadd.f32 0.0, %v2122
      %v2124 = vpop.f32.mrb[0].mxu0
      %v2125 = vpop.f32.mrb[0].mxu0
      %v2126 = vadd.f32 0.0, %v2125
      %v2127 = vpop.f32.mrb[0].mxu0
      %2128 = vmatprep.mubr.bf16.mxu0 0
      %2129 = vmatmul.mubr.bf16.gmra.mrb[0].mxu0 %v1991
      %v2130 = vpop.f32.mrb[0].mxu0
      %v2131 = vadd.f32 0.0, %v2130
      %v2132 = vpop.f32.mrb[0].mxu0
      %v2133 = vpop.f32.mrb[0].mxu0
      %v2134 = vadd.f32 0.0, %v2133
      %v2135 = vpop.f32.mrb[0].mxu0
      %2136 = vmatprep.mubr.bf16.mxu0 0
      %2137 = vmatmul.mubr.bf16.gmra.mrb[0].mxu0 %v1994
      %v2138 = vpop.f32.mrb[0].mxu0
      %v2139 = vadd.f32 0.0, %v2138
      %v2140 = vpop.f32.mrb[0].mxu0
      %v2141 = vpop.f32.mrb[0].mxu0
      %v2142 = vadd.f32 0.0, %v2141
      %v2143 = vpop.f32.mrb[0].mxu0
      %2144 = vmatprep.mubr.bf16.mxu0 0
      %2145 = vmatmul.mubr.bf16.gmra.mrb[0].mxu0 %v1997
      %v2146 = vpop.f32.mrb[0].mxu0
      %v2147 = vadd.f32 0.0, %v2146
      %v2148 = vpop.f32.mrb[0].mxu0
      %v2149 = vpop.f32.mrb[0].mxu0
      %v2150 = vadd.f32 0.0, %v2149
      %v2151 = vpop.f32.mrb[0].mxu0
      %2152 = vmatprep.mubr.bf16.mxu0 0
      %2153 = vmatmul.mubr.bf16.gmra.mrb[0].mxu0 %v2000
      %v2154 = vpop.f32.mrb[0].mxu0
      %v2155 = vadd.f32 0.0, %v2154
      %v2156 = vpop.f32.mrb[0].mxu0
      %v2157 = vpop.f32.mrb[0].mxu0
      %v2158 = vadd.f32 0.0, %v2157
      %v2159 = vpop.f32.mrb[0].mxu0
      %2160 = vmatprep.mubr.bf16.mxu0 0
      %2161 = vmatmul.mubr.bf16.gmra.mrb[0].mxu0 %v2003
      %v2162 = vpop.f32.mrb[0].mxu0
      %v2163 = vadd.f32 0.0, %v2162
      %v2164 = vpop.f32.mrb[0].mxu0
      %v2165 = vpop.f32.mrb[0].mxu0
      %v2166 = vadd.f32 0.0, %v2165
      %v2167 = vpop.f32.mrb[0].mxu0
      %2168 = vdwg.mxu0
      %v2169 = vadd.f32 %v1747, %v2043
      %v2170 = vadd.f32 %v1748, %v2046
      %v2171 = vadd.f32 %v1749, %v2051
      %v2172 = vadd.f32 %v1750, %v2054
      %v2173 = vadd.f32 %v1751, %v2059
      %v2174 = vadd.f32 %v1752, %v2062
      %v2175 = vadd.f32 %v1753, %v2067
      %v2176 = vadd.f32 %v1754, %v2070
      %v2177 = vadd.f32 %v1755, %v2075
      %v2178 = vadd.f32 %v1756, %v2078
      %v2179 = vadd.f32 %v1757, %v2083
      %v2180 = vadd.f32 %v1758, %v2086
      %v2181 = vadd.f32 %v1759, %v2091
      %v2182 = vadd.f32 %v1760, %v2094
      %v2183 = vadd.f32 %v1761, %v2099
      %v2184 = vadd.f32 %v1762, %v2102
      %v2185 = vadd.f32 %v1763, %v2107
      %v2186 = vadd.f32 %v1764, %v2110
      %v2187 = vadd.f32 %v1765, %v2115
      %v2188 = vadd.f32 %v1766, %v2118
      %v2189 = vadd.f32 %v1767, %v2123
      %v2190 = vadd.f32 %v1768, %v2126
      %v2191 = vadd.f32 %v1769, %v2131
      %v2192 = vadd.f32 %v1770, %v2134
      %v2193 = vadd.f32 %v1771, %v2139
      %v2194 = vadd.f32 %v1772, %v2142
      %v2195 = vadd.f32 %v1773, %v2147
      %v2196 = vadd.f32 %v1774, %v2150
      %v2197 = vadd.f32 %v1775, %v2155
      %v2198 = vadd.f32 %v1776, %v2158
      %v2199 = vadd.f32 %v1777, %v2163
      %v2200 = vadd.f32 %v1778, %v2166
      %v2201 = vpack.c.bf16 %v249, %v248
      %s2202 = scalar_lea.vmem %s1, 12
      %v2203 = vld [vmem:[%s2202] sm:$0x3]
      %v2205 = vsel %vm403, %v2201, 0
      %v2208 = vand.u32 %v2203, %v455
      %2210 = vmatprep.subr.bf16.mxu0 0
      %2211 = vmatpush1.bf16.msra.mxu0 %v2208
      %2212 = vmatprep.subr.bf16.mxu0 0
      %2213 = vmatpush1.bf16.msra.mxu0 0
      %2214 = vmatprep.subr.bf16.mxu0 0
      %2215 = vmatpush1.bf16.msra.mxu0 0
      %2216 = vmatprep.subr.bf16.mxu0 0
      %2217 = vmatpush1.bf16.msra.mxu0 0
      %2218 = vmatprep.subr.bf16.mxu0 0
      %2219 = vmatpush1.bf16.msra.mxu0 0
      %2220 = vmatprep.subr.bf16.mxu0 0
      %2221 = vmatpush1.bf16.msra.mxu0 0
      %2222 = vmatprep.subr.bf16.mxu0 0
      %2223 = vmatpush1.bf16.msra.mxu0 0
      %2224 = vmatprep.subr.bf16.mxu0 0
      %2225 = vmatpush1.bf16.msra.mxu0 0
      %2226 = vmatprep.subr.bf16.mxu0 0
      %2227 = vmatpush1.bf16.msra.mxu0 0
      %2228 = vmatprep.subr.bf16.mxu0 0
      %2229 = vmatpush1.bf16.msra.mxu0 0
      %2230 = vmatprep.subr.bf16.mxu0 0
      %2231 = vmatpush1.bf16.msra.mxu0 0
      %2232 = vmatprep.subr.bf16.mxu0 0
      %2233 = vmatpush1.bf16.msra.mxu0 0
      %2234 = vmatprep.subr.bf16.mxu0 0
      %2235 = vmatpush1.bf16.msra.mxu0 0
      %2236 = vmatprep.subr.bf16.mxu0 0
      %2237 = vmatpush1.bf16.msra.mxu0 0
      %2238 = vmatprep.subr.bf16.mxu0 0
      %2239 = vmatpush1.bf16.msra.mxu0 0
      %2240 = vmatprep.subr.bf16.mxu0 0
      %2241 = vmatpush1.bf16.msra.mxu0 0
      %2242 = vmatprep.mubr.bf16.mxu0 0
      %2243 = vmatmul.mubr.bf16.gmra.mrb[0].mxu0 %v624
      %v2244 = vpop.f32.mrb[0].mxu0
      %v2245 = vadd.f32 0.0, %v2244
      %v2246 = vpop.f32.mrb[0].mxu0
      %v2247 = vpop.f32.mrb[0].mxu0
      %v2248 = vadd.f32 0.0, %v2247
      %v2249 = vpop.f32.mrb[0].mxu0
      %2250 = vmatprep.mubr.bf16.mxu0 0
      %2251 = vmatmul.mubr.bf16.gmra.mrb[0].mxu0 %v627
      %v2252 = vpop.f32.mrb[0].mxu0
      %v2253 = vadd.f32 0.0, %v2252
      %v2254 = vpop.f32.mrb[0].mxu0
      %v2255 = vpop.f32.mrb[0].mxu0
      %v2256 = vadd.f32 0.0, %v2255
      %v2257 = vpop.f32.mrb[0].mxu0
      %2258 = vmatprep.mubr.bf16.mxu0 0
      %2259 = vmatmul.mubr.bf16.gmra.mrb[0].mxu0 %v630
      %v2260 = vpop.f32.mrb[0].mxu0
      %v2261 = vadd.f32 0.0, %v2260
      %v2262 = vpop.f32.mrb[0].mxu0
      %v2263 = vpop.f32.mrb[0].mxu0
      %v2264 = vadd.f32 0.0, %v2263
      %v2265 = vpop.f32.mrb[0].mxu0
      %2266 = vmatprep.mubr.bf16.mxu0 0
      %2267 = vmatmul.mubr.bf16.gmra.mrb[0].mxu0 %v633
      %v2268 = vpop.f32.mrb[0].mxu0
      %v2269 = vadd.f32 0.0, %v2268
      %v2270 = vpop.f32.mrb[0].mxu0
      %v2271 = vpop.f32.mrb[0].mxu0
      %v2272 = vadd.f32 0.0, %v2271
      %v2273 = vpop.f32.mrb[0].mxu0
      %2274 = vmatprep.mubr.bf16.mxu0 0
      %2275 = vmatmul.mubr.bf16.gmra.mrb[0].mxu0 %v636
      %v2276 = vpop.f32.mrb[0].mxu0
      %v2277 = vadd.f32 0.0, %v2276
      %v2278 = vpop.f32.mrb[0].mxu0
      %v2279 = vpop.f32.mrb[0].mxu0
      %v2280 = vadd.f32 0.0, %v2279
      %v2281 = vpop.f32.mrb[0].mxu0
      %2282 = vmatprep.mubr.bf16.mxu0 0
      %2283 = vmatmul.mubr.bf16.gmra.mrb[0].mxu0 %v639
      %v2284 = vpop.f32.mrb[0].mxu0
      %v2285 = vadd.f32 0.0, %v2284
      %v2286 = vpop.f32.mrb[0].mxu0
      %v2287 = vpop.f32.mrb[0].mxu0
      %v2288 = vadd.f32 0.0, %v2287
      %v2289 = vpop.f32.mrb[0].mxu0
      %2290 = vmatprep.mubr.bf16.mxu0 0
      %2291 = vmatmul.mubr.bf16.gmra.mrb[0].mxu0 %v642
      %v2292 = vpop.f32.mrb[0].mxu0
      %v2293 = vadd.f32 0.0, %v2292
      %v2294 = vpop.f32.mrb[0].mxu0
      %v2295 = vpop.f32.mrb[0].mxu0
      %v2296 = vadd.f32 0.0, %v2295
      %v2297 = vpop.f32.mrb[0].mxu0
      %2298 = vmatprep.mubr.bf16.mxu0 0
      %2299 = vmatmul.mubr.bf16.gmra.mrb[0].mxu0 %v645
      %v2300 = vpop.f32.mrb[0].mxu0
      %v2301 = vadd.f32 0.0, %v2300
      %v2302 = vpop.f32.mrb[0].mxu0
      %v2303 = vpop.f32.mrb[0].mxu0
      %v2304 = vadd.f32 0.0, %v2303
      %v2305 = vpop.f32.mrb[0].mxu0
      %2306 = vmatprep.mubr.bf16.mxu0 0
      %2307 = vmatmul.mubr.bf16.gmra.mrb[0].mxu0 %v648
      %v2308 = vpop.f32.mrb[0].mxu0
      %v2309 = vadd.f32 0.0, %v2308
      %v2310 = vpop.f32.mrb[0].mxu0
      %v2311 = vpop.f32.mrb[0].mxu0
      %v2312 = vadd.f32 0.0, %v2311
      %v2313 = vpop.f32.mrb[0].mxu0
      %2314 = vmatprep.mubr.bf16.mxu0 0
      %2315 = vmatmul.mubr.bf16.gmra.mrb[0].mxu0 %v651
      %v2316 = vpop.f32.mrb[0].mxu0
      %v2317 = vadd.f32 0.0, %v2316
      %v2318 = vpop.f32.mrb[0].mxu0
      %v2319 = vpop.f32.mrb[0].mxu0
      %v2320 = vadd.f32 0.0, %v2319
      %v2321 = vpop.f32.mrb[0].mxu0
      %2322 = vmatprep.mubr.bf16.mxu0 0
      %2323 = vmatmul.mubr.bf16.gmra.mrb[0].mxu0 %v654
      %v2324 = vpop.f32.mrb[0].mxu0
      %v2325 = vadd.f32 0.0, %v2324
      %v2326 = vpop.f32.mrb[0].mxu0
      %v2327 = vpop.f32.mrb[0].mxu0
      %v2328 = vadd.f32 0.0, %v2327
      %v2329 = vpop.f32.mrb[0].mxu0
      %2330 = vmatprep.mubr.bf16.mxu0 0
      %2331 = vmatmul.mubr.bf16.gmra.mrb[0].mxu0 %v657
      %v2332 = vpop.f32.mrb[0].mxu0
      %v2333 = vadd.f32 0.0, %v2332
      %v2334 = vpop.f32.mrb[0].mxu0
      %v2335 = vpop.f32.mrb[0].mxu0
      %v2336 = vadd.f32 0.0, %v2335
      %v2337 = vpop.f32.mrb[0].mxu0
      %2338 = vmatprep.mubr.bf16.mxu0 0
      %2339 = vmatmul.mubr.bf16.gmra.mrb[0].mxu0 %v660
      %v2340 = vpop.f32.mrb[0].mxu0
      %v2341 = vadd.f32 0.0, %v2340
      %v2342 = vpop.f32.mrb[0].mxu0
      %v2343 = vpop.f32.mrb[0].mxu0
      %v2344 = vadd.f32 0.0, %v2343
      %v2345 = vpop.f32.mrb[0].mxu0
      %2346 = vmatprep.mubr.bf16.mxu0 0
      %2347 = vmatmul.mubr.bf16.gmra.mrb[0].mxu0 %v663
      %v2348 = vpop.f32.mrb[0].mxu0
      %v2349 = vadd.f32 0.0, %v2348
      %v2350 = vpop.f32.mrb[0].mxu0
      %v2351 = vpop.f32.mrb[0].mxu0
      %v2352 = vadd.f32 0.0, %v2351
      %v2353 = vpop.f32.mrb[0].mxu0
      %2354 = vmatprep.mubr.bf16.mxu0 0
      %2355 = vmatmul.mubr.bf16.gmra.mrb[0].mxu0 %v666
      %v2356 = vpop.f32.mrb[0].mxu0
      %v2357 = vadd.f32 0.0, %v2356
      %v2358 = vpop.f32.mrb[0].mxu0
      %v2359 = vpop.f32.mrb[0].mxu0
      %v2360 = vadd.f32 0.0, %v2359
      %v2361 = vpop.f32.mrb[0].mxu0
      %2362 = vmatprep.mubr.bf16.mxu0 0
      %2363 = vmatmul.mubr.bf16.gmra.mrb[0].mxu0 %v2205
      %v2364 = vpop.f32.mrb[0].mxu0
      %v2365 = vadd.f32 0.0, %v2364
      %v2366 = vpop.f32.mrb[0].mxu0
      %v2367 = vpop.f32.mrb[0].mxu0
      %v2368 = vadd.f32 0.0, %v2367
      %v2369 = vpop.f32.mrb[0].mxu0
      %2370 = vdwg.mxu0
      %v2371 = vadd.f32 %v2169, %v2245
      %v2372 = vadd.f32 %v2170, %v2248
      %v2373 = vadd.f32 %v2171, %v2253
      %v2374 = vadd.f32 %v2172, %v2256
      %v2375 = vadd.f32 %v2173, %v2261
      %v2376 = vadd.f32 %v2174, %v2264
      %v2377 = vadd.f32 %v2175, %v2269
      %v2378 = vadd.f32 %v2176, %v2272
      %v2379 = vadd.f32 %v2177, %v2277
      %v2380 = vadd.f32 %v2178, %v2280
      %v2381 = vadd.f32 %v2179, %v2285
      %v2382 = vadd.f32 %v2180, %v2288
      %v2383 = vadd.f32 %v2181, %v2293
      %v2384 = vadd.f32 %v2182, %v2296
      %v2385 = vadd.f32 %v2183, %v2301
      %v2386 = vadd.f32 %v2184, %v2304
      %v2387 = vadd.f32 %v2185, %v2309
      %v2388 = vadd.f32 %v2186, %v2312
      %v2389 = vadd.f32 %v2187, %v2317
      %v2390 = vadd.f32 %v2188, %v2320
      %v2391 = vadd.f32 %v2189, %v2325
      %v2392 = vadd.f32 %v2190, %v2328
      %v2393 = vadd.f32 %v2191, %v2333
      %v2394 = vadd.f32 %v2192, %v2336
      %v2395 = vadd.f32 %v2193, %v2341
      %v2396 = vadd.f32 %v2194, %v2344
      %v2397 = vadd.f32 %v2195, %v2349
      %v2398 = vadd.f32 %v2196, %v2352
      %v2399 = vadd.f32 %v2197, %v2357
      %v2400 = vadd.f32 %v2198, %v2360
      %v2401 = vadd.f32 %v2199, %v2365
      %v2402 = vadd.f32 %v2200, %v2368
      %v2403 = vpack.c.bf16 %v285, %v284
      %s2404 = scalar_lea.vmem %s1, 14
      %v2405 = vld [vmem:[%s2404] sm:$0x3]
      %v2407 = vsel %vm403, %v2403, 0
      %v2410 = vand.u32 %v2405, %v455
      %2412 = vmatprep.subr.bf16.mxu0 0
      %2413 = vmatpush1.bf16.msra.mxu0 %v2410
      %2414 = vmatprep.subr.bf16.mxu0 0
      %2415 = vmatpush1.bf16.msra.mxu0 0
      %2416 = vmatprep.subr.bf16.mxu0 0
      %2417 = vmatpush1.bf16.msra.mxu0 0
      %2418 = vmatprep.subr.bf16.mxu0 0
      %2419 = vmatpush1.bf16.msra.mxu0 0
      %2420 = vmatprep.subr.bf16.mxu0 0
      %2421 = vmatpush1.bf16.msra.mxu0 0
      %2422 = vmatprep.subr.bf16.mxu0 0
      %2423 = vmatpush1.bf16.msra.mxu0 0
      %2424 = vmatprep.subr.bf16.mxu0 0
      %2425 = vmatpush1.bf16.msra.mxu0 0
      %2426 = vmatprep.subr.bf16.mxu0 0
      %2427 = vmatpush1.bf16.msra.mxu0 0
      %2428 = vmatprep.subr.bf16.mxu0 0
      %2429 = vmatpush1.bf16.msra.mxu0 0
      %2430 = vmatprep.subr.bf16.mxu0 0
      %2431 = vmatpush1.bf16.msra.mxu0 0
      %2432 = vmatprep.subr.bf16.mxu0 0
      %2433 = vmatpush1.bf16.msra.mxu0 0
      %2434 = vmatprep.subr.bf16.mxu0 0
      %2435 = vmatpush1.bf16.msra.mxu0 0
      %2436 = vmatprep.subr.bf16.mxu0 0
      %2437 = vmatpush1.bf16.msra.mxu0 0
      %2438 = vmatprep.subr.bf16.mxu0 0
      %2439 = vmatpush1.bf16.msra.mxu0 0
      %2440 = vmatprep.subr.bf16.mxu0 0
      %2441 = vmatpush1.bf16.msra.mxu0 0
      %2442 = vmatprep.subr.bf16.mxu0 0
      %2443 = vmatpush1.bf16.msra.mxu0 0
      %2444 = vmatprep.mubr.bf16.mxu0 0
      %2445 = vmatmul.mubr.bf16.gmra.mrb[0].mxu0 %v408
      %v2446 = vpop.f32.mrb[0].mxu0
      %v2447 = vadd.f32 0.0, %v2446
      %v2448 = vpop.f32.mrb[0].mxu0
      %v2449 = vpop.f32.mrb[0].mxu0
      %v2450 = vadd.f32 0.0, %v2449
      %v2451 = vpop.f32.mrb[0].mxu0
      %2452 = vmatprep.mubr.bf16.mxu0 0
      %2453 = vmatmul.mubr.bf16.gmra.mrb[0].mxu0 %v411
      %v2454 = vpop.f32.mrb[0].mxu0
      %v2455 = vadd.f32 0.0, %v2454
      %v2456 = vpop.f32.mrb[0].mxu0
      %v2457 = vpop.f32.mrb[0].mxu0
      %v2458 = vadd.f32 0.0, %v2457
      %v2459 = vpop.f32.mrb[0].mxu0
      %2460 = vmatprep.mubr.bf16.mxu0 0
      %2461 = vmatmul.mubr.bf16.gmra.mrb[0].mxu0 %v414
      %v2462 = vpop.f32.mrb[0].mxu0
      %v2463 = vadd.f32 0.0, %v2462
      %v2464 = vpop.f32.mrb[0].mxu0
      %v2465 = vpop.f32.mrb[0].mxu0
      %v2466 = vadd.f32 0.0, %v2465
      %v2467 = vpop.f32.mrb[0].mxu0
      %2468 = vmatprep.mubr.bf16.mxu0 0
      %2469 = vmatmul.mubr.bf16.gmra.mrb[0].mxu0 %v417
      %v2470 = vpop.f32.mrb[0].mxu0
      %v2471 = vadd.f32 0.0, %v2470
      %v2472 = vpop.f32.mrb[0].mxu0
      %v2473 = vpop.f32.mrb[0].mxu0
      %v2474 = vadd.f32 0.0, %v2473
      %v2475 = vpop.f32.mrb[0].mxu0
      %2476 = vmatprep.mubr.bf16.mxu0 0
      %2477 = vmatmul.mubr.bf16.gmra.mrb[0].mxu0 %v420
      %v2478 = vpop.f32.mrb[0].mxu0
      %v2479 = vadd.f32 0.0, %v2478
      %v2480 = vpop.f32.mrb[0].mxu0
      %v2481 = vpop.f32.mrb[0].mxu0
      %v2482 = vadd.f32 0.0, %v2481
      %v2483 = vpop.f32.mrb[0].mxu0
      %2484 = vmatprep.mubr.bf16.mxu0 0
      %2485 = vmatmul.mubr.bf16.gmra.mrb[0].mxu0 %v423
      %v2486 = vpop.f32.mrb[0].mxu0
      %v2487 = vadd.f32 0.0, %v2486
      %v2488 = vpop.f32.mrb[0].mxu0
      %v2489 = vpop.f32.mrb[0].mxu0
      %v2490 = vadd.f32 0.0, %v2489
      %v2491 = vpop.f32.mrb[0].mxu0
      %2492 = vmatprep.mubr.bf16.mxu0 0
      %2493 = vmatmul.mubr.bf16.gmra.mrb[0].mxu0 %v426
      %v2494 = vpop.f32.mrb[0].mxu0
      %v2495 = vadd.f32 0.0, %v2494
      %v2496 = vpop.f32.mrb[0].mxu0
      %v2497 = vpop.f32.mrb[0].mxu0
      %v2498 = vadd.f32 0.0, %v2497
      %v2499 = vpop.f32.mrb[0].mxu0
      %2500 = vmatprep.mubr.bf16.mxu0 0
      %2501 = vmatmul.mubr.bf16.gmra.mrb[0].mxu0 %v429
      %v2502 = vpop.f32.mrb[0].mxu0
      %v2503 = vadd.f32 0.0, %v2502
      %v2504 = vpop.f32.mrb[0].mxu0
      %v2505 = vpop.f32.mrb[0].mxu0
      %v2506 = vadd.f32 0.0, %v2505
      %v2507 = vpop.f32.mrb[0].mxu0
      %2508 = vmatprep.mubr.bf16.mxu0 0
      %2509 = vmatmul.mubr.bf16.gmra.mrb[0].mxu0 %v432
      %v2510 = vpop.f32.mrb[0].mxu0
      %v2511 = vadd.f32 0.0, %v2510
      %v2512 = vpop.f32.mrb[0].mxu0
      %v2513 = vpop.f32.mrb[0].mxu0
      %v2514 = vadd.f32 0.0, %v2513
      %v2515 = vpop.f32.mrb[0].mxu0
      %2516 = vmatprep.mubr.bf16.mxu0 0
      %2517 = vmatmul.mubr.bf16.gmra.mrb[0].mxu0 %v435
      %v2518 = vpop.f32.mrb[0].mxu0
      %v2519 = vadd.f32 0.0, %v2518
      %v2520 = vpop.f32.mrb[0].mxu0
      %v2521 = vpop.f32.mrb[0].mxu0
      %v2522 = vadd.f32 0.0, %v2521
      %v2523 = vpop.f32.mrb[0].mxu0
      %2524 = vmatprep.mubr.bf16.mxu0 0
      %2525 = vmatmul.mubr.bf16.gmra.mrb[0].mxu0 %v438
      %v2526 = vpop.f32.mrb[0].mxu0
      %v2527 = vadd.f32 0.0, %v2526
      %v2528 = vpop.f32.mrb[0].mxu0
      %v2529 = vpop.f32.mrb[0].mxu0
      %v2530 = vadd.f32 0.0, %v2529
      %v2531 = vpop.f32.mrb[0].mxu0
      %2532 = vmatprep.mubr.bf16.mxu0 0
      %2533 = vmatmul.mubr.bf16.gmra.mrb[0].mxu0 %v441
      %v2534 = vpop.f32.mrb[0].mxu0
      %v2535 = vadd.f32 0.0, %v2534
      %v2536 = vpop.f32.mrb[0].mxu0
      %v2537 = vpop.f32.mrb[0].mxu0
      %v2538 = vadd.f32 0.0, %v2537
      %v2539 = vpop.f32.mrb[0].mxu0
      %2540 = vmatprep.mubr.bf16.mxu0 0
      %2541 = vmatmul.mubr.bf16.gmra.mrb[0].mxu0 %v444
      %v2542 = vpop.f32.mrb[0].mxu0
      %v2543 = vadd.f32 0.0, %v2542
      %v2544 = vpop.f32.mrb[0].mxu0
      %v2545 = vpop.f32.mrb[0].mxu0
      %v2546 = vadd.f32 0.0, %v2545
      %v2547 = vpop.f32.mrb[0].mxu0
      %2548 = vmatprep.mubr.bf16.mxu0 0
      %2549 = vmatmul.mubr.bf16.gmra.mrb[0].mxu0 %v447
      %v2550 = vpop.f32.mrb[0].mxu0
      %v2551 = vadd.f32 0.0, %v2550
      %v2552 = vpop.f32.mrb[0].mxu0
      %v2553 = vpop.f32.mrb[0].mxu0
      %v2554 = vadd.f32 0.0, %v2553
      %v2555 = vpop.f32.mrb[0].mxu0
      %2556 = vmatprep.mubr.bf16.mxu0 0
      %2557 = vmatmul.mubr.bf16.gmra.mrb[0].mxu0 %v450
      %v2558 = vpop.f32.mrb[0].mxu0
      %v2559 = vadd.f32 0.0, %v2558
      %v2560 = vpop.f32.mrb[0].mxu0
      %v2561 = vpop.f32.mrb[0].mxu0
      %v2562 = vadd.f32 0.0, %v2561
      %v2563 = vpop.f32.mrb[0].mxu0
      %2564 = vmatprep.mubr.bf16.mxu0 0
      %2565 = vmatmul.mubr.bf16.gmra.mrb[0].mxu0 %v2407
      %v2566 = vpop.f32.mrb[0].mxu0
      %v2567 = vadd.f32 0.0, %v2566
      %v2568 = vpop.f32.mrb[0].mxu0
      %v2569 = vpop.f32.mrb[0].mxu0
      %v2570 = vadd.f32 0.0, %v2569
      %v2571 = vpop.f32.mrb[0].mxu0
      %2572 = vdwg.mxu0
      %v2573 = vadd.f32 %v2371, %v2447
      %v2574 = vadd.f32 %v2372, %v2450
      %v2575 = vadd.f32 %v2373, %v2455
      %v2576 = vadd.f32 %v2374, %v2458
      %v2577 = vadd.f32 %v2375, %v2463
      %v2578 = vadd.f32 %v2376, %v2466
      %v2579 = vadd.f32 %v2377, %v2471
      %v2580 = vadd.f32 %v2378, %v2474
      %v2581 = vadd.f32 %v2379, %v2479
      %v2582 = vadd.f32 %v2380, %v2482
      %v2583 = vadd.f32 %v2381, %v2487
      %v2584 = vadd.f32 %v2382, %v2490
      %v2585 = vadd.f32 %v2383, %v2495
      %v2586 = vadd.f32 %v2384, %v2498
      %v2587 = vadd.f32 %v2385, %v2503
      %v2588 = vadd.f32 %v2386, %v2506
      %v2589 = vadd.f32 %v2387, %v2511
      %v2590 = vadd.f32 %v2388, %v2514
      %v2591 = vadd.f32 %v2389, %v2519
      %v2592 = vadd.f32 %v2390, %v2522
      %v2593 = vadd.f32 %v2391, %v2527
      %v2594 = vadd.f32 %v2392, %v2530
      %v2595 = vadd.f32 %v2393, %v2535
      %v2596 = vadd.f32 %v2394, %v2538
      %v2597 = vadd.f32 %v2395, %v2543
      %v2598 = vadd.f32 %v2396, %v2546
      %v2599 = vadd.f32 %v2397, %v2551
      %v2600 = vadd.f32 %v2398, %v2554
      %v2601 = vadd.f32 %v2399, %v2559
      %v2602 = vadd.f32 %v2400, %v2562
      %v2603 = vadd.f32 %v2401, %v2567
      %v2604 = vadd.f32 %v2402, %v2570
      %v2608 = vrot.slane %v248, 1
      %v2609 = vrot.slane %v249, 1
      %v2610 = vsel %vm880, %v2608, %v2609
      %v2611 = vrot.slane %v250, 1
      %v2612 = vsel %vm880, %v2609, %v2611
      %v2615 = vpack.c.bf16 %v2612, %v2610
      %s2616 = scalar_lea.vmem %s1, 16
      %v2617 = vld [vmem:[%s2616] sm:$0x3]
      %v2619 = vsel %vm403, %v2615, 0
      %v2622 = vand.u32 %v2617, %v455
      %2624 = vmatprep.subr.bf16.mxu0 0
      %2625 = vmatpush1.bf16.msra.mxu0 %v2622
      %2626 = vmatprep.subr.bf16.mxu0 0
      %2627 = vmatpush1.bf16.msra.mxu0 0
      %2628 = vmatprep.subr.bf16.mxu0 0
      %2629 = vmatpush1.bf16.msra.mxu0 0
      %2630 = vmatprep.subr.bf16.mxu0 0
      %2631 = vmatpush1.bf16.msra.mxu0 0
      %2632 = vmatprep.subr.bf16.mxu0 0
      %2633 = vmatpush1.bf16.msra.mxu0 0
      %2634 = vmatprep.subr.bf16.mxu0 0
      %2635 = vmatpush1.bf16.msra.mxu0 0
      %2636 = vmatprep.subr.bf16.mxu0 0
      %2637 = vmatpush1.bf16.msra.mxu0 0
      %2638 = vmatprep.subr.bf16.mxu0 0
      %2639 = vmatpush1.bf16.msra.mxu0 0
      %2640 = vmatprep.subr.bf16.mxu0 0
      %2641 = vmatpush1.bf16.msra.mxu0 0
      %2642 = vmatprep.subr.bf16.mxu0 0
      %2643 = vmatpush1.bf16.msra.mxu0 0
      %2644 = vmatprep.subr.bf16.mxu0 0
      %2645 = vmatpush1.bf16.msra.mxu0 0
      %2646 = vmatprep.subr.bf16.mxu0 0
      %2647 = vmatpush1.bf16.msra.mxu0 0
      %2648 = vmatprep.subr.bf16.mxu0 0
      %2649 = vmatpush1.bf16.msra.mxu0 0
      %2650 = vmatprep.subr.bf16.mxu0 0
      %2651 = vmatpush1.bf16.msra.mxu0 0
      %2652 = vmatprep.subr.bf16.mxu0 0
      %2653 = vmatpush1.bf16.msra.mxu0 0
      %2654 = vmatprep.subr.bf16.mxu0 0
      %2655 = vmatpush1.bf16.msra.mxu0 0
      %2656 = vmatprep.mubr.bf16.mxu0 0
      %2657 = vmatmul.mubr.bf16.gmra.mrb[0].mxu0 %v1015
      %v2658 = vpop.f32.mrb[0].mxu0
      %v2659 = vadd.f32 0.0, %v2658
      %v2660 = vpop.f32.mrb[0].mxu0
      %v2661 = vpop.f32.mrb[0].mxu0
      %v2662 = vadd.f32 0.0, %v2661
      %v2663 = vpop.f32.mrb[0].mxu0
      %2664 = vmatprep.mubr.bf16.mxu0 0
      %2665 = vmatmul.mubr.bf16.gmra.mrb[0].mxu0 %v1018
      %v2666 = vpop.f32.mrb[0].mxu0
      %v2667 = vadd.f32 0.0, %v2666
      %v2668 = vpop.f32.mrb[0].mxu0
      %v2669 = vpop.f32.mrb[0].mxu0
      %v2670 = vadd.f32 0.0, %v2669
      %v2671 = vpop.f32.mrb[0].mxu0
      %2672 = vmatprep.mubr.bf16.mxu0 0
      %2673 = vmatmul.mubr.bf16.gmra.mrb[0].mxu0 %v1021
      %v2674 = vpop.f32.mrb[0].mxu0
      %v2675 = vadd.f32 0.0, %v2674
      %v2676 = vpop.f32.mrb[0].mxu0
      %v2677 = vpop.f32.mrb[0].mxu0
      %v2678 = vadd.f32 0.0, %v2677
      %v2679 = vpop.f32.mrb[0].mxu0
      %2680 = vmatprep.mubr.bf16.mxu0 0
      %2681 = vmatmul.mubr.bf16.gmra.mrb[0].mxu0 %v1024
      %v2682 = vpop.f32.mrb[0].mxu0
      %v2683 = vadd.f32 0.0, %v2682
      %v2684 = vpop.f32.mrb[0].mxu0
      %v2685 = vpop.f32.mrb[0].mxu0
      %v2686 = vadd.f32 0.0, %v2685
      %v2687 = vpop.f32.mrb[0].mxu0
      %2688 = vmatprep.mubr.bf16.mxu0 0
      %2689 = vmatmul.mubr.bf16.gmra.mrb[0].mxu0 %v1027
      %v2690 = vpop.f32.mrb[0].mxu0
      %v2691 = vadd.f32 0.0, %v2690
      %v2692 = vpop.f32.mrb[0].mxu0
      %v2693 = vpop.f32.mrb[0].mxu0
      %v2694 = vadd.f32 0.0, %v2693
      %v2695 = vpop.f32.mrb[0].mxu0
      %2696 = vmatprep.mubr.bf16.mxu0 0
      %2697 = vmatmul.mubr.bf16.gmra.mrb[0].mxu0 %v1030
      %v2698 = vpop.f32.mrb[0].mxu0
      %v2699 = vadd.f32 0.0, %v2698
      %v2700 = vpop.f32.mrb[0].mxu0
      %v2701 = vpop.f32.mrb[0].mxu0
      %v2702 = vadd.f32 0.0, %v2701
      %v2703 = vpop.f32.mrb[0].mxu0
      %2704 = vmatprep.mubr.bf16.mxu0 0
      %2705 = vmatmul.mubr.bf16.gmra.mrb[0].mxu0 %v1033
      %v2706 = vpop.f32.mrb[0].mxu0
      %v2707 = vadd.f32 0.0, %v2706
      %v2708 = vpop.f32.mrb[0].mxu0
      %v2709 = vpop.f32.mrb[0].mxu0
      %v2710 = vadd.f32 0.0, %v2709
      %v2711 = vpop.f32.mrb[0].mxu0
      %2712 = vmatprep.mubr.bf16.mxu0 0
      %2713 = vmatmul.mubr.bf16.gmra.mrb[0].mxu0 %v1036
      %v2714 = vpop.f32.mrb[0].mxu0
      %v2715 = vadd.f32 0.0, %v2714
      %v2716 = vpop.f32.mrb[0].mxu0
      %v2717 = vpop.f32.mrb[0].mxu0
      %v2718 = vadd.f32 0.0, %v2717
      %v2719 = vpop.f32.mrb[0].mxu0
      %2720 = vmatprep.mubr.bf16.mxu0 0
      %2721 = vmatmul.mubr.bf16.gmra.mrb[0].mxu0 %v1039
      %v2722 = vpop.f32.mrb[0].mxu0
      %v2723 = vadd.f32 0.0, %v2722
      %v2724 = vpop.f32.mrb[0].mxu0
      %v2725 = vpop.f32.mrb[0].mxu0
      %v2726 = vadd.f32 0.0, %v2725
      %v2727 = vpop.f32.mrb[0].mxu0
      %2728 = vmatprep.mubr.bf16.mxu0 0
      %2729 = vmatmul.mubr.bf16.gmra.mrb[0].mxu0 %v1042
      %v2730 = vpop.f32.mrb[0].mxu0
      %v2731 = vadd.f32 0.0, %v2730
      %v2732 = vpop.f32.mrb[0].mxu0
      %v2733 = vpop.f32.mrb[0].mxu0
      %v2734 = vadd.f32 0.0, %v2733
      %v2735 = vpop.f32.mrb[0].mxu0
      %2736 = vmatprep.mubr.bf16.mxu0 0
      %2737 = vmatmul.mubr.bf16.gmra.mrb[0].mxu0 %v1045
      %v2738 = vpop.f32.mrb[0].mxu0
      %v2739 = vadd.f32 0.0, %v2738
      %v2740 = vpop.f32.mrb[0].mxu0
      %v2741 = vpop.f32.mrb[0].mxu0
      %v2742 = vadd.f32 0.0, %v2741
      %v2743 = vpop.f32.mrb[0].mxu0
      %2744 = vmatprep.mubr.bf16.mxu0 0
      %2745 = vmatmul.mubr.bf16.gmra.mrb[0].mxu0 %v1048
      %v2746 = vpop.f32.mrb[0].mxu0
      %v2747 = vadd.f32 0.0, %v2746
      %v2748 = vpop.f32.mrb[0].mxu0
      %v2749 = vpop.f32.mrb[0].mxu0
      %v2750 = vadd.f32 0.0, %v2749
      %v2751 = vpop.f32.mrb[0].mxu0
      %2752 = vmatprep.mubr.bf16.mxu0 0
      %2753 = vmatmul.mubr.bf16.gmra.mrb[0].mxu0 %v1051
      %v2754 = vpop.f32.mrb[0].mxu0
      %v2755 = vadd.f32 0.0, %v2754
      %v2756 = vpop.f32.mrb[0].mxu0
      %v2757 = vpop.f32.mrb[0].mxu0
      %v2758 = vadd.f32 0.0, %v2757
      %v2759 = vpop.f32.mrb[0].mxu0
      %2760 = vmatprep.mubr.bf16.mxu0 0
      %2761 = vmatmul.mubr.bf16.gmra.mrb[0].mxu0 %v1054
      %v2762 = vpop.f32.mrb[0].mxu0
      %v2763 = vadd.f32 0.0, %v2762
      %v2764 = vpop.f32.mrb[0].mxu0
      %v2765 = vpop.f32.mrb[0].mxu0
      %v2766 = vadd.f32 0.0, %v2765
      %v2767 = vpop.f32.mrb[0].mxu0
      %2768 = vmatprep.mubr.bf16.mxu0 0
      %2769 = vmatmul.mubr.bf16.gmra.mrb[0].mxu0 %v1057
      %v2770 = vpop.f32.mrb[0].mxu0
      %v2771 = vadd.f32 0.0, %v2770
      %v2772 = vpop.f32.mrb[0].mxu0
      %v2773 = vpop.f32.mrb[0].mxu0
      %v2774 = vadd.f32 0.0, %v2773
      %v2775 = vpop.f32.mrb[0].mxu0
      %2776 = vmatprep.mubr.bf16.mxu0 0
      %2777 = vmatmul.mubr.bf16.gmra.mrb[0].mxu0 %v2619
      %v2778 = vpop.f32.mrb[0].mxu0
      %v2779 = vadd.f32 0.0, %v2778
      %v2780 = vpop.f32.mrb[0].mxu0
      %v2781 = vpop.f32.mrb[0].mxu0
      %v2782 = vadd.f32 0.0, %v2781
      %v2783 = vpop.f32.mrb[0].mxu0
      %2784 = vdwg.mxu0
      %v2785 = vadd.f32 %v2573, %v2659
      %v2786 = vadd.f32 %v2574, %v2662
      %v2787 = vadd.f32 %v2575, %v2667
      %v2788 = vadd.f32 %v2576, %v2670
      %v2789 = vadd.f32 %v2577, %v2675
      %v2790 = vadd.f32 %v2578, %v2678
      %v2791 = vadd.f32 %v2579, %v2683
      %v2792 = vadd.f32 %v2580, %v2686
      %v2793 = vadd.f32 %v2581, %v2691
      %v2794 = vadd.f32 %v2582, %v2694
      %v2795 = vadd.f32 %v2583, %v2699
      %v2796 = vadd.f32 %v2584, %v2702
      %v2797 = vadd.f32 %v2585, %v2707
      %v2798 = vadd.f32 %v2586, %v2710
      %v2799 = vadd.f32 %v2587, %v2715
      %v2800 = vadd.f32 %v2588, %v2718
      %v2801 = vadd.f32 %v2589, %v2723
      %v2802 = vadd.f32 %v2590, %v2726
      %v2803 = vadd.f32 %v2591, %v2731
      %v2804 = vadd.f32 %v2592, %v2734
      %v2805 = vadd.f32 %v2593, %v2739
      %v2806 = vadd.f32 %v2594, %v2742
      %v2807 = vadd.f32 %v2595, %v2747
      %v2808 = vadd.f32 %v2596, %v2750
      %v2809 = vadd.f32 %v2597, %v2755
      %v2810 = vadd.f32 %v2598, %v2758
      %v2811 = vadd.f32 %v2599, %v2763
      %v2812 = vadd.f32 %v2600, %v2766
      %v2813 = vadd.f32 %v2601, %v2771
      %v2814 = vadd.f32 %v2602, %v2774
      %v2815 = vadd.f32 %v2603, %v2779
      %v2816 = vadd.f32 %v2604, %v2782
      %v2817 = vld [vmem:[%s2] sm:$0x1]
      %v2819 = vlaneseq
      %v2820 = vshrl.u32 %v2819, 7
      %v2821 = vsub.s32 0, %v2820
      %v2822 = vrot.slane %v2817, %v2821
      %v2824 = vmul.f32 %v2785, %v2822
      %v2825 = vmul.f32 %v2786, %v2822
      %v2826 = vmul.f32 %v2787, %v2822
      %v2827 = vmul.f32 %v2788, %v2822
      %v2828 = vmul.f32 %v2789, %v2822
      %v2829 = vmul.f32 %v2790, %v2822
      %v2830 = vmul.f32 %v2791, %v2822
      %v2831 = vmul.f32 %v2792, %v2822
      %v2832 = vmul.f32 %v2793, %v2822
      %v2833 = vmul.f32 %v2794, %v2822
      %v2834 = vmul.f32 %v2795, %v2822
      %v2835 = vmul.f32 %v2796, %v2822
      %v2836 = vmul.f32 %v2797, %v2822
      %v2837 = vmul.f32 %v2798, %v2822
      %v2838 = vmul.f32 %v2799, %v2822
      %v2839 = vmul.f32 %v2800, %v2822
      %v2840 = vmul.f32 %v2801, %v2822
      %v2841 = vmul.f32 %v2802, %v2822
      %v2842 = vmul.f32 %v2803, %v2822
      %v2843 = vmul.f32 %v2804, %v2822
      %v2844 = vmul.f32 %v2805, %v2822
      %v2845 = vmul.f32 %v2806, %v2822
      %v2846 = vmul.f32 %v2807, %v2822
      %v2847 = vmul.f32 %v2808, %v2822
      %v2848 = vmul.f32 %v2809, %v2822
      %v2849 = vmul.f32 %v2810, %v2822
      %v2850 = vmul.f32 %v2811, %v2822
      %v2851 = vmul.f32 %v2812, %v2822
      %v2852 = vmul.f32 %v2813, %v2822
      %v2853 = vmul.f32 %v2814, %v2822
      %v2854 = vmul.f32 %v2815, %v2822
      %v2855 = vmul.f32 %v2816, %v2822
      %v2856 = vld [vmem:[%s3] sm:$0x1]
      %v2858 = vlaneseq
      %v2859 = vshrl.u32 %v2858, 7
      %v2860 = vsub.s32 0, %v2859
      %v2861 = vrot.slane %v2856, %v2860
      %v2863 = vadd.f32 %v2824, %v2861
      %v2864 = vadd.f32 %v2825, %v2861
      %v2865 = vadd.f32 %v2826, %v2861
      %v2866 = vadd.f32 %v2827, %v2861
      %v2867 = vadd.f32 %v2828, %v2861
      %v2868 = vadd.f32 %v2829, %v2861
      %v2869 = vadd.f32 %v2830, %v2861
      %v2870 = vadd.f32 %v2831, %v2861
      %v2871 = vadd.f32 %v2832, %v2861
      %v2872 = vadd.f32 %v2833, %v2861
      %v2873 = vadd.f32 %v2834, %v2861
      %v2874 = vadd.f32 %v2835, %v2861
      %v2875 = vadd.f32 %v2836, %v2861
      %v2876 = vadd.f32 %v2837, %v2861
      %v2877 = vadd.f32 %v2838, %v2861
      %v2878 = vadd.f32 %v2839, %v2861
      %v2879 = vadd.f32 %v2840, %v2861
      %v2880 = vadd.f32 %v2841, %v2861
      %v2881 = vadd.f32 %v2842, %v2861
      %v2882 = vadd.f32 %v2843, %v2861
      %v2883 = vadd.f32 %v2844, %v2861
      %v2884 = vadd.f32 %v2845, %v2861
      %v2885 = vadd.f32 %v2846, %v2861
      %v2886 = vadd.f32 %v2847, %v2861
      %v2887 = vadd.f32 %v2848, %v2861
      %v2888 = vadd.f32 %v2849, %v2861
      %v2889 = vadd.f32 %v2850, %v2861
      %v2890 = vadd.f32 %v2851, %v2861
      %v2891 = vadd.f32 %v2852, %v2861
      %v2892 = vadd.f32 %v2853, %v2861
      %v2893 = vadd.f32 %v2854, %v2861
      %v2894 = vadd.f32 %v2855, %v2861
      %v2895 = vmax.f32 %v2863, 0.0
      %v2896 = vmax.f32 %v2864, 0.0
      %v2897 = vmax.f32 %v2865, 0.0
      %v2898 = vmax.f32 %v2866, 0.0
      %v2899 = vmax.f32 %v2867, 0.0
      %v2900 = vmax.f32 %v2868, 0.0
      %v2901 = vmax.f32 %v2869, 0.0
      %v2902 = vmax.f32 %v2870, 0.0
      %v2903 = vmax.f32 %v2871, 0.0
      %v2904 = vmax.f32 %v2872, 0.0
      %v2905 = vmax.f32 %v2873, 0.0
      %v2906 = vmax.f32 %v2874, 0.0
      %v2907 = vmax.f32 %v2875, 0.0
      %v2908 = vmax.f32 %v2876, 0.0
      %v2909 = vmax.f32 %v2877, 0.0
      %v2910 = vmax.f32 %v2878, 0.0
      %v2911 = vmax.f32 %v2879, 0.0
      %v2912 = vmax.f32 %v2880, 0.0
      %v2913 = vmax.f32 %v2881, 0.0
      %v2914 = vmax.f32 %v2882, 0.0
      %v2915 = vmax.f32 %v2883, 0.0
      %v2916 = vmax.f32 %v2884, 0.0
      %v2917 = vmax.f32 %v2885, 0.0
      %v2918 = vmax.f32 %v2886, 0.0
      %v2919 = vmax.f32 %v2887, 0.0
      %v2920 = vmax.f32 %v2888, 0.0
      %v2921 = vmax.f32 %v2889, 0.0
      %v2922 = vmax.f32 %v2890, 0.0
      %v2923 = vmax.f32 %v2891, 0.0
      %v2924 = vmax.f32 %v2892, 0.0
      %v2925 = vmax.f32 %v2893, 0.0
      %v2926 = vmax.f32 %v2894, 0.0
      %vm2927 = vcmask 130048
      %2928 = vst.msk [vmem:[%s197] sm:$0xff] %vm2927, %v2895
      %2929 = vst.msk [vmem:[%s197 + $0x8] sm:$0xff] %vm2927, %v2896
      %2930 = vst.msk [vmem:[%s197 + $0x10] sm:$0xff] %vm2927, %v2897
      %2931 = vst.msk [vmem:[%s197 + $0x18] sm:$0xff] %vm2927, %v2898
      %2932 = vst.msk [vmem:[%s197 + $0x20] sm:$0xff] %vm2927, %v2899
      %2933 = vst.msk [vmem:[%s197 + $0x28] sm:$0xff] %vm2927, %v2900
      %2934 = vst.msk [vmem:[%s197 + $0x30] sm:$0xff] %vm2927, %v2901
      %2935 = vst.msk [vmem:[%s197 + $0x38] sm:$0xff] %vm2927, %v2902
      %2936 = vst.msk [vmem:[%s197 + $0x40] sm:$0xff] %vm2927, %v2903
      %2937 = vst.msk [vmem:[%s197 + $0x48] sm:$0xff] %vm2927, %v2904
      %2938 = vst.msk [vmem:[%s197 + $0x50] sm:$0xff] %vm2927, %v2905
      %2939 = vst.msk [vmem:[%s197 + $0x58] sm:$0xff] %vm2927, %v2906
      %2940 = vst.msk [vmem:[%s197 + $0x60] sm:$0xff] %vm2927, %v2907
      %2941 = vst.msk [vmem:[%s197 + $0x68] sm:$0xff] %vm2927, %v2908
      %2942 = vst.msk [vmem:[%s197 + $0x70] sm:$0xff] %vm2927, %v2909
      %2943 = vst.msk [vmem:[%s197 + $0x78] sm:$0xff] %vm2927, %v2910
      %2944 = vst.msk [vmem:[%s197 + $0x80] sm:$0xff] %vm2927, %v2911
      %2945 = vst.msk [vmem:[%s197 + $0x88] sm:$0xff] %vm2927, %v2912
      %2946 = vst.msk [vmem:[%s197 + $0x90] sm:$0xff] %vm2927, %v2913
      %2947 = vst.msk [vmem:[%s197 + $0x98] sm:$0xff] %vm2927, %v2914
      %2948 = vst.msk [vmem:[%s197 + $0xa0] sm:$0xff] %vm2927, %v2915
      %2949 = vst.msk [vmem:[%s197 + $0xa8] sm:$0xff] %vm2927, %v2916
      %2950 = vst.msk [vmem:[%s197 + $0xb0] sm:$0xff] %vm2927, %v2917
      %2951 = vst.msk [vmem:[%s197 + $0xb8] sm:$0xff] %vm2927, %v2918
      %2952 = vst.msk [vmem:[%s197 + $0xc0] sm:$0xff] %vm2927, %v2919
      %2953 = vst.msk [vmem:[%s197 + $0xc8] sm:$0xff] %vm2927, %v2920
      %2954 = vst.msk [vmem:[%s197 + $0xd0] sm:$0xff] %vm2927, %v2921
      %2955 = vst.msk [vmem:[%s197 + $0xd8] sm:$0xff] %vm2927, %v2922
      %2956 = vst.msk [vmem:[%s197 + $0xe0] sm:$0xff] %vm2927, %v2923
      %2957 = vst.msk [vmem:[%s197 + $0xe8] sm:$0xff] %vm2927, %v2924
      %2958 = vst.msk [vmem:[%s197 + $0xf0] sm:$0xff] %vm2927, %v2925
      %2959 = vst.msk [vmem:[%s197 + $0xf8] sm:$0xff] %vm2927, %v2926
      %s2960 = smul.u32 32, %s15
      %p2961 = scmp.lt.s32.totalorder %s2960, 63
      %s2962 = scalar_select %p2961, %s2960, 63
      %s2963 = smul.addr %s2962, 8
      %s2964 = scalar_lea.vmem %s4, %s2963
      // Predicated region
      $region37: #{forward.9} parent=35 // pred_check
        %p2965 = pneg %p122
      $region38: #{forward.9} parent=35 // pred_check_branch
        %2967 = sbr.rel (%p2965) target = $region40
      $region39: #{forward.9} parent=35 // pred_region
        %s2968 = smul.u32 32, %s15
      $region40: #{forward.9} parent=35 // pred_fallthru
        _
    $region36: #{forward.9} parent=5 // pred_fallthru
      _
    %p2969 = scmp.le.s32.totalorder 2, %s10
    // Predicated region
    $region41: #{forward.9} parent=5 // pred_check
      %p2970 = pneg %p2969
    $region42: #{forward.9} parent=5 // pred_check_branch
      %2972 = sbr.rel (%p2970) target = $region44
    $region43: #{forward.9} parent=5 // pred_region
      %s2973 = ssub.s32 %s10, 2
      // Predicated region
      $region45: #{forward.9} parent=43 // pred_check
        %p2974 = pneg %p128
      $region46: #{forward.9} parent=43 // pred_check_branch
        %2976 = sbr.rel (%p2974) target = $region48
      $region47: #{forward.9} parent=43 // pred_region
        %s2977 = smul.u32 32, %s16
        %p2978 = scmp.lt.s32.totalorder %s2977, 63
        %s2979 = scalar_select %p2978, %s2977, 63
        %s2980 = smul.addr %s2979, 8
        %s2981 = scalar_lea.vmem %s4, %s2980
      $region48: #{forward.9} parent=43 // pred_fallthru
        _
    $region44: #{forward.9} parent=5 // pred_fallthru
      _
  $region6: #{forward.9} parent=0 // loop_footer
    %s14 = sadd.s32 1, %s10
  $region7: #{forward.9} parent=0 // loop_footer_branch
    %9 = sbr.rel target = $region3
  $region8: #{forward.9} parent=0 // loop_exit
    _

// kernel: forward.10
$region0: #{forward.10}
  #allocation0 [shape = 'u32[]', space=smem, size = 0x4, offset = 0x4, fixed_abs, tag = 'smem constant byte address 0x4 - core index']
  #allocation1 [shape = 'u32[144,128]{1,0:T(1,128)}', space=vmem, size = 0x12000, scoped, tag = 'internal scratch']
  %s0 = inlined_call_operand.vmem [shape: f32[2,4,9,9,16], index: 0, kind: input, shape index: {}]
  %s1 = inlined_call_operand.vmem [shape: bf16[9,16,32], index: 1, kind: input, shape index: {}]
  %s2 = inlined_call_operand.vmem [shape: f32[1,32], index: 2, kind: input, shape index: {}]
  %s3 = inlined_call_operand.vmem [shape: f32[1,32], index: 3, kind: input, shape index: {}]
  %s4 = inlined_call_operand.vmem [shape: f32[128,32], index: 4, kind: output, shape index: {}]
  %s5 = sld [smem:[#allocation0]]
  $region49: #{forward.10} parent=0
    _
  %s7 = ssub.s32 1, %s5
  %s8 = scalar_select 0, %s7, %s5
  loop: start=0, step=1, limit=4
  $region2: #{forward.10} parent=0 // loop_pre_header
    _
  $region3: #{forward.10} parent=0 // loop_header
    %s10 = sphi 0, %s14
    %p11 = scmp.ge.s32.totalorder %s10, 4
    %s20 = sphi 0, %s22
    %s23 = sphi 0, %s20
    %s24 = sphi 0, %s23
    %s40 = sphi 0, %s24
    %s44 = sphi 0, %s44
    %s46 = sphi 0, %s44
    %s47 = sphi 0, %s46
    %s61 = sphi 0, %s47
    %s65 = sphi 0, %s65
    %s67 = sphi 0, %s65
    %s68 = sphi 0, %s67
    %s82 = sphi 0, %s68
    %s86 = sphi 0, %s86
    %s88 = sphi 0, %s86
    %s89 = sphi 0, %s88
    %s103 = sphi 0, %s89
    %s109 = sphi 0, %s111
    %s112 = sphi 0, %s109
    %s113 = sphi 0, %s112
    %s129 = sphi 0, %s113
  $region4: #{forward.10} parent=0 // loop_header_branch
    %13 = sbr.rel (%p11) target = $region8
  $region5: #{forward.10} parent=0 // loop_body
    %s15 = ssub.s32 %s10, 1
    %s16 = ssub.s32 %s10, 2
    %s17 = sadd.s32 %s10, 1
    %s18 = ssub.s32 %s10, %s17
    %p19 = scmp.eq.s32.totalorder %s18, 0
    %s21 = sadd.s32 %s20, 1
    %s22 = scalar_select %p19, %s20, %s21
    %p25 = pneg %p19
    %p26 = scmp.eq.s32.totalorder %s10, 1
    %p27 = por %p25, %p26
    %p28 = scmp.ne.s32.totalorder %s20, %s23
    %p29 = scmp.eq.s32.totalorder %s10, 0
    %p30 = por %p28, %p29
    %p31 = scmp.ne.s32.totalorder %s20, %s23
    %p32 = scmp.eq.s32.totalorder %s15, 1
    %p33 = por %p31, %p32
    %p34 = scmp.ne.s32.totalorder %s23, %s24
    %p35 = scmp.eq.s32.totalorder %s15, 0
    %p36 = por %p34, %p35
    %p37 = scmp.ne.s32.totalorder %s23, %s24
    %p38 = scmp.eq.s32.totalorder %s16, 1
    %p39 = por %p37, %p38
    %p41 = scmp.ne.s32.totalorder %s24, %s40
    %p42 = scmp.eq.s32.totalorder %s16, 0
    %p43 = por %p41, %p42
    %s45 = sadd.s32 %s44, 1
    %p48 = scmp.eq.s32.totalorder %s10, 1
    %p49 = scmp.ne.s32.totalorder %s44, %s46
    %p50 = scmp.eq.s32.totalorder %s10, 0
    %p51 = por %p49, %p50
    %p52 = scmp.ne.s32.totalorder %s44, %s46
    %p53 = scmp.eq.s32.totalorder %s15, 1
    %p54 = por %p52, %p53
    %p55 = scmp.ne.s32.totalorder %s46, %s47
    %p56 = scmp.eq.s32.totalorder %s15, 0
    %p57 = por %p55, %p56
    %p58 = scmp.ne.s32.totalorder %s46, %s47
    %p59 = scmp.eq.s32.totalorder %s16, 1
    %p60 = por %p58, %p59
    %p62 = scmp.ne.s32.totalorder %s47, %s61
    %p63 = scmp.eq.s32.totalorder %s16, 0
    %p64 = por %p62, %p63
    %s66 = sadd.s32 %s65, 1
    %p69 = scmp.eq.s32.totalorder %s10, 1
    %p70 = scmp.ne.s32.totalorder %s65, %s67
    %p71 = scmp.eq.s32.totalorder %s10, 0
    %p72 = por %p70, %p71
    %p73 = scmp.ne.s32.totalorder %s65, %s67
    %p74 = scmp.eq.s32.totalorder %s15, 1
    %p75 = por %p73, %p74
    %p76 = scmp.ne.s32.totalorder %s67, %s68
    %p77 = scmp.eq.s32.totalorder %s15, 0
    %p78 = por %p76, %p77
    %p79 = scmp.ne.s32.totalorder %s67, %s68
    %p80 = scmp.eq.s32.totalorder %s16, 1
    %p81 = por %p79, %p80
    %p83 = scmp.ne.s32.totalorder %s68, %s82
    %p84 = scmp.eq.s32.totalorder %s16, 0
    %p85 = por %p83, %p84
    %s87 = sadd.s32 %s86, 1
    %p90 = scmp.eq.s32.totalorder %s10, 1
    %p91 = scmp.ne.s32.totalorder %s86, %s88
    %p92 = scmp.eq.s32.totalorder %s10, 0
    %p93 = por %p91, %p92
    %p94 = scmp.ne.s32.totalorder %s86, %s88
    %p95 = scmp.eq.s32.totalorder %s15, 1
    %p96 = por %p94, %p95
    %p97 = scmp.ne.s32.totalorder %s88, %s89
    %p98 = scmp.eq.s32.totalorder %s15, 0
    %p99 = por %p97, %p98
    %p100 = scmp.ne.s32.totalorder %s88, %s89
    %p101 = scmp.eq.s32.totalorder %s16, 1
    %p102 = por %p100, %p101
    %p104 = scmp.ne.s32.totalorder %s89, %s103
    %p105 = scmp.eq.s32.totalorder %s16, 0
    %p106 = por %p104, %p105
    %s107 = ssub.s32 %s10, %s17
    %p108 = scmp.eq.s32.totalorder %s107, 0
    %s110 = sadd.s32 %s109, 1
    %s111 = scalar_select %p108, %s109, %s110
    %p114 = pneg %p108
    %p115 = scmp.eq.s32.totalorder %s10, 1
    %p116 = por %p114, %p115
    %p117 = scmp.ne.s32.totalorder %s109, %s112
    %p118 = scmp.eq.s32.totalorder %s10, 0
    %p119 = por %p117, %p118
    %p120 = scmp.ne.s32.totalorder %s109, %s112
    %p121 = scmp.eq.s32.totalorder %s15, 1
    %p122 = por %p120, %p121
    %p123 = scmp.ne.s32.totalorder %s112, %s113
    %p124 = scmp.eq.s32.totalorder %s15, 0
    %p125 = por %p123, %p124
    %p126 = scmp.ne.s32.totalorder %s112, %s113
    %p127 = scmp.eq.s32.totalorder %s16, 1
    %p128 = por %p126, %p127
    %p130 = scmp.ne.s32.totalorder %s113, %s129
    %p131 = scmp.eq.s32.totalorder %s16, 0
    %p132 = por %p130, %p131
    %p133 = scmp.le.s32.totalorder 1, %s10
    %p134 = scmp.lt.s32.totalorder %s10, 3
    %p135 = pnand %p133, %p134
    %p136 = pneg %p135
    // Predicated region
    $region9: #{forward.10} parent=5 // pred_check
      _
    $region10: #{forward.10} parent=5 // pred_check_branch
      %138 = sbr.rel (%p135) target = $region12
    $region11: #{forward.10} parent=5 // pred_region
      %s139 = ssub.s32 %s10, 1
      // Predicated region
      $region13: #{forward.10} parent=11 // pred_check
        %p140 = pneg %p57
      $region14: #{forward.10} parent=11 // pred_check_branch
        %142 = sbr.rel (%p140) target = $region16
      $region15: #{forward.10} parent=11 // pred_region
        _
      $region16: #{forward.10} parent=11 // pred_fallthru
        _
      // Predicated region
      $region17: #{forward.10} parent=11 // pred_check
        %p143 = pneg %p78
      $region18: #{forward.10} parent=11 // pred_check_branch
        %145 = sbr.rel (%p143) target = $region20
      $region19: #{forward.10} parent=11 // pred_region
        _
      $region20: #{forward.10} parent=11 // pred_fallthru
        _
      // Predicated region
      $region21: #{forward.10} parent=11 // pred_check
        %p146 = pneg %p99
      $region22: #{forward.10} parent=11 // pred_check_branch
        %148 = sbr.rel (%p146) target = $region24
      $region23: #{forward.10} parent=11 // pred_region
        _
      $region24: #{forward.10} parent=11 // pred_fallthru
        _
    $region12: #{forward.10} parent=5 // pred_fallthru
      _
    %p149 = scmp.lt.s32.totalorder %s10, 2
    // Predicated region
    $region25: #{forward.10} parent=5 // pred_check
      %p150 = pneg %p149
    $region26: #{forward.10} parent=5 // pred_check_branch
      %152 = sbr.rel (%p150) target = $region28
    $region27: #{forward.10} parent=5 // pred_region
      // Predicated region
      $region29: #{forward.10} parent=27 // pred_check
        %p153 = pneg %p30
      $region30: #{forward.10} parent=27 // pred_check_branch
        %155 = sbr.rel (%p153) target = $region32
      $region31: #{forward.10} parent=27 // pred_region
        %p156 = scmp.lt.s32.totalorder %s10, 1
        %s157 = scalar_select %p156, %s10, 1
        %s158 = smul.addr %s157, 72
        %s159 = smul.addr %s158, 8
        %s160 = scalar_lea.vmem %s0, %s159
      $region32: #{forward.10} parent=27 // pred_fallthru
        _
    $region28: #{forward.10} parent=5 // pred_fallthru
      _
    %p161 = scmp.le.s32.totalorder 1, %s10
    %p162 = scmp.lt.s32.totalorder %s10, 3
    %p163 = pnand %p161, %p162
    %p164 = pneg %p163
    // Predicated region
    $region33: #{forward.10} parent=5 // pred_check
      _
    $region34: #{forward.10} parent=5 // pred_check_branch
      %166 = sbr.rel (%p163) target = $region36
    $region35: #{forward.10} parent=5 // pred_region
      %s167 = ssub.s32 %s10, 1
      %p168 = scmp.lt.s32.totalorder %s15, 1
      %s169 = scalar_select %p168, %s15, 1
      %s170 = smul.addr %s169, 72
      %s171 = smul.addr %s170, 8
      %s172 = scalar_lea.vmem %s0, %s171
      %p173 = pneg %p36
      %p174 = pneg %p33
      %p175 = pneg %p57
      %p176 = pneg %p54
      %p177 = pneg %p78
      %p178 = pneg %p75
      %p179 = pneg %p99
      %p180 = pneg %p96
      %p181 = pneg %p125
      %p182 = pneg %p122
      %s183 = smul.u32 8, %s15
      %p184 = scmp.lt.s32.totalorder %s183, 15
      %s185 = scalar_select %p184, %s183, 15
      %s186 = smul.addr %s185, 8
      %s187 = scalar_lea.vmem %s4, %s186
      %p188 = scmp.lt.s32.totalorder %s15, 1
      %s189 = scalar_select %p188, %s15, 1
      %s190 = smul.addr %s189, 72
      %s191 = smul.addr %s190, 8
      %s192 = scalar_lea.vmem %s0, %s191
      %s193 = smul.u32 8, %s15
      %p194 = scmp.lt.s32.totalorder %s193, 15
      %s195 = scalar_select %p194, %s193, 15
      %s196 = smul.addr %s195, 8
      %s197 = scalar_lea.vmem %s4, %s196
      %s198 = smul.u32 8, %s15
      %v200 = vld [vmem:[%s192] sm:$0xff]
      %v201 = vld [vmem:[%s192 + $0x8] sm:$0x1]
      %v202 = vld [vmem:[%s192 + $0x10] sm:$0xff]
      %v203 = vld [vmem:[%s192 + $0x18] sm:$0x1]
      %v204 = vld [vmem:[%s192 + $0x20] sm:$0xff]
      %v205 = vld [vmem:[%s192 + $0x28] sm:$0x1]
      %v206 = vld [vmem:[%s192 + $0x30] sm:$0xff]
      %v207 = vld [vmem:[%s192 + $0x38] sm:$0x1]
      %v208 = vld [vmem:[%s192 + $0x40] sm:$0xff]
      %v209 = vld [vmem:[%s192 + $0x48] sm:$0x1]
      %v210 = vld [vmem:[%s192 + $0x50] sm:$0xff]
      %v211 = vld [vmem:[%s192 + $0x58] sm:$0x1]
      %v212 = vld [vmem:[%s192 + $0x60] sm:$0xff]
      %v213 = vld [vmem:[%s192 + $0x68] sm:$0x1]
      %v214 = vld [vmem:[%s192 + $0x70] sm:$0xff]
      %v215 = vld [vmem:[%s192 + $0x78] sm:$0x1]
      %v216 = vld [vmem:[%s192 + $0x80] sm:$0xff]
      %v217 = vld [vmem:[%s192 + $0x88] sm:$0x1]
      %s218 = scalar_lea.vmem %s192, 144
      %v219 = vld [vmem:[%s218] sm:$0xff]
      %v220 = vld [vmem:[%s218 + $0x10] sm:$0xff]
      %v221 = vld [vmem:[%s218 + $0x20] sm:$0xff]
      %v222 = vld [vmem:[%s218 + $0x30] sm:$0xff]
      %v223 = vld [vmem:[%s218 + $0x40] sm:$0xff]
      %v224 = vld [vmem:[%s218 + $0x50] sm:$0xff]
      %v225 = vld [vmem:[%s218 + $0x60] sm:$0xff]
      %v226 = vld [vmem:[%s218 + $0x70] sm:$0xff]
      %v227 = vld [vmem:[%s218 + $0x80] sm:$0xff]
      %s228 = scalar_lea.vmem %s192, 288
      %v229 = vld [vmem:[%s228] sm:$0xff]
      %v230 = vld [vmem:[%s228 + $0x8] sm:$0x1]
      %v231 = vld [vmem:[%s228 + $0x10] sm:$0xff]
      %v232 = vld [vmem:[%s228 + $0x18] sm:$0x1]
      %v233 = vld [vmem:[%s228 + $0x20] sm:$0xff]
      %v234 = vld [vmem:[%s228 + $0x28] sm:$0x1]
      %v235 = vld [vmem:[%s228 + $0x30] sm:$0xff]
      %v236 = vld [vmem:[%s228 + $0x38] sm:$0x1]
      %v237 = vld [vmem:[%s228 + $0x40] sm:$0xff]
      %v238 = vld [vmem:[%s228 + $0x48] sm:$0x1]
      %v239 = vld [vmem:[%s228 + $0x50] sm:$0xff]
      %v240 = vld [vmem:[%s228 + $0x58] sm:$0x1]
      %v241 = vld [vmem:[%s228 + $0x60] sm:$0xff]
      %v242 = vld [vmem:[%s228 + $0x68] sm:$0x1]
      %v243 = vld [vmem:[%s228 + $0x70] sm:$0xff]
      %v244 = vld [vmem:[%s228 + $0x78] sm:$0x1]
      %s245 = scalar_lea.vmem %s192, 432
      %v246 = vld [vmem:[%s245] sm:$0xff]
      %v247 = vld [vmem:[%s245 + $0x10] sm:$0xff]
      %v248 = vld [vmem:[%s245 + $0x20] sm:$0xff]
      %v249 = vld [vmem:[%s245 + $0x30] sm:$0xff]
      %v250 = vld [vmem:[%s245 + $0x40] sm:$0xff]
      %v251 = vld [vmem:[%s245 + $0x50] sm:$0xff]
      %v252 = vld [vmem:[%s245 + $0x60] sm:$0xff]
      %v253 = vld [vmem:[%s245 + $0x70] sm:$0xff]
      %v254 = vpack.c.bf16 %v202, %v200
      %v255 = vpack.c.bf16 %v206, %v204
      %v256 = vpack.c.bf16 %v210, %v208
      %v257 = vpack.c.bf16 %v214, %v212
      %v258 = vld [vmem:[%s1] sm:$0xf]
      %v259 = vld [vmem:[%s1 + $0x4] sm:$0xf]
      %v260 = vpack.c.bf16 %v220, %v219
      %v261 = vpack.c.bf16 %v222, %v221
      %v262 = vpack.c.bf16 %v224, %v223
      %v263 = vpack.c.bf16 %v226, %v225
      %s264 = scalar_lea.vmem %s1, 8
      %v265 = vld [vmem:[%s264] sm:$0xf]
      %v266 = vld [vmem:[%s264 + $0x4] sm:$0xf]
      %v269 = vunpack.c.l.b16 %v265
      %v270 = vunpack.c.l.b16 %v266
      %v271 = vpack.c.b16 %v270, %v269
      %vm273 = vcmask 130048
      %v275 = vsel %vm273, %v260, 0
      %v278 = vsel %vm273, %v261, 0
      %v281 = vsel %vm273, %v262, 0
      %v284 = vsel %vm273, %v263, 0
      %286 = vmatprep.subr.bf16.mxu0 0
      %287 = vmatpush1.bf16.msra.mxu0 %v271
      %288 = vmatprep.subr.bf16.mxu0 0
      %289 = vmatpush1.bf16.msra.mxu0 0
      %290 = vmatprep.subr.bf16.mxu0 0
      %291 = vmatpush1.bf16.msra.mxu0 0
      %292 = vmatprep.subr.bf16.mxu0 0
      %293 = vmatpush1.bf16.msra.mxu0 0
      %294 = vmatprep.subr.bf16.mxu0 0
      %295 = vmatpush1.bf16.msra.mxu0 0
      %296 = vmatprep.subr.bf16.mxu0 0
      %297 = vmatpush1.bf16.msra.mxu0 0
      %298 = vmatprep.subr.bf16.mxu0 0
      %299 = vmatpush1.bf16.msra.mxu0 0
      %300 = vmatprep.subr.bf16.mxu0 0
      %301 = vmatpush1.bf16.msra.mxu0 0
      %302 = vmatprep.subr.bf16.mxu0 0
      %303 = vmatpush1.bf16.msra.mxu0 0
      %304 = vmatprep.subr.bf16.mxu0 0
      %305 = vmatpush1.bf16.msra.mxu0 0
      %306 = vmatprep.subr.bf16.mxu0 0
      %307 = vmatpush1.bf16.msra.mxu0 0
      %308 = vmatprep.subr.bf16.mxu0 0
      %309 = vmatpush1.bf16.msra.mxu0 0
      %310 = vmatprep.subr.bf16.mxu0 0
      %311 = vmatpush1.bf16.msra.mxu0 0
      %312 = vmatprep.subr.bf16.mxu0 0
      %313 = vmatpush1.bf16.msra.mxu0 0
      %314 = vmatprep.subr.bf16.mxu0 0
      %315 = vmatpush1.bf16.msra.mxu0 0
      %316 = vmatprep.subr.bf16.mxu0 0
      %317 = vmatpush1.bf16.msra.mxu0 0
      %318 = vmatprep.mubr.bf16.mxu0 0
      %319 = vmatmul.mubr.bf16.gmra.mrb[0].mxu0 %v275
      %v320 = vpop.f32.mrb[0].mxu0
      %v321 = vadd.f32 0.0, %v320
      %v322 = vpop.f32.mrb[0].mxu0
      %v323 = vpop.f32.mrb[0].mxu0
      %v324 = vadd.f32 0.0, %v323
      %v325 = vpop.f32.mrb[0].mxu0
      %326 = vmatprep.mubr.bf16.mxu0 0
      %327 = vmatmul.mubr.bf16.gmra.mrb[0].mxu0 %v278
      %v328 = vpop.f32.mrb[0].mxu0
      %v329 = vadd.f32 0.0, %v328
      %v330 = vpop.f32.mrb[0].mxu0
      %v331 = vpop.f32.mrb[0].mxu0
      %v332 = vadd.f32 0.0, %v331
      %v333 = vpop.f32.mrb[0].mxu0
      %334 = vmatprep.mubr.bf16.mxu0 0
      %335 = vmatmul.mubr.bf16.gmra.mrb[0].mxu0 %v281
      %v336 = vpop.f32.mrb[0].mxu0
      %v337 = vadd.f32 0.0, %v336
      %v338 = vpop.f32.mrb[0].mxu0
      %v339 = vpop.f32.mrb[0].mxu0
      %v340 = vadd.f32 0.0, %v339
      %v341 = vpop.f32.mrb[0].mxu0
      %342 = vmatprep.mubr.bf16.mxu0 0
      %343 = vmatmul.mubr.bf16.gmra.mrb[0].mxu0 %v284
      %v344 = vpop.f32.mrb[0].mxu0
      %v345 = vadd.f32 0.0, %v344
      %v346 = vpop.f32.mrb[0].mxu0
      %v347 = vpop.f32.mrb[0].mxu0
      %v348 = vadd.f32 0.0, %v347
      %v349 = vpop.f32.mrb[0].mxu0
      %350 = vdwg.mxu0
      %v353 = vunpack.c.l.b16 %v258
      %v354 = vunpack.c.l.b16 %v259
      %v355 = vpack.c.b16 %v354, %v353
      %v358 = vsel %vm273, %v254, 0
      %v361 = vsel %vm273, %v255, 0
      %v364 = vsel %vm273, %v256, 0
      %v367 = vsel %vm273, %v257, 0
      %369 = vmatprep.subr.bf16.mxu0 0
      %370 = vmatpush1.bf16.msra.mxu0 %v355
      %371 = vmatprep.subr.bf16.mxu0 0
      %372 = vmatpush1.bf16.msra.mxu0 0
      %373 = vmatprep.subr.bf16.mxu0 0
      %374 = vmatpush1.bf16.msra.mxu0 0
      %375 = vmatprep.subr.bf16.mxu0 0
      %376 = vmatpush1.bf16.msra.mxu0 0
      %377 = vmatprep.subr.bf16.mxu0 0
      %378 = vmatpush1.bf16.msra.mxu0 0
      %379 = vmatprep.subr.bf16.mxu0 0
      %380 = vmatpush1.bf16.msra.mxu0 0
      %381 = vmatprep.subr.bf16.mxu0 0
      %382 = vmatpush1.bf16.msra.mxu0 0
      %383 = vmatprep.subr.bf16.mxu0 0
      %384 = vmatpush1.bf16.msra.mxu0 0
      %385 = vmatprep.subr.bf16.mxu0 0
      %386 = vmatpush1.bf16.msra.mxu0 0
      %387 = vmatprep.subr.bf16.mxu0 0
      %388 = vmatpush1.bf16.msra.mxu0 0
      %389 = vmatprep.subr.bf16.mxu0 0
      %390 = vmatpush1.bf16.msra.mxu0 0
      %391 = vmatprep.subr.bf16.mxu0 0
      %392 = vmatpush1.bf16.msra.mxu0 0
      %393 = vmatprep.subr.bf16.mxu0 0
      %394 = vmatpush1.bf16.msra.mxu0 0
      %395 = vmatprep.subr.bf16.mxu0 0
      %396 = vmatpush1.bf16.msra.mxu0 0
      %397 = vmatprep.subr.bf16.mxu0 0
      %398 = vmatpush1.bf16.msra.mxu0 0
      %399 = vmatprep.subr.bf16.mxu0 0
      %400 = vmatpush1.bf16.msra.mxu0 0
      %401 = vmatprep.mubr.bf16.mxu0 0
      %402 = vmatmul.mubr.bf16.gmra.mrb[0].mxu0 %v358
      %v403 = vpop.f32.mrb[0].mxu0
      %v404 = vadd.f32 %v321, %v403
      %v405 = vpop.f32.mrb[0].mxu0
      %v406 = vpop.f32.mrb[0].mxu0
      %v407 = vadd.f32 %v324, %v406
      %v408 = vpop.f32.mrb[0].mxu0
      %409 = vmatprep.mubr.bf16.mxu0 0
      %410 = vmatmul.mubr.bf16.gmra.mrb[0].mxu0 %v361
      %v411 = vpop.f32.mrb[0].mxu0
      %v412 = vadd.f32 %v329, %v411
      %v413 = vpop.f32.mrb[0].mxu0
      %v414 = vpop.f32.mrb[0].mxu0
      %v415 = vadd.f32 %v332, %v414
      %v416 = vpop.f32.mrb[0].mxu0
      %417 = vmatprep.mubr.bf16.mxu0 0
      %418 = vmatmul.mubr.bf16.gmra.mrb[0].mxu0 %v364
      %v419 = vpop.f32.mrb[0].mxu0
      %v420 = vadd.f32 %v337, %v419
      %v421 = vpop.f32.mrb[0].mxu0
      %v422 = vpop.f32.mrb[0].mxu0
      %v423 = vadd.f32 %v340, %v422
      %v424 = vpop.f32.mrb[0].mxu0
      %425 = vmatprep.mubr.bf16.mxu0 0
      %426 = vmatmul.mubr.bf16.gmra.mrb[0].mxu0 %v367
      %v427 = vpop.f32.mrb[0].mxu0
      %v428 = vadd.f32 %v345, %v427
      %v429 = vpop.f32.mrb[0].mxu0
      %v430 = vpop.f32.mrb[0].mxu0
      %v431 = vadd.f32 %v348, %v430
      %v432 = vpop.f32.mrb[0].mxu0
      %433 = vdwg.mxu0
      %vm450 = vcmask 1046528
      %v451 = vrot.slane %v200, 1
      %v452 = vrot.slane %v201, 1
      %v453 = vsel %vm450, %v451, %v452
      %v454 = vrot.slane %v202, 1
      %v455 = vrot.slane %v203, 1
      %v456 = vsel %vm450, %v454, %v455
      %v457 = vrot.slane %v204, 1
      %v458 = vrot.slane %v205, 1
      %v459 = vsel %vm450, %v457, %v458
      %v460 = vrot.slane %v206, 1
      %v461 = vrot.slane %v207, 1
      %v462 = vsel %vm450, %v460, %v461
      %v463 = vrot.slane %v208, 1
      %v464 = vrot.slane %v209, 1
      %v465 = vsel %vm450, %v463, %v464
      %v466 = vrot.slane %v210, 1
      %v467 = vrot.slane %v211, 1
      %v468 = vsel %vm450, %v466, %v467
      %v469 = vrot.slane %v212, 1
      %v470 = vrot.slane %v213, 1
      %v471 = vsel %vm450, %v469, %v470
      %v472 = vrot.slane %v214, 1
      %v473 = vrot.slane %v215, 1
      %v474 = vsel %vm450, %v472, %v473
      %v483 = vpack.c.bf16 %v456, %v453
      %v484 = vpack.c.bf16 %v462, %v459
      %v485 = vpack.c.bf16 %v468, %v465
      %v486 = vpack.c.bf16 %v474, %v471
      %s487 = scalar_lea.vmem %s1, 16
      %v488 = vld [vmem:[%s487] sm:$0xf]
      %v489 = vld [vmem:[%s487 + $0x4] sm:$0xf]
      %v492 = vunpack.c.l.b16 %v488
      %v493 = vunpack.c.l.b16 %v489
      %v494 = vpack.c.b16 %v493, %v492
      %v497 = vsel %vm273, %v483, 0
      %v500 = vsel %vm273, %v484, 0
      %v503 = vsel %vm273, %v485, 0
      %v506 = vsel %vm273, %v486, 0
      %508 = vmatprep.subr.bf16.mxu0 0
      %509 = vmatpush1.bf16.msra.mxu0 %v494
      %510 = vmatprep.subr.bf16.mxu0 0
      %511 = vmatpush1.bf16.msra.mxu0 0
      %512 = vmatprep.subr.bf16.mxu0 0
      %513 = vmatpush1.bf16.msra.mxu0 0
      %514 = vmatprep.subr.bf16.mxu0 0
      %515 = vmatpush1.bf16.msra.mxu0 0
      %516 = vmatprep.subr.bf16.mxu0 0
      %517 = vmatpush1.bf16.msra.mxu0 0
      %518 = vmatprep.subr.bf16.mxu0 0
      %519 = vmatpush1.bf16.msra.mxu0 0
      %520 = vmatprep.subr.bf16.mxu0 0
      %521 = vmatpush1.bf16.msra.mxu0 0
      %522 = vmatprep.subr.bf16.mxu0 0
      %523 = vmatpush1.bf16.msra.mxu0 0
      %524 = vmatprep.subr.bf16.mxu0 0
      %525 = vmatpush1.bf16.msra.mxu0 0
      %526 = vmatprep.subr.bf16.mxu0 0
      %527 = vmatpush1.bf16.msra.mxu0 0
      %528 = vmatprep.subr.bf16.mxu0 0
      %529 = vmatpush1.bf16.msra.mxu0 0
      %530 = vmatprep.subr.bf16.mxu0 0
      %531 = vmatpush1.bf16.msra.mxu0 0
      %532 = vmatprep.subr.bf16.mxu0 0
      %533 = vmatpush1.bf16.msra.mxu0 0
      %534 = vmatprep.subr.bf16.mxu0 0
      %535 = vmatpush1.bf16.msra.mxu0 0
      %536 = vmatprep.subr.bf16.mxu0 0
      %537 = vmatpush1.bf16.msra.mxu0 0
      %538 = vmatprep.subr.bf16.mxu0 0
      %539 = vmatpush1.bf16.msra.mxu0 0
      %540 = vmatprep.mubr.bf16.mxu0 0
      %541 = vmatmul.mubr.bf16.gmra.mrb[0].mxu0 %v497
      %v542 = vpop.f32.mrb[0].mxu0
      %v543 = vadd.f32 0.0, %v542
      %v544 = vpop.f32.mrb[0].mxu0
      %v545 = vpop.f32.mrb[0].mxu0
      %v546 = vadd.f32 0.0, %v545
      %v547 = vpop.f32.mrb[0].mxu0
      %548 = vmatprep.mubr.bf16.mxu0 0
      %549 = vmatmul.mubr.bf16.gmra.mrb[0].mxu0 %v500
      %v550 = vpop.f32.mrb[0].mxu0
      %v551 = vadd.f32 0.0, %v550
      %v552 = vpop.f32.mrb[0].mxu0
      %v553 = vpop.f32.mrb[0].mxu0
      %v554 = vadd.f32 0.0, %v553
      %v555 = vpop.f32.mrb[0].mxu0
      %556 = vmatprep.mubr.bf16.mxu0 0
      %557 = vmatmul.mubr.bf16.gmra.mrb[0].mxu0 %v503
      %v558 = vpop.f32.mrb[0].mxu0
      %v559 = vadd.f32 0.0, %v558
      %v560 = vpop.f32.mrb[0].mxu0
      %v561 = vpop.f32.mrb[0].mxu0
      %v562 = vadd.f32 0.0, %v561
      %v563 = vpop.f32.mrb[0].mxu0
      %564 = vmatprep.mubr.bf16.mxu0 0
      %565 = vmatmul.mubr.bf16.gmra.mrb[0].mxu0 %v506
      %v566 = vpop.f32.mrb[0].mxu0
      %v567 = vadd.f32 0.0, %v566
      %v568 = vpop.f32.mrb[0].mxu0
      %v569 = vpop.f32.mrb[0].mxu0
      %v570 = vadd.f32 0.0, %v569
      %v571 = vpop.f32.mrb[0].mxu0
      %572 = vdwg.mxu0
      %v573 = vadd.f32 %v404, %v543
      %v574 = vadd.f32 %v407, %v546
      %v575 = vadd.f32 %v412, %v551
      %v576 = vadd.f32 %v415, %v554
      %v577 = vadd.f32 %v420, %v559
      %v578 = vadd.f32 %v423, %v562
      %v579 = vadd.f32 %v428, %v567
      %v580 = vadd.f32 %v431, %v570
      %v581 = vpack.c.bf16 %v231, %v229
      %v582 = vpack.c.bf16 %v235, %v233
      %v583 = vpack.c.bf16 %v239, %v237
      %v584 = vpack.c.bf16 %v243, %v241
      %s585 = scalar_lea.vmem %s1, 24
      %v586 = vld [vmem:[%s585] sm:$0xf]
      %v587 = vld [vmem:[%s585 + $0x4] sm:$0xf]
      %v590 = vunpack.c.l.b16 %v586
      %v591 = vunpack.c.l.b16 %v587
      %v592 = vpack.c.b16 %v591, %v590
      %v595 = vsel %vm273, %v581, 0
      %v598 = vsel %vm273, %v582, 0
      %v601 = vsel %vm273, %v583, 0
      %v604 = vsel %vm273, %v584, 0
      %606 = vmatprep.subr.bf16.mxu0 0
      %607 = vmatpush1.bf16.msra.mxu0 %v592
      %608 = vmatprep.subr.bf16.mxu0 0
      %609 = vmatpush1.bf16.msra.mxu0 0
      %610 = vmatprep.subr.bf16.mxu0 0
      %611 = vmatpush1.bf16.msra.mxu0 0
      %612 = vmatprep.subr.bf16.mxu0 0
      %613 = vmatpush1.bf16.msra.mxu0 0
      %614 = vmatprep.subr.bf16.mxu0 0
      %615 = vmatpush1.bf16.msra.mxu0 0
      %616 = vmatprep.subr.bf16.mxu0 0
      %617 = vmatpush1.bf16.msra.mxu0 0
      %618 = vmatprep.subr.bf16.mxu0 0
      %619 = vmatpush1.bf16.msra.mxu0 0
      %620 = vmatprep.subr.bf16.mxu0 0
      %621 = vmatpush1.bf16.msra.mxu0 0
      %622 = vmatprep.subr.bf16.mxu0 0
      %623 = vmatpush1.bf16.msra.mxu0 0
      %624 = vmatprep.subr.bf16.mxu0 0
      %625 = vmatpush1.bf16.msra.mxu0 0
      %626 = vmatprep.subr.bf16.mxu0 0
      %627 = vmatpush1.bf16.msra.mxu0 0
      %628 = vmatprep.subr.bf16.mxu0 0
      %629 = vmatpush1.bf16.msra.mxu0 0
      %630 = vmatprep.subr.bf16.mxu0 0
      %631 = vmatpush1.bf16.msra.mxu0 0
      %632 = vmatprep.subr.bf16.mxu0 0
      %633 = vmatpush1.bf16.msra.mxu0 0
      %634 = vmatprep.subr.bf16.mxu0 0
      %635 = vmatpush1.bf16.msra.mxu0 0
      %636 = vmatprep.subr.bf16.mxu0 0
      %637 = vmatpush1.bf16.msra.mxu0 0
      %638 = vmatprep.mubr.bf16.mxu0 0
      %639 = vmatmul.mubr.bf16.gmra.mrb[0].mxu0 %v595
      %v640 = vpop.f32.mrb[0].mxu0
      %v641 = vadd.f32 0.0, %v640
      %v642 = vpop.f32.mrb[0].mxu0
      %v643 = vpop.f32.mrb[0].mxu0
      %v644 = vadd.f32 0.0, %v643
      %v645 = vpop.f32.mrb[0].mxu0
      %646 = vmatprep.mubr.bf16.mxu0 0
      %647 = vmatmul.mubr.bf16.gmra.mrb[0].mxu0 %v598
      %v648 = vpop.f32.mrb[0].mxu0
      %v649 = vadd.f32 0.0, %v648
      %v650 = vpop.f32.mrb[0].mxu0
      %v651 = vpop.f32.mrb[0].mxu0
      %v652 = vadd.f32 0.0, %v651
      %v653 = vpop.f32.mrb[0].mxu0
      %654 = vmatprep.mubr.bf16.mxu0 0
      %655 = vmatmul.mubr.bf16.gmra.mrb[0].mxu0 %v601
      %v656 = vpop.f32.mrb[0].mxu0
      %v657 = vadd.f32 0.0, %v656
      %v658 = vpop.f32.mrb[0].mxu0
      %v659 = vpop.f32.mrb[0].mxu0
      %v660 = vadd.f32 0.0, %v659
      %v661 = vpop.f32.mrb[0].mxu0
      %662 = vmatprep.mubr.bf16.mxu0 0
      %663 = vmatmul.mubr.bf16.gmra.mrb[0].mxu0 %v604
      %v664 = vpop.f32.mrb[0].mxu0
      %v665 = vadd.f32 0.0, %v664
      %v666 = vpop.f32.mrb[0].mxu0
      %v667 = vpop.f32.mrb[0].mxu0
      %v668 = vadd.f32 0.0, %v667
      %v669 = vpop.f32.mrb[0].mxu0
      %670 = vdwg.mxu0
      %v671 = vadd.f32 %v573, %v641
      %v672 = vadd.f32 %v574, %v644
      %v673 = vadd.f32 %v575, %v649
      %v674 = vadd.f32 %v576, %v652
      %v675 = vadd.f32 %v577, %v657
      %v676 = vadd.f32 %v578, %v660
      %v677 = vadd.f32 %v579, %v665
      %v678 = vadd.f32 %v580, %v668
      %v679 = vpack.c.bf16 %v247, %v246
      %v680 = vpack.c.bf16 %v249, %v248
      %v681 = vpack.c.bf16 %v251, %v250
      %v682 = vpack.c.bf16 %v253, %v252
      %s683 = scalar_lea.vmem %s1, 32
      %v684 = vld [vmem:[%s683] sm:$0xf]
      %v685 = vld [vmem:[%s683 + $0x4] sm:$0xf]
      %v688 = vunpack.c.l.b16 %v684
      %v689 = vunpack.c.l.b16 %v685
      %v690 = vpack.c.b16 %v689, %v688
      %v693 = vsel %vm273, %v679, 0
      %v696 = vsel %vm273, %v680, 0
      %v699 = vsel %vm273, %v681, 0
      %v702 = vsel %vm273, %v682, 0
      %704 = vmatprep.subr.bf16.mxu0 0
      %705 = vmatpush1.bf16.msra.mxu0 %v690
      %706 = vmatprep.subr.bf16.mxu0 0
      %707 = vmatpush1.bf16.msra.mxu0 0
      %708 = vmatprep.subr.bf16.mxu0 0
      %709 = vmatpush1.bf16.msra.mxu0 0
      %710 = vmatprep.subr.bf16.mxu0 0
      %711 = vmatpush1.bf16.msra.mxu0 0
      %712 = vmatprep.subr.bf16.mxu0 0
      %713 = vmatpush1.bf16.msra.mxu0 0
      %714 = vmatprep.subr.bf16.mxu0 0
      %715 = vmatpush1.bf16.msra.mxu0 0
      %716 = vmatprep.subr.bf16.mxu0 0
      %717 = vmatpush1.bf16.msra.mxu0 0
      %718 = vmatprep.subr.bf16.mxu0 0
      %719 = vmatpush1.bf16.msra.mxu0 0
      %720 = vmatprep.subr.bf16.mxu0 0
      %721 = vmatpush1.bf16.msra.mxu0 0
      %722 = vmatprep.subr.bf16.mxu0 0
      %723 = vmatpush1.bf16.msra.mxu0 0
      %724 = vmatprep.subr.bf16.mxu0 0
      %725 = vmatpush1.bf16.msra.mxu0 0
      %726 = vmatprep.subr.bf16.mxu0 0
      %727 = vmatpush1.bf16.msra.mxu0 0
      %728 = vmatprep.subr.bf16.mxu0 0
      %729 = vmatpush1.bf16.msra.mxu0 0
      %730 = vmatprep.subr.bf16.mxu0 0
      %731 = vmatpush1.bf16.msra.mxu0 0
      %732 = vmatprep.subr.bf16.mxu0 0
      %733 = vmatpush1.bf16.msra.mxu0 0
      %734 = vmatprep.subr.bf16.mxu0 0
      %735 = vmatpush1.bf16.msra.mxu0 0
      %736 = vmatprep.mubr.bf16.mxu0 0
      %737 = vmatmul.mubr.bf16.gmra.mrb[0].mxu0 %v693
      %v738 = vpop.f32.mrb[0].mxu0
      %v739 = vadd.f32 0.0, %v738
      %v740 = vpop.f32.mrb[0].mxu0
      %v741 = vpop.f32.mrb[0].mxu0
      %v742 = vadd.f32 0.0, %v741
      %v743 = vpop.f32.mrb[0].mxu0
      %744 = vmatprep.mubr.bf16.mxu0 0
      %745 = vmatmul.mubr.bf16.gmra.mrb[0].mxu0 %v696
      %v746 = vpop.f32.mrb[0].mxu0
      %v747 = vadd.f32 0.0, %v746
      %v748 = vpop.f32.mrb[0].mxu0
      %v749 = vpop.f32.mrb[0].mxu0
      %v750 = vadd.f32 0.0, %v749
      %v751 = vpop.f32.mrb[0].mxu0
      %752 = vmatprep.mubr.bf16.mxu0 0
      %753 = vmatmul.mubr.bf16.gmra.mrb[0].mxu0 %v699
      %v754 = vpop.f32.mrb[0].mxu0
      %v755 = vadd.f32 0.0, %v754
      %v756 = vpop.f32.mrb[0].mxu0
      %v757 = vpop.f32.mrb[0].mxu0
      %v758 = vadd.f32 0.0, %v757
      %v759 = vpop.f32.mrb[0].mxu0
      %760 = vmatprep.mubr.bf16.mxu0 0
      %761 = vmatmul.mubr.bf16.gmra.mrb[0].mxu0 %v702
      %v762 = vpop.f32.mrb[0].mxu0
      %v763 = vadd.f32 0.0, %v762
      %v764 = vpop.f32.mrb[0].mxu0
      %v765 = vpop.f32.mrb[0].mxu0
      %v766 = vadd.f32 0.0, %v765
      %v767 = vpop.f32.mrb[0].mxu0
      %768 = vdwg.mxu0
      %v769 = vadd.f32 %v671, %v739
      %v770 = vadd.f32 %v672, %v742
      %v771 = vadd.f32 %v673, %v747
      %v772 = vadd.f32 %v674, %v750
      %v773 = vadd.f32 %v675, %v755
      %v774 = vadd.f32 %v676, %v758
      %v775 = vadd.f32 %v677, %v763
      %v776 = vadd.f32 %v678, %v766
      %v793 = vrot.slane %v229, 1
      %v794 = vrot.slane %v230, 1
      %v795 = vsel %vm450, %v793, %v794
      %v796 = vrot.slane %v231, 1
      %v797 = vrot.slane %v232, 1
      %v798 = vsel %vm450, %v796, %v797
      %v799 = vrot.slane %v233, 1
      %v800 = vrot.slane %v234, 1
      %v801 = vsel %vm450, %v799, %v800
      %v802 = vrot.slane %v235, 1
      %v803 = vrot.slane %v236, 1
      %v804 = vsel %vm450, %v802, %v803
      %v805 = vrot.slane %v237, 1
      %v806 = vrot.slane %v238, 1
      %v807 = vsel %vm450, %v805, %v806
      %v808 = vrot.slane %v239, 1
      %v809 = vrot.slane %v240, 1
      %v810 = vsel %vm450, %v808, %v809
      %v811 = vrot.slane %v241, 1
      %v812 = vrot.slane %v242, 1
      %v813 = vsel %vm450, %v811, %v812
      %v814 = vrot.slane %v243, 1
      %v815 = vrot.slane %v244, 1
      %v816 = vsel %vm450, %v814, %v815
      %v825 = vpack.c.bf16 %v798, %v795
      %v826 = vpack.c.bf16 %v804, %v801
      %v827 = vpack.c.bf16 %v810, %v807
      %v828 = vpack.c.bf16 %v816, %v813
      %s829 = scalar_lea.vmem %s1, 40
      %v830 = vld [vmem:[%s829] sm:$0xf]
      %v831 = vld [vmem:[%s829 + $0x4] sm:$0xf]
      %v834 = vunpack.c.l.b16 %v830
      %v835 = vunpack.c.l.b16 %v831
      %v836 = vpack.c.b16 %v835, %v834
      %v839 = vsel %vm273, %v825, 0
      %v842 = vsel %vm273, %v826, 0
      %v845 = vsel %vm273, %v827, 0
      %v848 = vsel %vm273, %v828, 0
      %850 = vmatprep.subr.bf16.mxu0 0
      %851 = vmatpush1.bf16.msra.mxu0 %v836
      %852 = vmatprep.subr.bf16.mxu0 0
      %853 = vmatpush1.bf16.msra.mxu0 0
      %854 = vmatprep.subr.bf16.mxu0 0
      %855 = vmatpush1.bf16.msra.mxu0 0
      %856 = vmatprep.subr.bf16.mxu0 0
      %857 = vmatpush1.bf16.msra.mxu0 0
      %858 = vmatprep.subr.bf16.mxu0 0
      %859 = vmatpush1.bf16.msra.mxu0 0
      %860 = vmatprep.subr.bf16.mxu0 0
      %861 = vmatpush1.bf16.msra.mxu0 0
      %862 = vmatprep.subr.bf16.mxu0 0
      %863 = vmatpush1.bf16.msra.mxu0 0
      %864 = vmatprep.subr.bf16.mxu0 0
      %865 = vmatpush1.bf16.msra.mxu0 0
      %866 = vmatprep.subr.bf16.mxu0 0
      %867 = vmatpush1.bf16.msra.mxu0 0
      %868 = vmatprep.subr.bf16.mxu0 0
      %869 = vmatpush1.bf16.msra.mxu0 0
      %870 = vmatprep.subr.bf16.mxu0 0
      %871 = vmatpush1.bf16.msra.mxu0 0
      %872 = vmatprep.subr.bf16.mxu0 0
      %873 = vmatpush1.bf16.msra.mxu0 0
      %874 = vmatprep.subr.bf16.mxu0 0
      %875 = vmatpush1.bf16.msra.mxu0 0
      %876 = vmatprep.subr.bf16.mxu0 0
      %877 = vmatpush1.bf16.msra.mxu0 0
      %878 = vmatprep.subr.bf16.mxu0 0
      %879 = vmatpush1.bf16.msra.mxu0 0
      %880 = vmatprep.subr.bf16.mxu0 0
      %881 = vmatpush1.bf16.msra.mxu0 0
      %882 = vmatprep.mubr.bf16.mxu0 0
      %883 = vmatmul.mubr.bf16.gmra.mrb[0].mxu0 %v839
      %v884 = vpop.f32.mrb[0].mxu0
      %v885 = vadd.f32 0.0, %v884
      %v886 = vpop.f32.mrb[0].mxu0
      %v887 = vpop.f32.mrb[0].mxu0
      %v888 = vadd.f32 0.0, %v887
      %v889 = vpop.f32.mrb[0].mxu0
      %890 = vmatprep.mubr.bf16.mxu0 0
      %891 = vmatmul.mubr.bf16.gmra.mrb[0].mxu0 %v842
      %v892 = vpop.f32.mrb[0].mxu0
      %v893 = vadd.f32 0.0, %v892
      %v894 = vpop.f32.mrb[0].mxu0
      %v895 = vpop.f32.mrb[0].mxu0
      %v896 = vadd.f32 0.0, %v895
      %v897 = vpop.f32.mrb[0].mxu0
      %898 = vmatprep.mubr.bf16.mxu0 0
      %899 = vmatmul.mubr.bf16.gmra.mrb[0].mxu0 %v845
      %v900 = vpop.f32.mrb[0].mxu0
      %v901 = vadd.f32 0.0, %v900
      %v902 = vpop.f32.mrb[0].mxu0
      %v903 = vpop.f32.mrb[0].mxu0
      %v904 = vadd.f32 0.0, %v903
      %v905 = vpop.f32.mrb[0].mxu0
      %906 = vmatprep.mubr.bf16.mxu0 0
      %907 = vmatmul.mubr.bf16.gmra.mrb[0].mxu0 %v848
      %v908 = vpop.f32.mrb[0].mxu0
      %v909 = vadd.f32 0.0, %v908
      %v910 = vpop.f32.mrb[0].mxu0
      %v911 = vpop.f32.mrb[0].mxu0
      %v912 = vadd.f32 0.0, %v911
      %v913 = vpop.f32.mrb[0].mxu0
      %914 = vdwg.mxu0
      %v915 = vadd.f32 %v769, %v885
      %v916 = vadd.f32 %v770, %v888
      %v917 = vadd.f32 %v771, %v893
      %v918 = vadd.f32 %v772, %v896
      %v919 = vadd.f32 %v773, %v901
      %v920 = vadd.f32 %v774, %v904
      %v921 = vadd.f32 %v775, %v909
      %v922 = vadd.f32 %v776, %v912
      %v923 = vpack.c.bf16 %v204, %v202
      %v924 = vpack.c.bf16 %v208, %v206
      %v925 = vpack.c.bf16 %v212, %v210
      %v926 = vpack.c.bf16 %v216, %v214
      %s927 = scalar_lea.vmem %s1, 48
      %v928 = vld [vmem:[%s927] sm:$0xf]
      %v929 = vld [vmem:[%s927 + $0x4] sm:$0xf]
      %v932 = vunpack.c.l.b16 %v928
      %v933 = vunpack.c.l.b16 %v929
      %v934 = vpack.c.b16 %v933, %v932
      %v937 = vsel %vm273, %v923, 0
      %v940 = vsel %vm273, %v924, 0
      %v943 = vsel %vm273, %v925, 0
      %v946 = vsel %vm273, %v926, 0
      %948 = vmatprep.subr.bf16.mxu0 0
      %949 = vmatpush1.bf16.msra.mxu0 %v934
      %950 = vmatprep.subr.bf16.mxu0 0
      %951 = vmatpush1.bf16.msra.mxu0 0
      %952 = vmatprep.subr.bf16.mxu0 0
      %953 = vmatpush1.bf16.msra.mxu0 0
      %954 = vmatprep.subr.bf16.mxu0 0
      %955 = vmatpush1.bf16.msra.mxu0 0
      %956 = vmatprep.subr.bf16.mxu0 0
      %957 = vmatpush1.bf16.msra.mxu0 0
      %958 = vmatprep.subr.bf16.mxu0 0
      %959 = vmatpush1.bf16.msra.mxu0 0
      %960 = vmatprep.subr.bf16.mxu0 0
      %961 = vmatpush1.bf16.msra.mxu0 0
      %962 = vmatprep.subr.bf16.mxu0 0
      %963 = vmatpush1.bf16.msra.mxu0 0
      %964 = vmatprep.subr.bf16.mxu0 0
      %965 = vmatpush1.bf16.msra.mxu0 0
      %966 = vmatprep.subr.bf16.mxu0 0
      %967 = vmatpush1.bf16.msra.mxu0 0
      %968 = vmatprep.subr.bf16.mxu0 0
      %969 = vmatpush1.bf16.msra.mxu0 0
      %970 = vmatprep.subr.bf16.mxu0 0
      %971 = vmatpush1.bf16.msra.mxu0 0
      %972 = vmatprep.subr.bf16.mxu0 0
      %973 = vmatpush1.bf16.msra.mxu0 0
      %974 = vmatprep.subr.bf16.mxu0 0
      %975 = vmatpush1.bf16.msra.mxu0 0
      %976 = vmatprep.subr.bf16.mxu0 0
      %977 = vmatpush1.bf16.msra.mxu0 0
      %978 = vmatprep.subr.bf16.mxu0 0
      %979 = vmatpush1.bf16.msra.mxu0 0
      %980 = vmatprep.mubr.bf16.mxu0 0
      %981 = vmatmul.mubr.bf16.gmra.mrb[0].mxu0 %v937
      %v982 = vpop.f32.mrb[0].mxu0
      %v983 = vadd.f32 0.0, %v982
      %v984 = vpop.f32.mrb[0].mxu0
      %v985 = vpop.f32.mrb[0].mxu0
      %v986 = vadd.f32 0.0, %v985
      %v987 = vpop.f32.mrb[0].mxu0
      %988 = vmatprep.mubr.bf16.mxu0 0
      %989 = vmatmul.mubr.bf16.gmra.mrb[0].mxu0 %v940
      %v990 = vpop.f32.mrb[0].mxu0
      %v991 = vadd.f32 0.0, %v990
      %v992 = vpop.f32.mrb[0].mxu0
      %v993 = vpop.f32.mrb[0].mxu0
      %v994 = vadd.f32 0.0, %v993
      %v995 = vpop.f32.mrb[0].mxu0
      %996 = vmatprep.mubr.bf16.mxu0 0
      %997 = vmatmul.mubr.bf16.gmra.mrb[0].mxu0 %v943
      %v998 = vpop.f32.mrb[0].mxu0
      %v999 = vadd.f32 0.0, %v998
      %v1000 = vpop.f32.mrb[0].mxu0
      %v1001 = vpop.f32.mrb[0].mxu0
      %v1002 = vadd.f32 0.0, %v1001
      %v1003 = vpop.f32.mrb[0].mxu0
      %1004 = vmatprep.mubr.bf16.mxu0 0
      %1005 = vmatmul.mubr.bf16.gmra.mrb[0].mxu0 %v946
      %v1006 = vpop.f32.mrb[0].mxu0
      %v1007 = vadd.f32 0.0, %v1006
      %v1008 = vpop.f32.mrb[0].mxu0
      %v1009 = vpop.f32.mrb[0].mxu0
      %v1010 = vadd.f32 0.0, %v1009
      %v1011 = vpop.f32.mrb[0].mxu0
      %1012 = vdwg.mxu0
      %v1013 = vadd.f32 %v915, %v983
      %v1014 = vadd.f32 %v916, %v986
      %v1015 = vadd.f32 %v917, %v991
      %v1016 = vadd.f32 %v918, %v994
      %v1017 = vadd.f32 %v919, %v999
      %v1018 = vadd.f32 %v920, %v1002
      %v1019 = vadd.f32 %v921, %v1007
      %v1020 = vadd.f32 %v922, %v1010
      %v1021 = vpack.c.bf16 %v221, %v220
      %v1022 = vpack.c.bf16 %v223, %v222
      %v1023 = vpack.c.bf16 %v225, %v224
      %v1024 = vpack.c.bf16 %v227, %v226
      %s1025 = scalar_lea.vmem %s1, 56
      %v1026 = vld [vmem:[%s1025] sm:$0xf]
      %v1027 = vld [vmem:[%s1025 + $0x4] sm:$0xf]
      %v1030 = vunpack.c.l.b16 %v1026
      %v1031 = vunpack.c.l.b16 %v1027
      %v1032 = vpack.c.b16 %v1031, %v1030
      %v1035 = vsel %vm273, %v1021, 0
      %v1038 = vsel %vm273, %v1022, 0
      %v1041 = vsel %vm273, %v1023, 0
      %v1044 = vsel %vm273, %v1024, 0
      %1046 = vmatprep.subr.bf16.mxu0 0
      %1047 = vmatpush1.bf16.msra.mxu0 %v1032
      %1048 = vmatprep.subr.bf16.mxu0 0
      %1049 = vmatpush1.bf16.msra.mxu0 0
      %1050 = vmatprep.subr.bf16.mxu0 0
      %1051 = vmatpush1.bf16.msra.mxu0 0
      %1052 = vmatprep.subr.bf16.mxu0 0
      %1053 = vmatpush1.bf16.msra.mxu0 0
      %1054 = vmatprep.subr.bf16.mxu0 0
      %1055 = vmatpush1.bf16.msra.mxu0 0
      %1056 = vmatprep.subr.bf16.mxu0 0
      %1057 = vmatpush1.bf16.msra.mxu0 0
      %1058 = vmatprep.subr.bf16.mxu0 0
      %1059 = vmatpush1.bf16.msra.mxu0 0
      %1060 = vmatprep.subr.bf16.mxu0 0
      %1061 = vmatpush1.bf16.msra.mxu0 0
      %1062 = vmatprep.subr.bf16.mxu0 0
      %1063 = vmatpush1.bf16.msra.mxu0 0
      %1064 = vmatprep.subr.bf16.mxu0 0
      %1065 = vmatpush1.bf16.msra.mxu0 0
      %1066 = vmatprep.subr.bf16.mxu0 0
      %1067 = vmatpush1.bf16.msra.mxu0 0
      %1068 = vmatprep.subr.bf16.mxu0 0
      %1069 = vmatpush1.bf16.msra.mxu0 0
      %1070 = vmatprep.subr.bf16.mxu0 0
      %1071 = vmatpush1.bf16.msra.mxu0 0
      %1072 = vmatprep.subr.bf16.mxu0 0
      %1073 = vmatpush1.bf16.msra.mxu0 0
      %1074 = vmatprep.subr.bf16.mxu0 0
      %1075 = vmatpush1.bf16.msra.mxu0 0
      %1076 = vmatprep.subr.bf16.mxu0 0
      %1077 = vmatpush1.bf16.msra.mxu0 0
      %1078 = vmatprep.mubr.bf16.mxu0 0
      %1079 = vmatmul.mubr.bf16.gmra.mrb[0].mxu0 %v1035
      %v1080 = vpop.f32.mrb[0].mxu0
      %v1081 = vadd.f32 0.0, %v1080
      %v1082 = vpop.f32.mrb[0].mxu0
      %v1083 = vpop.f32.mrb[0].mxu0
      %v1084 = vadd.f32 0.0, %v1083
      %v1085 = vpop.f32.mrb[0].mxu0
      %1086 = vmatprep.mubr.bf16.mxu0 0
      %1087 = vmatmul.mubr.bf16.gmra.mrb[0].mxu0 %v1038
      %v1088 = vpop.f32.mrb[0].mxu0
      %v1089 = vadd.f32 0.0, %v1088
      %v1090 = vpop.f32.mrb[0].mxu0
      %v1091 = vpop.f32.mrb[0].mxu0
      %v1092 = vadd.f32 0.0, %v1091
      %v1093 = vpop.f32.mrb[0].mxu0
      %1094 = vmatprep.mubr.bf16.mxu0 0
      %1095 = vmatmul.mubr.bf16.gmra.mrb[0].mxu0 %v1041
      %v1096 = vpop.f32.mrb[0].mxu0
      %v1097 = vadd.f32 0.0, %v1096
      %v1098 = vpop.f32.mrb[0].mxu0
      %v1099 = vpop.f32.mrb[0].mxu0
      %v1100 = vadd.f32 0.0, %v1099
      %v1101 = vpop.f32.mrb[0].mxu0
      %1102 = vmatprep.mubr.bf16.mxu0 0
      %1103 = vmatmul.mubr.bf16.gmra.mrb[0].mxu0 %v1044
      %v1104 = vpop.f32.mrb[0].mxu0
      %v1105 = vadd.f32 0.0, %v1104
      %v1106 = vpop.f32.mrb[0].mxu0
      %v1107 = vpop.f32.mrb[0].mxu0
      %v1108 = vadd.f32 0.0, %v1107
      %v1109 = vpop.f32.mrb[0].mxu0
      %1110 = vdwg.mxu0
      %v1111 = vadd.f32 %v1013, %v1081
      %v1112 = vadd.f32 %v1014, %v1084
      %v1113 = vadd.f32 %v1015, %v1089
      %v1114 = vadd.f32 %v1016, %v1092
      %v1115 = vadd.f32 %v1017, %v1097
      %v1116 = vadd.f32 %v1018, %v1100
      %v1117 = vadd.f32 %v1019, %v1105
      %v1118 = vadd.f32 %v1020, %v1108
      %v1121 = vrot.slane %v216, 1
      %v1122 = vrot.slane %v217, 1
      %v1123 = vsel %vm450, %v1121, %v1122
      %v1125 = vpack.c.bf16 %v459, %v456
      %v1126 = vpack.c.bf16 %v465, %v462
      %v1127 = vpack.c.bf16 %v471, %v468
      %v1128 = vpack.c.bf16 %v1123, %v474
      %s1129 = scalar_lea.vmem %s1, 64
      %v1130 = vld [vmem:[%s1129] sm:$0xf]
      %v1131 = vld [vmem:[%s1129 + $0x4] sm:$0xf]
      %v1134 = vunpack.c.l.b16 %v1130
      %v1135 = vunpack.c.l.b16 %v1131
      %v1136 = vpack.c.b16 %v1135, %v1134
      %v1139 = vsel %vm273, %v1125, 0
      %v1142 = vsel %vm273, %v1126, 0
      %v1145 = vsel %vm273, %v1127, 0
      %v1148 = vsel %vm273, %v1128, 0
      %1150 = vmatprep.subr.bf16.mxu0 0
      %1151 = vmatpush1.bf16.msra.mxu0 %v1136
      %1152 = vmatprep.subr.bf16.mxu0 0
      %1153 = vmatpush1.bf16.msra.mxu0 0
      %1154 = vmatprep.subr.bf16.mxu0 0
      %1155 = vmatpush1.bf16.msra.mxu0 0
      %1156 = vmatprep.subr.bf16.mxu0 0
      %1157 = vmatpush1.bf16.msra.mxu0 0
      %1158 = vmatprep.subr.bf16.mxu0 0
      %1159 = vmatpush1.bf16.msra.mxu0 0
      %1160 = vmatprep.subr.bf16.mxu0 0
      %1161 = vmatpush1.bf16.msra.mxu0 0
      %1162 = vmatprep.subr.bf16.mxu0 0
      %1163 = vmatpush1.bf16.msra.mxu0 0
      %1164 = vmatprep.subr.bf16.mxu0 0
      %1165 = vmatpush1.bf16.msra.mxu0 0
      %1166 = vmatprep.subr.bf16.mxu0 0
      %1167 = vmatpush1.bf16.msra.mxu0 0
      %1168 = vmatprep.subr.bf16.mxu0 0
      %1169 = vmatpush1.bf16.msra.mxu0 0
      %1170 = vmatprep.subr.bf16.mxu0 0
      %1171 = vmatpush1.bf16.msra.mxu0 0
      %1172 = vmatprep.subr.bf16.mxu0 0
      %1173 = vmatpush1.bf16.msra.mxu0 0
      %1174 = vmatprep.subr.bf16.mxu0 0
      %1175 = vmatpush1.bf16.msra.mxu0 0
      %1176 = vmatprep.subr.bf16.mxu0 0
      %1177 = vmatpush1.bf16.msra.mxu0 0
      %1178 = vmatprep.subr.bf16.mxu0 0
      %1179 = vmatpush1.bf16.msra.mxu0 0
      %1180 = vmatprep.subr.bf16.mxu0 0
      %1181 = vmatpush1.bf16.msra.mxu0 0
      %1182 = vmatprep.mubr.bf16.mxu0 0
      %1183 = vmatmul.mubr.bf16.gmra.mrb[0].mxu0 %v1139
      %v1184 = vpop.f32.mrb[0].mxu0
      %v1185 = vadd.f32 0.0, %v1184
      %v1186 = vpop.f32.mrb[0].mxu0
      %v1187 = vpop.f32.mrb[0].mxu0
      %v1188 = vadd.f32 0.0, %v1187
      %v1189 = vpop.f32.mrb[0].mxu0
      %1190 = vmatprep.mubr.bf16.mxu0 0
      %1191 = vmatmul.mubr.bf16.gmra.mrb[0].mxu0 %v1142
      %v1192 = vpop.f32.mrb[0].mxu0
      %v1193 = vadd.f32 0.0, %v1192
      %v1194 = vpop.f32.mrb[0].mxu0
      %v1195 = vpop.f32.mrb[0].mxu0
      %v1196 = vadd.f32 0.0, %v1195
      %v1197 = vpop.f32.mrb[0].mxu0
      %1198 = vmatprep.mubr.bf16.mxu0 0
      %1199 = vmatmul.mubr.bf16.gmra.mrb[0].mxu0 %v1145
      %v1200 = vpop.f32.mrb[0].mxu0
      %v1201 = vadd.f32 0.0, %v1200
      %v1202 = vpop.f32.mrb[0].mxu0
      %v1203 = vpop.f32.mrb[0].mxu0
      %v1204 = vadd.f32 0.0, %v1203
      %v1205 = vpop.f32.mrb[0].mxu0
      %1206 = vmatprep.mubr.bf16.mxu0 0
      %1207 = vmatmul.mubr.bf16.gmra.mrb[0].mxu0 %v1148
      %v1208 = vpop.f32.mrb[0].mxu0
      %v1209 = vadd.f32 0.0, %v1208
      %v1210 = vpop.f32.mrb[0].mxu0
      %v1211 = vpop.f32.mrb[0].mxu0
      %v1212 = vadd.f32 0.0, %v1211
      %v1213 = vpop.f32.mrb[0].mxu0
      %1214 = vdwg.mxu0
      %v1215 = vadd.f32 %v1111, %v1185
      %v1216 = vadd.f32 %v1112, %v1188
      %v1217 = vadd.f32 %v1113, %v1193
      %v1218 = vadd.f32 %v1114, %v1196
      %v1219 = vadd.f32 %v1115, %v1201
      %v1220 = vadd.f32 %v1116, %v1204
      %v1221 = vadd.f32 %v1117, %v1209
      %v1222 = vadd.f32 %v1118, %v1212
      %v1223 = vld [vmem:[%s2] sm:$0x1]
      %v1225 = vlaneseq
      %v1226 = vshrl.u32 %v1225, 7
      %v1227 = vsub.s32 0, %v1226
      %v1228 = vrot.slane %v1223, %v1227
      %v1230 = vmul.f32 %v1215, %v1228
      %v1231 = vmul.f32 %v1216, %v1228
      %v1232 = vmul.f32 %v1217, %v1228
      %v1233 = vmul.f32 %v1218, %v1228
      %v1234 = vmul.f32 %v1219, %v1228
      %v1235 = vmul.f32 %v1220, %v1228
      %v1236 = vmul.f32 %v1221, %v1228
      %v1237 = vmul.f32 %v1222, %v1228
      %v1238 = vld [vmem:[%s3] sm:$0x1]
      %v1240 = vlaneseq
      %v1241 = vshrl.u32 %v1240, 7
      %v1242 = vsub.s32 0, %v1241
      %v1243 = vrot.slane %v1238, %v1242
      %v1245 = vadd.f32 %v1230, %v1243
      %v1246 = vadd.f32 %v1231, %v1243
      %v1247 = vadd.f32 %v1232, %v1243
      %v1248 = vadd.f32 %v1233, %v1243
      %v1249 = vadd.f32 %v1234, %v1243
      %v1250 = vadd.f32 %v1235, %v1243
      %v1251 = vadd.f32 %v1236, %v1243
      %v1252 = vadd.f32 %v1237, %v1243
      %v1253 = vmax.f32 %v1245, 0.0
      %v1254 = vmax.f32 %v1246, 0.0
      %v1255 = vmax.f32 %v1247, 0.0
      %v1256 = vmax.f32 %v1248, 0.0
      %v1257 = vmax.f32 %v1249, 0.0
      %v1258 = vmax.f32 %v1250, 0.0
      %v1259 = vmax.f32 %v1251, 0.0
      %v1260 = vmax.f32 %v1252, 0.0
      %vm1261 = vcmask 261120
      %1262 = vst.msk [vmem:[%s197] sm:$0xff] %vm1261, %v1253
      %1263 = vst.msk [vmem:[%s197 + $0x8] sm:$0xff] %vm1261, %v1254
      %1264 = vst.msk [vmem:[%s197 + $0x10] sm:$0xff] %vm1261, %v1255
      %1265 = vst.msk [vmem:[%s197 + $0x18] sm:$0xff] %vm1261, %v1256
      %1266 = vst.msk [vmem:[%s197 + $0x20] sm:$0xff] %vm1261, %v1257
      %1267 = vst.msk [vmem:[%s197 + $0x28] sm:$0xff] %vm1261, %v1258
      %1268 = vst.msk [vmem:[%s197 + $0x30] sm:$0xff] %vm1261, %v1259
      %1269 = vst.msk [vmem:[%s197 + $0x38] sm:$0xff] %vm1261, %v1260
      %s1270 = smul.u32 8, %s15
      %p1271 = scmp.lt.s32.totalorder %s1270, 15
      %s1272 = scalar_select %p1271, %s1270, 15
      %s1273 = smul.addr %s1272, 8
      %s1274 = scalar_lea.vmem %s4, %s1273
      // Predicated region
      $region37: #{forward.10} parent=35 // pred_check
        %p1275 = pneg %p122
      $region38: #{forward.10} parent=35 // pred_check_branch
        %1277 = sbr.rel (%p1275) target = $region40
      $region39: #{forward.10} parent=35 // pred_region
        %s1278 = smul.u32 8, %s15
      $region40: #{forward.10} parent=35 // pred_fallthru
        _
    $region36: #{forward.10} parent=5 // pred_fallthru
      _
    %p1279 = scmp.le.s32.totalorder 2, %s10
    // Predicated region
    $region41: #{forward.10} parent=5 // pred_check
      %p1280 = pneg %p1279
    $region42: #{forward.10} parent=5 // pred_check_branch
      %1282 = sbr.rel (%p1280) target = $region44
    $region43: #{forward.10} parent=5 // pred_region
      %s1283 = ssub.s32 %s10, 2
      // Predicated region
      $region45: #{forward.10} parent=43 // pred_check
        %p1284 = pneg %p128
      $region46: #{forward.10} parent=43 // pred_check_branch
        %1286 = sbr.rel (%p1284) target = $region48
      $region47: #{forward.10} parent=43 // pred_region
        %s1287 = smul.u32 8, %s16
        %p1288 = scmp.lt.s32.totalorder %s1287, 15
        %s1289 = scalar_select %p1288, %s1287, 15
        %s1290 = smul.addr %s1289, 8
        %s1291 = scalar_lea.vmem %s4, %s1290
      $region48: #{forward.10} parent=43 // pred_fallthru
        _
    $region44: #{forward.10} parent=5 // pred_fallthru
      _
  $region6: #{forward.10} parent=0 // loop_footer
    %s14 = sadd.s32 1, %s10
  $region7: #{forward.10} parent=0 // loop_footer_branch
    %9 = sbr.rel target = $region3
  $region8: #{forward.10} parent=0 // loop_exit
    _

// kernel: forward.11
$region0: #{forward.11}
  #allocation0 [shape = 'u32[]', space=smem, size = 0x4, offset = 0x4, fixed_abs, tag = 'smem constant byte address 0x4 - core index']
  #allocation1 [shape = 'u32[144,128]{1,0:T(1,128)}', space=vmem, size = 0x12000, scoped, tag = 'internal scratch']
  %s0 = inlined_call_operand.vmem [shape: f32[256,32], index: 0, kind: input, shape index: {}]
  %s1 = inlined_call_operand.vmem [shape: f32[1,32], index: 1, kind: input, shape index: {}]
  %s2 = inlined_call_operand.vmem [shape: f32[1,32], index: 2, kind: input, shape index: {}]
  %s3 = inlined_call_operand.vmem [shape: bf16[32,96], index: 3, kind: input, shape index: {}]
  %s4 = inlined_call_operand.vmem [shape: f32[1,96], index: 4, kind: input, shape index: {}]
  %s5 = inlined_call_operand.vmem [shape: bf16[256,96], index: 5, kind: output, shape index: {}]
  %s6 = sld [smem:[#allocation0]]
  $region53: #{forward.11} parent=0
    _
  %s8 = ssub.s32 1, %s6
  %s9 = scalar_select 0, %s8, %s6
  loop: start=0, step=1, limit=4
  $region2: #{forward.11} parent=0 // loop_pre_header
    _
  $region3: #{forward.11} parent=0 // loop_header
    %s11 = sphi 0, %s15
    %p12 = scmp.ge.s32.totalorder %s11, 4
    %s21 = sphi 0, %s23
    %s24 = sphi 0, %s21
    %s25 = sphi 0, %s24
    %s41 = sphi 0, %s25
    %s45 = sphi 0, %s45
    %s47 = sphi 0, %s45
    %s48 = sphi 0, %s47
    %s62 = sphi 0, %s48
    %s66 = sphi 0, %s66
    %s68 = sphi 0, %s66
    %s69 = sphi 0, %s68
    %s83 = sphi 0, %s69
    %s87 = sphi 0, %s87
    %s89 = sphi 0, %s87
    %s90 = sphi 0, %s89
    %s104 = sphi 0, %s90
    %s108 = sphi 0, %s108
    %s110 = sphi 0, %s108
    %s111 = sphi 0, %s110
    %s125 = sphi 0, %s111
    %s131 = sphi 0, %s133
    %s134 = sphi 0, %s131
    %s135 = sphi 0, %s134
    %s151 = sphi 0, %s135
  $region4: #{forward.11} parent=0 // loop_header_branch
    %14 = sbr.rel (%p12) target = $region8
  $region5: #{forward.11} parent=0 // loop_body
    %s16 = ssub.s32 %s11, 1
    %s17 = ssub.s32 %s11, 2
    %s18 = sadd.s32 %s11, 1
    %s19 = ssub.s32 %s11, %s18
    %p20 = scmp.eq.s32.totalorder %s19, 0
    %s22 = sadd.s32 %s21, 1
    %s23 = scalar_select %p20, %s21, %s22
    %p26 = pneg %p20
    %p27 = scmp.eq.s32.totalorder %s11, 1
    %p28 = por %p26, %p27
    %p29 = scmp.ne.s32.totalorder %s21, %s24
    %p30 = scmp.eq.s32.totalorder %s11, 0
    %p31 = por %p29, %p30
    %p32 = scmp.ne.s32.totalorder %s21, %s24
    %p33 = scmp.eq.s32.totalorder %s16, 1
    %p34 = por %p32, %p33
    %p35 = scmp.ne.s32.totalorder %s24, %s25
    %p36 = scmp.eq.s32.totalorder %s16, 0
    %p37 = por %p35, %p36
    %p38 = scmp.ne.s32.totalorder %s24, %s25
    %p39 = scmp.eq.s32.totalorder %s17, 1
    %p40 = por %p38, %p39
    %p42 = scmp.ne.s32.totalorder %s25, %s41
    %p43 = scmp.eq.s32.totalorder %s17, 0
    %p44 = por %p42, %p43
    %s46 = sadd.s32 %s45, 1
    %p49 = scmp.eq.s32.totalorder %s11, 1
    %p50 = scmp.ne.s32.totalorder %s45, %s47
    %p51 = scmp.eq.s32.totalorder %s11, 0
    %p52 = por %p50, %p51
    %p53 = scmp.ne.s32.totalorder %s45, %s47
    %p54 = scmp.eq.s32.totalorder %s16, 1
    %p55 = por %p53, %p54
    %p56 = scmp.ne.s32.totalorder %s47, %s48
    %p57 = scmp.eq.s32.totalorder %s16, 0
    %p58 = por %p56, %p57
    %p59 = scmp.ne.s32.totalorder %s47, %s48
    %p60 = scmp.eq.s32.totalorder %s17, 1
    %p61 = por %p59, %p60
    %p63 = scmp.ne.s32.totalorder %s48, %s62
    %p64 = scmp.eq.s32.totalorder %s17, 0
    %p65 = por %p63, %p64
    %s67 = sadd.s32 %s66, 1
    %p70 = scmp.eq.s32.totalorder %s11, 1
    %p71 = scmp.ne.s32.totalorder %s66, %s68
    %p72 = scmp.eq.s32.totalorder %s11, 0
    %p73 = por %p71, %p72
    %p74 = scmp.ne.s32.totalorder %s66, %s68
    %p75 = scmp.eq.s32.totalorder %s16, 1
    %p76 = por %p74, %p75
    %p77 = scmp.ne.s32.totalorder %s68, %s69
    %p78 = scmp.eq.s32.totalorder %s16, 0
    %p79 = por %p77, %p78
    %p80 = scmp.ne.s32.totalorder %s68, %s69
    %p81 = scmp.eq.s32.totalorder %s17, 1
    %p82 = por %p80, %p81
    %p84 = scmp.ne.s32.totalorder %s69, %s83
    %p85 = scmp.eq.s32.totalorder %s17, 0
    %p86 = por %p84, %p85
    %s88 = sadd.s32 %s87, 1
    %p91 = scmp.eq.s32.totalorder %s11, 1
    %p92 = scmp.ne.s32.totalorder %s87, %s89
    %p93 = scmp.eq.s32.totalorder %s11, 0
    %p94 = por %p92, %p93
    %p95 = scmp.ne.s32.totalorder %s87, %s89
    %p96 = scmp.eq.s32.totalorder %s16, 1
    %p97 = por %p95, %p96
    %p98 = scmp.ne.s32.totalorder %s89, %s90
    %p99 = scmp.eq.s32.totalorder %s16, 0
    %p100 = por %p98, %p99
    %p101 = scmp.ne.s32.totalorder %s89, %s90
    %p102 = scmp.eq.s32.totalorder %s17, 1
    %p103 = por %p101, %p102
    %p105 = scmp.ne.s32.totalorder %s90, %s104
    %p106 = scmp.eq.s32.totalorder %s17, 0
    %p107 = por %p105, %p106
    %s109 = sadd.s32 %s108, 1
    %p112 = scmp.eq.s32.totalorder %s11, 1
    %p113 = scmp.ne.s32.totalorder %s108, %s110
    %p114 = scmp.eq.s32.totalorder %s11, 0
    %p115 = por %p113, %p114
    %p116 = scmp.ne.s32.totalorder %s108, %s110
    %p117 = scmp.eq.s32.totalorder %s16, 1
    %p118 = por %p116, %p117
    %p119 = scmp.ne.s32.totalorder %s110, %s111
    %p120 = scmp.eq.s32.totalorder %s16, 0
    %p121 = por %p119, %p120
    %p122 = scmp.ne.s32.totalorder %s110, %s111
    %p123 = scmp.eq.s32.totalorder %s17, 1
    %p124 = por %p122, %p123
    %p126 = scmp.ne.s32.totalorder %s111, %s125
    %p127 = scmp.eq.s32.totalorder %s17, 0
    %p128 = por %p126, %p127
    %s129 = ssub.s32 %s11, %s18
    %p130 = scmp.eq.s32.totalorder %s129, 0
    %s132 = sadd.s32 %s131, 1
    %s133 = scalar_select %p130, %s131, %s132
    %p136 = pneg %p130
    %p137 = scmp.eq.s32.totalorder %s11, 1
    %p138 = por %p136, %p137
    %p139 = scmp.ne.s32.totalorder %s131, %s134
    %p140 = scmp.eq.s32.totalorder %s11, 0
    %p141 = por %p139, %p140
    %p142 = scmp.ne.s32.totalorder %s131, %s134
    %p143 = scmp.eq.s32.totalorder %s16, 1
    %p144 = por %p142, %p143
    %p145 = scmp.ne.s32.totalorder %s134, %s135
    %p146 = scmp.eq.s32.totalorder %s16, 0
    %p147 = por %p145, %p146
    %p148 = scmp.ne.s32.totalorder %s134, %s135
    %p149 = scmp.eq.s32.totalorder %s17, 1
    %p150 = por %p148, %p149
    %p152 = scmp.ne.s32.totalorder %s135, %s151
    %p153 = scmp.eq.s32.totalorder %s17, 0
    %p154 = por %p152, %p153
    %p155 = scmp.le.s32.totalorder 1, %s11
    %p156 = scmp.lt.s32.totalorder %s11, 3
    %p157 = pnand %p155, %p156
    %p158 = pneg %p157
    // Predicated region
    $region9: #{forward.11} parent=5 // pred_check
      _
    $region10: #{forward.11} parent=5 // pred_check_branch
      %160 = sbr.rel (%p157) target = $region12
    $region11: #{forward.11} parent=5 // pred_region
      %s161 = ssub.s32 %s11, 1
      // Predicated region
      $region13: #{forward.11} parent=11 // pred_check
        %p162 = pneg %p58
      $region14: #{forward.11} parent=11 // pred_check_branch
        %164 = sbr.rel (%p162) target = $region16
      $region15: #{forward.11} parent=11 // pred_region
        _
      $region16: #{forward.11} parent=11 // pred_fallthru
        _
      // Predicated region
      $region17: #{forward.11} parent=11 // pred_check
        %p165 = pneg %p79
      $region18: #{forward.11} parent=11 // pred_check_branch
        %167 = sbr.rel (%p165) target = $region20
      $region19: #{forward.11} parent=11 // pred_region
        _
      $region20: #{forward.11} parent=11 // pred_fallthru
        _
      // Predicated region
      $region21: #{forward.11} parent=11 // pred_check
        %p168 = pneg %p100
      $region22: #{forward.11} parent=11 // pred_check_branch
        %170 = sbr.rel (%p168) target = $region24
      $region23: #{forward.11} parent=11 // pred_region
        _
      $region24: #{forward.11} parent=11 // pred_fallthru
        _
      // Predicated region
      $region25: #{forward.11} parent=11 // pred_check
        %p171 = pneg %p121
      $region26: #{forward.11} parent=11 // pred_check_branch
        %173 = sbr.rel (%p171) target = $region28
      $region27: #{forward.11} parent=11 // pred_region
        _
      $region28: #{forward.11} parent=11 // pred_fallthru
        _
    $region12: #{forward.11} parent=5 // pred_fallthru
      _
    %p174 = scmp.lt.s32.totalorder %s11, 2
    // Predicated region
    $region29: #{forward.11} parent=5 // pred_check
      %p175 = pneg %p174
    $region30: #{forward.11} parent=5 // pred_check_branch
      %177 = sbr.rel (%p175) target = $region32
    $region31: #{forward.11} parent=5 // pred_region
      // Predicated region
      $region33: #{forward.11} parent=31 // pred_check
        %p178 = pneg %p31
      $region34: #{forward.11} parent=31 // pred_check_branch
        %180 = sbr.rel (%p178) target = $region36
      $region35: #{forward.11} parent=31 // pred_region
        %s181 = smul.u32 16, %s11
        %p182 = scmp.lt.s32.totalorder %s181, 31
        %s183 = scalar_select %p182, %s181, 31
        %s184 = smul.addr %s183, 8
        %s185 = scalar_lea.vmem %s0, %s184
        %s186 = smul.u32 16, %s11
      $region36: #{forward.11} parent=31 // pred_fallthru
        _
    $region32: #{forward.11} parent=5 // pred_fallthru
      _
    %p187 = scmp.le.s32.totalorder 1, %s11
    %p188 = scmp.lt.s32.totalorder %s11, 3
    %p189 = pnand %p187, %p188
    %p190 = pneg %p189
    // Predicated region
    $region37: #{forward.11} parent=5 // pred_check
      _
    $region38: #{forward.11} parent=5 // pred_check_branch
      %192 = sbr.rel (%p189) target = $region40
    $region39: #{forward.11} parent=5 // pred_region
      %s193 = ssub.s32 %s11, 1
      %s194 = smul.u32 16, %s16
      %p195 = scmp.lt.s32.totalorder %s194, 31
      %s196 = scalar_select %p195, %s194, 31
      %s197 = smul.addr %s196, 8
      %s198 = scalar_lea.vmem %s0, %s197
      %p199 = pneg %p37
      %p200 = pneg %p34
      %p201 = pneg %p58
      %p202 = pneg %p55
      %p203 = pneg %p79
      %p204 = pneg %p76
      %p205 = pneg %p100
      %p206 = pneg %p97
      %p207 = pneg %p121
      %p208 = pneg %p118
      %p209 = pneg %p147
      %p210 = pneg %p144
      %s211 = smul.u32 16, %s16
      %p212 = scmp.lt.s32.totalorder %s211, 31
      %s213 = scalar_select %p212, %s211, 31
      %s214 = smul.addr %s213, 4
      %s215 = scalar_lea.vmem %s5, %s214
      %s216 = smul.u32 16, %s16
      %p217 = scmp.lt.s32.totalorder %s216, 31
      %s218 = scalar_select %p217, %s216, 31
      %s219 = smul.addr %s218, 8
      %s220 = scalar_lea.vmem %s0, %s219
      %s221 = smul.u32 16, %s16
      %s222 = smul.u32 16, %s16
      %p223 = scmp.lt.s32.totalorder %s222, 31
      %s224 = scalar_select %p223, %s222, 31
      %s225 = smul.addr %s224, 4
      %s226 = scalar_lea.vmem %s5, %s225
      %s227 = smul.u32 16, %s16
      %v229 = vld [vmem:[%s220] sm:$0xff]
      %v230 = vld [vmem:[%s220 + $0x8] sm:$0xff]
      %v231 = vld [vmem:[%s220 + $0x10] sm:$0xff]
      %v232 = vld [vmem:[%s220 + $0x18] sm:$0xff]
      %v233 = vld [vmem:[%s220 + $0x20] sm:$0xff]
      %v234 = vld [vmem:[%s220 + $0x28] sm:$0xff]
      %v235 = vld [vmem:[%s220 + $0x30] sm:$0xff]
      %v236 = vld [vmem:[%s220 + $0x38] sm:$0xff]
      %v237 = vld [vmem:[%s220 + $0x40] sm:$0xff]
      %v238 = vld [vmem:[%s220 + $0x48] sm:$0xff]
      %v239 = vld [vmem:[%s220 + $0x50] sm:$0xff]
      %v240 = vld [vmem:[%s220 + $0x58] sm:$0xff]
      %v241 = vld [vmem:[%s220 + $0x60] sm:$0xff]
      %v242 = vld [vmem:[%s220 + $0x68] sm:$0xff]
      %v243 = vld [vmem:[%s220 + $0x70] sm:$0xff]
      %v244 = vld [vmem:[%s220 + $0x78] sm:$0xff]
      %vm245 = vcmask 261120
      %v246 = vsel %vm245, %v229, 0.0
      %247 = vadd.xlane.f32.xlu0 %v246
      %v248 = vpop.xlane.xlu0 %247
      %v249 = vsel %vm245, %v230, 0.0
      %250 = vadd.xlane.f32.xlu0 %v249
      %v251 = vpop.xlane.xlu0 %250
      %v252 = vsel %vm245, %v231, 0.0
      %253 = vadd.xlane.f32.xlu0 %v252
      %v254 = vpop.xlane.xlu0 %253
      %v255 = vsel %vm245, %v232, 0.0
      %256 = vadd.xlane.f32.xlu0 %v255
      %v257 = vpop.xlane.xlu0 %256
      %v258 = vsel %vm245, %v233, 0.0
      %259 = vadd.xlane.f32.xlu0 %v258
      %v260 = vpop.xlane.xlu0 %259
      %v261 = vsel %vm245, %v234, 0.0
      %262 = vadd.xlane.f32.xlu0 %v261
      %v263 = vpop.xlane.xlu0 %262
      %v264 = vsel %vm245, %v235, 0.0
      %265 = vadd.xlane.f32.xlu0 %v264
      %v266 = vpop.xlane.xlu0 %265
      %v267 = vsel %vm245, %v236, 0.0
      %268 = vadd.xlane.f32.xlu0 %v267
      %v269 = vpop.xlane.xlu0 %268
      %v270 = vsel %vm245, %v237, 0.0
      %271 = vadd.xlane.f32.xlu0 %v270
      %v272 = vpop.xlane.xlu0 %271
      %v273 = vsel %vm245, %v238, 0.0
      %274 = vadd.xlane.f32.xlu0 %v273
      %v275 = vpop.xlane.xlu0 %274
      %v276 = vsel %vm245, %v239, 0.0
      %277 = vadd.xlane.f32.xlu0 %v276
      %v278 = vpop.xlane.xlu0 %277
      %v279 = vsel %vm245, %v240, 0.0
      %280 = vadd.xlane.f32.xlu0 %v279
      %v281 = vpop.xlane.xlu0 %280
      %v282 = vsel %vm245, %v241, 0.0
      %283 = vadd.xlane.f32.xlu0 %v282
      %v284 = vpop.xlane.xlu0 %283
      %v285 = vsel %vm245, %v242, 0.0
      %286 = vadd.xlane.f32.xlu0 %v285
      %v287 = vpop.xlane.xlu0 %286
      %v288 = vsel %vm245, %v243, 0.0
      %289 = vadd.xlane.f32.xlu0 %v288
      %v290 = vpop.xlane.xlu0 %289
      %v291 = vsel %vm245, %v244, 0.0
      %292 = vadd.xlane.f32.xlu0 %v291
      %v293 = vpop.xlane.xlu0 %292
      %v294 = vrcp.pop 32.0
      %v295 = vmul.f32 %v248, %v294
      %v296 = vmul.f32 %v251, %v294
      %v297 = vmul.f32 %v254, %v294
      %v298 = vmul.f32 %v257, %v294
      %v299 = vmul.f32 %v260, %v294
      %v300 = vmul.f32 %v263, %v294
      %v301 = vmul.f32 %v266, %v294
      %v302 = vmul.f32 %v269, %v294
      %v303 = vmul.f32 %v272, %v294
      %v304 = vmul.f32 %v275, %v294
      %v305 = vmul.f32 %v278, %v294
      %v306 = vmul.f32 %v281, %v294
      %v307 = vmul.f32 %v284, %v294
      %v308 = vmul.f32 %v287, %v294
      %v309 = vmul.f32 %v290, %v294
      %v310 = vmul.f32 %v293, %v294
      %v311 = vsub.f32 %v229, %v295
      %v312 = vsub.f32 %v230, %v296
      %v313 = vsub.f32 %v231, %v297
      %v314 = vsub.f32 %v232, %v298
      %v315 = vsub.f32 %v233, %v299
      %v316 = vsub.f32 %v234, %v300
      %v317 = vsub.f32 %v235, %v301
      %v318 = vsub.f32 %v236, %v302
      %v319 = vsub.f32 %v237, %v303
      %v320 = vsub.f32 %v238, %v304
      %v321 = vsub.f32 %v239, %v305
      %v322 = vsub.f32 %v240, %v306
      %v323 = vsub.f32 %v241, %v307
      %v324 = vsub.f32 %v242, %v308
      %v325 = vsub.f32 %v243, %v309
      %v326 = vsub.f32 %v244, %v310
      %v327 = vmul.f32 %v311, %v311
      %v328 = vmul.f32 %v312, %v312
      %v329 = vmul.f32 %v313, %v313
      %v330 = vmul.f32 %v314, %v314
      %v331 = vmul.f32 %v315, %v315
      %v332 = vmul.f32 %v316, %v316
      %v333 = vmul.f32 %v317, %v317
      %v334 = vmul.f32 %v318, %v318
      %v335 = vmul.f32 %v319, %v319
      %v336 = vmul.f32 %v320, %v320
      %v337 = vmul.f32 %v321, %v321
      %v338 = vmul.f32 %v322, %v322
      %v339 = vmul.f32 %v323, %v323
      %v340 = vmul.f32 %v324, %v324
      %v341 = vmul.f32 %v325, %v325
      %v342 = vmul.f32 %v326, %v326
      %v343 = vsel %vm245, %v327, 0.0
      %344 = vadd.xlane.f32.xlu0 %v343
      %v345 = vpop.xlane.xlu0 %344
      %v346 = vsel %vm245, %v328, 0.0
      %347 = vadd.xlane.f32.xlu0 %v346
      %v348 = vpop.xlane.xlu0 %347
      %v349 = vsel %vm245, %v329, 0.0
      %350 = vadd.xlane.f32.xlu0 %v349
      %v351 = vpop.xlane.xlu0 %350
      %v352 = vsel %vm245, %v330, 0.0
      %353 = vadd.xlane.f32.xlu0 %v352
      %v354 = vpop.xlane.xlu0 %353
      %v355 = vsel %vm245, %v331, 0.0
      %356 = vadd.xlane.f32.xlu0 %v355
      %v357 = vpop.xlane.xlu0 %356
      %v358 = vsel %vm245, %v332, 0.0
      %359 = vadd.xlane.f32.xlu0 %v358
      %v360 = vpop.xlane.xlu0 %359
      %v361 = vsel %vm245, %v333, 0.0
      %362 = vadd.xlane.f32.xlu0 %v361
      %v363 = vpop.xlane.xlu0 %362
      %v364 = vsel %vm245, %v334, 0.0
      %365 = vadd.xlane.f32.xlu0 %v364
      %v366 = vpop.xlane.xlu0 %365
      %v367 = vsel %vm245, %v335, 0.0
      %368 = vadd.xlane.f32.xlu0 %v367
      %v369 = vpop.xlane.xlu0 %368
      %v370 = vsel %vm245, %v336, 0.0
      %371 = vadd.xlane.f32.xlu0 %v370
      %v372 = vpop.xlane.xlu0 %371
      %v373 = vsel %vm245, %v337, 0.0
      %374 = vadd.xlane.f32.xlu0 %v373
      %v375 = vpop.xlane.xlu0 %374
      %v376 = vsel %vm245, %v338, 0.0
      %377 = vadd.xlane.f32.xlu0 %v376
      %v378 = vpop.xlane.xlu0 %377
      %v379 = vsel %vm245, %v339, 0.0
      %380 = vadd.xlane.f32.xlu0 %v379
      %v381 = vpop.xlane.xlu0 %380
      %v382 = vsel %vm245, %v340, 0.0
      %383 = vadd.xlane.f32.xlu0 %v382
      %v384 = vpop.xlane.xlu0 %383
      %v385 = vsel %vm245, %v341, 0.0
      %386 = vadd.xlane.f32.xlu0 %v385
      %v387 = vpop.xlane.xlu0 %386
      %v388 = vsel %vm245, %v342, 0.0
      %389 = vadd.xlane.f32.xlu0 %v388
      %v390 = vpop.xlane.xlu0 %389
      %v391 = vmul.f32 %v345, %v294
      %v392 = vmul.f32 %v348, %v294
      %v393 = vmul.f32 %v351, %v294
      %v394 = vmul.f32 %v354, %v294
      %v395 = vmul.f32 %v357, %v294
      %v396 = vmul.f32 %v360, %v294
      %v397 = vmul.f32 %v363, %v294
      %v398 = vmul.f32 %v366, %v294
      %v399 = vmul.f32 %v369, %v294
      %v400 = vmul.f32 %v372, %v294
      %v401 = vmul.f32 %v375, %v294
      %v402 = vmul.f32 %v378, %v294
      %v403 = vmul.f32 %v381, %v294
      %v404 = vmul.f32 %v384, %v294
      %v405 = vmul.f32 %v387, %v294
      %v406 = vmul.f32 %v390, %v294
      %v407 = vadd.f32 %v391, 1e-06
      %v408 = vadd.f32 %v392, 1e-06
      %v409 = vadd.f32 %v393, 1e-06
      %v410 = vadd.f32 %v394, 1e-06
      %v411 = vadd.f32 %v395, 1e-06
      %v412 = vadd.f32 %v396, 1e-06
      %v413 = vadd.f32 %v397, 1e-06
      %v414 = vadd.f32 %v398, 1e-06
      %v415 = vadd.f32 %v399, 1e-06
      %v416 = vadd.f32 %v400, 1e-06
      %v417 = vadd.f32 %v401, 1e-06
      %v418 = vadd.f32 %v402, 1e-06
      %v419 = vadd.f32 %v403, 1e-06
      %v420 = vadd.f32 %v404, 1e-06
      %v421 = vadd.f32 %v405, 1e-06
      %v422 = vadd.f32 %v406, 1e-06
      %v423 = vrsqrt.pop %v407
      %v424 = vrsqrt.pop %v408
      %v425 = vrsqrt.pop %v409
      %v426 = vrsqrt.pop %v410
      %v427 = vrsqrt.pop %v411
      %v428 = vrsqrt.pop %v412
      %v429 = vrsqrt.pop %v413
      %v430 = vrsqrt.pop %v414
      %v431 = vrsqrt.pop %v415
      %v432 = vrsqrt.pop %v416
      %v433 = vrsqrt.pop %v417
      %v434 = vrsqrt.pop %v418
      %v435 = vrsqrt.pop %v419
      %v436 = vrsqrt.pop %v420
      %v437 = vrsqrt.pop %v421
      %v438 = vrsqrt.pop %v422
      %v439 = vmul.f32 %v311, %v423
      %v440 = vmul.f32 %v312, %v424
      %v441 = vmul.f32 %v313, %v425
      %v442 = vmul.f32 %v314, %v426
      %v443 = vmul.f32 %v315, %v427
      %v444 = vmul.f32 %v316, %v428
      %v445 = vmul.f32 %v317, %v429
      %v446 = vmul.f32 %v318, %v430
      %v447 = vmul.f32 %v319, %v431
      %v448 = vmul.f32 %v320, %v432
      %v449 = vmul.f32 %v321, %v433
      %v450 = vmul.f32 %v322, %v434
      %v451 = vmul.f32 %v323, %v435
      %v452 = vmul.f32 %v324, %v436
      %v453 = vmul.f32 %v325, %v437
      %v454 = vmul.f32 %v326, %v438
      %v455 = vld [vmem:[%s1] sm:$0x1]
      %v457 = vlaneseq
      %v458 = vshrl.u32 %v457, 7
      %v459 = vsub.s32 0, %v458
      %v460 = vrot.slane %v455, %v459
      %v462 = vmul.f32 %v439, %v460
      %v463 = vmul.f32 %v440, %v460
      %v464 = vmul.f32 %v441, %v460
      %v465 = vmul.f32 %v442, %v460
      %v466 = vmul.f32 %v443, %v460
      %v467 = vmul.f32 %v444, %v460
      %v468 = vmul.f32 %v445, %v460
      %v469 = vmul.f32 %v446, %v460
      %v470 = vmul.f32 %v447, %v460
      %v471 = vmul.f32 %v448, %v460
      %v472 = vmul.f32 %v449, %v460
      %v473 = vmul.f32 %v450, %v460
      %v474 = vmul.f32 %v451, %v460
      %v475 = vmul.f32 %v452, %v460
      %v476 = vmul.f32 %v453, %v460
      %v477 = vmul.f32 %v454, %v460
      %v478 = vld [vmem:[%s2] sm:$0x1]
      %v480 = vlaneseq
      %v481 = vshrl.u32 %v480, 7
      %v482 = vsub.s32 0, %v481
      %v483 = vrot.slane %v478, %v482
      %v485 = vadd.f32 %v462, %v483
      %v486 = vadd.f32 %v463, %v483
      %v487 = vadd.f32 %v464, %v483
      %v488 = vadd.f32 %v465, %v483
      %v489 = vadd.f32 %v466, %v483
      %v490 = vadd.f32 %v467, %v483
      %v491 = vadd.f32 %v468, %v483
      %v492 = vadd.f32 %v469, %v483
      %v493 = vadd.f32 %v470, %v483
      %v494 = vadd.f32 %v471, %v483
      %v495 = vadd.f32 %v472, %v483
      %v496 = vadd.f32 %v473, %v483
      %v497 = vadd.f32 %v474, %v483
      %v498 = vadd.f32 %v475, %v483
      %v499 = vadd.f32 %v476, %v483
      %v500 = vadd.f32 %v477, %v483
      %v501 = vpack.c.bf16 %v486, %v485
      %v502 = vpack.c.bf16 %v488, %v487
      %v503 = vpack.c.bf16 %v490, %v489
      %v504 = vpack.c.bf16 %v492, %v491
      %v505 = vpack.c.bf16 %v494, %v493
      %v506 = vpack.c.bf16 %v496, %v495
      %v507 = vpack.c.bf16 %v498, %v497
      %v508 = vpack.c.bf16 %v500, %v499
      %v509 = vld [vmem:[%s3] sm:$0xf]
      %v510 = vld [vmem:[%s3 + $0x4] sm:$0xf]
      %v511 = vld [vmem:[%s3 + $0x8] sm:$0xf]
      %v512 = vld [vmem:[%s3 + $0xc] sm:$0xf]
      %v513 = vld [vmem:[%s4] sm:$0x1]
      %v515 = vlaneseq
      %v516 = vshrl.u32 %v515, 7
      %v517 = vsub.s32 0, %v516
      %v518 = vrot.slane %v513, %v517
      %v524 = vunpack.c.l.b16 %v509
      %v525 = vunpack.c.l.b16 %v510
      %v526 = vunpack.c.l.b16 %v511
      %v527 = vunpack.c.l.b16 %v512
      %v528 = vpack.c.b16 %v525, %v524
      %v529 = vpack.c.b16 %v527, %v526
      %v533 = vsel %vm245, %v501, 0
      %v536 = vsel %vm245, %v502, 0
      %v539 = vsel %vm245, %v503, 0
      %v542 = vsel %vm245, %v504, 0
      %v545 = vsel %vm245, %v505, 0
      %v548 = vsel %vm245, %v506, 0
      %v551 = vsel %vm245, %v507, 0
      %v554 = vsel %vm245, %v508, 0
      %556 = vmatprep.subr.bf16.mxu0 0
      %557 = vmatpush1.bf16.msra.mxu0 %v528
      %558 = vmatprep.subr.bf16.mxu0 0
      %559 = vmatpush1.bf16.msra.mxu0 %v529
      %560 = vmatprep.subr.bf16.mxu0 0
      %561 = vmatpush1.bf16.msra.mxu0 0
      %562 = vmatprep.subr.bf16.mxu0 0
      %563 = vmatpush1.bf16.msra.mxu0 0
      %564 = vmatprep.subr.bf16.mxu0 0
      %565 = vmatpush1.bf16.msra.mxu0 0
      %566 = vmatprep.subr.bf16.mxu0 0
      %567 = vmatpush1.bf16.msra.mxu0 0
      %568 = vmatprep.subr.bf16.mxu0 0
      %569 = vmatpush1.bf16.msra.mxu0 0
      %570 = vmatprep.subr.bf16.mxu0 0
      %571 = vmatpush1.bf16.msra.mxu0 0
      %572 = vmatprep.subr.bf16.mxu0 0
      %573 = vmatpush1.bf16.msra.mxu0 0
      %574 = vmatprep.subr.bf16.mxu0 0
      %575 = vmatpush1.bf16.msra.mxu0 0
      %576 = vmatprep.subr.bf16.mxu0 0
      %577 = vmatpush1.bf16.msra.mxu0 0
      %578 = vmatprep.subr.bf16.mxu0 0
      %579 = vmatpush1.bf16.msra.mxu0 0
      %580 = vmatprep.subr.bf16.mxu0 0
      %581 = vmatpush1.bf16.msra.mxu0 0
      %582 = vmatprep.subr.bf16.mxu0 0
      %583 = vmatpush1.bf16.msra.mxu0 0
      %584 = vmatprep.subr.bf16.mxu0 0
      %585 = vmatpush1.bf16.msra.mxu0 0
      %586 = vmatprep.subr.bf16.mxu0 0
      %587 = vmatpush1.bf16.msra.mxu0 0
      %588 = vmatprep.mubr.bf16.mxu0 0
      %589 = vmatmul.mubr.bf16.gmra.mrb[0].mxu0 %v533
      %v590 = vpop.f32.mrb[0].mxu0
      %v591 = vadd.f32 %v518, %v590
      %v592 = vpop.f32.mrb[0].mxu0
      %v593 = vpop.f32.mrb[0].mxu0
      %v594 = vadd.f32 %v518, %v593
      %v595 = vpop.f32.mrb[0].mxu0
      %596 = vmatprep.mubr.bf16.mxu0 0
      %597 = vmatmul.mubr.bf16.gmra.mrb[0].mxu0 %v536
      %v598 = vpop.f32.mrb[0].mxu0
      %v599 = vadd.f32 %v518, %v598
      %v600 = vpop.f32.mrb[0].mxu0
      %v601 = vpop.f32.mrb[0].mxu0
      %v602 = vadd.f32 %v518, %v601
      %v603 = vpop.f32.mrb[0].mxu0
      %604 = vmatprep.mubr.bf16.mxu0 0
      %605 = vmatmul.mubr.bf16.gmra.mrb[0].mxu0 %v539
      %v606 = vpop.f32.mrb[0].mxu0
      %v607 = vadd.f32 %v518, %v606
      %v608 = vpop.f32.mrb[0].mxu0
      %v609 = vpop.f32.mrb[0].mxu0
      %v610 = vadd.f32 %v518, %v609
      %v611 = vpop.f32.mrb[0].mxu0
      %612 = vmatprep.mubr.bf16.mxu0 0
      %613 = vmatmul.mubr.bf16.gmra.mrb[0].mxu0 %v542
      %v614 = vpop.f32.mrb[0].mxu0
      %v615 = vadd.f32 %v518, %v614
      %v616 = vpop.f32.mrb[0].mxu0
      %v617 = vpop.f32.mrb[0].mxu0
      %v618 = vadd.f32 %v518, %v617
      %v619 = vpop.f32.mrb[0].mxu0
      %620 = vmatprep.mubr.bf16.mxu0 0
      %621 = vmatmul.mubr.bf16.gmra.mrb[0].mxu0 %v545
      %v622 = vpop.f32.mrb[0].mxu0
      %v623 = vadd.f32 %v518, %v622
      %v624 = vpop.f32.mrb[0].mxu0
      %v625 = vpop.f32.mrb[0].mxu0
      %v626 = vadd.f32 %v518, %v625
      %v627 = vpop.f32.mrb[0].mxu0
      %628 = vmatprep.mubr.bf16.mxu0 0
      %629 = vmatmul.mubr.bf16.gmra.mrb[0].mxu0 %v548
      %v630 = vpop.f32.mrb[0].mxu0
      %v631 = vadd.f32 %v518, %v630
      %v632 = vpop.f32.mrb[0].mxu0
      %v633 = vpop.f32.mrb[0].mxu0
      %v634 = vadd.f32 %v518, %v633
      %v635 = vpop.f32.mrb[0].mxu0
      %636 = vmatprep.mubr.bf16.mxu0 0
      %637 = vmatmul.mubr.bf16.gmra.mrb[0].mxu0 %v551
      %v638 = vpop.f32.mrb[0].mxu0
      %v639 = vadd.f32 %v518, %v638
      %v640 = vpop.f32.mrb[0].mxu0
      %v641 = vpop.f32.mrb[0].mxu0
      %v642 = vadd.f32 %v518, %v641
      %v643 = vpop.f32.mrb[0].mxu0
      %644 = vmatprep.mubr.bf16.mxu0 0
      %645 = vmatmul.mubr.bf16.gmra.mrb[0].mxu0 %v554
      %v646 = vpop.f32.mrb[0].mxu0
      %v647 = vadd.f32 %v518, %v646
      %v648 = vpop.f32.mrb[0].mxu0
      %v649 = vpop.f32.mrb[0].mxu0
      %v650 = vadd.f32 %v518, %v649
      %v651 = vpop.f32.mrb[0].mxu0
      %652 = vdwg.mxu0
      %v653 = vpack.c.bf16 %v594, %v591
      %v654 = vpack.c.bf16 %v602, %v599
      %v655 = vpack.c.bf16 %v610, %v607
      %v656 = vpack.c.bf16 %v618, %v615
      %v657 = vpack.c.bf16 %v626, %v623
      %v658 = vpack.c.bf16 %v634, %v631
      %v659 = vpack.c.bf16 %v642, %v639
      %v660 = vpack.c.bf16 %v650, %v647
      %v669 = vunpack.c.l.b16 %v653
      %v670 = vunpack.c.h.b16 %v653
      %v671 = vunpack.c.l.b16 %v654
      %v672 = vunpack.c.h.b16 %v654
      %v673 = vunpack.c.l.b16 %v655
      %v674 = vunpack.c.h.b16 %v655
      %v675 = vunpack.c.l.b16 %v656
      %v676 = vunpack.c.h.b16 %v656
      %v677 = vunpack.c.l.b16 %v657
      %v678 = vunpack.c.h.b16 %v657
      %v679 = vunpack.c.l.b16 %v658
      %v680 = vunpack.c.h.b16 %v658
      %v681 = vunpack.c.l.b16 %v659
      %v682 = vunpack.c.h.b16 %v659
      %v683 = vunpack.c.l.b16 %v660
      %v684 = vunpack.c.h.b16 %v660
      %v685 = vpack.c.b16 %v669, %v669
      %v686 = vpack.c.b16 %v670, %v670
      %v687 = vpack.c.b16 %v671, %v671
      %v688 = vpack.c.b16 %v672, %v672
      %v689 = vpack.c.b16 %v673, %v673
      %v690 = vpack.c.b16 %v674, %v674
      %v691 = vpack.c.b16 %v675, %v675
      %v692 = vpack.c.b16 %v676, %v676
      %v693 = vpack.c.b16 %v677, %v677
      %v694 = vpack.c.b16 %v678, %v678
      %v695 = vpack.c.b16 %v679, %v679
      %v696 = vpack.c.b16 %v680, %v680
      %v697 = vpack.c.b16 %v681, %v681
      %v698 = vpack.c.b16 %v682, %v682
      %v699 = vpack.c.b16 %v683, %v683
      %v700 = vpack.c.b16 %v684, %v684
      %vm717 = vcmask 781312
      %718 = vst.msk [vmem:[%s226] sm:$0xf] %vm717, %v685
      %719 = vst.msk [vmem:[%s226 + $0x4] sm:$0xf] %vm717, %v686
      %720 = vst.msk [vmem:[%s226 + $0x8] sm:$0xf] %vm717, %v687
      %721 = vst.msk [vmem:[%s226 + $0xc] sm:$0xf] %vm717, %v688
      %722 = vst.msk [vmem:[%s226 + $0x10] sm:$0xf] %vm717, %v689
      %723 = vst.msk [vmem:[%s226 + $0x14] sm:$0xf] %vm717, %v690
      %724 = vst.msk [vmem:[%s226 + $0x18] sm:$0xf] %vm717, %v691
      %725 = vst.msk [vmem:[%s226 + $0x1c] sm:$0xf] %vm717, %v692
      %726 = vst.msk [vmem:[%s226 + $0x20] sm:$0xf] %vm717, %v693
      %727 = vst.msk [vmem:[%s226 + $0x24] sm:$0xf] %vm717, %v694
      %728 = vst.msk [vmem:[%s226 + $0x28] sm:$0xf] %vm717, %v695
      %729 = vst.msk [vmem:[%s226 + $0x2c] sm:$0xf] %vm717, %v696
      %730 = vst.msk [vmem:[%s226 + $0x30] sm:$0xf] %vm717, %v697
      %731 = vst.msk [vmem:[%s226 + $0x34] sm:$0xf] %vm717, %v698
      %732 = vst.msk [vmem:[%s226 + $0x38] sm:$0xf] %vm717, %v699
      %733 = vst.msk [vmem:[%s226 + $0x3c] sm:$0xf] %vm717, %v700
      %s734 = smul.u32 16, %s16
      %p735 = scmp.lt.s32.totalorder %s734, 31
      %s736 = scalar_select %p735, %s734, 31
      %s737 = smul.addr %s736, 4
      %s738 = scalar_lea.vmem %s5, %s737
      // Predicated region
      $region41: #{forward.11} parent=39 // pred_check
        %p739 = pneg %p144
      $region42: #{forward.11} parent=39 // pred_check_branch
        %741 = sbr.rel (%p739) target = $region44
      $region43: #{forward.11} parent=39 // pred_region
        %s742 = smul.u32 16, %s16
      $region44: #{forward.11} parent=39 // pred_fallthru
        _
    $region40: #{forward.11} parent=5 // pred_fallthru
      _
    %p743 = scmp.le.s32.totalorder 2, %s11
    // Predicated region
    $region45: #{forward.11} parent=5 // pred_check
      %p744 = pneg %p743
    $region46: #{forward.11} parent=5 // pred_check_branch
      %746 = sbr.rel (%p744) target = $region48
    $region47: #{forward.11} parent=5 // pred_region
      %s747 = ssub.s32 %s11, 2
      // Predicated region
      $region49: #{forward.11} parent=47 // pred_check
        %p748 = pneg %p150
      $region50: #{forward.11} parent=47 // pred_check_branch
        %750 = sbr.rel (%p748) target = $region52
      $region51: #{forward.11} parent=47 // pred_region
        %s751 = smul.u32 16, %s17
        %p752 = scmp.lt.s32.totalorder %s751, 31
        %s753 = scalar_select %p752, %s751, 31
        %s754 = smul.addr %s753, 4
        %s755 = scalar_lea.vmem %s5, %s754
      $region52: #{forward.11} parent=47 // pred_fallthru
        _
    $region48: #{forward.11} parent=5 // pred_fallthru
      _
  $region6: #{forward.11} parent=0 // loop_footer
    %s15 = sadd.s32 1, %s11
  $region7: #{forward.11} parent=0 // loop_footer_branch
    %10 = sbr.rel target = $region3
  $region8: #{forward.11} parent=0 // loop_exit
    _

// kernel: forward.13
$region0: #{forward.13}
  #allocation0 [shape = 'u32[]', space=smem, size = 0x4, offset = 0x4, fixed_abs, tag = 'smem constant byte address 0x4 - core index']
  #allocation1 [shape = 'u32[144,128]{1,0:T(1,128)}', space=vmem, size = 0x12000, scoped, tag = 'internal scratch']
  %s0 = inlined_call_operand.vmem [shape: f32[256,32], index: 0, kind: input, shape index: {}]
  %s1 = inlined_call_operand.vmem [shape: f32[1,32], index: 1, kind: input, shape index: {}]
  %s2 = inlined_call_operand.vmem [shape: f32[1,32], index: 2, kind: input, shape index: {}]
  %s3 = inlined_call_operand.vmem [shape: bf16[32,32], index: 3, kind: input, shape index: {}]
  %s4 = inlined_call_operand.vmem [shape: f32[1,32], index: 4, kind: input, shape index: {}]
  %s5 = inlined_call_operand.vmem [shape: bf16[32,32], index: 5, kind: input, shape index: {}]
  %s6 = inlined_call_operand.vmem [shape: f32[1,32], index: 6, kind: input, shape index: {}]
  %s7 = inlined_call_operand.vmem [shape: f32[256,32], index: 7, kind: output, shape index: {}]
  %s8 = sld [smem:[#allocation0]]
  $region61: #{forward.13} parent=0
    _
  %s10 = ssub.s32 1, %s8
  %s11 = scalar_select 0, %s10, %s8
  loop: start=0, step=1, limit=4
  $region2: #{forward.13} parent=0 // loop_pre_header
    _
  $region3: #{forward.13} parent=0 // loop_header
    %s13 = sphi 0, %s17
    %p14 = scmp.ge.s32.totalorder %s13, 4
    %s23 = sphi 0, %s25
    %s26 = sphi 0, %s23
    %s27 = sphi 0, %s26
    %s43 = sphi 0, %s27
    %s47 = sphi 0, %s47
    %s49 = sphi 0, %s47
    %s50 = sphi 0, %s49
    %s64 = sphi 0, %s50
    %s68 = sphi 0, %s68
    %s70 = sphi 0, %s68
    %s71 = sphi 0, %s70
    %s85 = sphi 0, %s71
    %s89 = sphi 0, %s89
    %s91 = sphi 0, %s89
    %s92 = sphi 0, %s91
    %s106 = sphi 0, %s92
    %s110 = sphi 0, %s110
    %s112 = sphi 0, %s110
    %s113 = sphi 0, %s112
    %s127 = sphi 0, %s113
    %s131 = sphi 0, %s131
    %s133 = sphi 0, %s131
    %s134 = sphi 0, %s133
    %s148 = sphi 0, %s134
    %s152 = sphi 0, %s152
    %s154 = sphi 0, %s152
    %s155 = sphi 0, %s154
    %s169 = sphi 0, %s155
    %s175 = sphi 0, %s177
    %s178 = sphi 0, %s175
    %s179 = sphi 0, %s178
    %s195 = sphi 0, %s179
  $region4: #{forward.13} parent=0 // loop_header_branch
    %16 = sbr.rel (%p14) target = $region8
  $region5: #{forward.13} parent=0 // loop_body
    %s18 = ssub.s32 %s13, 1
    %s19 = ssub.s32 %s13, 2
    %s20 = sadd.s32 %s13, 1
    %s21 = ssub.s32 %s13, %s20
    %p22 = scmp.eq.s32.totalorder %s21, 0
    %s24 = sadd.s32 %s23, 1
    %s25 = scalar_select %p22, %s23, %s24
    %p28 = pneg %p22
    %p29 = scmp.eq.s32.totalorder %s13, 1
    %p30 = por %p28, %p29
    %p31 = scmp.ne.s32.totalorder %s23, %s26
    %p32 = scmp.eq.s32.totalorder %s13, 0
    %p33 = por %p31, %p32
    %p34 = scmp.ne.s32.totalorder %s23, %s26
    %p35 = scmp.eq.s32.totalorder %s18, 1
    %p36 = por %p34, %p35
    %p37 = scmp.ne.s32.totalorder %s26, %s27
    %p38 = scmp.eq.s32.totalorder %s18, 0
    %p39 = por %p37, %p38
    %p40 = scmp.ne.s32.totalorder %s26, %s27
    %p41 = scmp.eq.s32.totalorder %s19, 1
    %p42 = por %p40, %p41
    %p44 = scmp.ne.s32.totalorder %s27, %s43
    %p45 = scmp.eq.s32.totalorder %s19, 0
    %p46 = por %p44, %p45
    %s48 = sadd.s32 %s47, 1
    %p51 = scmp.eq.s32.totalorder %s13, 1
    %p52 = scmp.ne.s32.totalorder %s47, %s49
    %p53 = scmp.eq.s32.totalorder %s13, 0
    %p54 = por %p52, %p53
    %p55 = scmp.ne.s32.totalorder %s47, %s49
    %p56 = scmp.eq.s32.totalorder %s18, 1
    %p57 = por %p55, %p56
    %p58 = scmp.ne.s32.totalorder %s49, %s50
    %p59 = scmp.eq.s32.totalorder %s18, 0
    %p60 = por %p58, %p59
    %p61 = scmp.ne.s32.totalorder %s49, %s50
    %p62 = scmp.eq.s32.totalorder %s19, 1
    %p63 = por %p61, %p62
    %p65 = scmp.ne.s32.totalorder %s50, %s64
    %p66 = scmp.eq.s32.totalorder %s19, 0
    %p67 = por %p65, %p66
    %s69 = sadd.s32 %s68, 1
    %p72 = scmp.eq.s32.totalorder %s13, 1
    %p73 = scmp.ne.s32.totalorder %s68, %s70
    %p74 = scmp.eq.s32.totalorder %s13, 0
    %p75 = por %p73, %p74
    %p76 = scmp.ne.s32.totalorder %s68, %s70
    %p77 = scmp.eq.s32.totalorder %s18, 1
    %p78 = por %p76, %p77
    %p79 = scmp.ne.s32.totalorder %s70, %s71
    %p80 = scmp.eq.s32.totalorder %s18, 0
    %p81 = por %p79, %p80
    %p82 = scmp.ne.s32.totalorder %s70, %s71
    %p83 = scmp.eq.s32.totalorder %s19, 1
    %p84 = por %p82, %p83
    %p86 = scmp.ne.s32.totalorder %s71, %s85
    %p87 = scmp.eq.s32.totalorder %s19, 0
    %p88 = por %p86, %p87
    %s90 = sadd.s32 %s89, 1
    %p93 = scmp.eq.s32.totalorder %s13, 1
    %p94 = scmp.ne.s32.totalorder %s89, %s91
    %p95 = scmp.eq.s32.totalorder %s13, 0
    %p96 = por %p94, %p95
    %p97 = scmp.ne.s32.totalorder %s89, %s91
    %p98 = scmp.eq.s32.totalorder %s18, 1
    %p99 = por %p97, %p98
    %p100 = scmp.ne.s32.totalorder %s91, %s92
    %p101 = scmp.eq.s32.totalorder %s18, 0
    %p102 = por %p100, %p101
    %p103 = scmp.ne.s32.totalorder %s91, %s92
    %p104 = scmp.eq.s32.totalorder %s19, 1
    %p105 = por %p103, %p104
    %p107 = scmp.ne.s32.totalorder %s92, %s106
    %p108 = scmp.eq.s32.totalorder %s19, 0
    %p109 = por %p107, %p108
    %s111 = sadd.s32 %s110, 1
    %p114 = scmp.eq.s32.totalorder %s13, 1
    %p115 = scmp.ne.s32.totalorder %s110, %s112
    %p116 = scmp.eq.s32.totalorder %s13, 0
    %p117 = por %p115, %p116
    %p118 = scmp.ne.s32.totalorder %s110, %s112
    %p119 = scmp.eq.s32.totalorder %s18, 1
    %p120 = por %p118, %p119
    %p121 = scmp.ne.s32.totalorder %s112, %s113
    %p122 = scmp.eq.s32.totalorder %s18, 0
    %p123 = por %p121, %p122
    %p124 = scmp.ne.s32.totalorder %s112, %s113
    %p125 = scmp.eq.s32.totalorder %s19, 1
    %p126 = por %p124, %p125
    %p128 = scmp.ne.s32.totalorder %s113, %s127
    %p129 = scmp.eq.s32.totalorder %s19, 0
    %p130 = por %p128, %p129
    %s132 = sadd.s32 %s131, 1
    %p135 = scmp.eq.s32.totalorder %s13, 1
    %p136 = scmp.ne.s32.totalorder %s131, %s133
    %p137 = scmp.eq.s32.totalorder %s13, 0
    %p138 = por %p136, %p137
    %p139 = scmp.ne.s32.totalorder %s131, %s133
    %p140 = scmp.eq.s32.totalorder %s18, 1
    %p141 = por %p139, %p140
    %p142 = scmp.ne.s32.totalorder %s133, %s134
    %p143 = scmp.eq.s32.totalorder %s18, 0
    %p144 = por %p142, %p143
    %p145 = scmp.ne.s32.totalorder %s133, %s134
    %p146 = scmp.eq.s32.totalorder %s19, 1
    %p147 = por %p145, %p146
    %p149 = scmp.ne.s32.totalorder %s134, %s148
    %p150 = scmp.eq.s32.totalorder %s19, 0
    %p151 = por %p149, %p150
    %s153 = sadd.s32 %s152, 1
    %p156 = scmp.eq.s32.totalorder %s13, 1
    %p157 = scmp.ne.s32.totalorder %s152, %s154
    %p158 = scmp.eq.s32.totalorder %s13, 0
    %p159 = por %p157, %p158
    %p160 = scmp.ne.s32.totalorder %s152, %s154
    %p161 = scmp.eq.s32.totalorder %s18, 1
    %p162 = por %p160, %p161
    %p163 = scmp.ne.s32.totalorder %s154, %s155
    %p164 = scmp.eq.s32.totalorder %s18, 0
    %p165 = por %p163, %p164
    %p166 = scmp.ne.s32.totalorder %s154, %s155
    %p167 = scmp.eq.s32.totalorder %s19, 1
    %p168 = por %p166, %p167
    %p170 = scmp.ne.s32.totalorder %s155, %s169
    %p171 = scmp.eq.s32.totalorder %s19, 0
    %p172 = por %p170, %p171
    %s173 = ssub.s32 %s13, %s20
    %p174 = scmp.eq.s32.totalorder %s173, 0
    %s176 = sadd.s32 %s175, 1
    %s177 = scalar_select %p174, %s175, %s176
    %p180 = pneg %p174
    %p181 = scmp.eq.s32.totalorder %s13, 1
    %p182 = por %p180, %p181
    %p183 = scmp.ne.s32.totalorder %s175, %s178
    %p184 = scmp.eq.s32.totalorder %s13, 0
    %p185 = por %p183, %p184
    %p186 = scmp.ne.s32.totalorder %s175, %s178
    %p187 = scmp.eq.s32.totalorder %s18, 1
    %p188 = por %p186, %p187
    %p189 = scmp.ne.s32.totalorder %s178, %s179
    %p190 = scmp.eq.s32.totalorder %s18, 0
    %p191 = por %p189, %p190
    %p192 = scmp.ne.s32.totalorder %s178, %s179
    %p193 = scmp.eq.s32.totalorder %s19, 1
    %p194 = por %p192, %p193
    %p196 = scmp.ne.s32.totalorder %s179, %s195
    %p197 = scmp.eq.s32.totalorder %s19, 0
    %p198 = por %p196, %p197
    %p199 = scmp.le.s32.totalorder 1, %s13
    %p200 = scmp.lt.s32.totalorder %s13, 3
    %p201 = pnand %p199, %p200
    %p202 = pneg %p201
    // Predicated region
    $region9: #{forward.13} parent=5 // pred_check
      _
    $region10: #{forward.13} parent=5 // pred_check_branch
      %204 = sbr.rel (%p201) target = $region12
    $region11: #{forward.13} parent=5 // pred_region
      %s205 = ssub.s32 %s13, 1
      // Predicated region
      $region13: #{forward.13} parent=11 // pred_check
        %p206 = pneg %p60
      $region14: #{forward.13} parent=11 // pred_check_branch
        %208 = sbr.rel (%p206) target = $region16
      $region15: #{forward.13} parent=11 // pred_region
        _
      $region16: #{forward.13} parent=11 // pred_fallthru
        _
      // Predicated region
      $region17: #{forward.13} parent=11 // pred_check
        %p209 = pneg %p81
      $region18: #{forward.13} parent=11 // pred_check_branch
        %211 = sbr.rel (%p209) target = $region20
      $region19: #{forward.13} parent=11 // pred_region
        _
      $region20: #{forward.13} parent=11 // pred_fallthru
        _
      // Predicated region
      $region21: #{forward.13} parent=11 // pred_check
        %p212 = pneg %p102
      $region22: #{forward.13} parent=11 // pred_check_branch
        %214 = sbr.rel (%p212) target = $region24
      $region23: #{forward.13} parent=11 // pred_region
        _
      $region24: #{forward.13} parent=11 // pred_fallthru
        _
      // Predicated region
      $region25: #{forward.13} parent=11 // pred_check
        %p215 = pneg %p123
      $region26: #{forward.13} parent=11 // pred_check_branch
        %217 = sbr.rel (%p215) target = $region28
      $region27: #{forward.13} parent=11 // pred_region
        _
      $region28: #{forward.13} parent=11 // pred_fallthru
        _
      // Predicated region
      $region29: #{forward.13} parent=11 // pred_check
        %p218 = pneg %p144
      $region30: #{forward.13} parent=11 // pred_check_branch
        %220 = sbr.rel (%p218) target = $region32
      $region31: #{forward.13} parent=11 // pred_region
        _
      $region32: #{forward.13} parent=11 // pred_fallthru
        _
      // Predicated region
      $region33: #{forward.13} parent=11 // pred_check
        %p221 = pneg %p165
      $region34: #{forward.13} parent=11 // pred_check_branch
        %223 = sbr.rel (%p221) target = $region36
      $region35: #{forward.13} parent=11 // pred_region
        _
      $region36: #{forward.13} parent=11 // pred_fallthru
        _
    $region12: #{forward.13} parent=5 // pred_fallthru
      _
    %p224 = scmp.lt.s32.totalorder %s13, 2
    // Predicated region
    $region37: #{forward.13} parent=5 // pred_check
      %p225 = pneg %p224
    $region38: #{forward.13} parent=5 // pred_check_branch
      %227 = sbr.rel (%p225) target = $region40
    $region39: #{forward.13} parent=5 // pred_region
      // Predicated region
      $region41: #{forward.13} parent=39 // pred_check
        %p228 = pneg %p33
      $region42: #{forward.13} parent=39 // pred_check_branch
        %230 = sbr.rel (%p228) target = $region44
      $region43: #{forward.13} parent=39 // pred_region
        %s231 = smul.u32 16, %s13
        %p232 = scmp.lt.s32.totalorder %s231, 31
        %s233 = scalar_select %p232, %s231, 31
        %s234 = smul.addr %s233, 8
        %s235 = scalar_lea.vmem %s0, %s234
        %s236 = smul.u32 16, %s13
      $region44: #{forward.13} parent=39 // pred_fallthru
        _
    $region40: #{forward.13} parent=5 // pred_fallthru
      _
    %p237 = scmp.le.s32.totalorder 1, %s13
    %p238 = scmp.lt.s32.totalorder %s13, 3
    %p239 = pnand %p237, %p238
    %p240 = pneg %p239
    // Predicated region
    $region45: #{forward.13} parent=5 // pred_check
      _
    $region46: #{forward.13} parent=5 // pred_check_branch
      %242 = sbr.rel (%p239) target = $region48
    $region47: #{forward.13} parent=5 // pred_region
      %s243 = ssub.s32 %s13, 1
      %s244 = smul.u32 16, %s18
      %p245 = scmp.lt.s32.totalorder %s244, 31
      %s246 = scalar_select %p245, %s244, 31
      %s247 = smul.addr %s246, 8
      %s248 = scalar_lea.vmem %s0, %s247
      %p249 = pneg %p39
      %p250 = pneg %p36
      %p251 = pneg %p60
      %p252 = pneg %p57
      %p253 = pneg %p81
      %p254 = pneg %p78
      %p255 = pneg %p102
      %p256 = pneg %p99
      %p257 = pneg %p123
      %p258 = pneg %p120
      %p259 = pneg %p144
      %p260 = pneg %p141
      %p261 = pneg %p165
      %p262 = pneg %p162
      %p263 = pneg %p191
      %p264 = pneg %p188
      %s265 = smul.u32 16, %s18
      %p266 = scmp.lt.s32.totalorder %s265, 31
      %s267 = scalar_select %p266, %s265, 31
      %s268 = smul.addr %s267, 8
      %s269 = scalar_lea.vmem %s7, %s268
      %s270 = smul.u32 16, %s18
      %p271 = scmp.lt.s32.totalorder %s270, 31
      %s272 = scalar_select %p271, %s270, 31
      %s273 = smul.addr %s272, 8
      %s274 = scalar_lea.vmem %s0, %s273
      %s275 = smul.u32 16, %s18
      %s276 = smul.u32 16, %s18
      %p277 = scmp.lt.s32.totalorder %s276, 31
      %s278 = scalar_select %p277, %s276, 31
      %s279 = smul.addr %s278, 8
      %s280 = scalar_lea.vmem %s7, %s279
      %s281 = smul.u32 16, %s18
      %v283 = vld [vmem:[%s274] sm:$0xff]
      %v284 = vld [vmem:[%s274 + $0x8] sm:$0xff]
      %v285 = vld [vmem:[%s274 + $0x10] sm:$0xff]
      %v286 = vld [vmem:[%s274 + $0x18] sm:$0xff]
      %v287 = vld [vmem:[%s274 + $0x20] sm:$0xff]
      %v288 = vld [vmem:[%s274 + $0x28] sm:$0xff]
      %v289 = vld [vmem:[%s274 + $0x30] sm:$0xff]
      %v290 = vld [vmem:[%s274 + $0x38] sm:$0xff]
      %v291 = vld [vmem:[%s274 + $0x40] sm:$0xff]
      %v292 = vld [vmem:[%s274 + $0x48] sm:$0xff]
      %v293 = vld [vmem:[%s274 + $0x50] sm:$0xff]
      %v294 = vld [vmem:[%s274 + $0x58] sm:$0xff]
      %v295 = vld [vmem:[%s274 + $0x60] sm:$0xff]
      %v296 = vld [vmem:[%s274 + $0x68] sm:$0xff]
      %v297 = vld [vmem:[%s274 + $0x70] sm:$0xff]
      %v298 = vld [vmem:[%s274 + $0x78] sm:$0xff]
      %vm299 = vcmask 261120
      %v300 = vsel %vm299, %v283, 0.0
      %301 = vadd.xlane.f32.xlu0 %v300
      %v302 = vpop.xlane.xlu0 %301
      %v303 = vsel %vm299, %v284, 0.0
      %304 = vadd.xlane.f32.xlu0 %v303
      %v305 = vpop.xlane.xlu0 %304
      %v306 = vsel %vm299, %v285, 0.0
      %307 = vadd.xlane.f32.xlu0 %v306
      %v308 = vpop.xlane.xlu0 %307
      %v309 = vsel %vm299, %v286, 0.0
      %310 = vadd.xlane.f32.xlu0 %v309
      %v311 = vpop.xlane.xlu0 %310
      %v312 = vsel %vm299, %v287, 0.0
      %313 = vadd.xlane.f32.xlu0 %v312
      %v314 = vpop.xlane.xlu0 %313
      %v315 = vsel %vm299, %v288, 0.0
      %316 = vadd.xlane.f32.xlu0 %v315
      %v317 = vpop.xlane.xlu0 %316
      %v318 = vsel %vm299, %v289, 0.0
      %319 = vadd.xlane.f32.xlu0 %v318
      %v320 = vpop.xlane.xlu0 %319
      %v321 = vsel %vm299, %v290, 0.0
      %322 = vadd.xlane.f32.xlu0 %v321
      %v323 = vpop.xlane.xlu0 %322
      %v324 = vsel %vm299, %v291, 0.0
      %325 = vadd.xlane.f32.xlu0 %v324
      %v326 = vpop.xlane.xlu0 %325
      %v327 = vsel %vm299, %v292, 0.0
      %328 = vadd.xlane.f32.xlu0 %v327
      %v329 = vpop.xlane.xlu0 %328
      %v330 = vsel %vm299, %v293, 0.0
      %331 = vadd.xlane.f32.xlu0 %v330
      %v332 = vpop.xlane.xlu0 %331
      %v333 = vsel %vm299, %v294, 0.0
      %334 = vadd.xlane.f32.xlu0 %v333
      %v335 = vpop.xlane.xlu0 %334
      %v336 = vsel %vm299, %v295, 0.0
      %337 = vadd.xlane.f32.xlu0 %v336
      %v338 = vpop.xlane.xlu0 %337
      %v339 = vsel %vm299, %v296, 0.0
      %340 = vadd.xlane.f32.xlu0 %v339
      %v341 = vpop.xlane.xlu0 %340
      %v342 = vsel %vm299, %v297, 0.0
      %343 = vadd.xlane.f32.xlu0 %v342
      %v344 = vpop.xlane.xlu0 %343
      %v345 = vsel %vm299, %v298, 0.0
      %346 = vadd.xlane.f32.xlu0 %v345
      %v347 = vpop.xlane.xlu0 %346
      %v348 = vrcp.pop 32.0
      %v349 = vmul.f32 %v302, %v348
      %v350 = vmul.f32 %v305, %v348
      %v351 = vmul.f32 %v308, %v348
      %v352 = vmul.f32 %v311, %v348
      %v353 = vmul.f32 %v314, %v348
      %v354 = vmul.f32 %v317, %v348
      %v355 = vmul.f32 %v320, %v348
      %v356 = vmul.f32 %v323, %v348
      %v357 = vmul.f32 %v326, %v348
      %v358 = vmul.f32 %v329, %v348
      %v359 = vmul.f32 %v332, %v348
      %v360 = vmul.f32 %v335, %v348
      %v361 = vmul.f32 %v338, %v348
      %v362 = vmul.f32 %v341, %v348
      %v363 = vmul.f32 %v344, %v348
      %v364 = vmul.f32 %v347, %v348
      %v365 = vsub.f32 %v283, %v349
      %v366 = vsub.f32 %v284, %v350
      %v367 = vsub.f32 %v285, %v351
      %v368 = vsub.f32 %v286, %v352
      %v369 = vsub.f32 %v287, %v353
      %v370 = vsub.f32 %v288, %v354
      %v371 = vsub.f32 %v289, %v355
      %v372 = vsub.f32 %v290, %v356
      %v373 = vsub.f32 %v291, %v357
      %v374 = vsub.f32 %v292, %v358
      %v375 = vsub.f32 %v293, %v359
      %v376 = vsub.f32 %v294, %v360
      %v377 = vsub.f32 %v295, %v361
      %v378 = vsub.f32 %v296, %v362
      %v379 = vsub.f32 %v297, %v363
      %v380 = vsub.f32 %v298, %v364
      %v381 = vmul.f32 %v365, %v365
      %v382 = vmul.f32 %v366, %v366
      %v383 = vmul.f32 %v367, %v367
      %v384 = vmul.f32 %v368, %v368
      %v385 = vmul.f32 %v369, %v369
      %v386 = vmul.f32 %v370, %v370
      %v387 = vmul.f32 %v371, %v371
      %v388 = vmul.f32 %v372, %v372
      %v389 = vmul.f32 %v373, %v373
      %v390 = vmul.f32 %v374, %v374
      %v391 = vmul.f32 %v375, %v375
      %v392 = vmul.f32 %v376, %v376
      %v393 = vmul.f32 %v377, %v377
      %v394 = vmul.f32 %v378, %v378
      %v395 = vmul.f32 %v379, %v379
      %v396 = vmul.f32 %v380, %v380
      %v397 = vsel %vm299, %v381, 0.0
      %398 = vadd.xlane.f32.xlu0 %v397
      %v399 = vpop.xlane.xlu0 %398
      %v400 = vsel %vm299, %v382, 0.0
      %401 = vadd.xlane.f32.xlu0 %v400
      %v402 = vpop.xlane.xlu0 %401
      %v403 = vsel %vm299, %v383, 0.0
      %404 = vadd.xlane.f32.xlu0 %v403
      %v405 = vpop.xlane.xlu0 %404
      %v406 = vsel %vm299, %v384, 0.0
      %407 = vadd.xlane.f32.xlu0 %v406
      %v408 = vpop.xlane.xlu0 %407
      %v409 = vsel %vm299, %v385, 0.0
      %410 = vadd.xlane.f32.xlu0 %v409
      %v411 = vpop.xlane.xlu0 %410
      %v412 = vsel %vm299, %v386, 0.0
      %413 = vadd.xlane.f32.xlu0 %v412
      %v414 = vpop.xlane.xlu0 %413
      %v415 = vsel %vm299, %v387, 0.0
      %416 = vadd.xlane.f32.xlu0 %v415
      %v417 = vpop.xlane.xlu0 %416
      %v418 = vsel %vm299, %v388, 0.0
      %419 = vadd.xlane.f32.xlu0 %v418
      %v420 = vpop.xlane.xlu0 %419
      %v421 = vsel %vm299, %v389, 0.0
      %422 = vadd.xlane.f32.xlu0 %v421
      %v423 = vpop.xlane.xlu0 %422
      %v424 = vsel %vm299, %v390, 0.0
      %425 = vadd.xlane.f32.xlu0 %v424
      %v426 = vpop.xlane.xlu0 %425
      %v427 = vsel %vm299, %v391, 0.0
      %428 = vadd.xlane.f32.xlu0 %v427
      %v429 = vpop.xlane.xlu0 %428
      %v430 = vsel %vm299, %v392, 0.0
      %431 = vadd.xlane.f32.xlu0 %v430
      %v432 = vpop.xlane.xlu0 %431
      %v433 = vsel %vm299, %v393, 0.0
      %434 = vadd.xlane.f32.xlu0 %v433
      %v435 = vpop.xlane.xlu0 %434
      %v436 = vsel %vm299, %v394, 0.0
      %437 = vadd.xlane.f32.xlu0 %v436
      %v438 = vpop.xlane.xlu0 %437
      %v439 = vsel %vm299, %v395, 0.0
      %440 = vadd.xlane.f32.xlu0 %v439
      %v441 = vpop.xlane.xlu0 %440
      %v442 = vsel %vm299, %v396, 0.0
      %443 = vadd.xlane.f32.xlu0 %v442
      %v444 = vpop.xlane.xlu0 %443
      %v445 = vmul.f32 %v399, %v348
      %v446 = vmul.f32 %v402, %v348
      %v447 = vmul.f32 %v405, %v348
      %v448 = vmul.f32 %v408, %v348
      %v449 = vmul.f32 %v411, %v348
      %v450 = vmul.f32 %v414, %v348
      %v451 = vmul.f32 %v417, %v348
      %v452 = vmul.f32 %v420, %v348
      %v453 = vmul.f32 %v423, %v348
      %v454 = vmul.f32 %v426, %v348
      %v455 = vmul.f32 %v429, %v348
      %v456 = vmul.f32 %v432, %v348
      %v457 = vmul.f32 %v435, %v348
      %v458 = vmul.f32 %v438, %v348
      %v459 = vmul.f32 %v441, %v348
      %v460 = vmul.f32 %v444, %v348
      %v461 = vadd.f32 %v445, 1e-06
      %v462 = vadd.f32 %v446, 1e-06
      %v463 = vadd.f32 %v447, 1e-06
      %v464 = vadd.f32 %v448, 1e-06
      %v465 = vadd.f32 %v449, 1e-06
      %v466 = vadd.f32 %v450, 1e-06
      %v467 = vadd.f32 %v451, 1e-06
      %v468 = vadd.f32 %v452, 1e-06
      %v469 = vadd.f32 %v453, 1e-06
      %v470 = vadd.f32 %v454, 1e-06
      %v471 = vadd.f32 %v455, 1e-06
      %v472 = vadd.f32 %v456, 1e-06
      %v473 = vadd.f32 %v457, 1e-06
      %v474 = vadd.f32 %v458, 1e-06
      %v475 = vadd.f32 %v459, 1e-06
      %v476 = vadd.f32 %v460, 1e-06
      %v477 = vrsqrt.pop %v461
      %v478 = vrsqrt.pop %v462
      %v479 = vrsqrt.pop %v463
      %v480 = vrsqrt.pop %v464
      %v481 = vrsqrt.pop %v465
      %v482 = vrsqrt.pop %v466
      %v483 = vrsqrt.pop %v467
      %v484 = vrsqrt.pop %v468
      %v485 = vrsqrt.pop %v469
      %v486 = vrsqrt.pop %v470
      %v487 = vrsqrt.pop %v471
      %v488 = vrsqrt.pop %v472
      %v489 = vrsqrt.pop %v473
      %v490 = vrsqrt.pop %v474
      %v491 = vrsqrt.pop %v475
      %v492 = vrsqrt.pop %v476
      %v493 = vmul.f32 %v365, %v477
      %v494 = vmul.f32 %v366, %v478
      %v495 = vmul.f32 %v367, %v479
      %v496 = vmul.f32 %v368, %v480
      %v497 = vmul.f32 %v369, %v481
      %v498 = vmul.f32 %v370, %v482
      %v499 = vmul.f32 %v371, %v483
      %v500 = vmul.f32 %v372, %v484
      %v501 = vmul.f32 %v373, %v485
      %v502 = vmul.f32 %v374, %v486
      %v503 = vmul.f32 %v375, %v487
      %v504 = vmul.f32 %v376, %v488
      %v505 = vmul.f32 %v377, %v489
      %v506 = vmul.f32 %v378, %v490
      %v507 = vmul.f32 %v379, %v491
      %v508 = vmul.f32 %v380, %v492
      %v509 = vld [vmem:[%s1] sm:$0x1]
      %v511 = vlaneseq
      %v512 = vshrl.u32 %v511, 7
      %v513 = vsub.s32 0, %v512
      %v514 = vrot.slane %v509, %v513
      %v516 = vmul.f32 %v493, %v514
      %v517 = vmul.f32 %v494, %v514
      %v518 = vmul.f32 %v495, %v514
      %v519 = vmul.f32 %v496, %v514
      %v520 = vmul.f32 %v497, %v514
      %v521 = vmul.f32 %v498, %v514
      %v522 = vmul.f32 %v499, %v514
      %v523 = vmul.f32 %v500, %v514
      %v524 = vmul.f32 %v501, %v514
      %v525 = vmul.f32 %v502, %v514
      %v526 = vmul.f32 %v503, %v514
      %v527 = vmul.f32 %v504, %v514
      %v528 = vmul.f32 %v505, %v514
      %v529 = vmul.f32 %v506, %v514
      %v530 = vmul.f32 %v507, %v514
      %v531 = vmul.f32 %v508, %v514
      %v532 = vld [vmem:[%s2] sm:$0x1]
      %v534 = vlaneseq
      %v535 = vshrl.u32 %v534, 7
      %v536 = vsub.s32 0, %v535
      %v537 = vrot.slane %v532, %v536
      %v539 = vadd.f32 %v516, %v537
      %v540 = vadd.f32 %v517, %v537
      %v541 = vadd.f32 %v518, %v537
      %v542 = vadd.f32 %v519, %v537
      %v543 = vadd.f32 %v520, %v537
      %v544 = vadd.f32 %v521, %v537
      %v545 = vadd.f32 %v522, %v537
      %v546 = vadd.f32 %v523, %v537
      %v547 = vadd.f32 %v524, %v537
      %v548 = vadd.f32 %v525, %v537
      %v549 = vadd.f32 %v526, %v537
      %v550 = vadd.f32 %v527, %v537
      %v551 = vadd.f32 %v528, %v537
      %v552 = vadd.f32 %v529, %v537
      %v553 = vadd.f32 %v530, %v537
      %v554 = vadd.f32 %v531, %v537
      %v555 = vpack.c.bf16 %v540, %v539
      %v556 = vpack.c.bf16 %v542, %v541
      %v557 = vpack.c.bf16 %v544, %v543
      %v558 = vpack.c.bf16 %v546, %v545
      %v559 = vpack.c.bf16 %v548, %v547
      %v560 = vpack.c.bf16 %v550, %v549
      %v561 = vpack.c.bf16 %v552, %v551
      %v562 = vpack.c.bf16 %v554, %v553
      %v563 = vld [vmem:[%s3] sm:$0xf]
      %v564 = vld [vmem:[%s3 + $0x4] sm:$0xf]
      %v565 = vld [vmem:[%s3 + $0x8] sm:$0xf]
      %v566 = vld [vmem:[%s3 + $0xc] sm:$0xf]
      %v567 = vld [vmem:[%s4] sm:$0x1]
      %v569 = vlaneseq
      %v570 = vshrl.u32 %v569, 7
      %v571 = vsub.s32 0, %v570
      %v572 = vrot.slane %v567, %v571
      %v578 = vunpack.c.l.b16 %v563
      %v579 = vunpack.c.l.b16 %v564
      %v580 = vunpack.c.l.b16 %v565
      %v581 = vunpack.c.l.b16 %v566
      %v582 = vpack.c.b16 %v579, %v578
      %v583 = vpack.c.b16 %v581, %v580
      %v587 = vsel %vm299, %v555, 0
      %v590 = vsel %vm299, %v556, 0
      %v593 = vsel %vm299, %v557, 0
      %v596 = vsel %vm299, %v558, 0
      %v599 = vsel %vm299, %v559, 0
      %v602 = vsel %vm299, %v560, 0
      %v605 = vsel %vm299, %v561, 0
      %v608 = vsel %vm299, %v562, 0
      %610 = vmatprep.subr.bf16.mxu0 0
      %611 = vmatpush1.bf16.msra.mxu0 %v582
      %612 = vmatprep.subr.bf16.mxu0 0
      %613 = vmatpush1.bf16.msra.mxu0 %v583
      %614 = vmatprep.subr.bf16.mxu0 0
      %615 = vmatpush1.bf16.msra.mxu0 0
      %616 = vmatprep.subr.bf16.mxu0 0
      %617 = vmatpush1.bf16.msra.mxu0 0
      %618 = vmatprep.subr.bf16.mxu0 0
      %619 = vmatpush1.bf16.msra.mxu0 0
      %620 = vmatprep.subr.bf16.mxu0 0
      %621 = vmatpush1.bf16.msra.mxu0 0
      %622 = vmatprep.subr.bf16.mxu0 0
      %623 = vmatpush1.bf16.msra.mxu0 0
      %624 = vmatprep.subr.bf16.mxu0 0
      %625 = vmatpush1.bf16.msra.mxu0 0
      %626 = vmatprep.subr.bf16.mxu0 0
      %627 = vmatpush1.bf16.msra.mxu0 0
      %628 = vmatprep.subr.bf16.mxu0 0
      %629 = vmatpush1.bf16.msra.mxu0 0
      %630 = vmatprep.subr.bf16.mxu0 0
      %631 = vmatpush1.bf16.msra.mxu0 0
      %632 = vmatprep.subr.bf16.mxu0 0
      %633 = vmatpush1.bf16.msra.mxu0 0
      %634 = vmatprep.subr.bf16.mxu0 0
      %635 = vmatpush1.bf16.msra.mxu0 0
      %636 = vmatprep.subr.bf16.mxu0 0
      %637 = vmatpush1.bf16.msra.mxu0 0
      %638 = vmatprep.subr.bf16.mxu0 0
      %639 = vmatpush1.bf16.msra.mxu0 0
      %640 = vmatprep.subr.bf16.mxu0 0
      %641 = vmatpush1.bf16.msra.mxu0 0
      %642 = vmatprep.mubr.bf16.mxu0 0
      %643 = vmatmul.mubr.bf16.gmra.mrb[0].mxu0 %v587
      %v644 = vpop.f32.mrb[0].mxu0
      %v645 = vadd.f32 %v572, %v644
      %v646 = vpop.f32.mrb[0].mxu0
      %v647 = vpop.f32.mrb[0].mxu0
      %v648 = vadd.f32 %v572, %v647
      %v649 = vpop.f32.mrb[0].mxu0
      %650 = vmatprep.mubr.bf16.mxu0 0
      %651 = vmatmul.mubr.bf16.gmra.mrb[0].mxu0 %v590
      %v652 = vpop.f32.mrb[0].mxu0
      %v653 = vadd.f32 %v572, %v652
      %v654 = vpop.f32.mrb[0].mxu0
      %v655 = vpop.f32.mrb[0].mxu0
      %v656 = vadd.f32 %v572, %v655
      %v657 = vpop.f32.mrb[0].mxu0
      %658 = vmatprep.mubr.bf16.mxu0 0
      %659 = vmatmul.mubr.bf16.gmra.mrb[0].mxu0 %v593
      %v660 = vpop.f32.mrb[0].mxu0
      %v661 = vadd.f32 %v572, %v660
      %v662 = vpop.f32.mrb[0].mxu0
      %v663 = vpop.f32.mrb[0].mxu0
      %v664 = vadd.f32 %v572, %v663
      %v665 = vpop.f32.mrb[0].mxu0
      %666 = vmatprep.mubr.bf16.mxu0 0
      %667 = vmatmul.mubr.bf16.gmra.mrb[0].mxu0 %v596
      %v668 = vpop.f32.mrb[0].mxu0
      %v669 = vadd.f32 %v572, %v668
      %v670 = vpop.f32.mrb[0].mxu0
      %v671 = vpop.f32.mrb[0].mxu0
      %v672 = vadd.f32 %v572, %v671
      %v673 = vpop.f32.mrb[0].mxu0
      %674 = vmatprep.mubr.bf16.mxu0 0
      %675 = vmatmul.mubr.bf16.gmra.mrb[0].mxu0 %v599
      %v676 = vpop.f32.mrb[0].mxu0
      %v677 = vadd.f32 %v572, %v676
      %v678 = vpop.f32.mrb[0].mxu0
      %v679 = vpop.f32.mrb[0].mxu0
      %v680 = vadd.f32 %v572, %v679
      %v681 = vpop.f32.mrb[0].mxu0
      %682 = vmatprep.mubr.bf16.mxu0 0
      %683 = vmatmul.mubr.bf16.gmra.mrb[0].mxu0 %v602
      %v684 = vpop.f32.mrb[0].mxu0
      %v685 = vadd.f32 %v572, %v684
      %v686 = vpop.f32.mrb[0].mxu0
      %v687 = vpop.f32.mrb[0].mxu0
      %v688 = vadd.f32 %v572, %v687
      %v689 = vpop.f32.mrb[0].mxu0
      %690 = vmatprep.mubr.bf16.mxu0 0
      %691 = vmatmul.mubr.bf16.gmra.mrb[0].mxu0 %v605
      %v692 = vpop.f32.mrb[0].mxu0
      %v693 = vadd.f32 %v572, %v692
      %v694 = vpop.f32.mrb[0].mxu0
      %v695 = vpop.f32.mrb[0].mxu0
      %v696 = vadd.f32 %v572, %v695
      %v697 = vpop.f32.mrb[0].mxu0
      %698 = vmatprep.mubr.bf16.mxu0 0
      %699 = vmatmul.mubr.bf16.gmra.mrb[0].mxu0 %v608
      %v700 = vpop.f32.mrb[0].mxu0
      %v701 = vadd.f32 %v572, %v700
      %v702 = vpop.f32.mrb[0].mxu0
      %v703 = vpop.f32.mrb[0].mxu0
      %v704 = vadd.f32 %v572, %v703
      %v705 = vpop.f32.mrb[0].mxu0
      %706 = vdwg.mxu0
      %v707 = vmul.f32 %v645, %v645
      %v708 = vmul.f32 %v648, %v648
      %v709 = vmul.f32 %v653, %v653
      %v710 = vmul.f32 %v656, %v656
      %v711 = vmul.f32 %v661, %v661
      %v712 = vmul.f32 %v664, %v664
      %v713 = vmul.f32 %v669, %v669
      %v714 = vmul.f32 %v672, %v672
      %v715 = vmul.f32 %v677, %v677
      %v716 = vmul.f32 %v680, %v680
      %v717 = vmul.f32 %v685, %v685
      %v718 = vmul.f32 %v688, %v688
      %v719 = vmul.f32 %v693, %v693
      %v720 = vmul.f32 %v696, %v696
      %v721 = vmul.f32 %v701, %v701
      %v722 = vmul.f32 %v704, %v704
      %v723 = vmul.f32 %v645, %v707
      %v724 = vmul.f32 %v648, %v708
      %v725 = vmul.f32 %v653, %v709
      %v726 = vmul.f32 %v656, %v710
      %v727 = vmul.f32 %v661, %v711
      %v728 = vmul.f32 %v664, %v712
      %v729 = vmul.f32 %v669, %v713
      %v730 = vmul.f32 %v672, %v714
      %v731 = vmul.f32 %v677, %v715
      %v732 = vmul.f32 %v680, %v716
      %v733 = vmul.f32 %v685, %v717
      %v734 = vmul.f32 %v688, %v718
      %v735 = vmul.f32 %v693, %v719
      %v736 = vmul.f32 %v696, %v720
      %v737 = vmul.f32 %v701, %v721
      %v738 = vmul.f32 %v704, %v722
      %v739 = vmul.f32 %v723, 0.044715
      %v740 = vmul.f32 %v724, 0.044715
      %v741 = vmul.f32 %v725, 0.044715
      %v742 = vmul.f32 %v726, 0.044715
      %v743 = vmul.f32 %v727, 0.044715
      %v744 = vmul.f32 %v728, 0.044715
      %v745 = vmul.f32 %v729, 0.044715
      %v746 = vmul.f32 %v730, 0.044715
      %v747 = vmul.f32 %v731, 0.044715
      %v748 = vmul.f32 %v732, 0.044715
      %v749 = vmul.f32 %v733, 0.044715
      %v750 = vmul.f32 %v734, 0.044715
      %v751 = vmul.f32 %v735, 0.044715
      %v752 = vmul.f32 %v736, 0.044715
      %v753 = vmul.f32 %v737, 0.044715
      %v754 = vmul.f32 %v738, 0.044715
      %v755 = vadd.f32 %v645, %v739
      %v756 = vadd.f32 %v648, %v740
      %v757 = vadd.f32 %v653, %v741
      %v758 = vadd.f32 %v656, %v742
      %v759 = vadd.f32 %v661, %v743
      %v760 = vadd.f32 %v664, %v744
      %v761 = vadd.f32 %v669, %v745
      %v762 = vadd.f32 %v672, %v746
      %v763 = vadd.f32 %v677, %v747
      %v764 = vadd.f32 %v680, %v748
      %v765 = vadd.f32 %v685, %v749
      %v766 = vadd.f32 %v688, %v750
      %v767 = vadd.f32 %v693, %v751
      %v768 = vadd.f32 %v696, %v752
      %v769 = vadd.f32 %v701, %v753
      %v770 = vadd.f32 %v704, %v754
      %v771 = vmul.f32 %v755, 0.7978846
      %v772 = vmul.f32 %v756, 0.7978846
      %v773 = vmul.f32 %v757, 0.7978846
      %v774 = vmul.f32 %v758, 0.7978846
      %v775 = vmul.f32 %v759, 0.7978846
      %v776 = vmul.f32 %v760, 0.7978846
      %v777 = vmul.f32 %v761, 0.7978846
      %v778 = vmul.f32 %v762, 0.7978846
      %v779 = vmul.f32 %v763, 0.7978846
      %v780 = vmul.f32 %v764, 0.7978846
      %v781 = vmul.f32 %v765, 0.7978846
      %v782 = vmul.f32 %v766, 0.7978846
      %v783 = vmul.f32 %v767, 0.7978846
      %v784 = vmul.f32 %v768, 0.7978846
      %v785 = vmul.f32 %v769, 0.7978846
      %v786 = vmul.f32 %v770, 0.7978846
      %v787 = vtanh.pop %v771
      %v788 = vtanh.pop %v772
      %v789 = vtanh.pop %v773
      %v790 = vtanh.pop %v774
      %v791 = vtanh.pop %v775
      %v792 = vtanh.pop %v776
      %v793 = vtanh.pop %v777
      %v794 = vtanh.pop %v778
      %v795 = vtanh.pop %v779
      %v796 = vtanh.pop %v780
      %v797 = vtanh.pop %v781
      %v798 = vtanh.pop %v782
      %v799 = vtanh.pop %v783
      %v800 = vtanh.pop %v784
      %v801 = vtanh.pop %v785
      %v802 = vtanh.pop %v786
      %v803 = vadd.f32 %v787, 1.0
      %v804 = vadd.f32 %v788, 1.0
      %v805 = vadd.f32 %v789, 1.0
      %v806 = vadd.f32 %v790, 1.0
      %v807 = vadd.f32 %v791, 1.0
      %v808 = vadd.f32 %v792, 1.0
      %v809 = vadd.f32 %v793, 1.0
      %v810 = vadd.f32 %v794, 1.0
      %v811 = vadd.f32 %v795, 1.0
      %v812 = vadd.f32 %v796, 1.0
      %v813 = vadd.f32 %v797, 1.0
      %v814 = vadd.f32 %v798, 1.0
      %v815 = vadd.f32 %v799, 1.0
      %v816 = vadd.f32 %v800, 1.0
      %v817 = vadd.f32 %v801, 1.0
      %v818 = vadd.f32 %v802, 1.0
      %v819 = vmul.f32 %v803, 0.5
      %v820 = vmul.f32 %v804, 0.5
      %v821 = vmul.f32 %v805, 0.5
      %v822 = vmul.f32 %v806, 0.5
      %v823 = vmul.f32 %v807, 0.5
      %v824 = vmul.f32 %v808, 0.5
      %v825 = vmul.f32 %v809, 0.5
      %v826 = vmul.f32 %v810, 0.5
      %v827 = vmul.f32 %v811, 0.5
      %v828 = vmul.f32 %v812, 0.5
      %v829 = vmul.f32 %v813, 0.5
      %v830 = vmul.f32 %v814, 0.5
      %v831 = vmul.f32 %v815, 0.5
      %v832 = vmul.f32 %v816, 0.5
      %v833 = vmul.f32 %v817, 0.5
      %v834 = vmul.f32 %v818, 0.5
      %v835 = vmul.f32 %v645, %v819
      %v836 = vmul.f32 %v648, %v820
      %v837 = vmul.f32 %v653, %v821
      %v838 = vmul.f32 %v656, %v822
      %v839 = vmul.f32 %v661, %v823
      %v840 = vmul.f32 %v664, %v824
      %v841 = vmul.f32 %v669, %v825
      %v842 = vmul.f32 %v672, %v826
      %v843 = vmul.f32 %v677, %v827
      %v844 = vmul.f32 %v680, %v828
      %v845 = vmul.f32 %v685, %v829
      %v846 = vmul.f32 %v688, %v830
      %v847 = vmul.f32 %v693, %v831
      %v848 = vmul.f32 %v696, %v832
      %v849 = vmul.f32 %v701, %v833
      %v850 = vmul.f32 %v704, %v834
      %v851 = vpack.c.bf16 %v836, %v835
      %v852 = vpack.c.bf16 %v838, %v837
      %v853 = vpack.c.bf16 %v840, %v839
      %v854 = vpack.c.bf16 %v842, %v841
      %v855 = vpack.c.bf16 %v844, %v843
      %v856 = vpack.c.bf16 %v846, %v845
      %v857 = vpack.c.bf16 %v848, %v847
      %v858 = vpack.c.bf16 %v850, %v849
      %v859 = vld [vmem:[%s5] sm:$0xf]
      %v860 = vld [vmem:[%s5 + $0x4] sm:$0xf]
      %v861 = vld [vmem:[%s5 + $0x8] sm:$0xf]
      %v862 = vld [vmem:[%s5 + $0xc] sm:$0xf]
      %v863 = vld [vmem:[%s6] sm:$0x1]
      %v865 = vlaneseq
      %v866 = vshrl.u32 %v865, 7
      %v867 = vsub.s32 0, %v866
      %v868 = vrot.slane %v863, %v867
      %v874 = vunpack.c.l.b16 %v859
      %v875 = vunpack.c.l.b16 %v860
      %v876 = vunpack.c.l.b16 %v861
      %v877 = vunpack.c.l.b16 %v862
      %v878 = vpack.c.b16 %v875, %v874
      %v879 = vpack.c.b16 %v877, %v876
      %v883 = vsel %vm299, %v851, 0
      %v886 = vsel %vm299, %v852, 0
      %v889 = vsel %vm299, %v853, 0
      %v892 = vsel %vm299, %v854, 0
      %v895 = vsel %vm299, %v855, 0
      %v898 = vsel %vm299, %v856, 0
      %v901 = vsel %vm299, %v857, 0
      %v904 = vsel %vm299, %v858, 0
      %906 = vmatprep.subr.bf16.mxu0 0
      %907 = vmatpush1.bf16.msra.mxu0 %v878
      %908 = vmatprep.subr.bf16.mxu0 0
      %909 = vmatpush1.bf16.msra.mxu0 %v879
      %910 = vmatprep.subr.bf16.mxu0 0
      %911 = vmatpush1.bf16.msra.mxu0 0
      %912 = vmatprep.subr.bf16.mxu0 0
      %913 = vmatpush1.bf16.msra.mxu0 0
      %914 = vmatprep.subr.bf16.mxu0 0
      %915 = vmatpush1.bf16.msra.mxu0 0
      %916 = vmatprep.subr.bf16.mxu0 0
      %917 = vmatpush1.bf16.msra.mxu0 0
      %918 = vmatprep.subr.bf16.mxu0 0
      %919 = vmatpush1.bf16.msra.mxu0 0
      %920 = vmatprep.subr.bf16.mxu0 0
      %921 = vmatpush1.bf16.msra.mxu0 0
      %922 = vmatprep.subr.bf16.mxu0 0
      %923 = vmatpush1.bf16.msra.mxu0 0
      %924 = vmatprep.subr.bf16.mxu0 0
      %925 = vmatpush1.bf16.msra.mxu0 0
      %926 = vmatprep.subr.bf16.mxu0 0
      %927 = vmatpush1.bf16.msra.mxu0 0
      %928 = vmatprep.subr.bf16.mxu0 0
      %929 = vmatpush1.bf16.msra.mxu0 0
      %930 = vmatprep.subr.bf16.mxu0 0
      %931 = vmatpush1.bf16.msra.mxu0 0
      %932 = vmatprep.subr.bf16.mxu0 0
      %933 = vmatpush1.bf16.msra.mxu0 0
      %934 = vmatprep.subr.bf16.mxu0 0
      %935 = vmatpush1.bf16.msra.mxu0 0
      %936 = vmatprep.subr.bf16.mxu0 0
      %937 = vmatpush1.bf16.msra.mxu0 0
      %938 = vmatprep.mubr.bf16.mxu0 0
      %939 = vmatmul.mubr.bf16.gmra.mrb[0].mxu0 %v883
      %v940 = vpop.f32.mrb[0].mxu0
      %v941 = vadd.f32 %v868, %v940
      %v942 = vpop.f32.mrb[0].mxu0
      %v943 = vpop.f32.mrb[0].mxu0
      %v944 = vadd.f32 %v868, %v943
      %v945 = vpop.f32.mrb[0].mxu0
      %946 = vmatprep.mubr.bf16.mxu0 0
      %947 = vmatmul.mubr.bf16.gmra.mrb[0].mxu0 %v886
      %v948 = vpop.f32.mrb[0].mxu0
      %v949 = vadd.f32 %v868, %v948
      %v950 = vpop.f32.mrb[0].mxu0
      %v951 = vpop.f32.mrb[0].mxu0
      %v952 = vadd.f32 %v868, %v951
      %v953 = vpop.f32.mrb[0].mxu0
      %954 = vmatprep.mubr.bf16.mxu0 0
      %955 = vmatmul.mubr.bf16.gmra.mrb[0].mxu0 %v889
      %v956 = vpop.f32.mrb[0].mxu0
      %v957 = vadd.f32 %v868, %v956
      %v958 = vpop.f32.mrb[0].mxu0
      %v959 = vpop.f32.mrb[0].mxu0
      %v960 = vadd.f32 %v868, %v959
      %v961 = vpop.f32.mrb[0].mxu0
      %962 = vmatprep.mubr.bf16.mxu0 0
      %963 = vmatmul.mubr.bf16.gmra.mrb[0].mxu0 %v892
      %v964 = vpop.f32.mrb[0].mxu0
      %v965 = vadd.f32 %v868, %v964
      %v966 = vpop.f32.mrb[0].mxu0
      %v967 = vpop.f32.mrb[0].mxu0
      %v968 = vadd.f32 %v868, %v967
      %v969 = vpop.f32.mrb[0].mxu0
      %970 = vmatprep.mubr.bf16.mxu0 0
      %971 = vmatmul.mubr.bf16.gmra.mrb[0].mxu0 %v895
      %v972 = vpop.f32.mrb[0].mxu0
      %v973 = vadd.f32 %v868, %v972
      %v974 = vpop.f32.mrb[0].mxu0
      %v975 = vpop.f32.mrb[0].mxu0
      %v976 = vadd.f32 %v868, %v975
      %v977 = vpop.f32.mrb[0].mxu0
      %978 = vmatprep.mubr.bf16.mxu0 0
      %979 = vmatmul.mubr.bf16.gmra.mrb[0].mxu0 %v898
      %v980 = vpop.f32.mrb[0].mxu0
      %v981 = vadd.f32 %v868, %v980
      %v982 = vpop.f32.mrb[0].mxu0
      %v983 = vpop.f32.mrb[0].mxu0
      %v984 = vadd.f32 %v868, %v983
      %v985 = vpop.f32.mrb[0].mxu0
      %986 = vmatprep.mubr.bf16.mxu0 0
      %987 = vmatmul.mubr.bf16.gmra.mrb[0].mxu0 %v901
      %v988 = vpop.f32.mrb[0].mxu0
      %v989 = vadd.f32 %v868, %v988
      %v990 = vpop.f32.mrb[0].mxu0
      %v991 = vpop.f32.mrb[0].mxu0
      %v992 = vadd.f32 %v868, %v991
      %v993 = vpop.f32.mrb[0].mxu0
      %994 = vmatprep.mubr.bf16.mxu0 0
      %995 = vmatmul.mubr.bf16.gmra.mrb[0].mxu0 %v904
      %v996 = vpop.f32.mrb[0].mxu0
      %v997 = vadd.f32 %v868, %v996
      %v998 = vpop.f32.mrb[0].mxu0
      %v999 = vpop.f32.mrb[0].mxu0
      %v1000 = vadd.f32 %v868, %v999
      %v1001 = vpop.f32.mrb[0].mxu0
      %1002 = vdwg.mxu0
      %v1003 = vadd.f32 %v283, %v941
      %v1004 = vadd.f32 %v284, %v944
      %v1005 = vadd.f32 %v285, %v949
      %v1006 = vadd.f32 %v286, %v952
      %v1007 = vadd.f32 %v287, %v957
      %v1008 = vadd.f32 %v288, %v960
      %v1009 = vadd.f32 %v289, %v965
      %v1010 = vadd.f32 %v290, %v968
      %v1011 = vadd.f32 %v291, %v973
      %v1012 = vadd.f32 %v292, %v976
      %v1013 = vadd.f32 %v293, %v981
      %v1014 = vadd.f32 %v294, %v984
      %v1015 = vadd.f32 %v295, %v989
      %v1016 = vadd.f32 %v296, %v992
      %v1017 = vadd.f32 %v297, %v997
      %v1018 = vadd.f32 %v298, %v1000
      %1019 = vst.msk [vmem:[%s280] sm:$0xff] %vm299, %v1003
      %1020 = vst.msk [vmem:[%s280 + $0x8] sm:$0xff] %vm299, %v1004
      %1021 = vst.msk [vmem:[%s280 + $0x10] sm:$0xff] %vm299, %v1005
      %1022 = vst.msk [vmem:[%s280 + $0x18] sm:$0xff] %vm299, %v1006
      %1023 = vst.msk [vmem:[%s280 + $0x20] sm:$0xff] %vm299, %v1007
      %1024 = vst.msk [vmem:[%s280 + $0x28] sm:$0xff] %vm299, %v1008
      %1025 = vst.msk [vmem:[%s280 + $0x30] sm:$0xff] %vm299, %v1009
      %1026 = vst.msk [vmem:[%s280 + $0x38] sm:$0xff] %vm299, %v1010
      %1027 = vst.msk [vmem:[%s280 + $0x40] sm:$0xff] %vm299, %v1011
      %1028 = vst.msk [vmem:[%s280 + $0x48] sm:$0xff] %vm299, %v1012
      %1029 = vst.msk [vmem:[%s280 + $0x50] sm:$0xff] %vm299, %v1013
      %1030 = vst.msk [vmem:[%s280 + $0x58] sm:$0xff] %vm299, %v1014
      %1031 = vst.msk [vmem:[%s280 + $0x60] sm:$0xff] %vm299, %v1015
      %1032 = vst.msk [vmem:[%s280 + $0x68] sm:$0xff] %vm299, %v1016
      %1033 = vst.msk [vmem:[%s280 + $0x70] sm:$0xff] %vm299, %v1017
      %1034 = vst.msk [vmem:[%s280 + $0x78] sm:$0xff] %vm299, %v1018
      %s1035 = smul.u32 16, %s18
      %p1036 = scmp.lt.s32.totalorder %s1035, 31
      %s1037 = scalar_select %p1036, %s1035, 31
      %s1038 = smul.addr %s1037, 8
      %s1039 = scalar_lea.vmem %s7, %s1038
      // Predicated region
      $region49: #{forward.13} parent=47 // pred_check
        %p1040 = pneg %p188
      $region50: #{forward.13} parent=47 // pred_check_branch
        %1042 = sbr.rel (%p1040) target = $region52
      $region51: #{forward.13} parent=47 // pred_region
        %s1043 = smul.u32 16, %s18
      $region52: #{forward.13} parent=47 // pred_fallthru
        _
    $region48: #{forward.13} parent=5 // pred_fallthru
      _
    %p1044 = scmp.le.s32.totalorder 2, %s13
    // Predicated region
    $region53: #{forward.13} parent=5 // pred_check
      %p1045 = pneg %p1044
    $region54: #{forward.13} parent=5 // pred_check_branch
      %1047 = sbr.rel (%p1045) target = $region56
    $region55: #{forward.13} parent=5 // pred_region
      %s1048 = ssub.s32 %s13, 2
      // Predicated region
      $region57: #{forward.13} parent=55 // pred_check
        %p1049 = pneg %p194
      $region58: #{forward.13} parent=55 // pred_check_branch
        %1051 = sbr.rel (%p1049) target = $region60
      $region59: #{forward.13} parent=55 // pred_region
        %s1052 = smul.u32 16, %s19
        %p1053 = scmp.lt.s32.totalorder %s1052, 31
        %s1054 = scalar_select %p1053, %s1052, 31
        %s1055 = smul.addr %s1054, 8
        %s1056 = scalar_lea.vmem %s7, %s1055
      $region60: #{forward.13} parent=55 // pred_fallthru
        _
    $region56: #{forward.13} parent=5 // pred_fallthru
      _
  $region6: #{forward.13} parent=0 // loop_footer
    %s17 = sadd.s32 1, %s13
  $region7: #{forward.13} parent=0 // loop_footer_branch
    %12 = sbr.rel target = $region3
  $region8: #{forward.13} parent=0 // loop_exit
    _

// kernel: forward.17
$region0: #{forward.17}
  #allocation0 [shape = 'u32[]', space=smem, size = 0x4, offset = 0x4, fixed_abs, tag = 'smem constant byte address 0x4 - core index']
  #allocation1 [shape = 'u32[144,128]{1,0:T(1,128)}', space=vmem, size = 0x12000, scoped, tag = 'internal scratch']
  %s0 = inlined_call_operand.vmem [shape: f32[2,32], index: 0, kind: input, shape index: {}]
  %s1 = inlined_call_operand.vmem [shape: f32[1,32], index: 1, kind: input, shape index: {}]
  %s2 = inlined_call_operand.vmem [shape: f32[1,32], index: 2, kind: input, shape index: {}]
  %s3 = inlined_call_operand.vmem [shape: f32[1,32], index: 3, kind: input, shape index: {}]
  %s4 = inlined_call_operand.vmem [shape: f32[1,32], index: 4, kind: input, shape index: {}]
  %s5 = inlined_call_operand.hbm [shape: f32[2,32], index: 5, kind: output, shape index: {}]
  %s6 = sld [smem:[#allocation0]]
  $region30: #{forward.17} parent=0
    _
  %s8 = ssub.s32 1, %s6
  %s9 = scalar_select 0, %s8, %s6
  $region1: #{forward.17} parent=0
    #allocation2 [shape = 'u8[1024]{0}', space=vmem, size = 0x400, scoped, tag = 'output window, operand 0, single buffered']
    #allocation3 [shape = 's32[1]{0}', space=sflag, size = 0x4, scoped, tag = 'scoped memory for forward.17']
    %10 = vsyncpa [#allocation3], 0
    // Predicated region
    $region2: #{forward.17} parent=1 // pred_check
      _
    $region3: #{forward.17} parent=1 // pred_check_branch
      %12 = sbr.rel (0) target = $region5
    $region4: #{forward.17} parent=1 // pred_region
      _
    $region5: #{forward.17} parent=1 // pred_fallthru
      _
    // Predicated region
    $region6: #{forward.17} parent=1 // pred_check
      _
    $region7: #{forward.17} parent=1 // pred_check_branch
      %14 = sbr.rel (0) target = $region9
    $region8: #{forward.17} parent=1 // pred_region
      _
    $region9: #{forward.17} parent=1 // pred_fallthru
      _
    // Predicated region
    $region10: #{forward.17} parent=1 // pred_check
      _
    $region11: #{forward.17} parent=1 // pred_check_branch
      %16 = sbr.rel (0) target = $region13
    $region12: #{forward.17} parent=1 // pred_region
      _
    $region13: #{forward.17} parent=1 // pred_fallthru
      _
    // Predicated region
    $region14: #{forward.17} parent=1 // pred_check
      _
    $region15: #{forward.17} parent=1 // pred_check_branch
      %18 = sbr.rel (0) target = $region17
    $region16: #{forward.17} parent=1 // pred_region
      _
    $region17: #{forward.17} parent=1 // pred_fallthru
      _
    // Predicated region
    $region18: #{forward.17} parent=1 // pred_check
      _
    $region19: #{forward.17} parent=1 // pred_check_branch
      %20 = sbr.rel (0) target = $region21
    $region20: #{forward.17} parent=1 // pred_region
      _
    $region21: #{forward.17} parent=1 // pred_fallthru
      _
    %v21 = vld [vmem:[%s0] sm:$0x3]
    %vm22 = vcmask 254976
    %v23 = vsel %vm22, %v21, 0.0
    %24 = vadd.xlane.f32.xlu0 %v23
    %v25 = vpop.xlane.xlu0 %24
    %v26 = vrcp.pop 32.0
    %v27 = vmul.f32 %v25, %v26
    %v28 = vsub.f32 %v21, %v27
    %v29 = vmul.f32 %v28, %v28
    %v30 = vsel %vm22, %v29, 0.0
    %31 = vadd.xlane.f32.xlu0 %v30
    %v32 = vpop.xlane.xlu0 %31
    %v33 = vmul.f32 %v32, %v26
    %v34 = vadd.f32 %v33, 1e-06
    %v35 = vrsqrt.pop %v34
    %v36 = vmul.f32 %v28, %v35
    %v37 = vld [vmem:[%s1] sm:$0x1]
    %v39 = vlaneseq
    %v40 = vshrl.u32 %v39, 7
    %v41 = vsub.s32 0, %v40
    %v42 = vrot.slane %v37, %v41
    %v44 = vmul.f32 %v36, %v42
    %v45 = vld [vmem:[%s2] sm:$0x1]
    %v47 = vlaneseq
    %v48 = vshrl.u32 %v47, 7
    %v49 = vsub.s32 0, %v48
    %v50 = vrot.slane %v45, %v49
    %v52 = vadd.f32 %v44, %v50
    %v53 = vld [vmem:[%s3] sm:$0x1]
    %v55 = vlaneseq
    %v56 = vshrl.u32 %v55, 7
    %v57 = vsub.s32 0, %v56
    %v58 = vrot.slane %v53, %v57
    %v60 = vmul.f32 %v52, %v58
    %v61 = vld [vmem:[%s4] sm:$0x1]
    %v63 = vlaneseq
    %v64 = vshrl.u32 %v63, 7
    %v65 = vsub.s32 0, %v64
    %v66 = vrot.slane %v61, %v65
    %v68 = vadd.f32 %v60, %v66
    %69 = vst.msk [vmem:[#allocation2] sm:$0x3] %vm22, %v68
    // Predicated region
    $region22: #{forward.17} parent=1 // pred_check
      _
    $region23: #{forward.17} parent=1 // pred_check_branch
      %71 = sbr.rel (0) target = $region25
    $region24: #{forward.17} parent=1 // pred_region
      %s73 = ssub.s32 32, 32
      %74 = vsyncadd [#allocation3], %s73
      %s76 = sshll.u32 [#allocation2], 4
      %s77 = int_to_ptr.vmem [resolvable:$true] %s76
      %79 = dma.vmem_to_hbm [thread:$0]  %s77, 32, %s5, [#allocation3]
    $region25: #{forward.17} parent=1 // pred_fallthru
      _
    // Predicated region
    $region26: #{forward.17} parent=1 // pred_check
      _
    $region27: #{forward.17} parent=1 // pred_check_branch
      %81 = sbr.rel (0) target = $region29
    $region28: #{forward.17} parent=1 // pred_region
      %82 = dma.done [#allocation3], 32
    $region29: #{forward.17} parent=1 // pred_fallthru
      _
    %83 = vsyncpa [#allocation3], 1

// kernel: forward.12
$region0: #{forward.12}
  #allocation0 [shape = 'u32[]', space=smem, size = 0x4, offset = 0x4, fixed_abs, tag = 'smem constant byte address 0x4 - core index']
  #allocation1 [shape = 'u32[144,128]{1,0:T(1,128)}', space=vmem, size = 0x12000, scoped, tag = 'internal scratch']
  %s0 = inlined_call_operand.vmem [shape: bf16[256,96], index: 0, kind: input, shape index: {}]
  %s1 = inlined_call_operand.vmem [shape: f32[256,32], index: 1, kind: input, shape index: {}]
  %s2 = inlined_call_operand.vmem [shape: bf16[32,32], index: 2, kind: input, shape index: {}]
  %s3 = inlined_call_operand.vmem [shape: f32[1,32], index: 3, kind: input, shape index: {}]
  %s4 = inlined_call_operand.vmem [shape: f32[256,32], index: 4, kind: output, shape index: {}]
  %s5 = sld [smem:[#allocation0]]
  $region49: #{forward.12} parent=0
    _
  %s7 = ssub.s32 1, %s5
  %s8 = scalar_select 0, %s7, %s5
  loop: start=0, step=1, limit=4
  $region2: #{forward.12} parent=0 // loop_pre_header
    _
  $region3: #{forward.12} parent=0 // loop_header
    %s10 = sphi 0, %s14
    %p11 = scmp.ge.s32.totalorder %s10, 4
    %s20 = sphi 0, %s22
    %s23 = sphi 0, %s20
    %s24 = sphi 0, %s23
    %s40 = sphi 0, %s24
    %s46 = sphi 0, %s48
    %s49 = sphi 0, %s46
    %s50 = sphi 0, %s49
    %s66 = sphi 0, %s50
    %s70 = sphi 0, %s70
    %s72 = sphi 0, %s70
    %s73 = sphi 0, %s72
    %s87 = sphi 0, %s73
    %s91 = sphi 0, %s91
    %s93 = sphi 0, %s91
    %s94 = sphi 0, %s93
    %s108 = sphi 0, %s94
    %s114 = sphi 0, %s116
    %s117 = sphi 0, %s114
    %s118 = sphi 0, %s117
    %s134 = sphi 0, %s118
  $region4: #{forward.12} parent=0 // loop_header_branch
    %13 = sbr.rel (%p11) target = $region8
  $region5: #{forward.12} parent=0 // loop_body
    %s15 = ssub.s32 %s10, 1
    %s16 = ssub.s32 %s10, 2
    %s17 = sadd.s32 %s10, 1
    %s18 = ssub.s32 %s10, %s17
    %p19 = scmp.eq.s32.totalorder %s18, 0
    %s21 = sadd.s32 %s20, 1
    %s22 = scalar_select %p19, %s20, %s21
    %p25 = pneg %p19
    %p26 = scmp.eq.s32.totalorder %s10, 1
    %p27 = por %p25, %p26
    %p28 = scmp.ne.s32.totalorder %s20, %s23
    %p29 = scmp.eq.s32.totalorder %s10, 0
    %p30 = por %p28, %p29
    %p31 = scmp.ne.s32.totalorder %s20, %s23
    %p32 = scmp.eq.s32.totalorder %s15, 1
    %p33 = por %p31, %p32
    %p34 = scmp.ne.s32.totalorder %s23, %s24
    %p35 = scmp.eq.s32.totalorder %s15, 0
    %p36 = por %p34, %p35
    %p37 = scmp.ne.s32.totalorder %s23, %s24
    %p38 = scmp.eq.s32.totalorder %s16, 1
    %p39 = por %p37, %p38
    %p41 = scmp.ne.s32.totalorder %s24, %s40
    %p42 = scmp.eq.s32.totalorder %s16, 0
    %p43 = por %p41, %p42
    %s44 = ssub.s32 %s10, %s17
    %p45 = scmp.eq.s32.totalorder %s44, 0
    %s47 = sadd.s32 %s46, 1
    %s48 = scalar_select %p45, %s46, %s47
    %p51 = pneg %p45
    %p52 = scmp.eq.s32.totalorder %s10, 1
    %p53 = por %p51, %p52
    %p54 = scmp.ne.s32.totalorder %s46, %s49
    %p55 = scmp.eq.s32.totalorder %s10, 0
    %p56 = por %p54, %p55
    %p57 = scmp.ne.s32.totalorder %s46, %s49
    %p58 = scmp.eq.s32.totalorder %s15, 1
    %p59 = por %p57, %p58
    %p60 = scmp.ne.s32.totalorder %s49, %s50
    %p61 = scmp.eq.s32.totalorder %s15, 0
    %p62 = por %p60, %p61
    %p63 = scmp.ne.s32.totalorder %s49, %s50
    %p64 = scmp.eq.s32.totalorder %s16, 1
    %p65 = por %p63, %p64
    %p67 = scmp.ne.s32.totalorder %s50, %s66
    %p68 = scmp.eq.s32.totalorder %s16, 0
    %p69 = por %p67, %p68
    %s71 = sadd.s32 %s70, 1
    %p74 = scmp.eq.s32.totalorder %s10, 1
    %p75 = scmp.ne.s32.totalorder %s70, %s72
    %p76 = scmp.eq.s32.totalorder %s10, 0
    %p77 = por %p75, %p76
    %p78 = scmp.ne.s32.totalorder %s70, %s72
    %p79 = scmp.eq.s32.totalorder %s15, 1
    %p80 = por %p78, %p79
    %p81 = scmp.ne.s32.totalorder %s72, %s73
    %p82 = scmp.eq.s32.totalorder %s15, 0
    %p83 = por %p81, %p82
    %p84 = scmp.ne.s32.totalorder %s72, %s73
    %p85 = scmp.eq.s32.totalorder %s16, 1
    %p86 = por %p84, %p85
    %p88 = scmp.ne.s32.totalorder %s73, %s87
    %p89 = scmp.eq.s32.totalorder %s16, 0
    %p90 = por %p88, %p89
    %s92 = sadd.s32 %s91, 1
    %p95 = scmp.eq.s32.totalorder %s10, 1
    %p96 = scmp.ne.s32.totalorder %s91, %s93
    %p97 = scmp.eq.s32.totalorder %s10, 0
    %p98 = por %p96, %p97
    %p99 = scmp.ne.s32.totalorder %s91, %s93
    %p100 = scmp.eq.s32.totalorder %s15, 1
    %p101 = por %p99, %p100
    %p102 = scmp.ne.s32.totalorder %s93, %s94
    %p103 = scmp.eq.s32.totalorder %s15, 0
    %p104 = por %p102, %p103
    %p105 = scmp.ne.s32.totalorder %s93, %s94
    %p106 = scmp.eq.s32.totalorder %s16, 1
    %p107 = por %p105, %p106
    %p109 = scmp.ne.s32.totalorder %s94, %s108
    %p110 = scmp.eq.s32.totalorder %s16, 0
    %p111 = por %p109, %p110
    %s112 = ssub.s32 %s10, %s17
    %p113 = scmp.eq.s32.totalorder %s112, 0
    %s115 = sadd.s32 %s114, 1
    %s116 = scalar_select %p113, %s114, %s115
    %p119 = pneg %p113
    %p120 = scmp.eq.s32.totalorder %s10, 1
    %p121 = por %p119, %p120
    %p122 = scmp.ne.s32.totalorder %s114, %s117
    %p123 = scmp.eq.s32.totalorder %s10, 0
    %p124 = por %p122, %p123
    %p125 = scmp.ne.s32.totalorder %s114, %s117
    %p126 = scmp.eq.s32.totalorder %s15, 1
    %p127 = por %p125, %p126
    %p128 = scmp.ne.s32.totalorder %s117, %s118
    %p129 = scmp.eq.s32.totalorder %s15, 0
    %p130 = por %p128, %p129
    %p131 = scmp.ne.s32.totalorder %s117, %s118
    %p132 = scmp.eq.s32.totalorder %s16, 1
    %p133 = por %p131, %p132
    %p135 = scmp.ne.s32.totalorder %s118, %s134
    %p136 = scmp.eq.s32.totalorder %s16, 0
    %p137 = por %p135, %p136
    %p138 = scmp.le.s32.totalorder 1, %s10
    %p139 = scmp.lt.s32.totalorder %s10, 3
    %p140 = pnand %p138, %p139
    %p141 = pneg %p140
    // Predicated region
    $region9: #{forward.12} parent=5 // pred_check
      _
    $region10: #{forward.12} parent=5 // pred_check_branch
      %143 = sbr.rel (%p140) target = $region12
    $region11: #{forward.12} parent=5 // pred_region
      %s144 = ssub.s32 %s10, 1
      // Predicated region
      $region13: #{forward.12} parent=11 // pred_check
        %p145 = pneg %p83
      $region14: #{forward.12} parent=11 // pred_check_branch
        %147 = sbr.rel (%p145) target = $region16
      $region15: #{forward.12} parent=11 // pred_region
        _
      $region16: #{forward.12} parent=11 // pred_fallthru
        _
      // Predicated region
      $region17: #{forward.12} parent=11 // pred_check
        %p148 = pneg %p104
      $region18: #{forward.12} parent=11 // pred_check_branch
        %150 = sbr.rel (%p148) target = $region20
      $region19: #{forward.12} parent=11 // pred_region
        _
      $region20: #{forward.12} parent=11 // pred_fallthru
        _
    $region12: #{forward.12} parent=5 // pred_fallthru
      _
    %p151 = scmp.lt.s32.totalorder %s10, 2
    // Predicated region
    $region21: #{forward.12} parent=5 // pred_check
      %p152 = pneg %p151
    $region22: #{forward.12} parent=5 // pred_check_branch
      %154 = sbr.rel (%p152) target = $region24
    $region23: #{forward.12} parent=5 // pred_region
      // Predicated region
      $region25: #{forward.12} parent=23 // pred_check
        %p155 = pneg %p30
      $region26: #{forward.12} parent=23 // pred_check_branch
        %157 = sbr.rel (%p155) target = $region28
      $region27: #{forward.12} parent=23 // pred_region
        %s158 = smul.u32 16, %s10
        %p159 = scmp.lt.s32.totalorder %s158, 31
        %s160 = scalar_select %p159, %s158, 31
        %s161 = smul.addr %s160, 4
        %s162 = scalar_lea.vmem %s0, %s161
        %s163 = smul.u32 16, %s10
      $region28: #{forward.12} parent=23 // pred_fallthru
        _
      // Predicated region
      $region29: #{forward.12} parent=23 // pred_check
        %p164 = pneg %p56
      $region30: #{forward.12} parent=23 // pred_check_branch
        %166 = sbr.rel (%p164) target = $region32
      $region31: #{forward.12} parent=23 // pred_region
        %s167 = smul.u32 16, %s10
        %p168 = scmp.lt.s32.totalorder %s167, 31
        %s169 = scalar_select %p168, %s167, 31
        %s170 = smul.addr %s169, 8
        %s171 = scalar_lea.vmem %s1, %s170
        %s172 = smul.u32 16, %s10
      $region32: #{forward.12} parent=23 // pred_fallthru
        _
    $region24: #{forward.12} parent=5 // pred_fallthru
      _
    %p173 = scmp.le.s32.totalorder 1, %s10
    %p174 = scmp.lt.s32.totalorder %s10, 3
    %p175 = pnand %p173, %p174
    %p176 = pneg %p175
    // Predicated region
    $region33: #{forward.12} parent=5 // pred_check
      _
    $region34: #{forward.12} parent=5 // pred_check_branch
      %178 = sbr.rel (%p175) target = $region36
    $region35: #{forward.12} parent=5 // pred_region
      %s179 = ssub.s32 %s10, 1
      %s180 = smul.u32 16, %s15
      %p181 = scmp.lt.s32.totalorder %s180, 31
      %s182 = scalar_select %p181, %s180, 31
      %s183 = smul.addr %s182, 4
      %s184 = scalar_lea.vmem %s0, %s183
      %p185 = pneg %p36
      %p186 = pneg %p33
      %s187 = smul.u32 16, %s15
      %p188 = scmp.lt.s32.totalorder %s187, 31
      %s189 = scalar_select %p188, %s187, 31
      %s190 = smul.addr %s189, 8
      %s191 = scalar_lea.vmem %s1, %s190
      %p192 = pneg %p62
      %p193 = pneg %p59
      %p194 = pneg %p83
      %p195 = pneg %p80
      %p196 = pneg %p104
      %p197 = pneg %p101
      %p198 = pneg %p130
      %p199 = pneg %p127
      %s200 = smul.u32 16, %s15
      %p201 = scmp.lt.s32.totalorder %s200, 31
      %s202 = scalar_select %p201, %s200, 31
      %s203 = smul.addr %s202, 8
      %s204 = scalar_lea.vmem %s4, %s203
      %s205 = smul.u32 16, %s15
      %p206 = scmp.lt.s32.totalorder %s205, 31
      %s207 = scalar_select %p206, %s205, 31
      %s208 = smul.addr %s207, 4
      %s209 = scalar_lea.vmem %s0, %s208
      %s210 = smul.u32 16, %s15
      %s211 = smul.u32 16, %s15
      %p212 = scmp.lt.s32.totalorder %s211, 31
      %s213 = scalar_select %p212, %s211, 31
      %s214 = smul.addr %s213, 8
      %s215 = scalar_lea.vmem %s1, %s214
      %s216 = smul.u32 16, %s15
      %s217 = smul.u32 16, %s15
      %p218 = scmp.lt.s32.totalorder %s217, 31
      %s219 = scalar_select %p218, %s217, 31
      %s220 = smul.addr %s219, 8
      %s221 = scalar_lea.vmem %s4, %s220
      %s222 = smul.u32 16, %s15
      %v224 = vld [vmem:[%s215] sm:$0xff]
      %v225 = vld [vmem:[%s215 + $0x8] sm:$0xff]
      %v226 = vld [vmem:[%s215 + $0x10] sm:$0xff]
      %v227 = vld [vmem:[%s215 + $0x18] sm:$0xff]
      %v228 = vld [vmem:[%s215 + $0x20] sm:$0xff]
      %v229 = vld [vmem:[%s215 + $0x28] sm:$0xff]
      %v230 = vld [vmem:[%s215 + $0x30] sm:$0xff]
      %v231 = vld [vmem:[%s215 + $0x38] sm:$0xff]
      %v232 = vld [vmem:[%s215 + $0x40] sm:$0xff]
      %v233 = vld [vmem:[%s215 + $0x48] sm:$0xff]
      %v234 = vld [vmem:[%s215 + $0x50] sm:$0xff]
      %v235 = vld [vmem:[%s215 + $0x58] sm:$0xff]
      %v236 = vld [vmem:[%s215 + $0x60] sm:$0xff]
      %v237 = vld [vmem:[%s215 + $0x68] sm:$0xff]
      %v238 = vld [vmem:[%s215 + $0x70] sm:$0xff]
      %v239 = vld [vmem:[%s215 + $0x78] sm:$0xff]
      %v240 = vlaneseq
      %v241 = vand.u32 %v240, 127
      %vm242 = vcmp.lt.s32.totalorder %v241, 65
      %v243 = vld [vmem:[%s3] sm:$0x1]
      %v245 = vlaneseq
      %v246 = vshrl.u32 %v245, 7
      %v247 = vsub.s32 0, %v246
      %v248 = vrot.slane %v243, %v247
      %v250 = vadd.f32 %v224, %v248
      %v251 = vadd.f32 %v225, %v248
      %v252 = vadd.f32 %v226, %v248
      %v253 = vadd.f32 %v227, %v248
      %v254 = vadd.f32 %v228, %v248
      %v255 = vadd.f32 %v229, %v248
      %v256 = vadd.f32 %v230, %v248
      %v257 = vadd.f32 %v231, %v248
      %v258 = vadd.f32 %v232, %v248
      %v259 = vadd.f32 %v233, %v248
      %v260 = vadd.f32 %v234, %v248
      %v261 = vadd.f32 %v235, %v248
      %v262 = vadd.f32 %v236, %v248
      %v263 = vadd.f32 %v237, %v248
      %v264 = vadd.f32 %v238, %v248
      %v265 = vadd.f32 %v239, %v248
      %v266 = vld [vmem:[%s209] sm:$0xf]
      %v267 = vld [vmem:[%s209 + $0x4] sm:$0xf]
      %v268 = vld [vmem:[%s209 + $0x8] sm:$0xf]
      %v269 = vld [vmem:[%s209 + $0xc] sm:$0xf]
      %v270 = vld [vmem:[%s209 + $0x10] sm:$0xf]
      %v271 = vld [vmem:[%s209 + $0x14] sm:$0xf]
      %v272 = vld [vmem:[%s209 + $0x18] sm:$0xf]
      %v273 = vld [vmem:[%s209 + $0x1c] sm:$0xf]
      %v274 = vld [vmem:[%s209 + $0x20] sm:$0xf]
      %v275 = vld [vmem:[%s209 + $0x24] sm:$0xf]
      %v276 = vld [vmem:[%s209 + $0x28] sm:$0xf]
      %v277 = vld [vmem:[%s209 + $0x2c] sm:$0xf]
      %v278 = vld [vmem:[%s209 + $0x30] sm:$0xf]
      %v279 = vld [vmem:[%s209 + $0x34] sm:$0xf]
      %v280 = vld [vmem:[%s209 + $0x38] sm:$0xf]
      %v281 = vld [vmem:[%s209 + $0x3c] sm:$0xf]
      %v298 = vunpack.c.l.b16 %v266
      %v299 = vunpack.c.l.b16 %v267
      %v300 = vunpack.c.l.b16 %v268
      %v301 = vunpack.c.l.b16 %v269
      %v302 = vunpack.c.l.b16 %v270
      %v303 = vunpack.c.l.b16 %v271
      %v304 = vunpack.c.l.b16 %v272
      %v305 = vunpack.c.l.b16 %v273
      %v306 = vunpack.c.l.b16 %v274
      %v307 = vunpack.c.l.b16 %v275
      %v308 = vunpack.c.l.b16 %v276
      %v309 = vunpack.c.l.b16 %v277
      %v310 = vunpack.c.l.b16 %v278
      %v311 = vunpack.c.l.b16 %v279
      %v312 = vunpack.c.l.b16 %v280
      %v313 = vunpack.c.l.b16 %v281
      %v314 = vpack.c.b16 %v299, %v298
      %v315 = vpack.c.b16 %v301, %v300
      %v316 = vpack.c.b16 %v303, %v302
      %v317 = vpack.c.b16 %v305, %v304
      %v318 = vpack.c.b16 %v307, %v306
      %v319 = vpack.c.b16 %v309, %v308
      %v320 = vpack.c.b16 %v311, %v310
      %v321 = vpack.c.b16 %v313, %v312
      %322 = vrot.lane.b32.xlu0 %v314, 96
      %v323 = vpop.permute.xlu0 %322
      %324 = vrot.lane.b32.xlu0 %v315, 96
      %v325 = vpop.permute.xlu0 %324
      %326 = vrot.lane.b32.xlu0 %v316, 96
      %v327 = vpop.permute.xlu0 %326
      %328 = vrot.lane.b32.xlu0 %v317, 96
      %v329 = vpop.permute.xlu0 %328
      %330 = vrot.lane.b32.xlu0 %v318, 96
      %v331 = vpop.permute.xlu0 %330
      %332 = vrot.lane.b32.xlu0 %v319, 96
      %v333 = vpop.permute.xlu0 %332
      %334 = vrot.lane.b32.xlu0 %v320, 96
      %v335 = vpop.permute.xlu0 %334
      %336 = vrot.lane.b32.xlu0 %v321, 96
      %v337 = vpop.permute.xlu0 %336
      %vm338 = vcmask 64512
      %v340 = vsel %vm338, %v314, 0
      %v343 = vsel %vm338, %v315, 0
      %v346 = vsel %vm338, %v316, 0
      %v349 = vsel %vm338, %v317, 0
      %v352 = vsel %vm338, %v318, 0
      %v355 = vsel %vm338, %v319, 0
      %v358 = vsel %vm338, %v320, 0
      %v361 = vsel %vm338, %v321, 0
      %v364 = vsel %vm338, %v323, 0
      %v367 = vsel %vm338, %v325, 0
      %v370 = vsel %vm338, %v327, 0
      %v373 = vsel %vm338, %v329, 0
      %v376 = vsel %vm338, %v331, 0
      %v379 = vsel %vm338, %v333, 0
      %v382 = vsel %vm338, %v335, 0
      %v385 = vsel %vm338, %v337, 0
      %387 = vmatprep.subr.bf16.mxu0 0
      %388 = vmatpush1.bf16.xpose.msra.mxu0 %v364
      %389 = vmatprep.subr.bf16.mxu0 0
      %390 = vmatpush1.bf16.xpose.msra.mxu0 %v367
      %391 = vmatprep.subr.bf16.mxu0 0
      %392 = vmatpush1.bf16.xpose.msra.mxu0 %v370
      %393 = vmatprep.subr.bf16.mxu0 0
      %394 = vmatpush1.bf16.xpose.msra.mxu0 %v373
      %395 = vmatprep.subr.bf16.mxu0 0
      %396 = vmatpush1.bf16.xpose.msra.mxu0 %v376
      %397 = vmatprep.subr.bf16.mxu0 0
      %398 = vmatpush1.bf16.xpose.msra.mxu0 %v379
      %399 = vmatprep.subr.bf16.mxu0 0
      %400 = vmatpush1.bf16.xpose.msra.mxu0 %v382
      %401 = vmatprep.subr.bf16.mxu0 0
      %402 = vmatpush1.bf16.xpose.msra.mxu0 %v385
      %403 = vmatprep.subr.bf16.mxu0 0
      %404 = vmatpush1.bf16.xpose.msra.mxu0 0
      %405 = vmatprep.subr.bf16.mxu0 0
      %406 = vmatpush1.bf16.xpose.msra.mxu0 0
      %407 = vmatprep.subr.bf16.mxu0 0
      %408 = vmatpush1.bf16.xpose.msra.mxu0 0
      %409 = vmatprep.subr.bf16.mxu0 0
      %410 = vmatpush1.bf16.xpose.msra.mxu0 0
      %411 = vmatprep.subr.bf16.mxu0 0
      %412 = vmatpush1.bf16.xpose.msra.mxu0 0
      %413 = vmatprep.subr.bf16.mxu0 0
      %414 = vmatpush1.bf16.xpose.msra.mxu0 0
      %415 = vmatprep.subr.bf16.mxu0 0
      %416 = vmatpush1.bf16.xpose.msra.mxu0 0
      %417 = vmatprep.subr.bf16.mxu0 0
      %418 = vmatpush1.bf16.xpose.msra.mxu0 0
      %419 = vmatprep.mubr.bf16.mxu0 0
      %420 = vmatmul.mubr.bf16.gmra.mrb[0].mxu0 %v340
      %v421 = vpop.f32.mrb[0].mxu0
      %v422 = vadd.f32 0.0, %v421
      %v423 = vpop.f32.mrb[0].mxu0
      %v424 = vpop.f32.mrb[0].mxu0
      %v425 = vadd.f32 0.0, %v424
      %v426 = vpop.f32.mrb[0].mxu0
      %427 = vmatprep.mubr.bf16.mxu0 0
      %428 = vmatmul.mubr.bf16.gmra.mrb[0].mxu0 %v343
      %v429 = vpop.f32.mrb[0].mxu0
      %v430 = vadd.f32 0.0, %v429
      %v431 = vpop.f32.mrb[0].mxu0
      %v432 = vpop.f32.mrb[0].mxu0
      %v433 = vadd.f32 0.0, %v432
      %v434 = vpop.f32.mrb[0].mxu0
      %435 = vmatprep.mubr.bf16.mxu0 0
      %436 = vmatmul.mubr.bf16.gmra.mrb[0].mxu0 %v346
      %v437 = vpop.f32.mrb[0].mxu0
      %v438 = vadd.f32 0.0, %v437
      %v439 = vpop.f32.mrb[0].mxu0
      %v440 = vpop.f32.mrb[0].mxu0
      %v441 = vadd.f32 0.0, %v440
      %v442 = vpop.f32.mrb[0].mxu0
      %443 = vmatprep.mubr.bf16.mxu0 0
      %444 = vmatmul.mubr.bf16.gmra.mrb[0].mxu0 %v349
      %v445 = vpop.f32.mrb[0].mxu0
      %v446 = vadd.f32 0.0, %v445
      %v447 = vpop.f32.mrb[0].mxu0
      %v448 = vpop.f32.mrb[0].mxu0
      %v449 = vadd.f32 0.0, %v448
      %v450 = vpop.f32.mrb[0].mxu0
      %451 = vmatprep.mubr.bf16.mxu0 0
      %452 = vmatmul.mubr.bf16.gmra.mrb[0].mxu0 %v352
      %v453 = vpop.f32.mrb[0].mxu0
      %v454 = vadd.f32 0.0, %v453
      %v455 = vpop.f32.mrb[0].mxu0
      %v456 = vpop.f32.mrb[0].mxu0
      %v457 = vadd.f32 0.0, %v456
      %v458 = vpop.f32.mrb[0].mxu0
      %459 = vmatprep.mubr.bf16.mxu0 0
      %460 = vmatmul.mubr.bf16.gmra.mrb[0].mxu0 %v355
      %v461 = vpop.f32.mrb[0].mxu0
      %v462 = vadd.f32 0.0, %v461
      %v463 = vpop.f32.mrb[0].mxu0
      %v464 = vpop.f32.mrb[0].mxu0
      %v465 = vadd.f32 0.0, %v464
      %v466 = vpop.f32.mrb[0].mxu0
      %467 = vmatprep.mubr.bf16.mxu0 0
      %468 = vmatmul.mubr.bf16.gmra.mrb[0].mxu0 %v358
      %v469 = vpop.f32.mrb[0].mxu0
      %v470 = vadd.f32 0.0, %v469
      %v471 = vpop.f32.mrb[0].mxu0
      %v472 = vpop.f32.mrb[0].mxu0
      %v473 = vadd.f32 0.0, %v472
      %v474 = vpop.f32.mrb[0].mxu0
      %475 = vmatprep.mubr.bf16.mxu0 0
      %476 = vmatmul.mubr.bf16.gmra.mrb[0].mxu0 %v361
      %v477 = vpop.f32.mrb[0].mxu0
      %v478 = vadd.f32 0.0, %v477
      %v479 = vpop.f32.mrb[0].mxu0
      %v480 = vpop.f32.mrb[0].mxu0
      %v481 = vadd.f32 0.0, %v480
      %v482 = vpop.f32.mrb[0].mxu0
      %483 = vdwg.mxu0
      %v484 = vmul.f32 %v422, 0.35355338
      %v485 = vmul.f32 %v425, 0.35355338
      %v486 = vmul.f32 %v430, 0.35355338
      %v487 = vmul.f32 %v433, 0.35355338
      %v488 = vmul.f32 %v438, 0.35355338
      %v489 = vmul.f32 %v441, 0.35355338
      %v490 = vmul.f32 %v446, 0.35355338
      %v491 = vmul.f32 %v449, 0.35355338
      %v492 = vmul.f32 %v454, 0.35355338
      %v493 = vmul.f32 %v457, 0.35355338
      %v494 = vmul.f32 %v462, 0.35355338
      %v495 = vmul.f32 %v465, 0.35355338
      %v496 = vmul.f32 %v470, 0.35355338
      %v497 = vmul.f32 %v473, 0.35355338
      %v498 = vmul.f32 %v478, 0.35355338
      %v499 = vmul.f32 %v481, 0.35355338
      %v500 = vsel %vm242, %v484, -1e+30
      %v501 = vsel %vm242, %v485, -1e+30
      %v502 = vsel %vm242, %v486, -1e+30
      %v503 = vsel %vm242, %v487, -1e+30
      %v504 = vsel %vm242, %v488, -1e+30
      %v505 = vsel %vm242, %v489, -1e+30
      %v506 = vsel %vm242, %v490, -1e+30
      %v507 = vsel %vm242, %v491, -1e+30
      %v508 = vsel %vm242, %v492, -1e+30
      %v509 = vsel %vm242, %v493, -1e+30
      %v510 = vsel %vm242, %v494, -1e+30
      %v511 = vsel %vm242, %v495, -1e+30
      %v512 = vsel %vm242, %v496, -1e+30
      %v513 = vsel %vm242, %v497, -1e+30
      %v514 = vsel %vm242, %v498, -1e+30
      %v515 = vsel %vm242, %v499, -1e+30
      %516 = vmax.xlane.f32.xlu0 %v500
      %v517 = vpop.xlane.xlu0 %516
      %518 = vmax.xlane.f32.xlu0 %v501
      %v519 = vpop.xlane.xlu0 %518
      %520 = vmax.xlane.f32.xlu0 %v502
      %v521 = vpop.xlane.xlu0 %520
      %522 = vmax.xlane.f32.xlu0 %v503
      %v523 = vpop.xlane.xlu0 %522
      %524 = vmax.xlane.f32.xlu0 %v504
      %v525 = vpop.xlane.xlu0 %524
      %526 = vmax.xlane.f32.xlu0 %v505
      %v527 = vpop.xlane.xlu0 %526
      %528 = vmax.xlane.f32.xlu0 %v506
      %v529 = vpop.xlane.xlu0 %528
      %530 = vmax.xlane.f32.xlu0 %v507
      %v531 = vpop.xlane.xlu0 %530
      %532 = vmax.xlane.f32.xlu0 %v508
      %v533 = vpop.xlane.xlu0 %532
      %534 = vmax.xlane.f32.xlu0 %v509
      %v535 = vpop.xlane.xlu0 %534
      %536 = vmax.xlane.f32.xlu0 %v510
      %v537 = vpop.xlane.xlu0 %536
      %538 = vmax.xlane.f32.xlu0 %v511
      %v539 = vpop.xlane.xlu0 %538
      %540 = vmax.xlane.f32.xlu0 %v512
      %v541 = vpop.xlane.xlu0 %540
      %542 = vmax.xlane.f32.xlu0 %v513
      %v543 = vpop.xlane.xlu0 %542
      %544 = vmax.xlane.f32.xlu0 %v514
      %v545 = vpop.xlane.xlu0 %544
      %546 = vmax.xlane.f32.xlu0 %v515
      %v547 = vpop.xlane.xlu0 %546
      %v548 = vsub.f32 %v500, %v517
      %v549 = vsub.f32 %v501, %v519
      %v550 = vsub.f32 %v502, %v521
      %v551 = vsub.f32 %v503, %v523
      %v552 = vsub.f32 %v504, %v525
      %v553 = vsub.f32 %v505, %v527
      %v554 = vsub.f32 %v506, %v529
      %v555 = vsub.f32 %v507, %v531
      %v556 = vsub.f32 %v508, %v533
      %v557 = vsub.f32 %v509, %v535
      %v558 = vsub.f32 %v510, %v537
      %v559 = vsub.f32 %v511, %v539
      %v560 = vsub.f32 %v512, %v541
      %v561 = vsub.f32 %v513, %v543
      %v562 = vsub.f32 %v514, %v545
      %v563 = vsub.f32 %v515, %v547
      %v564 = vmul.f32 %v548, 1.442695
      %v565 = vpow.pop %v564
      %v566 = vmul.f32 %v549, 1.442695
      %v567 = vpow.pop %v566
      %v568 = vmul.f32 %v550, 1.442695
      %v569 = vpow.pop %v568
      %v570 = vmul.f32 %v551, 1.442695
      %v571 = vpow.pop %v570
      %v572 = vmul.f32 %v552, 1.442695
      %v573 = vpow.pop %v572
      %v574 = vmul.f32 %v553, 1.442695
      %v575 = vpow.pop %v574
      %v576 = vmul.f32 %v554, 1.442695
      %v577 = vpow.pop %v576
      %v578 = vmul.f32 %v555, 1.442695
      %v579 = vpow.pop %v578
      %v580 = vmul.f32 %v556, 1.442695
      %v581 = vpow.pop %v580
      %v582 = vmul.f32 %v557, 1.442695
      %v583 = vpow.pop %v582
      %v584 = vmul.f32 %v558, 1.442695
      %v585 = vpow.pop %v584
      %v586 = vmul.f32 %v559, 1.442695
      %v587 = vpow.pop %v586
      %v588 = vmul.f32 %v560, 1.442695
      %v589 = vpow.pop %v588
      %v590 = vmul.f32 %v561, 1.442695
      %v591 = vpow.pop %v590
      %v592 = vmul.f32 %v562, 1.442695
      %v593 = vpow.pop %v592
      %v594 = vmul.f32 %v563, 1.442695
      %v595 = vpow.pop %v594
      %596 = vadd.xlane.f32.xlu0 %v565
      %v597 = vpop.xlane.xlu0 %596
      %598 = vadd.xlane.f32.xlu0 %v567
      %v599 = vpop.xlane.xlu0 %598
      %600 = vadd.xlane.f32.xlu0 %v569
      %v601 = vpop.xlane.xlu0 %600
      %602 = vadd.xlane.f32.xlu0 %v571
      %v603 = vpop.xlane.xlu0 %602
      %604 = vadd.xlane.f32.xlu0 %v573
      %v605 = vpop.xlane.xlu0 %604
      %606 = vadd.xlane.f32.xlu0 %v575
      %v607 = vpop.xlane.xlu0 %606
      %608 = vadd.xlane.f32.xlu0 %v577
      %v609 = vpop.xlane.xlu0 %608
      %610 = vadd.xlane.f32.xlu0 %v579
      %v611 = vpop.xlane.xlu0 %610
      %612 = vadd.xlane.f32.xlu0 %v581
      %v613 = vpop.xlane.xlu0 %612
      %614 = vadd.xlane.f32.xlu0 %v583
      %v615 = vpop.xlane.xlu0 %614
      %616 = vadd.xlane.f32.xlu0 %v585
      %v617 = vpop.xlane.xlu0 %616
      %618 = vadd.xlane.f32.xlu0 %v587
      %v619 = vpop.xlane.xlu0 %618
      %620 = vadd.xlane.f32.xlu0 %v589
      %v621 = vpop.xlane.xlu0 %620
      %622 = vadd.xlane.f32.xlu0 %v591
      %v623 = vpop.xlane.xlu0 %622
      %624 = vadd.xlane.f32.xlu0 %v593
      %v625 = vpop.xlane.xlu0 %624
      %626 = vadd.xlane.f32.xlu0 %v595
      %v627 = vpop.xlane.xlu0 %626
      %v628 = vrcp.pop %v597
      %v629 = vrcp.pop %v599
      %v630 = vrcp.pop %v601
      %v631 = vrcp.pop %v603
      %v632 = vrcp.pop %v605
      %v633 = vrcp.pop %v607
      %v634 = vrcp.pop %v609
      %v635 = vrcp.pop %v611
      %v636 = vrcp.pop %v613
      %v637 = vrcp.pop %v615
      %v638 = vrcp.pop %v617
      %v639 = vrcp.pop %v619
      %v640 = vrcp.pop %v621
      %v641 = vrcp.pop %v623
      %v642 = vrcp.pop %v625
      %v643 = vrcp.pop %v627
      %v644 = vmul.f32 %v565, %v628
      %v645 = vmul.f32 %v567, %v629
      %v646 = vmul.f32 %v569, %v630
      %v647 = vmul.f32 %v571, %v631
      %v648 = vmul.f32 %v573, %v632
      %v649 = vmul.f32 %v575, %v633
      %v650 = vmul.f32 %v577, %v634
      %v651 = vmul.f32 %v579, %v635
      %v652 = vmul.f32 %v581, %v636
      %v653 = vmul.f32 %v583, %v637
      %v654 = vmul.f32 %v585, %v638
      %v655 = vmul.f32 %v587, %v639
      %v656 = vmul.f32 %v589, %v640
      %v657 = vmul.f32 %v591, %v641
      %v658 = vmul.f32 %v593, %v642
      %v659 = vmul.f32 %v595, %v643
      %v660 = vpack.c.bf16 %v645, %v644
      %v661 = vpack.c.bf16 %v647, %v646
      %v662 = vpack.c.bf16 %v649, %v648
      %v663 = vpack.c.bf16 %v651, %v650
      %v664 = vpack.c.bf16 %v653, %v652
      %v665 = vpack.c.bf16 %v655, %v654
      %v666 = vpack.c.bf16 %v657, %v656
      %v667 = vpack.c.bf16 %v659, %v658
      %668 = vrot.lane.b32.xlu0 %v314, 64
      %v669 = vpop.permute.xlu0 %668
      %670 = vrot.lane.b32.xlu0 %v315, 64
      %v671 = vpop.permute.xlu0 %670
      %672 = vrot.lane.b32.xlu0 %v316, 64
      %v673 = vpop.permute.xlu0 %672
      %674 = vrot.lane.b32.xlu0 %v317, 64
      %v675 = vpop.permute.xlu0 %674
      %676 = vrot.lane.b32.xlu0 %v318, 64
      %v677 = vpop.permute.xlu0 %676
      %678 = vrot.lane.b32.xlu0 %v319, 64
      %v679 = vpop.permute.xlu0 %678
      %680 = vrot.lane.b32.xlu0 %v320, 64
      %v681 = vpop.permute.xlu0 %680
      %682 = vrot.lane.b32.xlu0 %v321, 64
      %v683 = vpop.permute.xlu0 %682
      %692 = vmatprep.subr.bf16.mxu0 0
      %693 = vmatpush1.bf16.msra.mxu0 %v669
      %694 = vmatprep.subr.bf16.mxu0 0
      %695 = vmatpush1.bf16.msra.mxu0 %v671
      %696 = vmatprep.subr.bf16.mxu0 0
      %697 = vmatpush1.bf16.msra.mxu0 %v673
      %698 = vmatprep.subr.bf16.mxu0 0
      %699 = vmatpush1.bf16.msra.mxu0 %v675
      %700 = vmatprep.subr.bf16.mxu0 0
      %701 = vmatpush1.bf16.msra.mxu0 %v677
      %702 = vmatprep.subr.bf16.mxu0 0
      %703 = vmatpush1.bf16.msra.mxu0 %v679
      %704 = vmatprep.subr.bf16.mxu0 0
      %705 = vmatpush1.bf16.msra.mxu0 %v681
      %706 = vmatprep.subr.bf16.mxu0 0
      %707 = vmatpush1.bf16.msra.mxu0 %v683
      %708 = vmatprep.subr.bf16.mxu0 0
      %709 = vmatpush1.bf16.msra.mxu0 0
      %710 = vmatprep.subr.bf16.mxu0 0
      %711 = vmatpush1.bf16.msra.mxu0 0
      %712 = vmatprep.subr.bf16.mxu0 0
      %713 = vmatpush1.bf16.msra.mxu0 0
      %714 = vmatprep.subr.bf16.mxu0 0
      %715 = vmatpush1.bf16.msra.mxu0 0
      %716 = vmatprep.subr.bf16.mxu0 0
      %717 = vmatpush1.bf16.msra.mxu0 0
      %718 = vmatprep.subr.bf16.mxu0 0
      %719 = vmatpush1.bf16.msra.mxu0 0
      %720 = vmatprep.subr.bf16.mxu0 0
      %721 = vmatpush1.bf16.msra.mxu0 0
      %722 = vmatprep.subr.bf16.mxu0 0
      %723 = vmatpush1.bf16.msra.mxu0 0
      %724 = vmatprep.mubr.bf16.mxu0 0
      %725 = vmatmul.mubr.bf16.gmra.mrb[0].mxu0 %v660
      %v726 = vpop.f32.mrb[0].mxu0
      %v727 = vadd.f32 0.0, %v726
      %v728 = vpop.f32.mrb[0].mxu0
      %v729 = vpop.f32.mrb[0].mxu0
      %v730 = vadd.f32 0.0, %v729
      %v731 = vpop.f32.mrb[0].mxu0
      %732 = vmatprep.mubr.bf16.mxu0 0
      %733 = vmatmul.mubr.bf16.gmra.mrb[0].mxu0 %v661
      %v734 = vpop.f32.mrb[0].mxu0
      %v735 = vadd.f32 0.0, %v734
      %v736 = vpop.f32.mrb[0].mxu0
      %v737 = vpop.f32.mrb[0].mxu0
      %v738 = vadd.f32 0.0, %v737
      %v739 = vpop.f32.mrb[0].mxu0
      %740 = vmatprep.mubr.bf16.mxu0 0
      %741 = vmatmul.mubr.bf16.gmra.mrb[0].mxu0 %v662
      %v742 = vpop.f32.mrb[0].mxu0
      %v743 = vadd.f32 0.0, %v742
      %v744 = vpop.f32.mrb[0].mxu0
      %v745 = vpop.f32.mrb[0].mxu0
      %v746 = vadd.f32 0.0, %v745
      %v747 = vpop.f32.mrb[0].mxu0
      %748 = vmatprep.mubr.bf16.mxu0 0
      %749 = vmatmul.mubr.bf16.gmra.mrb[0].mxu0 %v663
      %v750 = vpop.f32.mrb[0].mxu0
      %v751 = vadd.f32 0.0, %v750
      %v752 = vpop.f32.mrb[0].mxu0
      %v753 = vpop.f32.mrb[0].mxu0
      %v754 = vadd.f32 0.0, %v753
      %v755 = vpop.f32.mrb[0].mxu0
      %756 = vmatprep.mubr.bf16.mxu0 0
      %757 = vmatmul.mubr.bf16.gmra.mrb[0].mxu0 %v664
      %v758 = vpop.f32.mrb[0].mxu0
      %v759 = vadd.f32 0.0, %v758
      %v760 = vpop.f32.mrb[0].mxu0
      %v761 = vpop.f32.mrb[0].mxu0
      %v762 = vadd.f32 0.0, %v761
      %v763 = vpop.f32.mrb[0].mxu0
      %764 = vmatprep.mubr.bf16.mxu0 0
      %765 = vmatmul.mubr.bf16.gmra.mrb[0].mxu0 %v665
      %v766 = vpop.f32.mrb[0].mxu0
      %v767 = vadd.f32 0.0, %v766
      %v768 = vpop.f32.mrb[0].mxu0
      %v769 = vpop.f32.mrb[0].mxu0
      %v770 = vadd.f32 0.0, %v769
      %v771 = vpop.f32.mrb[0].mxu0
      %772 = vmatprep.mubr.bf16.mxu0 0
      %773 = vmatmul.mubr.bf16.gmra.mrb[0].mxu0 %v666
      %v774 = vpop.f32.mrb[0].mxu0
      %v775 = vadd.f32 0.0, %v774
      %v776 = vpop.f32.mrb[0].mxu0
      %v777 = vpop.f32.mrb[0].mxu0
      %v778 = vadd.f32 0.0, %v777
      %v779 = vpop.f32.mrb[0].mxu0
      %780 = vmatprep.mubr.bf16.mxu0 0
      %781 = vmatmul.mubr.bf16.gmra.mrb[0].mxu0 %v667
      %v782 = vpop.f32.mrb[0].mxu0
      %v783 = vadd.f32 0.0, %v782
      %v784 = vpop.f32.mrb[0].mxu0
      %v785 = vpop.f32.mrb[0].mxu0
      %v786 = vadd.f32 0.0, %v785
      %v787 = vpop.f32.mrb[0].mxu0
      %788 = vdwg.mxu0
      %v789 = vpack.c.bf16 %v730, %v727
      %v790 = vpack.c.bf16 %v738, %v735
      %v791 = vpack.c.bf16 %v746, %v743
      %v792 = vpack.c.bf16 %v754, %v751
      %v793 = vpack.c.bf16 %v762, %v759
      %v794 = vpack.c.bf16 %v770, %v767
      %v795 = vpack.c.bf16 %v778, %v775
      %v796 = vpack.c.bf16 %v786, %v783
      %v797 = vld [vmem:[%s2] sm:$0xf]
      %v799 = vsel %vm338, %v789, 0
      %v802 = vsel %vm338, %v790, 0
      %v805 = vsel %vm338, %v791, 0
      %v808 = vsel %vm338, %v792, 0
      %v811 = vsel %vm338, %v793, 0
      %v814 = vsel %vm338, %v794, 0
      %v817 = vsel %vm338, %v795, 0
      %v820 = vsel %vm338, %v796, 0
      %vm822 = vcmask 1043456
      %v824 = vsel %vm822, %v797, 0
      %826 = vmatprep.subr.bf16.mxu0 0
      %827 = vmatpush1.bf16.msra.mxu0 %v824
      %828 = vmatprep.subr.bf16.mxu0 0
      %829 = vmatpush1.bf16.msra.mxu0 0
      %830 = vmatprep.subr.bf16.mxu0 0
      %831 = vmatpush1.bf16.msra.mxu0 0
      %832 = vmatprep.subr.bf16.mxu0 0
      %833 = vmatpush1.bf16.msra.mxu0 0
      %834 = vmatprep.subr.bf16.mxu0 0
      %835 = vmatpush1.bf16.msra.mxu0 0
      %836 = vmatprep.subr.bf16.mxu0 0
      %837 = vmatpush1.bf16.msra.mxu0 0
      %838 = vmatprep.subr.bf16.mxu0 0
      %839 = vmatpush1.bf16.msra.mxu0 0
      %840 = vmatprep.subr.bf16.mxu0 0
      %841 = vmatpush1.bf16.msra.mxu0 0
      %842 = vmatprep.subr.bf16.mxu0 0
      %843 = vmatpush1.bf16.msra.mxu0 0
      %844 = vmatprep.subr.bf16.mxu0 0
      %845 = vmatpush1.bf16.msra.mxu0 0
      %846 = vmatprep.subr.bf16.mxu0 0
      %847 = vmatpush1.bf16.msra.mxu0 0
      %848 = vmatprep.subr.bf16.mxu0 0
      %849 = vmatpush1.bf16.msra.mxu0 0
      %850 = vmatprep.subr.bf16.mxu0 0
      %851 = vmatpush1.bf16.msra.mxu0 0
      %852 = vmatprep.subr.bf16.mxu0 0
      %853 = vmatpush1.bf16.msra.mxu0 0
      %854 = vmatprep.subr.bf16.mxu0 0
      %855 = vmatpush1.bf16.msra.mxu0 0
      %856 = vmatprep.subr.bf16.mxu0 0
      %857 = vmatpush1.bf16.msra.mxu0 0
      %858 = vmatprep.mubr.bf16.mxu0 0
      %859 = vmatmul.mubr.bf16.gmra.mrb[0].mxu0 %v799
      %v860 = vpop.f32.mrb[0].mxu0
      %v861 = vadd.f32 0.0, %v860
      %v862 = vpop.f32.mrb[0].mxu0
      %v863 = vpop.f32.mrb[0].mxu0
      %v864 = vadd.f32 0.0, %v863
      %v865 = vpop.f32.mrb[0].mxu0
      %866 = vmatprep.mubr.bf16.mxu0 0
      %867 = vmatmul.mubr.bf16.gmra.mrb[0].mxu0 %v802
      %v868 = vpop.f32.mrb[0].mxu0
      %v869 = vadd.f32 0.0, %v868
      %v870 = vpop.f32.mrb[0].mxu0
      %v871 = vpop.f32.mrb[0].mxu0
      %v872 = vadd.f32 0.0, %v871
      %v873 = vpop.f32.mrb[0].mxu0
      %874 = vmatprep.mubr.bf16.mxu0 0
      %875 = vmatmul.mubr.bf16.gmra.mrb[0].mxu0 %v805
      %v876 = vpop.f32.mrb[0].mxu0
      %v877 = vadd.f32 0.0, %v876
      %v878 = vpop.f32.mrb[0].mxu0
      %v879 = vpop.f32.mrb[0].mxu0
      %v880 = vadd.f32 0.0, %v879
      %v881 = vpop.f32.mrb[0].mxu0
      %882 = vmatprep.mubr.bf16.mxu0 0
      %883 = vmatmul.mubr.bf16.gmra.mrb[0].mxu0 %v808
      %v884 = vpop.f32.mrb[0].mxu0
      %v885 = vadd.f32 0.0, %v884
      %v886 = vpop.f32.mrb[0].mxu0
      %v887 = vpop.f32.mrb[0].mxu0
      %v888 = vadd.f32 0.0, %v887
      %v889 = vpop.f32.mrb[0].mxu0
      %890 = vmatprep.mubr.bf16.mxu0 0
      %891 = vmatmul.mubr.bf16.gmra.mrb[0].mxu0 %v811
      %v892 = vpop.f32.mrb[0].mxu0
      %v893 = vadd.f32 0.0, %v892
      %v894 = vpop.f32.mrb[0].mxu0
      %v895 = vpop.f32.mrb[0].mxu0
      %v896 = vadd.f32 0.0, %v895
      %v897 = vpop.f32.mrb[0].mxu0
      %898 = vmatprep.mubr.bf16.mxu0 0
      %899 = vmatmul.mubr.bf16.gmra.mrb[0].mxu0 %v814
      %v900 = vpop.f32.mrb[0].mxu0
      %v901 = vadd.f32 0.0, %v900
      %v902 = vpop.f32.mrb[0].mxu0
      %v903 = vpop.f32.mrb[0].mxu0
      %v904 = vadd.f32 0.0, %v903
      %v905 = vpop.f32.mrb[0].mxu0
      %906 = vmatprep.mubr.bf16.mxu0 0
      %907 = vmatmul.mubr.bf16.gmra.mrb[0].mxu0 %v817
      %v908 = vpop.f32.mrb[0].mxu0
      %v909 = vadd.f32 0.0, %v908
      %v910 = vpop.f32.mrb[0].mxu0
      %v911 = vpop.f32.mrb[0].mxu0
      %v912 = vadd.f32 0.0, %v911
      %v913 = vpop.f32.mrb[0].mxu0
      %914 = vmatprep.mubr.bf16.mxu0 0
      %915 = vmatmul.mubr.bf16.gmra.mrb[0].mxu0 %v820
      %v916 = vpop.f32.mrb[0].mxu0
      %v917 = vadd.f32 0.0, %v916
      %v918 = vpop.f32.mrb[0].mxu0
      %v919 = vpop.f32.mrb[0].mxu0
      %v920 = vadd.f32 0.0, %v919
      %v921 = vpop.f32.mrb[0].mxu0
      %922 = vdwg.mxu0
      %v923 = vadd.f32 %v250, %v861
      %v924 = vadd.f32 %v251, %v864
      %v925 = vadd.f32 %v252, %v869
      %v926 = vadd.f32 %v253, %v872
      %v927 = vadd.f32 %v254, %v877
      %v928 = vadd.f32 %v255, %v880
      %v929 = vadd.f32 %v256, %v885
      %v930 = vadd.f32 %v257, %v888
      %v931 = vadd.f32 %v258, %v893
      %v932 = vadd.f32 %v259, %v896
      %v933 = vadd.f32 %v260, %v901
      %v934 = vadd.f32 %v261, %v904
      %v935 = vadd.f32 %v262, %v909
      %v936 = vadd.f32 %v263, %v912
      %v937 = vadd.f32 %v264, %v917
      %v938 = vadd.f32 %v265, %v920
      %939 = vrot.lane.b32.xlu0 %v314, 120
      %v940 = vpop.permute.xlu0 %939
      %941 = vrot.lane.b32.xlu0 %v315, 120
      %v942 = vpop.permute.xlu0 %941
      %943 = vrot.lane.b32.xlu0 %v316, 120
      %v944 = vpop.permute.xlu0 %943
      %945 = vrot.lane.b32.xlu0 %v317, 120
      %v946 = vpop.permute.xlu0 %945
      %947 = vrot.lane.b32.xlu0 %v318, 120
      %v948 = vpop.permute.xlu0 %947
      %949 = vrot.lane.b32.xlu0 %v319, 120
      %v950 = vpop.permute.xlu0 %949
      %951 = vrot.lane.b32.xlu0 %v320, 120
      %v952 = vpop.permute.xlu0 %951
      %953 = vrot.lane.b32.xlu0 %v321, 120
      %v954 = vpop.permute.xlu0 %953
      %955 = vrot.lane.b32.xlu0 %v314, 88
      %v956 = vpop.permute.xlu0 %955
      %957 = vrot.lane.b32.xlu0 %v315, 88
      %v958 = vpop.permute.xlu0 %957
      %959 = vrot.lane.b32.xlu0 %v316, 88
      %v960 = vpop.permute.xlu0 %959
      %961 = vrot.lane.b32.xlu0 %v317, 88
      %v962 = vpop.permute.xlu0 %961
      %963 = vrot.lane.b32.xlu0 %v318, 88
      %v964 = vpop.permute.xlu0 %963
      %965 = vrot.lane.b32.xlu0 %v319, 88
      %v966 = vpop.permute.xlu0 %965
      %967 = vrot.lane.b32.xlu0 %v320, 88
      %v968 = vpop.permute.xlu0 %967
      %969 = vrot.lane.b32.xlu0 %v321, 88
      %v970 = vpop.permute.xlu0 %969
      %v972 = vsel %vm338, %v940, 0
      %v975 = vsel %vm338, %v942, 0
      %v978 = vsel %vm338, %v944, 0
      %v981 = vsel %vm338, %v946, 0
      %v984 = vsel %vm338, %v948, 0
      %v987 = vsel %vm338, %v950, 0
      %v990 = vsel %vm338, %v952, 0
      %v993 = vsel %vm338, %v954, 0
      %v996 = vsel %vm338, %v956, 0
      %v999 = vsel %vm338, %v958, 0
      %v1002 = vsel %vm338, %v960, 0
      %v1005 = vsel %vm338, %v962, 0
      %v1008 = vsel %vm338, %v964, 0
      %v1011 = vsel %vm338, %v966, 0
      %v1014 = vsel %vm338, %v968, 0
      %v1017 = vsel %vm338, %v970, 0
      %1019 = vmatprep.subr.bf16.mxu0 0
      %1020 = vmatpush1.bf16.xpose.msra.mxu0 %v996
      %1021 = vmatprep.subr.bf16.mxu0 0
      %1022 = vmatpush1.bf16.xpose.msra.mxu0 %v999
      %1023 = vmatprep.subr.bf16.mxu0 0
      %1024 = vmatpush1.bf16.xpose.msra.mxu0 %v1002
      %1025 = vmatprep.subr.bf16.mxu0 0
      %1026 = vmatpush1.bf16.xpose.msra.mxu0 %v1005
      %1027 = vmatprep.subr.bf16.mxu0 0
      %1028 = vmatpush1.bf16.xpose.msra.mxu0 %v1008
      %1029 = vmatprep.subr.bf16.mxu0 0
      %1030 = vmatpush1.bf16.xpose.msra.mxu0 %v1011
      %1031 = vmatprep.subr.bf16.mxu0 0
      %1032 = vmatpush1.bf16.xpose.msra.mxu0 %v1014
      %1033 = vmatprep.subr.bf16.mxu0 0
      %1034 = vmatpush1.bf16.xpose.msra.mxu0 %v1017
      %1035 = vmatprep.subr.bf16.mxu0 0
      %1036 = vmatpush1.bf16.xpose.msra.mxu0 0
      %1037 = vmatprep.subr.bf16.mxu0 0
      %1038 = vmatpush1.bf16.xpose.msra.mxu0 0
      %1039 = vmatprep.subr.bf16.mxu0 0
      %1040 = vmatpush1.bf16.xpose.msra.mxu0 0
      %1041 = vmatprep.subr.bf16.mxu0 0
      %1042 = vmatpush1.bf16.xpose.msra.mxu0 0
      %1043 = vmatprep.subr.bf16.mxu0 0
      %1044 = vmatpush1.bf16.xpose.msra.mxu0 0
      %1045 = vmatprep.subr.bf16.mxu0 0
      %1046 = vmatpush1.bf16.xpose.msra.mxu0 0
      %1047 = vmatprep.subr.bf16.mxu0 0
      %1048 = vmatpush1.bf16.xpose.msra.mxu0 0
      %1049 = vmatprep.subr.bf16.mxu0 0
      %1050 = vmatpush1.bf16.xpose.msra.mxu0 0
      %1051 = vmatprep.mubr.bf16.mxu0 0
      %1052 = vmatmul.mubr.bf16.gmra.mrb[0].mxu0 %v972
      %v1053 = vpop.f32.mrb[0].mxu0
      %v1054 = vadd.f32 0.0, %v1053
      %v1055 = vpop.f32.mrb[0].mxu0
      %v1056 = vpop.f32.mrb[0].mxu0
      %v1057 = vadd.f32 0.0, %v1056
      %v1058 = vpop.f32.mrb[0].mxu0
      %1059 = vmatprep.mubr.bf16.mxu0 0
      %1060 = vmatmul.mubr.bf16.gmra.mrb[0].mxu0 %v975
      %v1061 = vpop.f32.mrb[0].mxu0
      %v1062 = vadd.f32 0.0, %v1061
      %v1063 = vpop.f32.mrb[0].mxu0
      %v1064 = vpop.f32.mrb[0].mxu0
      %v1065 = vadd.f32 0.0, %v1064
      %v1066 = vpop.f32.mrb[0].mxu0
      %1067 = vmatprep.mubr.bf16.mxu0 0
      %1068 = vmatmul.mubr.bf16.gmra.mrb[0].mxu0 %v978
      %v1069 = vpop.f32.mrb[0].mxu0
      %v1070 = vadd.f32 0.0, %v1069
      %v1071 = vpop.f32.mrb[0].mxu0
      %v1072 = vpop.f32.mrb[0].mxu0
      %v1073 = vadd.f32 0.0, %v1072
      %v1074 = vpop.f32.mrb[0].mxu0
      %1075 = vmatprep.mubr.bf16.mxu0 0
      %1076 = vmatmul.mubr.bf16.gmra.mrb[0].mxu0 %v981
      %v1077 = vpop.f32.mrb[0].mxu0
      %v1078 = vadd.f32 0.0, %v1077
      %v1079 = vpop.f32.mrb[0].mxu0
      %v1080 = vpop.f32.mrb[0].mxu0
      %v1081 = vadd.f32 0.0, %v1080
      %v1082 = vpop.f32.mrb[0].mxu0
      %1083 = vmatprep.mubr.bf16.mxu0 0
      %1084 = vmatmul.mubr.bf16.gmra.mrb[0].mxu0 %v984
      %v1085 = vpop.f32.mrb[0].mxu0
      %v1086 = vadd.f32 0.0, %v1085
      %v1087 = vpop.f32.mrb[0].mxu0
      %v1088 = vpop.f32.mrb[0].mxu0
      %v1089 = vadd.f32 0.0, %v1088
      %v1090 = vpop.f32.mrb[0].mxu0
      %1091 = vmatprep.mubr.bf16.mxu0 0
      %1092 = vmatmul.mubr.bf16.gmra.mrb[0].mxu0 %v987
      %v1093 = vpop.f32.mrb[0].mxu0
      %v1094 = vadd.f32 0.0, %v1093
      %v1095 = vpop.f32.mrb[0].mxu0
      %v1096 = vpop.f32.mrb[0].mxu0
      %v1097 = vadd.f32 0.0, %v1096
      %v1098 = vpop.f32.mrb[0].mxu0
      %1099 = vmatprep.mubr.bf16.mxu0 0
      %1100 = vmatmul.mubr.bf16.gmra.mrb[0].mxu0 %v990
      %v1101 = vpop.f32.mrb[0].mxu0
      %v1102 = vadd.f32 0.0, %v1101
      %v1103 = vpop.f32.mrb[0].mxu0
      %v1104 = vpop.f32.mrb[0].mxu0
      %v1105 = vadd.f32 0.0, %v1104
      %v1106 = vpop.f32.mrb[0].mxu0
      %1107 = vmatprep.mubr.bf16.mxu0 0
      %1108 = vmatmul.mubr.bf16.gmra.mrb[0].mxu0 %v993
      %v1109 = vpop.f32.mrb[0].mxu0
      %v1110 = vadd.f32 0.0, %v1109
      %v1111 = vpop.f32.mrb[0].mxu0
      %v1112 = vpop.f32.mrb[0].mxu0
      %v1113 = vadd.f32 0.0, %v1112
      %v1114 = vpop.f32.mrb[0].mxu0
      %1115 = vdwg.mxu0
      %v1116 = vmul.f32 %v1054, 0.35355338
      %v1117 = vmul.f32 %v1057, 0.35355338
      %v1118 = vmul.f32 %v1062, 0.35355338
      %v1119 = vmul.f32 %v1065, 0.35355338
      %v1120 = vmul.f32 %v1070, 0.35355338
      %v1121 = vmul.f32 %v1073, 0.35355338
      %v1122 = vmul.f32 %v1078, 0.35355338
      %v1123 = vmul.f32 %v1081, 0.35355338
      %v1124 = vmul.f32 %v1086, 0.35355338
      %v1125 = vmul.f32 %v1089, 0.35355338
      %v1126 = vmul.f32 %v1094, 0.35355338
      %v1127 = vmul.f32 %v1097, 0.35355338
      %v1128 = vmul.f32 %v1102, 0.35355338
      %v1129 = vmul.f32 %v1105, 0.35355338
      %v1130 = vmul.f32 %v1110, 0.35355338
      %v1131 = vmul.f32 %v1113, 0.35355338
      %v1132 = vsel %vm242, %v1116, -1e+30
      %v1133 = vsel %vm242, %v1117, -1e+30
      %v1134 = vsel %vm242, %v1118, -1e+30
      %v1135 = vsel %vm242, %v1119, -1e+30
      %v1136 = vsel %vm242, %v1120, -1e+30
      %v1137 = vsel %vm242, %v1121, -1e+30
      %v1138 = vsel %vm242, %v1122, -1e+30
      %v1139 = vsel %vm242, %v1123, -1e+30
      %v1140 = vsel %vm242, %v1124, -1e+30
      %v1141 = vsel %vm242, %v1125, -1e+30
      %v1142 = vsel %vm242, %v1126, -1e+30
      %v1143 = vsel %vm242, %v1127, -1e+30
      %v1144 = vsel %vm242, %v1128, -1e+30
      %v1145 = vsel %vm242, %v1129, -1e+30
      %v1146 = vsel %vm242, %v1130, -1e+30
      %v1147 = vsel %vm242, %v1131, -1e+30
      %1148 = vmax.xlane.f32.xlu0 %v1132
      %v1149 = vpop.xlane.xlu0 %1148
      %1150 = vmax.xlane.f32.xlu0 %v1133
      %v1151 = vpop.xlane.xlu0 %1150
      %1152 = vmax.xlane.f32.xlu0 %v1134
      %v1153 = vpop.xlane.xlu0 %1152
      %1154 = vmax.xlane.f32.xlu0 %v1135
      %v1155 = vpop.xlane.xlu0 %1154
      %1156 = vmax.xlane.f32.xlu0 %v1136
      %v1157 = vpop.xlane.xlu0 %1156
      %1158 = vmax.xlane.f32.xlu0 %v1137
      %v1159 = vpop.xlane.xlu0 %1158
      %1160 = vmax.xlane.f32.xlu0 %v1138
      %v1161 = vpop.xlane.xlu0 %1160
      %1162 = vmax.xlane.f32.xlu0 %v1139
      %v1163 = vpop.xlane.xlu0 %1162
      %1164 = vmax.xlane.f32.xlu0 %v1140
      %v1165 = vpop.xlane.xlu0 %1164
      %1166 = vmax.xlane.f32.xlu0 %v1141
      %v1167 = vpop.xlane.xlu0 %1166
      %1168 = vmax.xlane.f32.xlu0 %v1142
      %v1169 = vpop.xlane.xlu0 %1168
      %1170 = vmax.xlane.f32.xlu0 %v1143
      %v1171 = vpop.xlane.xlu0 %1170
      %1172 = vmax.xlane.f32.xlu0 %v1144
      %v1173 = vpop.xlane.xlu0 %1172
      %1174 = vmax.xlane.f32.xlu0 %v1145
      %v1175 = vpop.xlane.xlu0 %1174
      %1176 = vmax.xlane.f32.xlu0 %v1146
      %v1177 = vpop.xlane.xlu0 %1176
      %1178 = vmax.xlane.f32.xlu0 %v1147
      %v1179 = vpop.xlane.xlu0 %1178
      %v1180 = vsub.f32 %v1132, %v1149
      %v1181 = vsub.f32 %v1133, %v1151
      %v1182 = vsub.f32 %v1134, %v1153
      %v1183 = vsub.f32 %v1135, %v1155
      %v1184 = vsub.f32 %v1136, %v1157
      %v1185 = vsub.f32 %v1137, %v1159
      %v1186 = vsub.f32 %v1138, %v1161
      %v1187 = vsub.f32 %v1139, %v1163
      %v1188 = vsub.f32 %v1140, %v1165
      %v1189 = vsub.f32 %v1141, %v1167
      %v1190 = vsub.f32 %v1142, %v1169
      %v1191 = vsub.f32 %v1143, %v1171
      %v1192 = vsub.f32 %v1144, %v1173
      %v1193 = vsub.f32 %v1145, %v1175
      %v1194 = vsub.f32 %v1146, %v1177
      %v1195 = vsub.f32 %v1147, %v1179
      %v1196 = vmul.f32 %v1180, 1.442695
      %v1197 = vpow.pop %v1196
      %v1198 = vmul.f32 %v1181, 1.442695
      %v1199 = vpow.pop %v1198
      %v1200 = vmul.f32 %v1182, 1.442695
      %v1201 = vpow.pop %v1200
      %v1202 = vmul.f32 %v1183, 1.442695
      %v1203 = vpow.pop %v1202
      %v1204 = vmul.f32 %v1184, 1.442695
      %v1205 = vpow.pop %v1204
      %v1206 = vmul.f32 %v1185, 1.442695
      %v1207 = vpow.pop %v1206
      %v1208 = vmul.f32 %v1186, 1.442695
      %v1209 = vpow.pop %v1208
      %v1210 = vmul.f32 %v1187, 1.442695
      %v1211 = vpow.pop %v1210
      %v1212 = vmul.f32 %v1188, 1.442695
      %v1213 = vpow.pop %v1212
      %v1214 = vmul.f32 %v1189, 1.442695
      %v1215 = vpow.pop %v1214
      %v1216 = vmul.f32 %v1190, 1.442695
      %v1217 = vpow.pop %v1216
      %v1218 = vmul.f32 %v1191, 1.442695
      %v1219 = vpow.pop %v1218
      %v1220 = vmul.f32 %v1192, 1.442695
      %v1221 = vpow.pop %v1220
      %v1222 = vmul.f32 %v1193, 1.442695
      %v1223 = vpow.pop %v1222
      %v1224 = vmul.f32 %v1194, 1.442695
      %v1225 = vpow.pop %v1224
      %v1226 = vmul.f32 %v1195, 1.442695
      %v1227 = vpow.pop %v1226
      %1228 = vadd.xlane.f32.xlu0 %v1197
      %v1229 = vpop.xlane.xlu0 %1228
      %1230 = vadd.xlane.f32.xlu0 %v1199
      %v1231 = vpop.xlane.xlu0 %1230
      %1232 = vadd.xlane.f32.xlu0 %v1201
      %v1233 = vpop.xlane.xlu0 %1232
      %1234 = vadd.xlane.f32.xlu0 %v1203
      %v1235 = vpop.xlane.xlu0 %1234
      %1236 = vadd.xlane.f32.xlu0 %v1205
      %v1237 = vpop.xlane.xlu0 %1236
      %1238 = vadd.xlane.f32.xlu0 %v1207
      %v1239 = vpop.xlane.xlu0 %1238
      %1240 = vadd.xlane.f32.xlu0 %v1209
      %v1241 = vpop.xlane.xlu0 %1240
      %1242 = vadd.xlane.f32.xlu0 %v1211
      %v1243 = vpop.xlane.xlu0 %1242
      %1244 = vadd.xlane.f32.xlu0 %v1213
      %v1245 = vpop.xlane.xlu0 %1244
      %1246 = vadd.xlane.f32.xlu0 %v1215
      %v1247 = vpop.xlane.xlu0 %1246
      %1248 = vadd.xlane.f32.xlu0 %v1217
      %v1249 = vpop.xlane.xlu0 %1248
      %1250 = vadd.xlane.f32.xlu0 %v1219
      %v1251 = vpop.xlane.xlu0 %1250
      %1252 = vadd.xlane.f32.xlu0 %v1221
      %v1253 = vpop.xlane.xlu0 %1252
      %1254 = vadd.xlane.f32.xlu0 %v1223
      %v1255 = vpop.xlane.xlu0 %1254
      %1256 = vadd.xlane.f32.xlu0 %v1225
      %v1257 = vpop.xlane.xlu0 %1256
      %1258 = vadd.xlane.f32.xlu0 %v1227
      %v1259 = vpop.xlane.xlu0 %1258
      %v1260 = vrcp.pop %v1229
      %v1261 = vrcp.pop %v1231
      %v1262 = vrcp.pop %v1233
      %v1263 = vrcp.pop %v1235
      %v1264 = vrcp.pop %v1237
      %v1265 = vrcp.pop %v1239
      %v1266 = vrcp.pop %v1241
      %v1267 = vrcp.pop %v1243
      %v1268 = vrcp.pop %v1245
      %v1269 = vrcp.pop %v1247
      %v1270 = vrcp.pop %v1249
      %v1271 = vrcp.pop %v1251
      %v1272 = vrcp.pop %v1253
      %v1273 = vrcp.pop %v1255
      %v1274 = vrcp.pop %v1257
      %v1275 = vrcp.pop %v1259
      %v1276 = vmul.f32 %v1197, %v1260
      %v1277 = vmul.f32 %v1199, %v1261
      %v1278 = vmul.f32 %v1201, %v1262
      %v1279 = vmul.f32 %v1203, %v1263
      %v1280 = vmul.f32 %v1205, %v1264
      %v1281 = vmul.f32 %v1207, %v1265
      %v1282 = vmul.f32 %v1209, %v1266
      %v1283 = vmul.f32 %v1211, %v1267
      %v1284 = vmul.f32 %v1213, %v1268
      %v1285 = vmul.f32 %v1215, %v1269
      %v1286 = vmul.f32 %v1217, %v1270
      %v1287 = vmul.f32 %v1219, %v1271
      %v1288 = vmul.f32 %v1221, %v1272
      %v1289 = vmul.f32 %v1223, %v1273
      %v1290 = vmul.f32 %v1225, %v1274
      %v1291 = vmul.f32 %v1227, %v1275
      %v1292 = vpack.c.bf16 %v1277, %v1276
      %v1293 = vpack.c.bf16 %v1279, %v1278
      %v1294 = vpack.c.bf16 %v1281, %v1280
      %v1295 = vpack.c.bf16 %v1283, %v1282
      %v1296 = vpack.c.bf16 %v1285, %v1284
      %v1297 = vpack.c.bf16 %v1287, %v1286
      %v1298 = vpack.c.bf16 %v1289, %v1288
      %v1299 = vpack.c.bf16 %v1291, %v1290
      %1300 = vrot.lane.b32.xlu0 %v314, 56
      %v1301 = vpop.permute.xlu0 %1300
      %1302 = vrot.lane.b32.xlu0 %v315, 56
      %v1303 = vpop.permute.xlu0 %1302
      %1304 = vrot.lane.b32.xlu0 %v316, 56
      %v1305 = vpop.permute.xlu0 %1304
      %1306 = vrot.lane.b32.xlu0 %v317, 56
      %v1307 = vpop.permute.xlu0 %1306
      %1308 = vrot.lane.b32.xlu0 %v318, 56
      %v1309 = vpop.permute.xlu0 %1308
      %1310 = vrot.lane.b32.xlu0 %v319, 56
      %v1311 = vpop.permute.xlu0 %1310
      %1312 = vrot.lane.b32.xlu0 %v320, 56
      %v1313 = vpop.permute.xlu0 %1312
      %1314 = vrot.lane.b32.xlu0 %v321, 56
      %v1315 = vpop.permute.xlu0 %1314
      %1324 = vmatprep.subr.bf16.mxu0 0
      %1325 = vmatpush1.bf16.msra.mxu0 %v1301
      %1326 = vmatprep.subr.bf16.mxu0 0
      %1327 = vmatpush1.bf16.msra.mxu0 %v1303
      %1328 = vmatprep.subr.bf16.mxu0 0
      %1329 = vmatpush1.bf16.msra.mxu0 %v1305
      %1330 = vmatprep.subr.bf16.mxu0 0
      %1331 = vmatpush1.bf16.msra.mxu0 %v1307
      %1332 = vmatprep.subr.bf16.mxu0 0
      %1333 = vmatpush1.bf16.msra.mxu0 %v1309
      %1334 = vmatprep.subr.bf16.mxu0 0
      %1335 = vmatpush1.bf16.msra.mxu0 %v1311
      %1336 = vmatprep.subr.bf16.mxu0 0
      %1337 = vmatpush1.bf16.msra.mxu0 %v1313
      %1338 = vmatprep.subr.bf16.mxu0 0
      %1339 = vmatpush1.bf16.msra.mxu0 %v1315
      %1340 = vmatprep.subr.bf16.mxu0 0
      %1341 = vmatpush1.bf16.msra.mxu0 0
      %1342 = vmatprep.subr.bf16.mxu0 0
      %1343 = vmatpush1.bf16.msra.mxu0 0
      %1344 = vmatprep.subr.bf16.mxu0 0
      %1345 = vmatpush1.bf16.msra.mxu0 0
      %1346 = vmatprep.subr.bf16.mxu0 0
      %1347 = vmatpush1.bf16.msra.mxu0 0
      %1348 = vmatprep.subr.bf16.mxu0 0
      %1349 = vmatpush1.bf16.msra.mxu0 0
      %1350 = vmatprep.subr.bf16.mxu0 0
      %1351 = vmatpush1.bf16.msra.mxu0 0
      %1352 = vmatprep.subr.bf16.mxu0 0
      %1353 = vmatpush1.bf16.msra.mxu0 0
      %1354 = vmatprep.subr.bf16.mxu0 0
      %1355 = vmatpush1.bf16.msra.mxu0 0
      %1356 = vmatprep.mubr.bf16.mxu0 0
      %1357 = vmatmul.mubr.bf16.gmra.mrb[0].mxu0 %v1292
      %v1358 = vpop.f32.mrb[0].mxu0
      %v1359 = vadd.f32 0.0, %v1358
      %v1360 = vpop.f32.mrb[0].mxu0
      %v1361 = vpop.f32.mrb[0].mxu0
      %v1362 = vadd.f32 0.0, %v1361
      %v1363 = vpop.f32.mrb[0].mxu0
      %1364 = vmatprep.mubr.bf16.mxu0 0
      %1365 = vmatmul.mubr.bf16.gmra.mrb[0].mxu0 %v1293
      %v1366 = vpop.f32.mrb[0].mxu0
      %v1367 = vadd.f32 0.0, %v1366
      %v1368 = vpop.f32.mrb[0].mxu0
      %v1369 = vpop.f32.mrb[0].mxu0
      %v1370 = vadd.f32 0.0, %v1369
      %v1371 = vpop.f32.mrb[0].mxu0
      %1372 = vmatprep.mubr.bf16.mxu0 0
      %1373 = vmatmul.mubr.bf16.gmra.mrb[0].mxu0 %v1294
      %v1374 = vpop.f32.mrb[0].mxu0
      %v1375 = vadd.f32 0.0, %v1374
      %v1376 = vpop.f32.mrb[0].mxu0
      %v1377 = vpop.f32.mrb[0].mxu0
      %v1378 = vadd.f32 0.0, %v1377
      %v1379 = vpop.f32.mrb[0].mxu0
      %1380 = vmatprep.mubr.bf16.mxu0 0
      %1381 = vmatmul.mubr.bf16.gmra.mrb[0].mxu0 %v1295
      %v1382 = vpop.f32.mrb[0].mxu0
      %v1383 = vadd.f32 0.0, %v1382
      %v1384 = vpop.f32.mrb[0].mxu0
      %v1385 = vpop.f32.mrb[0].mxu0
      %v1386 = vadd.f32 0.0, %v1385
      %v1387 = vpop.f32.mrb[0].mxu0
      %1388 = vmatprep.mubr.bf16.mxu0 0
      %1389 = vmatmul.mubr.bf16.gmra.mrb[0].mxu0 %v1296
      %v1390 = vpop.f32.mrb[0].mxu0
      %v1391 = vadd.f32 0.0, %v1390
      %v1392 = vpop.f32.mrb[0].mxu0
      %v1393 = vpop.f32.mrb[0].mxu0
      %v1394 = vadd.f32 0.0, %v1393
      %v1395 = vpop.f32.mrb[0].mxu0
      %1396 = vmatprep.mubr.bf16.mxu0 0
      %1397 = vmatmul.mubr.bf16.gmra.mrb[0].mxu0 %v1297
      %v1398 = vpop.f32.mrb[0].mxu0
      %v1399 = vadd.f32 0.0, %v1398
      %v1400 = vpop.f32.mrb[0].mxu0
      %v1401 = vpop.f32.mrb[0].mxu0
      %v1402 = vadd.f32 0.0, %v1401
      %v1403 = vpop.f32.mrb[0].mxu0
      %1404 = vmatprep.mubr.bf16.mxu0 0
      %1405 = vmatmul.mubr.bf16.gmra.mrb[0].mxu0 %v1298
      %v1406 = vpop.f32.mrb[0].mxu0
      %v1407 = vadd.f32 0.0, %v1406
      %v1408 = vpop.f32.mrb[0].mxu0
      %v1409 = vpop.f32.mrb[0].mxu0
      %v1410 = vadd.f32 0.0, %v1409
      %v1411 = vpop.f32.mrb[0].mxu0
      %1412 = vmatprep.mubr.bf16.mxu0 0
      %1413 = vmatmul.mubr.bf16.gmra.mrb[0].mxu0 %v1299
      %v1414 = vpop.f32.mrb[0].mxu0
      %v1415 = vadd.f32 0.0, %v1414
      %v1416 = vpop.f32.mrb[0].mxu0
      %v1417 = vpop.f32.mrb[0].mxu0
      %v1418 = vadd.f32 0.0, %v1417
      %v1419 = vpop.f32.mrb[0].mxu0
      %1420 = vdwg.mxu0
      %v1421 = vpack.c.bf16 %v1362, %v1359
      %v1422 = vpack.c.bf16 %v1370, %v1367
      %v1423 = vpack.c.bf16 %v1378, %v1375
      %v1424 = vpack.c.bf16 %v1386, %v1383
      %v1425 = vpack.c.bf16 %v1394, %v1391
      %v1426 = vpack.c.bf16 %v1402, %v1399
      %v1427 = vpack.c.bf16 %v1410, %v1407
      %v1428 = vpack.c.bf16 %v1418, %v1415
      %v1429 = vld [vmem:[%s2 + $0x4] sm:$0xf]
      %v1431 = vsel %vm338, %v1421, 0
      %v1434 = vsel %vm338, %v1422, 0
      %v1437 = vsel %vm338, %v1423, 0
      %v1440 = vsel %vm338, %v1424, 0
      %v1443 = vsel %vm338, %v1425, 0
      %v1446 = vsel %vm338, %v1426, 0
      %v1449 = vsel %vm338, %v1427, 0
      %v1452 = vsel %vm338, %v1428, 0
      %v1455 = vsel %vm822, %v1429, 0
      %1457 = vmatprep.subr.bf16.mxu0 0
      %1458 = vmatpush1.bf16.msra.mxu0 %v1455
      %1459 = vmatprep.subr.bf16.mxu0 0
      %1460 = vmatpush1.bf16.msra.mxu0 0
      %1461 = vmatprep.subr.bf16.mxu0 0
      %1462 = vmatpush1.bf16.msra.mxu0 0
      %1463 = vmatprep.subr.bf16.mxu0 0
      %1464 = vmatpush1.bf16.msra.mxu0 0
      %1465 = vmatprep.subr.bf16.mxu0 0
      %1466 = vmatpush1.bf16.msra.mxu0 0
      %1467 = vmatprep.subr.bf16.mxu0 0
      %1468 = vmatpush1.bf16.msra.mxu0 0
      %1469 = vmatprep.subr.bf16.mxu0 0
      %1470 = vmatpush1.bf16.msra.mxu0 0
      %1471 = vmatprep.subr.bf16.mxu0 0
      %1472 = vmatpush1.bf16.msra.mxu0 0
      %1473 = vmatprep.subr.bf16.mxu0 0
      %1474 = vmatpush1.bf16.msra.mxu0 0
      %1475 = vmatprep.subr.bf16.mxu0 0
      %1476 = vmatpush1.bf16.msra.mxu0 0
      %1477 = vmatprep.subr.bf16.mxu0 0
      %1478 = vmatpush1.bf16.msra.mxu0 0
      %1479 = vmatprep.subr.bf16.mxu0 0
      %1480 = vmatpush1.bf16.msra.mxu0 0
      %1481 = vmatprep.subr.bf16.mxu0 0
      %1482 = vmatpush1.bf16.msra.mxu0 0
      %1483 = vmatprep.subr.bf16.mxu0 0
      %1484 = vmatpush1.bf16.msra.mxu0 0
      %1485 = vmatprep.subr.bf16.mxu0 0
      %1486 = vmatpush1.bf16.msra.mxu0 0
      %1487 = vmatprep.subr.bf16.mxu0 0
      %1488 = vmatpush1.bf16.msra.mxu0 0
      %1489 = vmatprep.mubr.bf16.mxu0 0
      %1490 = vmatmul.mubr.bf16.gmra.mrb[0].mxu0 %v1431
      %v1491 = vpop.f32.mrb[0].mxu0
      %v1492 = vadd.f32 0.0, %v1491
      %v1493 = vpop.f32.mrb[0].mxu0
      %v1494 = vpop.f32.mrb[0].mxu0
      %v1495 = vadd.f32 0.0, %v1494
      %v1496 = vpop.f32.mrb[0].mxu0
      %1497 = vmatprep.mubr.bf16.mxu0 0
      %1498 = vmatmul.mubr.bf16.gmra.mrb[0].mxu0 %v1434
      %v1499 = vpop.f32.mrb[0].mxu0
      %v1500 = vadd.f32 0.0, %v1499
      %v1501 = vpop.f32.mrb[0].mxu0
      %v1502 = vpop.f32.mrb[0].mxu0
      %v1503 = vadd.f32 0.0, %v1502
      %v1504 = vpop.f32.mrb[0].mxu0
      %1505 = vmatprep.mubr.bf16.mxu0 0
      %1506 = vmatmul.mubr.bf16.gmra.mrb[0].mxu0 %v1437
      %v1507 = vpop.f32.mrb[0].mxu0
      %v1508 = vadd.f32 0.0, %v1507
      %v1509 = vpop.f32.mrb[0].mxu0
      %v1510 = vpop.f32.mrb[0].mxu0
      %v1511 = vadd.f32 0.0, %v1510
      %v1512 = vpop.f32.mrb[0].mxu0
      %1513 = vmatprep.mubr.bf16.mxu0 0
      %1514 = vmatmul.mubr.bf16.gmra.mrb[0].mxu0 %v1440
      %v1515 = vpop.f32.mrb[0].mxu0
      %v1516 = vadd.f32 0.0, %v1515
      %v1517 = vpop.f32.mrb[0].mxu0
      %v1518 = vpop.f32.mrb[0].mxu0
      %v1519 = vadd.f32 0.0, %v1518
      %v1520 = vpop.f32.mrb[0].mxu0
      %1521 = vmatprep.mubr.bf16.mxu0 0
      %1522 = vmatmul.mubr.bf16.gmra.mrb[0].mxu0 %v1443
      %v1523 = vpop.f32.mrb[0].mxu0
      %v1524 = vadd.f32 0.0, %v1523
      %v1525 = vpop.f32.mrb[0].mxu0
      %v1526 = vpop.f32.mrb[0].mxu0
      %v1527 = vadd.f32 0.0, %v1526
      %v1528 = vpop.f32.mrb[0].mxu0
      %1529 = vmatprep.mubr.bf16.mxu0 0
      %1530 = vmatmul.mubr.bf16.gmra.mrb[0].mxu0 %v1446
      %v1531 = vpop.f32.mrb[0].mxu0
      %v1532 = vadd.f32 0.0, %v1531
      %v1533 = vpop.f32.mrb[0].mxu0
      %v1534 = vpop.f32.mrb[0].mxu0
      %v1535 = vadd.f32 0.0, %v1534
      %v1536 = vpop.f32.mrb[0].mxu0
      %1537 = vmatprep.mubr.bf16.mxu0 0
      %1538 = vmatmul.mubr.bf16.gmra.mrb[0].mxu0 %v1449
      %v1539 = vpop.f32.mrb[0].mxu0
      %v1540 = vadd.f32 0.0, %v1539
      %v1541 = vpop.f32.mrb[0].mxu0
      %v1542 = vpop.f32.mrb[0].mxu0
      %v1543 = vadd.f32 0.0, %v1542
      %v1544 = vpop.f32.mrb[0].mxu0
      %1545 = vmatprep.mubr.bf16.mxu0 0
      %1546 = vmatmul.mubr.bf16.gmra.mrb[0].mxu0 %v1452
      %v1547 = vpop.f32.mrb[0].mxu0
      %v1548 = vadd.f32 0.0, %v1547
      %v1549 = vpop.f32.mrb[0].mxu0
      %v1550 = vpop.f32.mrb[0].mxu0
      %v1551 = vadd.f32 0.0, %v1550
      %v1552 = vpop.f32.mrb[0].mxu0
      %1553 = vdwg.mxu0
      %v1554 = vadd.f32 %v923, %v1492
      %v1555 = vadd.f32 %v924, %v1495
      %v1556 = vadd.f32 %v925, %v1500
      %v1557 = vadd.f32 %v926, %v1503
      %v1558 = vadd.f32 %v927, %v1508
      %v1559 = vadd.f32 %v928, %v1511
      %v1560 = vadd.f32 %v929, %v1516
      %v1561 = vadd.f32 %v930, %v1519
      %v1562 = vadd.f32 %v931, %v1524
      %v1563 = vadd.f32 %v932, %v1527
      %v1564 = vadd.f32 %v933, %v1532
      %v1565 = vadd.f32 %v934, %v1535
      %v1566 = vadd.f32 %v935, %v1540
      %v1567 = vadd.f32 %v936, %v1543
      %v1568 = vadd.f32 %v937, %v1548
      %v1569 = vadd.f32 %v938, %v1551
      %1570 = vrot.lane.b32.xlu0 %v314, 112
      %v1571 = vpop.permute.xlu0 %1570
      %1572 = vrot.lane.b32.xlu0 %v315, 112
      %v1573 = vpop.permute.xlu0 %1572
      %1574 = vrot.lane.b32.xlu0 %v316, 112
      %v1575 = vpop.permute.xlu0 %1574
      %1576 = vrot.lane.b32.xlu0 %v317, 112
      %v1577 = vpop.permute.xlu0 %1576
      %1578 = vrot.lane.b32.xlu0 %v318, 112
      %v1579 = vpop.permute.xlu0 %1578
      %1580 = vrot.lane.b32.xlu0 %v319, 112
      %v1581 = vpop.permute.xlu0 %1580
      %1582 = vrot.lane.b32.xlu0 %v320, 112
      %v1583 = vpop.permute.xlu0 %1582
      %1584 = vrot.lane.b32.xlu0 %v321, 112
      %v1585 = vpop.permute.xlu0 %1584
      %1586 = vrot.lane.b32.xlu0 %v314, 80
      %v1587 = vpop.permute.xlu0 %1586
      %1588 = vrot.lane.b32.xlu0 %v315, 80
      %v1589 = vpop.permute.xlu0 %1588
      %1590 = vrot.lane.b32.xlu0 %v316, 80
      %v1591 = vpop.permute.xlu0 %1590
      %1592 = vrot.lane.b32.xlu0 %v317, 80
      %v1593 = vpop.permute.xlu0 %1592
      %1594 = vrot.lane.b32.xlu0 %v318, 80
      %v1595 = vpop.permute.xlu0 %1594
      %1596 = vrot.lane.b32.xlu0 %v319, 80
      %v1597 = vpop.permute.xlu0 %1596
      %1598 = vrot.lane.b32.xlu0 %v320, 80
      %v1599 = vpop.permute.xlu0 %1598
      %1600 = vrot.lane.b32.xlu0 %v321, 80
      %v1601 = vpop.permute.xlu0 %1600
      %v1603 = vsel %vm338, %v1571, 0
      %v1606 = vsel %vm338, %v1573, 0
      %v1609 = vsel %vm338, %v1575, 0
      %v1612 = vsel %vm338, %v1577, 0
      %v1615 = vsel %vm338, %v1579, 0
      %v1618 = vsel %vm338, %v1581, 0
      %v1621 = vsel %vm338, %v1583, 0
      %v1624 = vsel %vm338, %v1585, 0
      %v1627 = vsel %vm338, %v1587, 0
      %v1630 = vsel %vm338, %v1589, 0
      %v1633 = vsel %vm338, %v1591, 0
      %v1636 = vsel %vm338, %v1593, 0
      %v1639 = vsel %vm338, %v1595, 0
      %v1642 = vsel %vm338, %v1597, 0
      %v1645 = vsel %vm338, %v1599, 0
      %v1648 = vsel %vm338, %v1601, 0
      %1650 = vmatprep.subr.bf16.mxu0 0
      %1651 = vmatpush1.bf16.xpose.msra.mxu0 %v1627
      %1652 = vmatprep.subr.bf16.mxu0 0
      %1653 = vmatpush1.bf16.xpose.msra.mxu0 %v1630
      %1654 = vmatprep.subr.bf16.mxu0 0
      %1655 = vmatpush1.bf16.xpose.msra.mxu0 %v1633
      %1656 = vmatprep.subr.bf16.mxu0 0
      %1657 = vmatpush1.bf16.xpose.msra.mxu0 %v1636
      %1658 = vmatprep.subr.bf16.mxu0 0
      %1659 = vmatpush1.bf16.xpose.msra.mxu0 %v1639
      %1660 = vmatprep.subr.bf16.mxu0 0
      %1661 = vmatpush1.bf16.xpose.msra.mxu0 %v1642
      %1662 = vmatprep.subr.bf16.mxu0 0
      %1663 = vmatpush1.bf16.xpose.msra.mxu0 %v1645
      %1664 = vmatprep.subr.bf16.mxu0 0
      %1665 = vmatpush1.bf16.xpose.msra.mxu0 %v1648
      %1666 = vmatprep.subr.bf16.mxu0 0
      %1667 = vmatpush1.bf16.xpose.msra.mxu0 0
      %1668 = vmatprep.subr.bf16.mxu0 0
      %1669 = vmatpush1.bf16.xpose.msra.mxu0 0
      %1670 = vmatprep.subr.bf16.mxu0 0
      %1671 = vmatpush1.bf16.xpose.msra.mxu0 0
      %1672 = vmatprep.subr.bf16.mxu0 0
      %1673 = vmatpush1.bf16.xpose.msra.mxu0 0
      %1674 = vmatprep.subr.bf16.mxu0 0
      %1675 = vmatpush1.bf16.xpose.msra.mxu0 0
      %1676 = vmatprep.subr.bf16.mxu0 0
      %1677 = vmatpush1.bf16.xpose.msra.mxu0 0
      %1678 = vmatprep.subr.bf16.mxu0 0
      %1679 = vmatpush1.bf16.xpose.msra.mxu0 0
      %1680 = vmatprep.subr.bf16.mxu0 0
      %1681 = vmatpush1.bf16.xpose.msra.mxu0 0
      %1682 = vmatprep.mubr.bf16.mxu0 0
      %1683 = vmatmul.mubr.bf16.gmra.mrb[0].mxu0 %v1603
      %v1684 = vpop.f32.mrb[0].mxu0
      %v1685 = vadd.f32 0.0, %v1684
      %v1686 = vpop.f32.mrb[0].mxu0
      %v1687 = vpop.f32.mrb[0].mxu0
      %v1688 = vadd.f32 0.0, %v1687
      %v1689 = vpop.f32.mrb[0].mxu0
      %1690 = vmatprep.mubr.bf16.mxu0 0
      %1691 = vmatmul.mubr.bf16.gmra.mrb[0].mxu0 %v1606
      %v1692 = vpop.f32.mrb[0].mxu0
      %v1693 = vadd.f32 0.0, %v1692
      %v1694 = vpop.f32.mrb[0].mxu0
      %v1695 = vpop.f32.mrb[0].mxu0
      %v1696 = vadd.f32 0.0, %v1695
      %v1697 = vpop.f32.mrb[0].mxu0
      %1698 = vmatprep.mubr.bf16.mxu0 0
      %1699 = vmatmul.mubr.bf16.gmra.mrb[0].mxu0 %v1609
      %v1700 = vpop.f32.mrb[0].mxu0
      %v1701 = vadd.f32 0.0, %v1700
      %v1702 = vpop.f32.mrb[0].mxu0
      %v1703 = vpop.f32.mrb[0].mxu0
      %v1704 = vadd.f32 0.0, %v1703
      %v1705 = vpop.f32.mrb[0].mxu0
      %1706 = vmatprep.mubr.bf16.mxu0 0
      %1707 = vmatmul.mubr.bf16.gmra.mrb[0].mxu0 %v1612
      %v1708 = vpop.f32.mrb[0].mxu0
      %v1709 = vadd.f32 0.0, %v1708
      %v1710 = vpop.f32.mrb[0].mxu0
      %v1711 = vpop.f32.mrb[0].mxu0
      %v1712 = vadd.f32 0.0, %v1711
      %v1713 = vpop.f32.mrb[0].mxu0
      %1714 = vmatprep.mubr.bf16.mxu0 0
      %1715 = vmatmul.mubr.bf16.gmra.mrb[0].mxu0 %v1615
      %v1716 = vpop.f32.mrb[0].mxu0
      %v1717 = vadd.f32 0.0, %v1716
      %v1718 = vpop.f32.mrb[0].mxu0
      %v1719 = vpop.f32.mrb[0].mxu0
      %v1720 = vadd.f32 0.0, %v1719
      %v1721 = vpop.f32.mrb[0].mxu0
      %1722 = vmatprep.mubr.bf16.mxu0 0
      %1723 = vmatmul.mubr.bf16.gmra.mrb[0].mxu0 %v1618
      %v1724 = vpop.f32.mrb[0].mxu0
      %v1725 = vadd.f32 0.0, %v1724
      %v1726 = vpop.f32.mrb[0].mxu0
      %v1727 = vpop.f32.mrb[0].mxu0
      %v1728 = vadd.f32 0.0, %v1727
      %v1729 = vpop.f32.mrb[0].mxu0
      %1730 = vmatprep.mubr.bf16.mxu0 0
      %1731 = vmatmul.mubr.bf16.gmra.mrb[0].mxu0 %v1621
      %v1732 = vpop.f32.mrb[0].mxu0
      %v1733 = vadd.f32 0.0, %v1732
      %v1734 = vpop.f32.mrb[0].mxu0
      %v1735 = vpop.f32.mrb[0].mxu0
      %v1736 = vadd.f32 0.0, %v1735
      %v1737 = vpop.f32.mrb[0].mxu0
      %1738 = vmatprep.mubr.bf16.mxu0 0
      %1739 = vmatmul.mubr.bf16.gmra.mrb[0].mxu0 %v1624
      %v1740 = vpop.f32.mrb[0].mxu0
      %v1741 = vadd.f32 0.0, %v1740
      %v1742 = vpop.f32.mrb[0].mxu0
      %v1743 = vpop.f32.mrb[0].mxu0
      %v1744 = vadd.f32 0.0, %v1743
      %v1745 = vpop.f32.mrb[0].mxu0
      %1746 = vdwg.mxu0
      %v1747 = vmul.f32 %v1685, 0.35355338
      %v1748 = vmul.f32 %v1688, 0.35355338
      %v1749 = vmul.f32 %v1693, 0.35355338
      %v1750 = vmul.f32 %v1696, 0.35355338
      %v1751 = vmul.f32 %v1701, 0.35355338
      %v1752 = vmul.f32 %v1704, 0.35355338
      %v1753 = vmul.f32 %v1709, 0.35355338
      %v1754 = vmul.f32 %v1712, 0.35355338
      %v1755 = vmul.f32 %v1717, 0.35355338
      %v1756 = vmul.f32 %v1720, 0.35355338
      %v1757 = vmul.f32 %v1725, 0.35355338
      %v1758 = vmul.f32 %v1728, 0.35355338
      %v1759 = vmul.f32 %v1733, 0.35355338
      %v1760 = vmul.f32 %v1736, 0.35355338
      %v1761 = vmul.f32 %v1741, 0.35355338
      %v1762 = vmul.f32 %v1744, 0.35355338
      %v1763 = vsel %vm242, %v1747, -1e+30
      %v1764 = vsel %vm242, %v1748, -1e+30
      %v1765 = vsel %vm242, %v1749, -1e+30
      %v1766 = vsel %vm242, %v1750, -1e+30
      %v1767 = vsel %vm242, %v1751, -1e+30
      %v1768 = vsel %vm242, %v1752, -1e+30
      %v1769 = vsel %vm242, %v1753, -1e+30
      %v1770 = vsel %vm242, %v1754, -1e+30
      %v1771 = vsel %vm242, %v1755, -1e+30
      %v1772 = vsel %vm242, %v1756, -1e+30
      %v1773 = vsel %vm242, %v1757, -1e+30
      %v1774 = vsel %vm242, %v1758, -1e+30
      %v1775 = vsel %vm242, %v1759, -1e+30
      %v1776 = vsel %vm242, %v1760, -1e+30
      %v1777 = vsel %vm242, %v1761, -1e+30
      %v1778 = vsel %vm242, %v1762, -1e+30
      %1779 = vmax.xlane.f32.xlu0 %v1763
      %v1780 = vpop.xlane.xlu0 %1779
      %1781 = vmax.xlane.f32.xlu0 %v1764
      %v1782 = vpop.xlane.xlu0 %1781
      %1783 = vmax.xlane.f32.xlu0 %v1765
      %v1784 = vpop.xlane.xlu0 %1783
      %1785 = vmax.xlane.f32.xlu0 %v1766
      %v1786 = vpop.xlane.xlu0 %1785
      %1787 = vmax.xlane.f32.xlu0 %v1767
      %v1788 = vpop.xlane.xlu0 %1787
      %1789 = vmax.xlane.f32.xlu0 %v1768
      %v1790 = vpop.xlane.xlu0 %1789
      %1791 = vmax.xlane.f32.xlu0 %v1769
      %v1792 = vpop.xlane.xlu0 %1791
      %1793 = vmax.xlane.f32.xlu0 %v1770
      %v1794 = vpop.xlane.xlu0 %1793
      %1795 = vmax.xlane.f32.xlu0 %v1771
      %v1796 = vpop.xlane.xlu0 %1795
      %1797 = vmax.xlane.f32.xlu0 %v1772
      %v1798 = vpop.xlane.xlu0 %1797
      %1799 = vmax.xlane.f32.xlu0 %v1773
      %v1800 = vpop.xlane.xlu0 %1799
      %1801 = vmax.xlane.f32.xlu0 %v1774
      %v1802 = vpop.xlane.xlu0 %1801
      %1803 = vmax.xlane.f32.xlu0 %v1775
      %v1804 = vpop.xlane.xlu0 %1803
      %1805 = vmax.xlane.f32.xlu0 %v1776
      %v1806 = vpop.xlane.xlu0 %1805
      %1807 = vmax.xlane.f32.xlu0 %v1777
      %v1808 = vpop.xlane.xlu0 %1807
      %1809 = vmax.xlane.f32.xlu0 %v1778
      %v1810 = vpop.xlane.xlu0 %1809
      %v1811 = vsub.f32 %v1763, %v1780
      %v1812 = vsub.f32 %v1764, %v1782
      %v1813 = vsub.f32 %v1765, %v1784
      %v1814 = vsub.f32 %v1766, %v1786
      %v1815 = vsub.f32 %v1767, %v1788
      %v1816 = vsub.f32 %v1768, %v1790
      %v1817 = vsub.f32 %v1769, %v1792
      %v1818 = vsub.f32 %v1770, %v1794
      %v1819 = vsub.f32 %v1771, %v1796
      %v1820 = vsub.f32 %v1772, %v1798
      %v1821 = vsub.f32 %v1773, %v1800
      %v1822 = vsub.f32 %v1774, %v1802
      %v1823 = vsub.f32 %v1775, %v1804
      %v1824 = vsub.f32 %v1776, %v1806
      %v1825 = vsub.f32 %v1777, %v1808
      %v1826 = vsub.f32 %v1778, %v1810
      %v1827 = vmul.f32 %v1811, 1.442695
      %v1828 = vpow.pop %v1827
      %v1829 = vmul.f32 %v1812, 1.442695
      %v1830 = vpow.pop %v1829
      %v1831 = vmul.f32 %v1813, 1.442695
      %v1832 = vpow.pop %v1831
      %v1833 = vmul.f32 %v1814, 1.442695
      %v1834 = vpow.pop %v1833
      %v1835 = vmul.f32 %v1815, 1.442695
      %v1836 = vpow.pop %v1835
      %v1837 = vmul.f32 %v1816, 1.442695
      %v1838 = vpow.pop %v1837
      %v1839 = vmul.f32 %v1817, 1.442695
      %v1840 = vpow.pop %v1839
      %v1841 = vmul.f32 %v1818, 1.442695
      %v1842 = vpow.pop %v1841
      %v1843 = vmul.f32 %v1819, 1.442695
      %v1844 = vpow.pop %v1843
      %v1845 = vmul.f32 %v1820, 1.442695
      %v1846 = vpow.pop %v1845
      %v1847 = vmul.f32 %v1821, 1.442695
      %v1848 = vpow.pop %v1847
      %v1849 = vmul.f32 %v1822, 1.442695
      %v1850 = vpow.pop %v1849
      %v1851 = vmul.f32 %v1823, 1.442695
      %v1852 = vpow.pop %v1851
      %v1853 = vmul.f32 %v1824, 1.442695
      %v1854 = vpow.pop %v1853
      %v1855 = vmul.f32 %v1825, 1.442695
      %v1856 = vpow.pop %v1855
      %v1857 = vmul.f32 %v1826, 1.442695
      %v1858 = vpow.pop %v1857
      %1859 = vadd.xlane.f32.xlu0 %v1828
      %v1860 = vpop.xlane.xlu0 %1859
      %1861 = vadd.xlane.f32.xlu0 %v1830
      %v1862 = vpop.xlane.xlu0 %1861
      %1863 = vadd.xlane.f32.xlu0 %v1832
      %v1864 = vpop.xlane.xlu0 %1863
      %1865 = vadd.xlane.f32.xlu0 %v1834
      %v1866 = vpop.xlane.xlu0 %1865
      %1867 = vadd.xlane.f32.xlu0 %v1836
      %v1868 = vpop.xlane.xlu0 %1867
      %1869 = vadd.xlane.f32.xlu0 %v1838
      %v1870 = vpop.xlane.xlu0 %1869
      %1871 = vadd.xlane.f32.xlu0 %v1840
      %v1872 = vpop.xlane.xlu0 %1871
      %1873 = vadd.xlane.f32.xlu0 %v1842
      %v1874 = vpop.xlane.xlu0 %1873
      %1875 = vadd.xlane.f32.xlu0 %v1844
      %v1876 = vpop.xlane.xlu0 %1875
      %1877 = vadd.xlane.f32.xlu0 %v1846
      %v1878 = vpop.xlane.xlu0 %1877
      %1879 = vadd.xlane.f32.xlu0 %v1848
      %v1880 = vpop.xlane.xlu0 %1879
      %1881 = vadd.xlane.f32.xlu0 %v1850
      %v1882 = vpop.xlane.xlu0 %1881
      %1883 = vadd.xlane.f32.xlu0 %v1852
      %v1884 = vpop.xlane.xlu0 %1883
      %1885 = vadd.xlane.f32.xlu0 %v1854
      %v1886 = vpop.xlane.xlu0 %1885
      %1887 = vadd.xlane.f32.xlu0 %v1856
      %v1888 = vpop.xlane.xlu0 %1887
      %1889 = vadd.xlane.f32.xlu0 %v1858
      %v1890 = vpop.xlane.xlu0 %1889
      %v1891 = vrcp.pop %v1860
      %v1892 = vrcp.pop %v1862
      %v1893 = vrcp.pop %v1864
      %v1894 = vrcp.pop %v1866
      %v1895 = vrcp.pop %v1868
      %v1896 = vrcp.pop %v1870
      %v1897 = vrcp.pop %v1872
      %v1898 = vrcp.pop %v1874
      %v1899 = vrcp.pop %v1876
      %v1900 = vrcp.pop %v1878
      %v1901 = vrcp.pop %v1880
      %v1902 = vrcp.pop %v1882
      %v1903 = vrcp.pop %v1884
      %v1904 = vrcp.pop %v1886
      %v1905 = vrcp.pop %v1888
      %v1906 = vrcp.pop %v1890
      %v1907 = vmul.f32 %v1828, %v1891
      %v1908 = vmul.f32 %v1830, %v1892
      %v1909 = vmul.f32 %v1832, %v1893
      %v1910 = vmul.f32 %v1834, %v1894
      %v1911 = vmul.f32 %v1836, %v1895
      %v1912 = vmul.f32 %v1838, %v1896
      %v1913 = vmul.f32 %v1840, %v1897
      %v1914 = vmul.f32 %v1842, %v1898
      %v1915 = vmul.f32 %v1844, %v1899
      %v1916 = vmul.f32 %v1846, %v1900
      %v1917 = vmul.f32 %v1848, %v1901
      %v1918 = vmul.f32 %v1850, %v1902
      %v1919 = vmul.f32 %v1852, %v1903
      %v1920 = vmul.f32 %v1854, %v1904
      %v1921 = vmul.f32 %v1856, %v1905
      %v1922 = vmul.f32 %v1858, %v1906
      %v1923 = vpack.c.bf16 %v1908, %v1907
      %v1924 = vpack.c.bf16 %v1910, %v1909
      %v1925 = vpack.c.bf16 %v1912, %v1911
      %v1926 = vpack.c.bf16 %v1914, %v1913
      %v1927 = vpack.c.bf16 %v1916, %v1915
      %v1928 = vpack.c.bf16 %v1918, %v1917
      %v1929 = vpack.c.bf16 %v1920, %v1919
      %v1930 = vpack.c.bf16 %v1922, %v1921
      %1931 = vrot.lane.b32.xlu0 %v314, 48
      %v1932 = vpop.permute.xlu0 %1931
      %1933 = vrot.lane.b32.xlu0 %v315, 48
      %v1934 = vpop.permute.xlu0 %1933
      %1935 = vrot.lane.b32.xlu0 %v316, 48
      %v1936 = vpop.permute.xlu0 %1935
      %1937 = vrot.lane.b32.xlu0 %v317, 48
      %v1938 = vpop.permute.xlu0 %1937
      %1939 = vrot.lane.b32.xlu0 %v318, 48
      %v1940 = vpop.permute.xlu0 %1939
      %1941 = vrot.lane.b32.xlu0 %v319, 48
      %v1942 = vpop.permute.xlu0 %1941
      %1943 = vrot.lane.b32.xlu0 %v320, 48
      %v1944 = vpop.permute.xlu0 %1943
      %1945 = vrot.lane.b32.xlu0 %v321, 48
      %v1946 = vpop.permute.xlu0 %1945
      %1955 = vmatprep.subr.bf16.mxu0 0
      %1956 = vmatpush1.bf16.msra.mxu0 %v1932
      %1957 = vmatprep.subr.bf16.mxu0 0
      %1958 = vmatpush1.bf16.msra.mxu0 %v1934
      %1959 = vmatprep.subr.bf16.mxu0 0
      %1960 = vmatpush1.bf16.msra.mxu0 %v1936
      %1961 = vmatprep.subr.bf16.mxu0 0
      %1962 = vmatpush1.bf16.msra.mxu0 %v1938
      %1963 = vmatprep.subr.bf16.mxu0 0
      %1964 = vmatpush1.bf16.msra.mxu0 %v1940
      %1965 = vmatprep.subr.bf16.mxu0 0
      %1966 = vmatpush1.bf16.msra.mxu0 %v1942
      %1967 = vmatprep.subr.bf16.mxu0 0
      %1968 = vmatpush1.bf16.msra.mxu0 %v1944
      %1969 = vmatprep.subr.bf16.mxu0 0
      %1970 = vmatpush1.bf16.msra.mxu0 %v1946
      %1971 = vmatprep.subr.bf16.mxu0 0
      %1972 = vmatpush1.bf16.msra.mxu0 0
      %1973 = vmatprep.subr.bf16.mxu0 0
      %1974 = vmatpush1.bf16.msra.mxu0 0
      %1975 = vmatprep.subr.bf16.mxu0 0
      %1976 = vmatpush1.bf16.msra.mxu0 0
      %1977 = vmatprep.subr.bf16.mxu0 0
      %1978 = vmatpush1.bf16.msra.mxu0 0
      %1979 = vmatprep.subr.bf16.mxu0 0
      %1980 = vmatpush1.bf16.msra.mxu0 0
      %1981 = vmatprep.subr.bf16.mxu0 0
      %1982 = vmatpush1.bf16.msra.mxu0 0
      %1983 = vmatprep.subr.bf16.mxu0 0
      %1984 = vmatpush1.bf16.msra.mxu0 0
      %1985 = vmatprep.subr.bf16.mxu0 0
      %1986 = vmatpush1.bf16.msra.mxu0 0
      %1987 = vmatprep.mubr.bf16.mxu0 0
      %1988 = vmatmul.mubr.bf16.gmra.mrb[0].mxu0 %v1923
      %v1989 = vpop.f32.mrb[0].mxu0
      %v1990 = vadd.f32 0.0, %v1989
      %v1991 = vpop.f32.mrb[0].mxu0
      %v1992 = vpop.f32.mrb[0].mxu0
      %v1993 = vadd.f32 0.0, %v1992
      %v1994 = vpop.f32.mrb[0].mxu0
      %1995 = vmatprep.mubr.bf16.mxu0 0
      %1996 = vmatmul.mubr.bf16.gmra.mrb[0].mxu0 %v1924
      %v1997 = vpop.f32.mrb[0].mxu0
      %v1998 = vadd.f32 0.0, %v1997
      %v1999 = vpop.f32.mrb[0].mxu0
      %v2000 = vpop.f32.mrb[0].mxu0
      %v2001 = vadd.f32 0.0, %v2000
      %v2002 = vpop.f32.mrb[0].mxu0
      %2003 = vmatprep.mubr.bf16.mxu0 0
      %2004 = vmatmul.mubr.bf16.gmra.mrb[0].mxu0 %v1925
      %v2005 = vpop.f32.mrb[0].mxu0
      %v2006 = vadd.f32 0.0, %v2005
      %v2007 = vpop.f32.mrb[0].mxu0
      %v2008 = vpop.f32.mrb[0].mxu0
      %v2009 = vadd.f32 0.0, %v2008
      %v2010 = vpop.f32.mrb[0].mxu0
      %2011 = vmatprep.mubr.bf16.mxu0 0
      %2012 = vmatmul.mubr.bf16.gmra.mrb[0].mxu0 %v1926
      %v2013 = vpop.f32.mrb[0].mxu0
      %v2014 = vadd.f32 0.0, %v2013
      %v2015 = vpop.f32.mrb[0].mxu0
      %v2016 = vpop.f32.mrb[0].mxu0
      %v2017 = vadd.f32 0.0, %v2016
      %v2018 = vpop.f32.mrb[0].mxu0
      %2019 = vmatprep.mubr.bf16.mxu0 0
      %2020 = vmatmul.mubr.bf16.gmra.mrb[0].mxu0 %v1927
      %v2021 = vpop.f32.mrb[0].mxu0
      %v2022 = vadd.f32 0.0, %v2021
      %v2023 = vpop.f32.mrb[0].mxu0
      %v2024 = vpop.f32.mrb[0].mxu0
      %v2025 = vadd.f32 0.0, %v2024
      %v2026 = vpop.f32.mrb[0].mxu0
      %2027 = vmatprep.mubr.bf16.mxu0 0
      %2028 = vmatmul.mubr.bf16.gmra.mrb[0].mxu0 %v1928
      %v2029 = vpop.f32.mrb[0].mxu0
      %v2030 = vadd.f32 0.0, %v2029
      %v2031 = vpop.f32.mrb[0].mxu0
      %v2032 = vpop.f32.mrb[0].mxu0
      %v2033 = vadd.f32 0.0, %v2032
      %v2034 = vpop.f32.mrb[0].mxu0
      %2035 = vmatprep.mubr.bf16.mxu0 0
      %2036 = vmatmul.mubr.bf16.gmra.mrb[0].mxu0 %v1929
      %v2037 = vpop.f32.mrb[0].mxu0
      %v2038 = vadd.f32 0.0, %v2037
      %v2039 = vpop.f32.mrb[0].mxu0
      %v2040 = vpop.f32.mrb[0].mxu0
      %v2041 = vadd.f32 0.0, %v2040
      %v2042 = vpop.f32.mrb[0].mxu0
      %2043 = vmatprep.mubr.bf16.mxu0 0
      %2044 = vmatmul.mubr.bf16.gmra.mrb[0].mxu0 %v1930
      %v2045 = vpop.f32.mrb[0].mxu0
      %v2046 = vadd.f32 0.0, %v2045
      %v2047 = vpop.f32.mrb[0].mxu0
      %v2048 = vpop.f32.mrb[0].mxu0
      %v2049 = vadd.f32 0.0, %v2048
      %v2050 = vpop.f32.mrb[0].mxu0
      %2051 = vdwg.mxu0
      %v2052 = vpack.c.bf16 %v1993, %v1990
      %v2053 = vpack.c.bf16 %v2001, %v1998
      %v2054 = vpack.c.bf16 %v2009, %v2006
      %v2055 = vpack.c.bf16 %v2017, %v2014
      %v2056 = vpack.c.bf16 %v2025, %v2022
      %v2057 = vpack.c.bf16 %v2033, %v2030
      %v2058 = vpack.c.bf16 %v2041, %v2038
      %v2059 = vpack.c.bf16 %v2049, %v2046
      %v2060 = vld [vmem:[%s2 + $0x8] sm:$0xf]
      %v2062 = vsel %vm338, %v2052, 0
      %v2065 = vsel %vm338, %v2053, 0
      %v2068 = vsel %vm338, %v2054, 0
      %v2071 = vsel %vm338, %v2055, 0
      %v2074 = vsel %vm338, %v2056, 0
      %v2077 = vsel %vm338, %v2057, 0
      %v2080 = vsel %vm338, %v2058, 0
      %v2083 = vsel %vm338, %v2059, 0
      %v2086 = vsel %vm822, %v2060, 0
      %2088 = vmatprep.subr.bf16.mxu0 0
      %2089 = vmatpush1.bf16.msra.mxu0 %v2086
      %2090 = vmatprep.subr.bf16.mxu0 0
      %2091 = vmatpush1.bf16.msra.mxu0 0
      %2092 = vmatprep.subr.bf16.mxu0 0
      %2093 = vmatpush1.bf16.msra.mxu0 0
      %2094 = vmatprep.subr.bf16.mxu0 0
      %2095 = vmatpush1.bf16.msra.mxu0 0
      %2096 = vmatprep.subr.bf16.mxu0 0
      %2097 = vmatpush1.bf16.msra.mxu0 0
      %2098 = vmatprep.subr.bf16.mxu0 0
      %2099 = vmatpush1.bf16.msra.mxu0 0
      %2100 = vmatprep.subr.bf16.mxu0 0
      %2101 = vmatpush1.bf16.msra.mxu0 0
      %2102 = vmatprep.subr.bf16.mxu0 0
      %2103 = vmatpush1.bf16.msra.mxu0 0
      %2104 = vmatprep.subr.bf16.mxu0 0
      %2105 = vmatpush1.bf16.msra.mxu0 0
      %2106 = vmatprep.subr.bf16.mxu0 0
      %2107 = vmatpush1.bf16.msra.mxu0 0
      %2108 = vmatprep.subr.bf16.mxu0 0
      %2109 = vmatpush1.bf16.msra.mxu0 0
      %2110 = vmatprep.subr.bf16.mxu0 0
      %2111 = vmatpush1.bf16.msra.mxu0 0
      %2112 = vmatprep.subr.bf16.mxu0 0
      %2113 = vmatpush1.bf16.msra.mxu0 0
      %2114 = vmatprep.subr.bf16.mxu0 0
      %2115 = vmatpush1.bf16.msra.mxu0 0
      %2116 = vmatprep.subr.bf16.mxu0 0
      %2117 = vmatpush1.bf16.msra.mxu0 0
      %2118 = vmatprep.subr.bf16.mxu0 0
      %2119 = vmatpush1.bf16.msra.mxu0 0
      %2120 = vmatprep.mubr.bf16.mxu0 0
      %2121 = vmatmul.mubr.bf16.gmra.mrb[0].mxu0 %v2062
      %v2122 = vpop.f32.mrb[0].mxu0
      %v2123 = vadd.f32 0.0, %v2122
      %v2124 = vpop.f32.mrb[0].mxu0
      %v2125 = vpop.f32.mrb[0].mxu0
      %v2126 = vadd.f32 0.0, %v2125
      %v2127 = vpop.f32.mrb[0].mxu0
      %2128 = vmatprep.mubr.bf16.mxu0 0
      %2129 = vmatmul.mubr.bf16.gmra.mrb[0].mxu0 %v2065
      %v2130 = vpop.f32.mrb[0].mxu0
      %v2131 = vadd.f32 0.0, %v2130
      %v2132 = vpop.f32.mrb[0].mxu0
      %v2133 = vpop.f32.mrb[0].mxu0
      %v2134 = vadd.f32 0.0, %v2133
      %v2135 = vpop.f32.mrb[0].mxu0
      %2136 = vmatprep.mubr.bf16.mxu0 0
      %2137 = vmatmul.mubr.bf16.gmra.mrb[0].mxu0 %v2068
      %v2138 = vpop.f32.mrb[0].mxu0
      %v2139 = vadd.f32 0.0, %v2138
      %v2140 = vpop.f32.mrb[0].mxu0
      %v2141 = vpop.f32.mrb[0].mxu0
      %v2142 = vadd.f32 0.0, %v2141
      %v2143 = vpop.f32.mrb[0].mxu0
      %2144 = vmatprep.mubr.bf16.mxu0 0
      %2145 = vmatmul.mubr.bf16.gmra.mrb[0].mxu0 %v2071
      %v2146 = vpop.f32.mrb[0].mxu0
      %v2147 = vadd.f32 0.0, %v2146
      %v2148 = vpop.f32.mrb[0].mxu0
      %v2149 = vpop.f32.mrb[0].mxu0
      %v2150 = vadd.f32 0.0, %v2149
      %v2151 = vpop.f32.mrb[0].mxu0
      %2152 = vmatprep.mubr.bf16.mxu0 0
      %2153 = vmatmul.mubr.bf16.gmra.mrb[0].mxu0 %v2074
      %v2154 = vpop.f32.mrb[0].mxu0
      %v2155 = vadd.f32 0.0, %v2154
      %v2156 = vpop.f32.mrb[0].mxu0
      %v2157 = vpop.f32.mrb[0].mxu0
      %v2158 = vadd.f32 0.0, %v2157
      %v2159 = vpop.f32.mrb[0].mxu0
      %2160 = vmatprep.mubr.bf16.mxu0 0
      %2161 = vmatmul.mubr.bf16.gmra.mrb[0].mxu0 %v2077
      %v2162 = vpop.f32.mrb[0].mxu0
      %v2163 = vadd.f32 0.0, %v2162
      %v2164 = vpop.f32.mrb[0].mxu0
      %v2165 = vpop.f32.mrb[0].mxu0
      %v2166 = vadd.f32 0.0, %v2165
      %v2167 = vpop.f32.mrb[0].mxu0
      %2168 = vmatprep.mubr.bf16.mxu0 0
      %2169 = vmatmul.mubr.bf16.gmra.mrb[0].mxu0 %v2080
      %v2170 = vpop.f32.mrb[0].mxu0
      %v2171 = vadd.f32 0.0, %v2170
      %v2172 = vpop.f32.mrb[0].mxu0
      %v2173 = vpop.f32.mrb[0].mxu0
      %v2174 = vadd.f32 0.0, %v2173
      %v2175 = vpop.f32.mrb[0].mxu0
      %2176 = vmatprep.mubr.bf16.mxu0 0
      %2177 = vmatmul.mubr.bf16.gmra.mrb[0].mxu0 %v2083
      %v2178 = vpop.f32.mrb[0].mxu0
      %v2179 = vadd.f32 0.0, %v2178
      %v2180 = vpop.f32.mrb[0].mxu0
      %v2181 = vpop.f32.mrb[0].mxu0
      %v2182 = vadd.f32 0.0, %v2181
      %v2183 = vpop.f32.mrb[0].mxu0
      %2184 = vdwg.mxu0
      %v2185 = vadd.f32 %v1554, %v2123
      %v2186 = vadd.f32 %v1555, %v2126
      %v2187 = vadd.f32 %v1556, %v2131
      %v2188 = vadd.f32 %v1557, %v2134
      %v2189 = vadd.f32 %v1558, %v2139
      %v2190 = vadd.f32 %v1559, %v2142
      %v2191 = vadd.f32 %v1560, %v2147
      %v2192 = vadd.f32 %v1561, %v2150
      %v2193 = vadd.f32 %v1562, %v2155
      %v2194 = vadd.f32 %v1563, %v2158
      %v2195 = vadd.f32 %v1564, %v2163
      %v2196 = vadd.f32 %v1565, %v2166
      %v2197 = vadd.f32 %v1566, %v2171
      %v2198 = vadd.f32 %v1567, %v2174
      %v2199 = vadd.f32 %v1568, %v2179
      %v2200 = vadd.f32 %v1569, %v2182
      %2201 = vrot.lane.b32.xlu0 %v314, 104
      %v2202 = vpop.permute.xlu0 %2201
      %2203 = vrot.lane.b32.xlu0 %v315, 104
      %v2204 = vpop.permute.xlu0 %2203
      %2205 = vrot.lane.b32.xlu0 %v316, 104
      %v2206 = vpop.permute.xlu0 %2205
      %2207 = vrot.lane.b32.xlu0 %v317, 104
      %v2208 = vpop.permute.xlu0 %2207
      %2209 = vrot.lane.b32.xlu0 %v318, 104
      %v2210 = vpop.permute.xlu0 %2209
      %2211 = vrot.lane.b32.xlu0 %v319, 104
      %v2212 = vpop.permute.xlu0 %2211
      %2213 = vrot.lane.b32.xlu0 %v320, 104
      %v2214 = vpop.permute.xlu0 %2213
      %2215 = vrot.lane.b32.xlu0 %v321, 104
      %v2216 = vpop.permute.xlu0 %2215
      %2217 = vrot.lane.b32.xlu0 %v314, 72
      %v2218 = vpop.permute.xlu0 %2217
      %2219 = vrot.lane.b32.xlu0 %v315, 72
      %v2220 = vpop.permute.xlu0 %2219
      %2221 = vrot.lane.b32.xlu0 %v316, 72
      %v2222 = vpop.permute.xlu0 %2221
      %2223 = vrot.lane.b32.xlu0 %v317, 72
      %v2224 = vpop.permute.xlu0 %2223
      %2225 = vrot.lane.b32.xlu0 %v318, 72
      %v2226 = vpop.permute.xlu0 %2225
      %2227 = vrot.lane.b32.xlu0 %v319, 72
      %v2228 = vpop.permute.xlu0 %2227
      %2229 = vrot.lane.b32.xlu0 %v320, 72
      %v2230 = vpop.permute.xlu0 %2229
      %2231 = vrot.lane.b32.xlu0 %v321, 72
      %v2232 = vpop.permute.xlu0 %2231
      %v2234 = vsel %vm338, %v2202, 0
      %v2237 = vsel %vm338, %v2204, 0
      %v2240 = vsel %vm338, %v2206, 0
      %v2243 = vsel %vm338, %v2208, 0
      %v2246 = vsel %vm338, %v2210, 0
      %v2249 = vsel %vm338, %v2212, 0
      %v2252 = vsel %vm338, %v2214, 0
      %v2255 = vsel %vm338, %v2216, 0
      %v2258 = vsel %vm338, %v2218, 0
      %v2261 = vsel %vm338, %v2220, 0
      %v2264 = vsel %vm338, %v2222, 0
      %v2267 = vsel %vm338, %v2224, 0
      %v2270 = vsel %vm338, %v2226, 0
      %v2273 = vsel %vm338, %v2228, 0
      %v2276 = vsel %vm338, %v2230, 0
      %v2279 = vsel %vm338, %v2232, 0
      %2281 = vmatprep.subr.bf16.mxu0 0
      %2282 = vmatpush1.bf16.xpose.msra.mxu0 %v2258
      %2283 = vmatprep.subr.bf16.mxu0 0
      %2284 = vmatpush1.bf16.xpose.msra.mxu0 %v2261
      %2285 = vmatprep.subr.bf16.mxu0 0
      %2286 = vmatpush1.bf16.xpose.msra.mxu0 %v2264
      %2287 = vmatprep.subr.bf16.mxu0 0
      %2288 = vmatpush1.bf16.xpose.msra.mxu0 %v2267
      %2289 = vmatprep.subr.bf16.mxu0 0
      %2290 = vmatpush1.bf16.xpose.msra.mxu0 %v2270
      %2291 = vmatprep.subr.bf16.mxu0 0
      %2292 = vmatpush1.bf16.xpose.msra.mxu0 %v2273
      %2293 = vmatprep.subr.bf16.mxu0 0
      %2294 = vmatpush1.bf16.xpose.msra.mxu0 %v2276
      %2295 = vmatprep.subr.bf16.mxu0 0
      %2296 = vmatpush1.bf16.xpose.msra.mxu0 %v2279
      %2297 = vmatprep.subr.bf16.mxu0 0
      %2298 = vmatpush1.bf16.xpose.msra.mxu0 0
      %2299 = vmatprep.subr.bf16.mxu0 0
      %2300 = vmatpush1.bf16.xpose.msra.mxu0 0
      %2301 = vmatprep.subr.bf16.mxu0 0
      %2302 = vmatpush1.bf16.xpose.msra.mxu0 0
      %2303 = vmatprep.subr.bf16.mxu0 0
      %2304 = vmatpush1.bf16.xpose.msra.mxu0 0
      %2305 = vmatprep.subr.bf16.mxu0 0
      %2306 = vmatpush1.bf16.xpose.msra.mxu0 0
      %2307 = vmatprep.subr.bf16.mxu0 0
      %2308 = vmatpush1.bf16.xpose.msra.mxu0 0
      %2309 = vmatprep.subr.bf16.mxu0 0
      %2310 = vmatpush1.bf16.xpose.msra.mxu0 0
      %2311 = vmatprep.subr.bf16.mxu0 0
      %2312 = vmatpush1.bf16.xpose.msra.mxu0 0
      %2313 = vmatprep.mubr.bf16.mxu0 0
      %2314 = vmatmul.mubr.bf16.gmra.mrb[0].mxu0 %v2234
      %v2315 = vpop.f32.mrb[0].mxu0
      %v2316 = vadd.f32 0.0, %v2315
      %v2317 = vpop.f32.mrb[0].mxu0
      %v2318 = vpop.f32.mrb[0].mxu0
      %v2319 = vadd.f32 0.0, %v2318
      %v2320 = vpop.f32.mrb[0].mxu0
      %2321 = vmatprep.mubr.bf16.mxu0 0
      %2322 = vmatmul.mubr.bf16.gmra.mrb[0].mxu0 %v2237
      %v2323 = vpop.f32.mrb[0].mxu0
      %v2324 = vadd.f32 0.0, %v2323
      %v2325 = vpop.f32.mrb[0].mxu0
      %v2326 = vpop.f32.mrb[0].mxu0
      %v2327 = vadd.f32 0.0, %v2326
      %v2328 = vpop.f32.mrb[0].mxu0
      %2329 = vmatprep.mubr.bf16.mxu0 0
      %2330 = vmatmul.mubr.bf16.gmra.mrb[0].mxu0 %v2240
      %v2331 = vpop.f32.mrb[0].mxu0
      %v2332 = vadd.f32 0.0, %v2331
      %v2333 = vpop.f32.mrb[0].mxu0
      %v2334 = vpop.f32.mrb[0].mxu0
      %v2335 = vadd.f32 0.0, %v2334
      %v2336 = vpop.f32.mrb[0].mxu0
      %2337 = vmatprep.mubr.bf16.mxu0 0
      %2338 = vmatmul.mubr.bf16.gmra.mrb[0].mxu0 %v2243
      %v2339 = vpop.f32.mrb[0].mxu0
      %v2340 = vadd.f32 0.0, %v2339
      %v2341 = vpop.f32.mrb[0].mxu0
      %v2342 = vpop.f32.mrb[0].mxu0
      %v2343 = vadd.f32 0.0, %v2342
      %v2344 = vpop.f32.mrb[0].mxu0
      %2345 = vmatprep.mubr.bf16.mxu0 0
      %2346 = vmatmul.mubr.bf16.gmra.mrb[0].mxu0 %v2246
      %v2347 = vpop.f32.mrb[0].mxu0
      %v2348 = vadd.f32 0.0, %v2347
      %v2349 = vpop.f32.mrb[0].mxu0
      %v2350 = vpop.f32.mrb[0].mxu0
      %v2351 = vadd.f32 0.0, %v2350
      %v2352 = vpop.f32.mrb[0].mxu0
      %2353 = vmatprep.mubr.bf16.mxu0 0
      %2354 = vmatmul.mubr.bf16.gmra.mrb[0].mxu0 %v2249
      %v2355 = vpop.f32.mrb[0].mxu0
      %v2356 = vadd.f32 0.0, %v2355
      %v2357 = vpop.f32.mrb[0].mxu0
      %v2358 = vpop.f32.mrb[0].mxu0
      %v2359 = vadd.f32 0.0, %v2358
      %v2360 = vpop.f32.mrb[0].mxu0
      %2361 = vmatprep.mubr.bf16.mxu0 0
      %2362 = vmatmul.mubr.bf16.gmra.mrb[0].mxu0 %v2252
      %v2363 = vpop.f32.mrb[0].mxu0
      %v2364 = vadd.f32 0.0, %v2363
      %v2365 = vpop.f32.mrb[0].mxu0
      %v2366 = vpop.f32.mrb[0].mxu0
      %v2367 = vadd.f32 0.0, %v2366
      %v2368 = vpop.f32.mrb[0].mxu0
      %2369 = vmatprep.mubr.bf16.mxu0 0
      %2370 = vmatmul.mubr.bf16.gmra.mrb[0].mxu0 %v2255
      %v2371 = vpop.f32.mrb[0].mxu0
      %v2372 = vadd.f32 0.0, %v2371
      %v2373 = vpop.f32.mrb[0].mxu0
      %v2374 = vpop.f32.mrb[0].mxu0
      %v2375 = vadd.f32 0.0, %v2374
      %v2376 = vpop.f32.mrb[0].mxu0
      %2377 = vdwg.mxu0
      %v2378 = vmul.f32 %v2316, 0.35355338
      %v2379 = vmul.f32 %v2319, 0.35355338
      %v2380 = vmul.f32 %v2324, 0.35355338
      %v2381 = vmul.f32 %v2327, 0.35355338
      %v2382 = vmul.f32 %v2332, 0.35355338
      %v2383 = vmul.f32 %v2335, 0.35355338
      %v2384 = vmul.f32 %v2340, 0.35355338
      %v2385 = vmul.f32 %v2343, 0.35355338
      %v2386 = vmul.f32 %v2348, 0.35355338
      %v2387 = vmul.f32 %v2351, 0.35355338
      %v2388 = vmul.f32 %v2356, 0.35355338
      %v2389 = vmul.f32 %v2359, 0.35355338
      %v2390 = vmul.f32 %v2364, 0.35355338
      %v2391 = vmul.f32 %v2367, 0.35355338
      %v2392 = vmul.f32 %v2372, 0.35355338
      %v2393 = vmul.f32 %v2375, 0.35355338
      %v2394 = vsel %vm242, %v2378, -1e+30
      %v2395 = vsel %vm242, %v2379, -1e+30
      %v2396 = vsel %vm242, %v2380, -1e+30
      %v2397 = vsel %vm242, %v2381, -1e+30
      %v2398 = vsel %vm242, %v2382, -1e+30
      %v2399 = vsel %vm242, %v2383, -1e+30
      %v2400 = vsel %vm242, %v2384, -1e+30
      %v2401 = vsel %vm242, %v2385, -1e+30
      %v2402 = vsel %vm242, %v2386, -1e+30
      %v2403 = vsel %vm242, %v2387, -1e+30
      %v2404 = vsel %vm242, %v2388, -1e+30
      %v2405 = vsel %vm242, %v2389, -1e+30
      %v2406 = vsel %vm242, %v2390, -1e+30
      %v2407 = vsel %vm242, %v2391, -1e+30
      %v2408 = vsel %vm242, %v2392, -1e+30
      %v2409 = vsel %vm242, %v2393, -1e+30
      %2410 = vmax.xlane.f32.xlu0 %v2394
      %v2411 = vpop.xlane.xlu0 %2410
      %2412 = vmax.xlane.f32.xlu0 %v2395
      %v2413 = vpop.xlane.xlu0 %2412
      %2414 = vmax.xlane.f32.xlu0 %v2396
      %v2415 = vpop.xlane.xlu0 %2414
      %2416 = vmax.xlane.f32.xlu0 %v2397
      %v2417 = vpop.xlane.xlu0 %2416
      %2418 = vmax.xlane.f32.xlu0 %v2398
      %v2419 = vpop.xlane.xlu0 %2418
      %2420 = vmax.xlane.f32.xlu0 %v2399
      %v2421 = vpop.xlane.xlu0 %2420
      %2422 = vmax.xlane.f32.xlu0 %v2400
      %v2423 = vpop.xlane.xlu0 %2422
      %2424 = vmax.xlane.f32.xlu0 %v2401
      %v2425 = vpop.xlane.xlu0 %2424
      %2426 = vmax.xlane.f32.xlu0 %v2402
      %v2427 = vpop.xlane.xlu0 %2426
      %2428 = vmax.xlane.f32.xlu0 %v2403
      %v2429 = vpop.xlane.xlu0 %2428
      %2430 = vmax.xlane.f32.xlu0 %v2404
      %v2431 = vpop.xlane.xlu0 %2430
      %2432 = vmax.xlane.f32.xlu0 %v2405
      %v2433 = vpop.xlane.xlu0 %2432
      %2434 = vmax.xlane.f32.xlu0 %v2406
      %v2435 = vpop.xlane.xlu0 %2434
      %2436 = vmax.xlane.f32.xlu0 %v2407
      %v2437 = vpop.xlane.xlu0 %2436
      %2438 = vmax.xlane.f32.xlu0 %v2408
      %v2439 = vpop.xlane.xlu0 %2438
      %2440 = vmax.xlane.f32.xlu0 %v2409
      %v2441 = vpop.xlane.xlu0 %2440
      %v2442 = vsub.f32 %v2394, %v2411
      %v2443 = vsub.f32 %v2395, %v2413
      %v2444 = vsub.f32 %v2396, %v2415
      %v2445 = vsub.f32 %v2397, %v2417
      %v2446 = vsub.f32 %v2398, %v2419
      %v2447 = vsub.f32 %v2399, %v2421
      %v2448 = vsub.f32 %v2400, %v2423
      %v2449 = vsub.f32 %v2401, %v2425
      %v2450 = vsub.f32 %v2402, %v2427
      %v2451 = vsub.f32 %v2403, %v2429
      %v2452 = vsub.f32 %v2404, %v2431
      %v2453 = vsub.f32 %v2405, %v2433
      %v2454 = vsub.f32 %v2406, %v2435
      %v2455 = vsub.f32 %v2407, %v2437
      %v2456 = vsub.f32 %v2408, %v2439
      %v2457 = vsub.f32 %v2409, %v2441
      %v2458 = vmul.f32 %v2442, 1.442695
      %v2459 = vpow.pop %v2458
      %v2460 = vmul.f32 %v2443, 1.442695
      %v2461 = vpow.pop %v2460
      %v2462 = vmul.f32 %v2444, 1.442695
      %v2463 = vpow.pop %v2462
      %v2464 = vmul.f32 %v2445, 1.442695
      %v2465 = vpow.pop %v2464
      %v2466 = vmul.f32 %v2446, 1.442695
      %v2467 = vpow.pop %v2466
      %v2468 = vmul.f32 %v2447, 1.442695
      %v2469 = vpow.pop %v2468
      %v2470 = vmul.f32 %v2448, 1.442695
      %v2471 = vpow.pop %v2470
      %v2472 = vmul.f32 %v2449, 1.442695
      %v2473 = vpow.pop %v2472
      %v2474 = vmul.f32 %v2450, 1.442695
      %v2475 = vpow.pop %v2474
      %v2476 = vmul.f32 %v2451, 1.442695
      %v2477 = vpow.pop %v2476
      %v2478 = vmul.f32 %v2452, 1.442695
      %v2479 = vpow.pop %v2478
      %v2480 = vmul.f32 %v2453, 1.442695
      %v2481 = vpow.pop %v2480
      %v2482 = vmul.f32 %v2454, 1.442695
      %v2483 = vpow.pop %v2482
      %v2484 = vmul.f32 %v2455, 1.442695
      %v2485 = vpow.pop %v2484
      %v2486 = vmul.f32 %v2456, 1.442695
      %v2487 = vpow.pop %v2486
      %v2488 = vmul.f32 %v2457, 1.442695
      %v2489 = vpow.pop %v2488
      %2490 = vadd.xlane.f32.xlu0 %v2459
      %v2491 = vpop.xlane.xlu0 %2490
      %2492 = vadd.xlane.f32.xlu0 %v2461
      %v2493 = vpop.xlane.xlu0 %2492
      %2494 = vadd.xlane.f32.xlu0 %v2463
      %v2495 = vpop.xlane.xlu0 %2494
      %2496 = vadd.xlane.f32.xlu0 %v2465
      %v2497 = vpop.xlane.xlu0 %2496
      %2498 = vadd.xlane.f32.xlu0 %v2467
      %v2499 = vpop.xlane.xlu0 %2498
      %2500 = vadd.xlane.f32.xlu0 %v2469
      %v2501 = vpop.xlane.xlu0 %2500
      %2502 = vadd.xlane.f32.xlu0 %v2471
      %v2503 = vpop.xlane.xlu0 %2502
      %2504 = vadd.xlane.f32.xlu0 %v2473
      %v2505 = vpop.xlane.xlu0 %2504
      %2506 = vadd.xlane.f32.xlu0 %v2475
      %v2507 = vpop.xlane.xlu0 %2506
      %2508 = vadd.xlane.f32.xlu0 %v2477
      %v2509 = vpop.xlane.xlu0 %2508
      %2510 = vadd.xlane.f32.xlu0 %v2479
      %v2511 = vpop.xlane.xlu0 %2510
      %2512 = vadd.xlane.f32.xlu0 %v2481
      %v2513 = vpop.xlane.xlu0 %2512
      %2514 = vadd.xlane.f32.xlu0 %v2483
      %v2515 = vpop.xlane.xlu0 %2514
      %2516 = vadd.xlane.f32.xlu0 %v2485
      %v2517 = vpop.xlane.xlu0 %2516
      %2518 = vadd.xlane.f32.xlu0 %v2487
      %v2519 = vpop.xlane.xlu0 %2518
      %2520 = vadd.xlane.f32.xlu0 %v2489
      %v2521 = vpop.xlane.xlu0 %2520
      %v2522 = vrcp.pop %v2491
      %v2523 = vrcp.pop %v2493
      %v2524 = vrcp.pop %v2495
      %v2525 = vrcp.pop %v2497
      %v2526 = vrcp.pop %v2499
      %v2527 = vrcp.pop %v2501
      %v2528 = vrcp.pop %v2503
      %v2529 = vrcp.pop %v2505
      %v2530 = vrcp.pop %v2507
      %v2531 = vrcp.pop %v2509
      %v2532 = vrcp.pop %v2511
      %v2533 = vrcp.pop %v2513
      %v2534 = vrcp.pop %v2515
      %v2535 = vrcp.pop %v2517
      %v2536 = vrcp.pop %v2519
      %v2537 = vrcp.pop %v2521
      %v2538 = vmul.f32 %v2459, %v2522
      %v2539 = vmul.f32 %v2461, %v2523
      %v2540 = vmul.f32 %v2463, %v2524
      %v2541 = vmul.f32 %v2465, %v2525
      %v2542 = vmul.f32 %v2467, %v2526
      %v2543 = vmul.f32 %v2469, %v2527
      %v2544 = vmul.f32 %v2471, %v2528
      %v2545 = vmul.f32 %v2473, %v2529
      %v2546 = vmul.f32 %v2475, %v2530
      %v2547 = vmul.f32 %v2477, %v2531
      %v2548 = vmul.f32 %v2479, %v2532
      %v2549 = vmul.f32 %v2481, %v2533
      %v2550 = vmul.f32 %v2483, %v2534
      %v2551 = vmul.f32 %v2485, %v2535
      %v2552 = vmul.f32 %v2487, %v2536
      %v2553 = vmul.f32 %v2489, %v2537
      %v2554 = vpack.c.bf16 %v2539, %v2538
      %v2555 = vpack.c.bf16 %v2541, %v2540
      %v2556 = vpack.c.bf16 %v2543, %v2542
      %v2557 = vpack.c.bf16 %v2545, %v2544
      %v2558 = vpack.c.bf16 %v2547, %v2546
      %v2559 = vpack.c.bf16 %v2549, %v2548
      %v2560 = vpack.c.bf16 %v2551, %v2550
      %v2561 = vpack.c.bf16 %v2553, %v2552
      %2562 = vrot.lane.b32.xlu0 %v314, 40
      %v2563 = vpop.permute.xlu0 %2562
      %2564 = vrot.lane.b32.xlu0 %v315, 40
      %v2565 = vpop.permute.xlu0 %2564
      %2566 = vrot.lane.b32.xlu0 %v316, 40
      %v2567 = vpop.permute.xlu0 %2566
      %2568 = vrot.lane.b32.xlu0 %v317, 40
      %v2569 = vpop.permute.xlu0 %2568
      %2570 = vrot.lane.b32.xlu0 %v318, 40
      %v2571 = vpop.permute.xlu0 %2570
      %2572 = vrot.lane.b32.xlu0 %v319, 40
      %v2573 = vpop.permute.xlu0 %2572
      %2574 = vrot.lane.b32.xlu0 %v320, 40
      %v2575 = vpop.permute.xlu0 %2574
      %2576 = vrot.lane.b32.xlu0 %v321, 40
      %v2577 = vpop.permute.xlu0 %2576
      %2586 = vmatprep.subr.bf16.mxu0 0
      %2587 = vmatpush1.bf16.msra.mxu0 %v2563
      %2588 = vmatprep.subr.bf16.mxu0 0
      %2589 = vmatpush1.bf16.msra.mxu0 %v2565
      %2590 = vmatprep.subr.bf16.mxu0 0
      %2591 = vmatpush1.bf16.msra.mxu0 %v2567
      %2592 = vmatprep.subr.bf16.mxu0 0
      %2593 = vmatpush1.bf16.msra.mxu0 %v2569
      %2594 = vmatprep.subr.bf16.mxu0 0
      %2595 = vmatpush1.bf16.msra.mxu0 %v2571
      %2596 = vmatprep.subr.bf16.mxu0 0
      %2597 = vmatpush1.bf16.msra.mxu0 %v2573
      %2598 = vmatprep.subr.bf16.mxu0 0
      %2599 = vmatpush1.bf16.msra.mxu0 %v2575
      %2600 = vmatprep.subr.bf16.mxu0 0
      %2601 = vmatpush1.bf16.msra.mxu0 %v2577
      %2602 = vmatprep.subr.bf16.mxu0 0
      %2603 = vmatpush1.bf16.msra.mxu0 0
      %2604 = vmatprep.subr.bf16.mxu0 0
      %2605 = vmatpush1.bf16.msra.mxu0 0
      %2606 = vmatprep.subr.bf16.mxu0 0
      %2607 = vmatpush1.bf16.msra.mxu0 0
      %2608 = vmatprep.subr.bf16.mxu0 0
      %2609 = vmatpush1.bf16.msra.mxu0 0
      %2610 = vmatprep.subr.bf16.mxu0 0
      %2611 = vmatpush1.bf16.msra.mxu0 0
      %2612 = vmatprep.subr.bf16.mxu0 0
      %2613 = vmatpush1.bf16.msra.mxu0 0
      %2614 = vmatprep.subr.bf16.mxu0 0
      %2615 = vmatpush1.bf16.msra.mxu0 0
      %2616 = vmatprep.subr.bf16.mxu0 0
      %2617 = vmatpush1.bf16.msra.mxu0 0
      %2618 = vmatprep.mubr.bf16.mxu0 0
      %2619 = vmatmul.mubr.bf16.gmra.mrb[0].mxu0 %v2554
      %v2620 = vpop.f32.mrb[0].mxu0
      %v2621 = vadd.f32 0.0, %v2620
      %v2622 = vpop.f32.mrb[0].mxu0
      %v2623 = vpop.f32.mrb[0].mxu0
      %v2624 = vadd.f32 0.0, %v2623
      %v2625 = vpop.f32.mrb[0].mxu0
      %2626 = vmatprep.mubr.bf16.mxu0 0
      %2627 = vmatmul.mubr.bf16.gmra.mrb[0].mxu0 %v2555
      %v2628 = vpop.f32.mrb[0].mxu0
      %v2629 = vadd.f32 0.0, %v2628
      %v2630 = vpop.f32.mrb[0].mxu0
      %v2631 = vpop.f32.mrb[0].mxu0
      %v2632 = vadd.f32 0.0, %v2631
      %v2633 = vpop.f32.mrb[0].mxu0
      %2634 = vmatprep.mubr.bf16.mxu0 0
      %2635 = vmatmul.mubr.bf16.gmra.mrb[0].mxu0 %v2556
      %v2636 = vpop.f32.mrb[0].mxu0
      %v2637 = vadd.f32 0.0, %v2636
      %v2638 = vpop.f32.mrb[0].mxu0
      %v2639 = vpop.f32.mrb[0].mxu0
      %v2640 = vadd.f32 0.0, %v2639
      %v2641 = vpop.f32.mrb[0].mxu0
      %2642 = vmatprep.mubr.bf16.mxu0 0
      %2643 = vmatmul.mubr.bf16.gmra.mrb[0].mxu0 %v2557
      %v2644 = vpop.f32.mrb[0].mxu0
      %v2645 = vadd.f32 0.0, %v2644
      %v2646 = vpop.f32.mrb[0].mxu0
      %v2647 = vpop.f32.mrb[0].mxu0
      %v2648 = vadd.f32 0.0, %v2647
      %v2649 = vpop.f32.mrb[0].mxu0
      %2650 = vmatprep.mubr.bf16.mxu0 0
      %2651 = vmatmul.mubr.bf16.gmra.mrb[0].mxu0 %v2558
      %v2652 = vpop.f32.mrb[0].mxu0
      %v2653 = vadd.f32 0.0, %v2652
      %v2654 = vpop.f32.mrb[0].mxu0
      %v2655 = vpop.f32.mrb[0].mxu0
      %v2656 = vadd.f32 0.0, %v2655
      %v2657 = vpop.f32.mrb[0].mxu0
      %2658 = vmatprep.mubr.bf16.mxu0 0
      %2659 = vmatmul.mubr.bf16.gmra.mrb[0].mxu0 %v2559
      %v2660 = vpop.f32.mrb[0].mxu0
      %v2661 = vadd.f32 0.0, %v2660
      %v2662 = vpop.f32.mrb[0].mxu0
      %v2663 = vpop.f32.mrb[0].mxu0
      %v2664 = vadd.f32 0.0, %v2663
      %v2665 = vpop.f32.mrb[0].mxu0
      %2666 = vmatprep.mubr.bf16.mxu0 0
      %2667 = vmatmul.mubr.bf16.gmra.mrb[0].mxu0 %v2560
      %v2668 = vpop.f32.mrb[0].mxu0
      %v2669 = vadd.f32 0.0, %v2668
      %v2670 = vpop.f32.mrb[0].mxu0
      %v2671 = vpop.f32.mrb[0].mxu0
      %v2672 = vadd.f32 0.0, %v2671
      %v2673 = vpop.f32.mrb[0].mxu0
      %2674 = vmatprep.mubr.bf16.mxu0 0
      %2675 = vmatmul.mubr.bf16.gmra.mrb[0].mxu0 %v2561
      %v2676 = vpop.f32.mrb[0].mxu0
      %v2677 = vadd.f32 0.0, %v2676
      %v2678 = vpop.f32.mrb[0].mxu0
      %v2679 = vpop.f32.mrb[0].mxu0
      %v2680 = vadd.f32 0.0, %v2679
      %v2681 = vpop.f32.mrb[0].mxu0
      %2682 = vdwg.mxu0
      %v2683 = vpack.c.bf16 %v2624, %v2621
      %v2684 = vpack.c.bf16 %v2632, %v2629
      %v2685 = vpack.c.bf16 %v2640, %v2637
      %v2686 = vpack.c.bf16 %v2648, %v2645
      %v2687 = vpack.c.bf16 %v2656, %v2653
      %v2688 = vpack.c.bf16 %v2664, %v2661
      %v2689 = vpack.c.bf16 %v2672, %v2669
      %v2690 = vpack.c.bf16 %v2680, %v2677
      %v2691 = vld [vmem:[%s2 + $0xc] sm:$0xf]
      %v2693 = vsel %vm338, %v2683, 0
      %v2696 = vsel %vm338, %v2684, 0
      %v2699 = vsel %vm338, %v2685, 0
      %v2702 = vsel %vm338, %v2686, 0
      %v2705 = vsel %vm338, %v2687, 0
      %v2708 = vsel %vm338, %v2688, 0
      %v2711 = vsel %vm338, %v2689, 0
      %v2714 = vsel %vm338, %v2690, 0
      %v2717 = vsel %vm822, %v2691, 0
      %2719 = vmatprep.subr.bf16.mxu0 0
      %2720 = vmatpush1.bf16.msra.mxu0 %v2717
      %2721 = vmatprep.subr.bf16.mxu0 0
      %2722 = vmatpush1.bf16.msra.mxu0 0
      %2723 = vmatprep.subr.bf16.mxu0 0
      %2724 = vmatpush1.bf16.msra.mxu0 0
      %2725 = vmatprep.subr.bf16.mxu0 0
      %2726 = vmatpush1.bf16.msra.mxu0 0
      %2727 = vmatprep.subr.bf16.mxu0 0
      %2728 = vmatpush1.bf16.msra.mxu0 0
      %2729 = vmatprep.subr.bf16.mxu0 0
      %2730 = vmatpush1.bf16.msra.mxu0 0
      %2731 = vmatprep.subr.bf16.mxu0 0
      %2732 = vmatpush1.bf16.msra.mxu0 0
      %2733 = vmatprep.subr.bf16.mxu0 0
      %2734 = vmatpush1.bf16.msra.mxu0 0
      %2735 = vmatprep.subr.bf16.mxu0 0
      %2736 = vmatpush1.bf16.msra.mxu0 0
      %2737 = vmatprep.subr.bf16.mxu0 0
      %2738 = vmatpush1.bf16.msra.mxu0 0
      %2739 = vmatprep.subr.bf16.mxu0 0
      %2740 = vmatpush1.bf16.msra.mxu0 0
      %2741 = vmatprep.subr.bf16.mxu0 0
      %2742 = vmatpush1.bf16.msra.mxu0 0
      %2743 = vmatprep.subr.bf16.mxu0 0
      %2744 = vmatpush1.bf16.msra.mxu0 0
      %2745 = vmatprep.subr.bf16.mxu0 0
      %2746 = vmatpush1.bf16.msra.mxu0 0
      %2747 = vmatprep.subr.bf16.mxu0 0
      %2748 = vmatpush1.bf16.msra.mxu0 0
      %2749 = vmatprep.subr.bf16.mxu0 0
      %2750 = vmatpush1.bf16.msra.mxu0 0
      %2751 = vmatprep.mubr.bf16.mxu0 0
      %2752 = vmatmul.mubr.bf16.gmra.mrb[0].mxu0 %v2693
      %v2753 = vpop.f32.mrb[0].mxu0
      %v2754 = vadd.f32 0.0, %v2753
      %v2755 = vpop.f32.mrb[0].mxu0
      %v2756 = vpop.f32.mrb[0].mxu0
      %v2757 = vadd.f32 0.0, %v2756
      %v2758 = vpop.f32.mrb[0].mxu0
      %2759 = vmatprep.mubr.bf16.mxu0 0
      %2760 = vmatmul.mubr.bf16.gmra.mrb[0].mxu0 %v2696
      %v2761 = vpop.f32.mrb[0].mxu0
      %v2762 = vadd.f32 0.0, %v2761
      %v2763 = vpop.f32.mrb[0].mxu0
      %v2764 = vpop.f32.mrb[0].mxu0
      %v2765 = vadd.f32 0.0, %v2764
      %v2766 = vpop.f32.mrb[0].mxu0
      %2767 = vmatprep.mubr.bf16.mxu0 0
      %2768 = vmatmul.mubr.bf16.gmra.mrb[0].mxu0 %v2699
      %v2769 = vpop.f32.mrb[0].mxu0
      %v2770 = vadd.f32 0.0, %v2769
      %v2771 = vpop.f32.mrb[0].mxu0
      %v2772 = vpop.f32.mrb[0].mxu0
      %v2773 = vadd.f32 0.0, %v2772
      %v2774 = vpop.f32.mrb[0].mxu0
      %2775 = vmatprep.mubr.bf16.mxu0 0
      %2776 = vmatmul.mubr.bf16.gmra.mrb[0].mxu0 %v2702
      %v2777 = vpop.f32.mrb[0].mxu0
      %v2778 = vadd.f32 0.0, %v2777
      %v2779 = vpop.f32.mrb[0].mxu0
      %v2780 = vpop.f32.mrb[0].mxu0
      %v2781 = vadd.f32 0.0, %v2780
      %v2782 = vpop.f32.mrb[0].mxu0
      %2783 = vmatprep.mubr.bf16.mxu0 0
      %2784 = vmatmul.mubr.bf16.gmra.mrb[0].mxu0 %v2705
      %v2785 = vpop.f32.mrb[0].mxu0
      %v2786 = vadd.f32 0.0, %v2785
      %v2787 = vpop.f32.mrb[0].mxu0
      %v2788 = vpop.f32.mrb[0].mxu0
      %v2789 = vadd.f32 0.0, %v2788
      %v2790 = vpop.f32.mrb[0].mxu0
      %2791 = vmatprep.mubr.bf16.mxu0 0
      %2792 = vmatmul.mubr.bf16.gmra.mrb[0].mxu0 %v2708
      %v2793 = vpop.f32.mrb[0].mxu0
      %v2794 = vadd.f32 0.0, %v2793
      %v2795 = vpop.f32.mrb[0].mxu0
      %v2796 = vpop.f32.mrb[0].mxu0
      %v2797 = vadd.f32 0.0, %v2796
      %v2798 = vpop.f32.mrb[0].mxu0
      %2799 = vmatprep.mubr.bf16.mxu0 0
      %2800 = vmatmul.mubr.bf16.gmra.mrb[0].mxu0 %v2711
      %v2801 = vpop.f32.mrb[0].mxu0
      %v2802 = vadd.f32 0.0, %v2801
      %v2803 = vpop.f32.mrb[0].mxu0
      %v2804 = vpop.f32.mrb[0].mxu0
      %v2805 = vadd.f32 0.0, %v2804
      %v2806 = vpop.f32.mrb[0].mxu0
      %2807 = vmatprep.mubr.bf16.mxu0 0
      %2808 = vmatmul.mubr.bf16.gmra.mrb[0].mxu0 %v2714
      %v2809 = vpop.f32.mrb[0].mxu0
      %v2810 = vadd.f32 0.0, %v2809
      %v2811 = vpop.f32.mrb[0].mxu0
      %v2812 = vpop.f32.mrb[0].mxu0
      %v2813 = vadd.f32 0.0, %v2812
      %v2814 = vpop.f32.mrb[0].mxu0
      %2815 = vdwg.mxu0
      %v2816 = vadd.f32 %v2185, %v2754
      %v2817 = vadd.f32 %v2186, %v2757
      %v2818 = vadd.f32 %v2187, %v2762
      %v2819 = vadd.f32 %v2188, %v2765
      %v2820 = vadd.f32 %v2189, %v2770
      %v2821 = vadd.f32 %v2190, %v2773
      %v2822 = vadd.f32 %v2191, %v2778
      %v2823 = vadd.f32 %v2192, %v2781
      %v2824 = vadd.f32 %v2193, %v2786
      %v2825 = vadd.f32 %v2194, %v2789
      %v2826 = vadd.f32 %v2195, %v2794
      %v2827 = vadd.f32 %v2196, %v2797
      %v2828 = vadd.f32 %v2197, %v2802
      %v2829 = vadd.f32 %v2198, %v2805
      %v2830 = vadd.f32 %v2199, %v2810
      %v2831 = vadd.f32 %v2200, %v2813
      %vm2832 = vcmask 261120
      %2833 = vst.msk [vmem:[%s221] sm:$0xff] %vm2832, %v2816
      %2834 = vst.msk [vmem:[%s221 + $0x8] sm:$0xff] %vm2832, %v2817
      %2835 = vst.msk [vmem:[%s221 + $0x10] sm:$0xff] %vm2832, %v2818
      %2836 = vst.msk [vmem:[%s221 + $0x18] sm:$0xff] %vm2832, %v2819
      %2837 = vst.msk [vmem:[%s221 + $0x20] sm:$0xff] %vm2832, %v2820
      %2838 = vst.msk [vmem:[%s221 + $0x28] sm:$0xff] %vm2832, %v2821
      %2839 = vst.msk [vmem:[%s221 + $0x30] sm:$0xff] %vm2832, %v2822
      %2840 = vst.msk [vmem:[%s221 + $0x38] sm:$0xff] %vm2832, %v2823
      %2841 = vst.msk [vmem:[%s221 + $0x40] sm:$0xff] %vm2832, %v2824
      %2842 = vst.msk [vmem:[%s221 + $0x48] sm:$0xff] %vm2832, %v2825
      %2843 = vst.msk [vmem:[%s221 + $0x50] sm:$0xff] %vm2832, %v2826
      %2844 = vst.msk [vmem:[%s221 + $0x58] sm:$0xff] %vm2832, %v2827
      %2845 = vst.msk [vmem:[%s221 + $0x60] sm:$0xff] %vm2832, %v2828
      %2846 = vst.msk [vmem:[%s221 + $0x68] sm:$0xff] %vm2832, %v2829
      %2847 = vst.msk [vmem:[%s221 + $0x70] sm:$0xff] %vm2832, %v2830
      %2848 = vst.msk [vmem:[%s221 + $0x78] sm:$0xff] %vm2832, %v2831
      %s2849 = smul.u32 16, %s15
      %p2850 = scmp.lt.s32.totalorder %s2849, 31
      %s2851 = scalar_select %p2850, %s2849, 31
      %s2852 = smul.addr %s2851, 8
      %s2853 = scalar_lea.vmem %s4, %s2852
      // Predicated region
      $region37: #{forward.12} parent=35 // pred_check
        %p2854 = pneg %p127
      $region38: #{forward.12} parent=35 // pred_check_branch
        %2856 = sbr.rel (%p2854) target = $region40
      $region39: #{forward.12} parent=35 // pred_region
        %s2857 = smul.u32 16, %s15
      $region40: #{forward.12} parent=35 // pred_fallthru
        _
    $region36: #{forward.12} parent=5 // pred_fallthru
      _
    %p2858 = scmp.le.s32.totalorder 2, %s10
    // Predicated region
    $region41: #{forward.12} parent=5 // pred_check
      %p2859 = pneg %p2858
    $region42: #{forward.12} parent=5 // pred_check_branch
      %2861 = sbr.rel (%p2859) target = $region44
    $region43: #{forward.12} parent=5 // pred_region
      %s2862 = ssub.s32 %s10, 2
      // Predicated region
      $region45: #{forward.12} parent=43 // pred_check
        %p2863 = pneg %p133
      $region46: #{forward.12} parent=43 // pred_check_branch
        %2865 = sbr.rel (%p2863) target = $region48
      $region47: #{forward.12} parent=43 // pred_region
        %s2866 = smul.u32 16, %s16
        %p2867 = scmp.lt.s32.totalorder %s2866, 31
        %s2868 = scalar_select %p2867, %s2866, 31
        %s2869 = smul.addr %s2868, 8
        %s2870 = scalar_lea.vmem %s4, %s2869
      $region48: #{forward.12} parent=43 // pred_fallthru
        _
    $region44: #{forward.12} parent=5 // pred_fallthru
      _
  $region6: #{forward.12} parent=0 // loop_footer
    %s14 = sadd.s32 1, %s10
  $region7: #{forward.12} parent=0 // loop_footer_branch
    %9 = sbr.rel target = $region3
  $region8: #{forward.12} parent=0 // loop_exit
    _

</llo_original>
